<compile_context>
chip_gen: v5e
topology: v5e:2x2
jax: 0.10.0
libtpu: 0.0.40
codegen_flags: <defaults>
</compile_context>

<pallas_src>
import functools
import math

import jax
import jax.numpy as jnp
from jax import lax
from jax.experimental import pallas as pl
from jax.experimental.pallas import tpu as pltpu

LANES = 128


# ---------------------------------------------------------------------------
# Fused kernel: conv stack + GAP + FC for ONE image per grid step.
# ---------------------------------------------------------------------------
def _age_classifier_kernel(x_ref, cw_ref, cb_ref, fcw_ref, fcb_ref, o_ref,
                           *, C, H, W, L):
    """Shapes seen by the kernel:
      x_ref   : (1, C, H+2L, W+2L) VMEM f32 — image with zero halo of width L
      cw_ref  : (L*3*3*C*C,)       SMEM f32 — conv weights, layout [l,dy,dx,ci,co]
      cb_ref  : (L*C,)             SMEM f32 — conv biases,  layout [l,co]
      fcw_ref : (C, 128)           VMEM f32 — fc weight (transposed, zero padded)
      fcb_ref : (1, 128)           VMEM f32 — fc bias (zero padded)
      o_ref   : (1, 1, 128)        VMEM f32 — lane-dense padded logits row
    """
    sh, sw = H + 2 * L, W + 2 * L
    # Per-channel (sh, sw) planes for this image.
    canvas = [x_ref[0, c] for c in range(C)]

    for l in range(L):
        oh, ow = sh - 2, sw - 2

        # Hoist the 9*C shifted taps — shared by every output channel.
        taps = []
        for ci in range(C):
            plane = canvas[ci]
            for dy in range(3):
                for dx in range(3):
                    taps.append(plane[dy:dy + oh, dx:dx + ow])

        # Halo mask for this layer: re-creates the zero padding that the next
        # conv layer expects (hoisted out of the output-channel loop).
        pad = L - 1 - l
        inside = None
        if pad > 0:
            ri = lax.broadcasted_iota(jnp.int32, (oh, ow), 0)
            cj = lax.broadcasted_iota(jnp.int32, (oh, ow), 1)
            inside = ((ri >= pad) & (ri < oh - pad) &
                      (cj >= pad) & (cj < ow - pad))

        new_canvas = []
        for co in range(C):
            acc = jnp.zeros((oh, ow), jnp.float32)
            t = 0
            for ci in range(C):
                for dy in range(3):
                    for dx in range(3):
                        widx = (((l * 3 + dy) * 3 + dx) * C + ci) * C + co
                        acc = acc + cw_ref[widx] * taps[t]   # VPU scalar FMA
                        t += 1
            acc = jnp.maximum(acc + cb_ref[l * C + co], 0.0)  # bias + ReLU (f32)
            if inside is not None:
                acc = jnp.where(inside, acc, 0.0)
            new_canvas.append(acc)
        canvas = new_canvas
        sh, sw = oh, ow

    # Global average pool (per channel) + Linear into a 128-lane padded row.
    inv_hw = 1.0 / float(H * W)
    fcw = fcw_ref[...]                    # (C, 128)
    out = fcb_ref[...]                    # (1, 128)
    for c in range(C):
        row_sum = jnp.sum(canvas[c], axis=1, keepdims=True)          # (H, 1)
        pooled = jnp.sum(row_sum, axis=0, keepdims=True) * inv_hw    # (1, 1)
        out = out + pooled * fcw[c:c + 1, :]
    o_ref[0] = out


# ---------------------------------------------------------------------------
# Wrapper
# ---------------------------------------------------------------------------
def age_classifier_forward(x, params, *, num_classes=3):
    """x: (N, C, H, W) float32 (PyTorch NCHW). Returns logits (N, num_classes)."""
    N, C, H, W = x.shape
    conv_w = params["conv_w"]     # (L, C_out, C_in, 3, 3)  — PyTorch OIHW per layer
    conv_b = params["conv_b"]     # (L, C)
    fc_w = params["fc_w"]         # (num_classes, C)
    fc_b = params["fc_b"]         # (num_classes,)
    L = conv_w.shape[0]

    # One-time zero halo of width L; the kernel consumes one ring per conv layer.
    xp = jnp.pad(x.astype(jnp.float32), ((0, 0), (0, 0), (L, L), (L, L)))
    SH, SW = H + 2 * L, W + 2 * L

    # Flat scalar tables for SMEM: [l, dy, dx, ci, co] and [l, co].
    cw_flat = jnp.transpose(conv_w, (0, 3, 4, 2, 1)).reshape(-1).astype(jnp.float32)
    cb_flat = conv_b.reshape(-1).astype(jnp.float32)

    # Lane-dense FC params (zero padded past num_classes).
    fcw_pad = jnp.zeros((C, LANES), jnp.float32).at[:, :num_classes].set(
        fc_w.T.astype(jnp.float32))
    fcb_pad = jnp.zeros((1, LANES), jnp.float32).at[0, :num_classes].set(
        fc_b.astype(jnp.float32))

    kernel = functools.partial(_age_classifier_kernel, C=C, H=H, W=W, L=L)

    flops = 2 * N * sum(9 * C * C * (H + 2 * (L - 1 - l)) * (W + 2 * (L - 1 - l))
                        for l in range(L)) + 2 * N * C * (H * W + LANES)
    bytes_accessed = 4 * (xp.size + N * LANES + cw_flat.size + cb_flat.size
                          + fcw_pad.size + fcb_pad.size)

    out = pl.pallas_call(
        kernel,
        out_shape=jax.ShapeDtypeStruct((N, 1, LANES), jnp.float32),
        grid=(N,),
        in_specs=[
            pl.BlockSpec((1, C, SH, SW), lambda n: (n, 0, 0, 0)),
            pl.BlockSpec(memory_space=pltpu.MemorySpace.SMEM),
            pl.BlockSpec(memory_space=pltpu.MemorySpace.SMEM),
            pl.BlockSpec((C, LANES), lambda n: (0, 0)),
            pl.BlockSpec((1, LANES), lambda n: (0, 0)),
        ],
        out_specs=pl.BlockSpec((1, 1, LANES), lambda n: (n, 0, 0)),
        compiler_params=pltpu.CompilerParams(
            dimension_semantics=("parallel",)),
        cost_estimate=pl.CostEstimate(
            flops=flops, transcendentals=0, bytes_accessed=bytes_accessed),
    )(xp, cw_flat, cb_flat, fcw_pad, fcb_pad)

    return out.reshape(N, LANES)[:, :num_classes]


# ---------------------------------------------------------------------------
# Parameter init matching the PyTorch module (conv weights ~ N(0, sqrt(2/n)))
# ---------------------------------------------------------------------------
def init_params(key, in_channels, num_classes=3, num_layers=3):
    n = 3 * 3 * in_channels                       # kh * kw * out_channels
    std = math.sqrt(2.0 / n)
    keys = jax.random.split(key, 2 * num_layers + 2)
    conv_w = jnp.stack([
        std * jax.random.normal(keys[i], (in_channels, in_channels, 3, 3), jnp.float32)
        for i in range(num_layers)])
    bound = 1.0 / math.sqrt(in_channels * 9)      # PyTorch default bias init range
    conv_b = jnp.stack([
        jax.random.uniform(keys[num_layers + i], (in_channels,), jnp.float32,
                           -bound, bound)
        for i in range(num_layers)])
    fcb = 1.0 / math.sqrt(in_channels)
    fc_w = jax.random.uniform(keys[-2], (num_classes, in_channels), jnp.float32,
                              -fcb, fcb)
    fc_b = jax.random.uniform(keys[-1], (num_classes,), jnp.float32, -fcb, fcb)
    return {"conv_w": conv_w, "conv_b": conv_b, "fc_w": fc_w, "fc_b": fc_b}


# ---------------------------------------------------------------------------
# Pure-JAX reference (high precision) for a correctness check.
# ---------------------------------------------------------------------------
def _reference_forward(x, params):
    y = x.astype(jnp.float32)
    L = params["conv_w"].shape[0]
    for l in range(L):
        y = lax.conv_general_dilated(
            y, params["conv_w"][l], window_strides=(1, 1),
            padding=((1, 1), (1, 1)),
            dimension_numbers=("NCHW", "OIHW", "NCHW"),
            precision=lax.Precision.HIGHEST)
        y = jnp.maximum(y + params["conv_b"][l][None, :, None, None], 0.0)
    pooled = jnp.mean(y, axis=(2, 3))                          # (N, C)
    return jnp.dot(pooled, params["fc_w"].T,
                   precision=lax.Precision.HIGHEST) + params["fc_b"]


if __name__ == "__main__":
    key = jax.random.PRNGKey(0)
    kx, kp = jax.random.split(key)

    N, C, H, W = 2, 4, 16, 16
    NUM_CLASSES, NUM_LAYERS = 3, 3

    x = jax.random.normal(kx, (N, C, H, W), jnp.float32)
    params = init_params(kp, C, NUM_CLASSES, NUM_LAYERS)

    logits = age_classifier_forward(x, params, num_classes=NUM_CLASSES)
    logits = jax.block_until_ready(logits)
    assert logits.shape == (N, NUM_CLASSES)

    ref = jax.block_until_ready(_reference_forward(x, params))
    assert jnp.allclose(logits, ref, atol=1e-3, rtol=1e-3), (logits, ref)

    print("KERNEL_OK")
</pallas_src>

<mosaic_0001>
module attributes {stable_mosaic.version = 11 : i64} {
  func.func @_age_classifier_kernel(%arg0: i32, %arg1: memref<1x4x22x22xf32, #tpu.memory_space<vmem>>, %arg2: memref<432xf32, #tpu.memory_space<smem>>, %arg3: memref<12xf32, #tpu.memory_space<smem>>, %arg4: memref<4x128xf32, #tpu.memory_space<vmem>>, %arg5: memref<1x128xf32, #tpu.memory_space<vmem>>, %arg6: memref<1x1x128xf32, #tpu.memory_space<vmem>>) attributes {dimension_semantics = [#tpu.dimension_semantics<parallel>], iteration_bounds = array<i64: 2>, scalar_prefetch = 0 : i64, scratch_operands = 0 : i64, tpu.core_type = #tpu.core_type<tc>, window_params = [{transform_indices = @transform_0, window_bounds = array<i64: 1, 4, 22, 22>}, {transform_indices = @transform_1, window_bounds = array<i64: 432>}, {transform_indices = @transform_2, window_bounds = array<i64: 12>}, {pipeline_mode = #tpu.pipeline_mode<synchronous>, transform_indices = @transform_3, window_bounds = array<i64: 4, 128>}, {pipeline_mode = #tpu.pipeline_mode<synchronous>, transform_indices = @transform_4, window_bounds = array<i64: 1, 128>}, {transform_indices = @transform_5, window_bounds = array<i64: 1, 1, 128>}]} {
    %c0 = arith.constant 0 : index
    %c0_0 = arith.constant 0 : index
    %c0_1 = arith.constant 0 : index
    %c0_2 = arith.constant 0 : index
    %0 = vector.load %arg1[%c0, %c0_0, %c0_1, %c0_2] : memref<1x4x22x22xf32, #tpu.memory_space<vmem>>, vector<1x1x22x22xf32>
    %1 = vector.shape_cast %0 : vector<1x1x22x22xf32> to vector<22x22xf32>
    %c0_3 = arith.constant 0 : index
    %c1 = arith.constant 1 : index
    %c0_4 = arith.constant 0 : index
    %c0_5 = arith.constant 0 : index
    %2 = vector.load %arg1[%c0_3, %c1, %c0_4, %c0_5] : memref<1x4x22x22xf32, #tpu.memory_space<vmem>>, vector<1x1x22x22xf32>
    %3 = vector.shape_cast %2 : vector<1x1x22x22xf32> to vector<22x22xf32>
    %c0_6 = arith.constant 0 : index
    %c2 = arith.constant 2 : index
    %c0_7 = arith.constant 0 : index
    %c0_8 = arith.constant 0 : index
    %4 = vector.load %arg1[%c0_6, %c2, %c0_7, %c0_8] : memref<1x4x22x22xf32, #tpu.memory_space<vmem>>, vector<1x1x22x22xf32>
    %5 = vector.shape_cast %4 : vector<1x1x22x22xf32> to vector<22x22xf32>
    %c0_9 = arith.constant 0 : index
    %c3 = arith.constant 3 : index
    %c0_10 = arith.constant 0 : index
    %c0_11 = arith.constant 0 : index
    %6 = vector.load %arg1[%c0_9, %c3, %c0_10, %c0_11] : memref<1x4x22x22xf32, #tpu.memory_space<vmem>>, vector<1x1x22x22xf32>
    %7 = vector.shape_cast %6 : vector<1x1x22x22xf32> to vector<22x22xf32>
    %8 = vector.extract_strided_slice %1 {offsets = [0, 0], sizes = [20, 20], strides = [1, 1]} : vector<22x22xf32> to vector<20x20xf32>
    %9 = vector.extract_strided_slice %1 {offsets = [0, 1], sizes = [20, 20], strides = [1, 1]} : vector<22x22xf32> to vector<20x20xf32>
    %10 = vector.extract_strided_slice %1 {offsets = [0, 2], sizes = [20, 20], strides = [1, 1]} : vector<22x22xf32> to vector<20x20xf32>
    %11 = vector.extract_strided_slice %1 {offsets = [1, 0], sizes = [20, 20], strides = [1, 1]} : vector<22x22xf32> to vector<20x20xf32>
    %12 = vector.extract_strided_slice %1 {offsets = [1, 1], sizes = [20, 20], strides = [1, 1]} : vector<22x22xf32> to vector<20x20xf32>
    %13 = vector.extract_strided_slice %1 {offsets = [1, 2], sizes = [20, 20], strides = [1, 1]} : vector<22x22xf32> to vector<20x20xf32>
    %14 = vector.extract_strided_slice %1 {offsets = [2, 0], sizes = [20, 20], strides = [1, 1]} : vector<22x22xf32> to vector<20x20xf32>
    %15 = vector.extract_strided_slice %1 {offsets = [2, 1], sizes = [20, 20], strides = [1, 1]} : vector<22x22xf32> to vector<20x20xf32>
    %16 = vector.extract_strided_slice %1 {offsets = [2, 2], sizes = [20, 20], strides = [1, 1]} : vector<22x22xf32> to vector<20x20xf32>
    %17 = vector.extract_strided_slice %3 {offsets = [0, 0], sizes = [20, 20], strides = [1, 1]} : vector<22x22xf32> to vector<20x20xf32>
    %18 = vector.extract_strided_slice %3 {offsets = [0, 1], sizes = [20, 20], strides = [1, 1]} : vector<22x22xf32> to vector<20x20xf32>
    %19 = vector.extract_strided_slice %3 {offsets = [0, 2], sizes = [20, 20], strides = [1, 1]} : vector<22x22xf32> to vector<20x20xf32>
    %20 = vector.extract_strided_slice %3 {offsets = [1, 0], sizes = [20, 20], strides = [1, 1]} : vector<22x22xf32> to vector<20x20xf32>
    %21 = vector.extract_strided_slice %3 {offsets = [1, 1], sizes = [20, 20], strides = [1, 1]} : vector<22x22xf32> to vector<20x20xf32>
    %22 = vector.extract_strided_slice %3 {offsets = [1, 2], sizes = [20, 20], strides = [1, 1]} : vector<22x22xf32> to vector<20x20xf32>
    %23 = vector.extract_strided_slice %3 {offsets = [2, 0], sizes = [20, 20], strides = [1, 1]} : vector<22x22xf32> to vector<20x20xf32>
    %24 = vector.extract_strided_slice %3 {offsets = [2, 1], sizes = [20, 20], strides = [1, 1]} : vector<22x22xf32> to vector<20x20xf32>
    %25 = vector.extract_strided_slice %3 {offsets = [2, 2], sizes = [20, 20], strides = [1, 1]} : vector<22x22xf32> to vector<20x20xf32>
    %26 = vector.extract_strided_slice %5 {offsets = [0, 0], sizes = [20, 20], strides = [1, 1]} : vector<22x22xf32> to vector<20x20xf32>
    %27 = vector.extract_strided_slice %5 {offsets = [0, 1], sizes = [20, 20], strides = [1, 1]} : vector<22x22xf32> to vector<20x20xf32>
    %28 = vector.extract_strided_slice %5 {offsets = [0, 2], sizes = [20, 20], strides = [1, 1]} : vector<22x22xf32> to vector<20x20xf32>
    %29 = vector.extract_strided_slice %5 {offsets = [1, 0], sizes = [20, 20], strides = [1, 1]} : vector<22x22xf32> to vector<20x20xf32>
    %30 = vector.extract_strided_slice %5 {offsets = [1, 1], sizes = [20, 20], strides = [1, 1]} : vector<22x22xf32> to vector<20x20xf32>
    %31 = vector.extract_strided_slice %5 {offsets = [1, 2], sizes = [20, 20], strides = [1, 1]} : vector<22x22xf32> to vector<20x20xf32>
    %32 = vector.extract_strided_slice %5 {offsets = [2, 0], sizes = [20, 20], strides = [1, 1]} : vector<22x22xf32> to vector<20x20xf32>
    %33 = vector.extract_strided_slice %5 {offsets = [2, 1], sizes = [20, 20], strides = [1, 1]} : vector<22x22xf32> to vector<20x20xf32>
    %34 = vector.extract_strided_slice %5 {offsets = [2, 2], sizes = [20, 20], strides = [1, 1]} : vector<22x22xf32> to vector<20x20xf32>
    %35 = vector.extract_strided_slice %7 {offsets = [0, 0], sizes = [20, 20], strides = [1, 1]} : vector<22x22xf32> to vector<20x20xf32>
    %36 = vector.extract_strided_slice %7 {offsets = [0, 1], sizes = [20, 20], strides = [1, 1]} : vector<22x22xf32> to vector<20x20xf32>
    %37 = vector.extract_strided_slice %7 {offsets = [0, 2], sizes = [20, 20], strides = [1, 1]} : vector<22x22xf32> to vector<20x20xf32>
    %38 = vector.extract_strided_slice %7 {offsets = [1, 0], sizes = [20, 20], strides = [1, 1]} : vector<22x22xf32> to vector<20x20xf32>
    %39 = vector.extract_strided_slice %7 {offsets = [1, 1], sizes = [20, 20], strides = [1, 1]} : vector<22x22xf32> to vector<20x20xf32>
    %40 = vector.extract_strided_slice %7 {offsets = [1, 2], sizes = [20, 20], strides = [1, 1]} : vector<22x22xf32> to vector<20x20xf32>
    %41 = vector.extract_strided_slice %7 {offsets = [2, 0], sizes = [20, 20], strides = [1, 1]} : vector<22x22xf32> to vector<20x20xf32>
    %42 = vector.extract_strided_slice %7 {offsets = [2, 1], sizes = [20, 20], strides = [1, 1]} : vector<22x22xf32> to vector<20x20xf32>
    %43 = vector.extract_strided_slice %7 {offsets = [2, 2], sizes = [20, 20], strides = [1, 1]} : vector<22x22xf32> to vector<20x20xf32>
    %44 = tpu.iota {dimensions = array<i32: 0>} : vector<20x20xi32>
    %45 = tpu.iota {dimensions = array<i32: 1>} : vector<20x20xi32>
    %c2_i32 = arith.constant 2 : i32
    %46 = vector.broadcast %c2_i32 : i32 to vector<20x20xi32>
    %47 = arith.cmpi sge, %44, %46 : vector<20x20xi32>
    %c18_i32 = arith.constant 18 : i32
    %48 = vector.broadcast %c18_i32 : i32 to vector<20x20xi32>
    %49 = arith.cmpi slt, %44, %48 : vector<20x20xi32>
    %50 = arith.andi %47, %49 : vector<20x20xi1>
    %c2_i32_12 = arith.constant 2 : i32
    %51 = vector.broadcast %c2_i32_12 : i32 to vector<20x20xi32>
    %52 = arith.cmpi sge, %45, %51 : vector<20x20xi32>
    %53 = arith.andi %50, %52 : vector<20x20xi1>
    %c18_i32_13 = arith.constant 18 : i32
    %54 = vector.broadcast %c18_i32_13 : i32 to vector<20x20xi32>
    %55 = arith.cmpi slt, %45, %54 : vector<20x20xi32>
    %56 = arith.andi %53, %55 : vector<20x20xi1>
    %cst = arith.constant 0.000000e+00 : f32
    %57 = vector.broadcast %cst : f32 to vector<20x20xf32>
    %c0_14 = arith.constant 0 : index
    %58 = memref.load %arg2[%c0_14] : memref<432xf32, #tpu.memory_space<smem>>
    %59 = vector.broadcast %58 : f32 to vector<20x20xf32>
    %60 = arith.mulf %59, %8 : vector<20x20xf32>
    %61 = arith.addf %57, %60 : vector<20x20xf32>
    %c16 = arith.constant 16 : index
    %62 = memref.load %arg2[%c16] : memref<432xf32, #tpu.memory_space<smem>>
    %63 = vector.broadcast %62 : f32 to vector<20x20xf32>
    %64 = arith.mulf %63, %9 : vector<20x20xf32>
    %65 = arith.addf %61, %64 : vector<20x20xf32>
    %c32 = arith.constant 32 : index
    %66 = memref.load %arg2[%c32] : memref<432xf32, #tpu.memory_space<smem>>
    %67 = vector.broadcast %66 : f32 to vector<20x20xf32>
    %68 = arith.mulf %67, %10 : vector<20x20xf32>
    %69 = arith.addf %65, %68 : vector<20x20xf32>
    %c48 = arith.constant 48 : index
    %70 = memref.load %arg2[%c48] : memref<432xf32, #tpu.memory_space<smem>>
    %71 = vector.broadcast %70 : f32 to vector<20x20xf32>
    %72 = arith.mulf %71, %11 : vector<20x20xf32>
    %73 = arith.addf %69, %72 : vector<20x20xf32>
    %c64 = arith.constant 64 : index
    %74 = memref.load %arg2[%c64] : memref<432xf32, #tpu.memory_space<smem>>
    %75 = vector.broadcast %74 : f32 to vector<20x20xf32>
    %76 = arith.mulf %75, %12 : vector<20x20xf32>
    %77 = arith.addf %73, %76 : vector<20x20xf32>
    %c80 = arith.constant 80 : index
    %78 = memref.load %arg2[%c80] : memref<432xf32, #tpu.memory_space<smem>>
    %79 = vector.broadcast %78 : f32 to vector<20x20xf32>
    %80 = arith.mulf %79, %13 : vector<20x20xf32>
    %81 = arith.addf %77, %80 : vector<20x20xf32>
    %c96 = arith.constant 96 : index
    %82 = memref.load %arg2[%c96] : memref<432xf32, #tpu.memory_space<smem>>
    %83 = vector.broadcast %82 : f32 to vector<20x20xf32>
    %84 = arith.mulf %83, %14 : vector<20x20xf32>
    %85 = arith.addf %81, %84 : vector<20x20xf32>
    %c112 = arith.constant 112 : index
    %86 = memref.load %arg2[%c112] : memref<432xf32, #tpu.memory_space<smem>>
    %87 = vector.broadcast %86 : f32 to vector<20x20xf32>
    %88 = arith.mulf %87, %15 : vector<20x20xf32>
    %89 = arith.addf %85, %88 : vector<20x20xf32>
    %c128 = arith.constant 128 : index
    %90 = memref.load %arg2[%c128] : memref<432xf32, #tpu.memory_space<smem>>
    %91 = vector.broadcast %90 : f32 to vector<20x20xf32>
    %92 = arith.mulf %91, %16 : vector<20x20xf32>
    %93 = arith.addf %89, %92 : vector<20x20xf32>
    %c4 = arith.constant 4 : index
    %94 = memref.load %arg2[%c4] : memref<432xf32, #tpu.memory_space<smem>>
    %95 = vector.broadcast %94 : f32 to vector<20x20xf32>
    %96 = arith.mulf %95, %17 : vector<20x20xf32>
    %97 = arith.addf %93, %96 : vector<20x20xf32>
    %c20 = arith.constant 20 : index
    %98 = memref.load %arg2[%c20] : memref<432xf32, #tpu.memory_space<smem>>
    %99 = vector.broadcast %98 : f32 to vector<20x20xf32>
    %100 = arith.mulf %99, %18 : vector<20x20xf32>
    %101 = arith.addf %97, %100 : vector<20x20xf32>
    %c36 = arith.constant 36 : index
    %102 = memref.load %arg2[%c36] : memref<432xf32, #tpu.memory_space<smem>>
    %103 = vector.broadcast %102 : f32 to vector<20x20xf32>
    %104 = arith.mulf %103, %19 : vector<20x20xf32>
    %105 = arith.addf %101, %104 : vector<20x20xf32>
    %c52 = arith.constant 52 : index
    %106 = memref.load %arg2[%c52] : memref<432xf32, #tpu.memory_space<smem>>
    %107 = vector.broadcast %106 : f32 to vector<20x20xf32>
    %108 = arith.mulf %107, %20 : vector<20x20xf32>
    %109 = arith.addf %105, %108 : vector<20x20xf32>
    %c68 = arith.constant 68 : index
    %110 = memref.load %arg2[%c68] : memref<432xf32, #tpu.memory_space<smem>>
    %111 = vector.broadcast %110 : f32 to vector<20x20xf32>
    %112 = arith.mulf %111, %21 : vector<20x20xf32>
    %113 = arith.addf %109, %112 : vector<20x20xf32>
    %c84 = arith.constant 84 : index
    %114 = memref.load %arg2[%c84] : memref<432xf32, #tpu.memory_space<smem>>
    %115 = vector.broadcast %114 : f32 to vector<20x20xf32>
    %116 = arith.mulf %115, %22 : vector<20x20xf32>
    %117 = arith.addf %113, %116 : vector<20x20xf32>
    %c100 = arith.constant 100 : index
    %118 = memref.load %arg2[%c100] : memref<432xf32, #tpu.memory_space<smem>>
    %119 = vector.broadcast %118 : f32 to vector<20x20xf32>
    %120 = arith.mulf %119, %23 : vector<20x20xf32>
    %121 = arith.addf %117, %120 : vector<20x20xf32>
    %c116 = arith.constant 116 : index
    %122 = memref.load %arg2[%c116] : memref<432xf32, #tpu.memory_space<smem>>
    %123 = vector.broadcast %122 : f32 to vector<20x20xf32>
    %124 = arith.mulf %123, %24 : vector<20x20xf32>
    %125 = arith.addf %121, %124 : vector<20x20xf32>
    %c132 = arith.constant 132 : index
    %126 = memref.load %arg2[%c132] : memref<432xf32, #tpu.memory_space<smem>>
    %127 = vector.broadcast %126 : f32 to vector<20x20xf32>
    %128 = arith.mulf %127, %25 : vector<20x20xf32>
    %129 = arith.addf %125, %128 : vector<20x20xf32>
    %c8 = arith.constant 8 : index
    %130 = memref.load %arg2[%c8] : memref<432xf32, #tpu.memory_space<smem>>
    %131 = vector.broadcast %130 : f32 to vector<20x20xf32>
    %132 = arith.mulf %131, %26 : vector<20x20xf32>
    %133 = arith.addf %129, %132 : vector<20x20xf32>
    %c24 = arith.constant 24 : index
    %134 = memref.load %arg2[%c24] : memref<432xf32, #tpu.memory_space<smem>>
    %135 = vector.broadcast %134 : f32 to vector<20x20xf32>
    %136 = arith.mulf %135, %27 : vector<20x20xf32>
    %137 = arith.addf %133, %136 : vector<20x20xf32>
    %c40 = arith.constant 40 : index
    %138 = memref.load %arg2[%c40] : memref<432xf32, #tpu.memory_space<smem>>
    %139 = vector.broadcast %138 : f32 to vector<20x20xf32>
    %140 = arith.mulf %139, %28 : vector<20x20xf32>
    %141 = arith.addf %137, %140 : vector<20x20xf32>
    %c56 = arith.constant 56 : index
    %142 = memref.load %arg2[%c56] : memref<432xf32, #tpu.memory_space<smem>>
    %143 = vector.broadcast %142 : f32 to vector<20x20xf32>
    %144 = arith.mulf %143, %29 : vector<20x20xf32>
    %145 = arith.addf %141, %144 : vector<20x20xf32>
    %c72 = arith.constant 72 : index
    %146 = memref.load %arg2[%c72] : memref<432xf32, #tpu.memory_space<smem>>
    %147 = vector.broadcast %146 : f32 to vector<20x20xf32>
    %148 = arith.mulf %147, %30 : vector<20x20xf32>
    %149 = arith.addf %145, %148 : vector<20x20xf32>
    %c88 = arith.constant 88 : index
    %150 = memref.load %arg2[%c88] : memref<432xf32, #tpu.memory_space<smem>>
    %151 = vector.broadcast %150 : f32 to vector<20x20xf32>
    %152 = arith.mulf %151, %31 : vector<20x20xf32>
    %153 = arith.addf %149, %152 : vector<20x20xf32>
    %c104 = arith.constant 104 : index
    %154 = memref.load %arg2[%c104] : memref<432xf32, #tpu.memory_space<smem>>
    %155 = vector.broadcast %154 : f32 to vector<20x20xf32>
    %156 = arith.mulf %155, %32 : vector<20x20xf32>
    %157 = arith.addf %153, %156 : vector<20x20xf32>
    %c120 = arith.constant 120 : index
    %158 = memref.load %arg2[%c120] : memref<432xf32, #tpu.memory_space<smem>>
    %159 = vector.broadcast %158 : f32 to vector<20x20xf32>
    %160 = arith.mulf %159, %33 : vector<20x20xf32>
    %161 = arith.addf %157, %160 : vector<20x20xf32>
    %c136 = arith.constant 136 : index
    %162 = memref.load %arg2[%c136] : memref<432xf32, #tpu.memory_space<smem>>
    %163 = vector.broadcast %162 : f32 to vector<20x20xf32>
    %164 = arith.mulf %163, %34 : vector<20x20xf32>
    %165 = arith.addf %161, %164 : vector<20x20xf32>
    %c12 = arith.constant 12 : index
    %166 = memref.load %arg2[%c12] : memref<432xf32, #tpu.memory_space<smem>>
    %167 = vector.broadcast %166 : f32 to vector<20x20xf32>
    %168 = arith.mulf %167, %35 : vector<20x20xf32>
    %169 = arith.addf %165, %168 : vector<20x20xf32>
    %c28 = arith.constant 28 : index
    %170 = memref.load %arg2[%c28] : memref<432xf32, #tpu.memory_space<smem>>
    %171 = vector.broadcast %170 : f32 to vector<20x20xf32>
    %172 = arith.mulf %171, %36 : vector<20x20xf32>
    %173 = arith.addf %169, %172 : vector<20x20xf32>
    %c44 = arith.constant 44 : index
    %174 = memref.load %arg2[%c44] : memref<432xf32, #tpu.memory_space<smem>>
    %175 = vector.broadcast %174 : f32 to vector<20x20xf32>
    %176 = arith.mulf %175, %37 : vector<20x20xf32>
    %177 = arith.addf %173, %176 : vector<20x20xf32>
    %c60 = arith.constant 60 : index
    %178 = memref.load %arg2[%c60] : memref<432xf32, #tpu.memory_space<smem>>
    %179 = vector.broadcast %178 : f32 to vector<20x20xf32>
    %180 = arith.mulf %179, %38 : vector<20x20xf32>
    %181 = arith.addf %177, %180 : vector<20x20xf32>
    %c76 = arith.constant 76 : index
    %182 = memref.load %arg2[%c76] : memref<432xf32, #tpu.memory_space<smem>>
    %183 = vector.broadcast %182 : f32 to vector<20x20xf32>
    %184 = arith.mulf %183, %39 : vector<20x20xf32>
    %185 = arith.addf %181, %184 : vector<20x20xf32>
    %c92 = arith.constant 92 : index
    %186 = memref.load %arg2[%c92] : memref<432xf32, #tpu.memory_space<smem>>
    %187 = vector.broadcast %186 : f32 to vector<20x20xf32>
    %188 = arith.mulf %187, %40 : vector<20x20xf32>
    %189 = arith.addf %185, %188 : vector<20x20xf32>
    %c108 = arith.constant 108 : index
    %190 = memref.load %arg2[%c108] : memref<432xf32, #tpu.memory_space<smem>>
    %191 = vector.broadcast %190 : f32 to vector<20x20xf32>
    %192 = arith.mulf %191, %41 : vector<20x20xf32>
    %193 = arith.addf %189, %192 : vector<20x20xf32>
    %c124 = arith.constant 124 : index
    %194 = memref.load %arg2[%c124] : memref<432xf32, #tpu.memory_space<smem>>
    %195 = vector.broadcast %194 : f32 to vector<20x20xf32>
    %196 = arith.mulf %195, %42 : vector<20x20xf32>
    %197 = arith.addf %193, %196 : vector<20x20xf32>
    %c140 = arith.constant 140 : index
    %198 = memref.load %arg2[%c140] : memref<432xf32, #tpu.memory_space<smem>>
    %199 = vector.broadcast %198 : f32 to vector<20x20xf32>
    %200 = arith.mulf %199, %43 : vector<20x20xf32>
    %201 = arith.addf %197, %200 : vector<20x20xf32>
    %c0_15 = arith.constant 0 : index
    %202 = memref.load %arg3[%c0_15] : memref<12xf32, #tpu.memory_space<smem>>
    %203 = vector.broadcast %202 : f32 to vector<20x20xf32>
    %204 = arith.addf %201, %203 : vector<20x20xf32>
    %cst_16 = arith.constant 0.000000e+00 : f32
    %205 = vector.broadcast %cst_16 : f32 to vector<20x20xf32>
    %206 = arith.maximumf %204, %205 : vector<20x20xf32>
    %cst_17 = arith.constant 0.000000e+00 : f32
    %207 = vector.broadcast %cst_17 : f32 to vector<20x20xf32>
    %208 = arith.select %56, %206, %207 : vector<20x20xi1>, vector<20x20xf32>
    %cst_18 = arith.constant 0.000000e+00 : f32
    %209 = vector.broadcast %cst_18 : f32 to vector<20x20xf32>
    %c1_19 = arith.constant 1 : index
    %210 = memref.load %arg2[%c1_19] : memref<432xf32, #tpu.memory_space<smem>>
    %211 = vector.broadcast %210 : f32 to vector<20x20xf32>
    %212 = arith.mulf %211, %8 : vector<20x20xf32>
    %213 = arith.addf %209, %212 : vector<20x20xf32>
    %c17 = arith.constant 17 : index
    %214 = memref.load %arg2[%c17] : memref<432xf32, #tpu.memory_space<smem>>
    %215 = vector.broadcast %214 : f32 to vector<20x20xf32>
    %216 = arith.mulf %215, %9 : vector<20x20xf32>
    %217 = arith.addf %213, %216 : vector<20x20xf32>
    %c33 = arith.constant 33 : index
    %218 = memref.load %arg2[%c33] : memref<432xf32, #tpu.memory_space<smem>>
    %219 = vector.broadcast %218 : f32 to vector<20x20xf32>
    %220 = arith.mulf %219, %10 : vector<20x20xf32>
    %221 = arith.addf %217, %220 : vector<20x20xf32>
    %c49 = arith.constant 49 : index
    %222 = memref.load %arg2[%c49] : memref<432xf32, #tpu.memory_space<smem>>
    %223 = vector.broadcast %222 : f32 to vector<20x20xf32>
    %224 = arith.mulf %223, %11 : vector<20x20xf32>
    %225 = arith.addf %221, %224 : vector<20x20xf32>
    %c65 = arith.constant 65 : index
    %226 = memref.load %arg2[%c65] : memref<432xf32, #tpu.memory_space<smem>>
    %227 = vector.broadcast %226 : f32 to vector<20x20xf32>
    %228 = arith.mulf %227, %12 : vector<20x20xf32>
    %229 = arith.addf %225, %228 : vector<20x20xf32>
    %c81 = arith.constant 81 : index
    %230 = memref.load %arg2[%c81] : memref<432xf32, #tpu.memory_space<smem>>
    %231 = vector.broadcast %230 : f32 to vector<20x20xf32>
    %232 = arith.mulf %231, %13 : vector<20x20xf32>
    %233 = arith.addf %229, %232 : vector<20x20xf32>
    %c97 = arith.constant 97 : index
    %234 = memref.load %arg2[%c97] : memref<432xf32, #tpu.memory_space<smem>>
    %235 = vector.broadcast %234 : f32 to vector<20x20xf32>
    %236 = arith.mulf %235, %14 : vector<20x20xf32>
    %237 = arith.addf %233, %236 : vector<20x20xf32>
    %c113 = arith.constant 113 : index
    %238 = memref.load %arg2[%c113] : memref<432xf32, #tpu.memory_space<smem>>
    %239 = vector.broadcast %238 : f32 to vector<20x20xf32>
    %240 = arith.mulf %239, %15 : vector<20x20xf32>
    %241 = arith.addf %237, %240 : vector<20x20xf32>
    %c129 = arith.constant 129 : index
    %242 = memref.load %arg2[%c129] : memref<432xf32, #tpu.memory_space<smem>>
    %243 = vector.broadcast %242 : f32 to vector<20x20xf32>
    %244 = arith.mulf %243, %16 : vector<20x20xf32>
    %245 = arith.addf %241, %244 : vector<20x20xf32>
    %c5 = arith.constant 5 : index
    %246 = memref.load %arg2[%c5] : memref<432xf32, #tpu.memory_space<smem>>
    %247 = vector.broadcast %246 : f32 to vector<20x20xf32>
    %248 = arith.mulf %247, %17 : vector<20x20xf32>
    %249 = arith.addf %245, %248 : vector<20x20xf32>
    %c21 = arith.constant 21 : index
    %250 = memref.load %arg2[%c21] : memref<432xf32, #tpu.memory_space<smem>>
    %251 = vector.broadcast %250 : f32 to vector<20x20xf32>
    %252 = arith.mulf %251, %18 : vector<20x20xf32>
    %253 = arith.addf %249, %252 : vector<20x20xf32>
    %c37 = arith.constant 37 : index
    %254 = memref.load %arg2[%c37] : memref<432xf32, #tpu.memory_space<smem>>
    %255 = vector.broadcast %254 : f32 to vector<20x20xf32>
    %256 = arith.mulf %255, %19 : vector<20x20xf32>
    %257 = arith.addf %253, %256 : vector<20x20xf32>
    %c53 = arith.constant 53 : index
    %258 = memref.load %arg2[%c53] : memref<432xf32, #tpu.memory_space<smem>>
    %259 = vector.broadcast %258 : f32 to vector<20x20xf32>
    %260 = arith.mulf %259, %20 : vector<20x20xf32>
    %261 = arith.addf %257, %260 : vector<20x20xf32>
    %c69 = arith.constant 69 : index
    %262 = memref.load %arg2[%c69] : memref<432xf32, #tpu.memory_space<smem>>
    %263 = vector.broadcast %262 : f32 to vector<20x20xf32>
    %264 = arith.mulf %263, %21 : vector<20x20xf32>
    %265 = arith.addf %261, %264 : vector<20x20xf32>
    %c85 = arith.constant 85 : index
    %266 = memref.load %arg2[%c85] : memref<432xf32, #tpu.memory_space<smem>>
    %267 = vector.broadcast %266 : f32 to vector<20x20xf32>
    %268 = arith.mulf %267, %22 : vector<20x20xf32>
    %269 = arith.addf %265, %268 : vector<20x20xf32>
    %c101 = arith.constant 101 : index
    %270 = memref.load %arg2[%c101] : memref<432xf32, #tpu.memory_space<smem>>
    %271 = vector.broadcast %270 : f32 to vector<20x20xf32>
    %272 = arith.mulf %271, %23 : vector<20x20xf32>
    %273 = arith.addf %269, %272 : vector<20x20xf32>
    %c117 = arith.constant 117 : index
    %274 = memref.load %arg2[%c117] : memref<432xf32, #tpu.memory_space<smem>>
    %275 = vector.broadcast %274 : f32 to vector<20x20xf32>
    %276 = arith.mulf %275, %24 : vector<20x20xf32>
    %277 = arith.addf %273, %276 : vector<20x20xf32>
    %c133 = arith.constant 133 : index
    %278 = memref.load %arg2[%c133] : memref<432xf32, #tpu.memory_space<smem>>
    %279 = vector.broadcast %278 : f32 to vector<20x20xf32>
    %280 = arith.mulf %279, %25 : vector<20x20xf32>
    %281 = arith.addf %277, %280 : vector<20x20xf32>
    %c9 = arith.constant 9 : index
    %282 = memref.load %arg2[%c9] : memref<432xf32, #tpu.memory_space<smem>>
    %283 = vector.broadcast %282 : f32 to vector<20x20xf32>
    %284 = arith.mulf %283, %26 : vector<20x20xf32>
    %285 = arith.addf %281, %284 : vector<20x20xf32>
    %c25 = arith.constant 25 : index
    %286 = memref.load %arg2[%c25] : memref<432xf32, #tpu.memory_space<smem>>
    %287 = vector.broadcast %286 : f32 to vector<20x20xf32>
    %288 = arith.mulf %287, %27 : vector<20x20xf32>
    %289 = arith.addf %285, %288 : vector<20x20xf32>
    %c41 = arith.constant 41 : index
    %290 = memref.load %arg2[%c41] : memref<432xf32, #tpu.memory_space<smem>>
    %291 = vector.broadcast %290 : f32 to vector<20x20xf32>
    %292 = arith.mulf %291, %28 : vector<20x20xf32>
    %293 = arith.addf %289, %292 : vector<20x20xf32>
    %c57 = arith.constant 57 : index
    %294 = memref.load %arg2[%c57] : memref<432xf32, #tpu.memory_space<smem>>
    %295 = vector.broadcast %294 : f32 to vector<20x20xf32>
    %296 = arith.mulf %295, %29 : vector<20x20xf32>
    %297 = arith.addf %293, %296 : vector<20x20xf32>
    %c73 = arith.constant 73 : index
    %298 = memref.load %arg2[%c73] : memref<432xf32, #tpu.memory_space<smem>>
    %299 = vector.broadcast %298 : f32 to vector<20x20xf32>
    %300 = arith.mulf %299, %30 : vector<20x20xf32>
    %301 = arith.addf %297, %300 : vector<20x20xf32>
    %c89 = arith.constant 89 : index
    %302 = memref.load %arg2[%c89] : memref<432xf32, #tpu.memory_space<smem>>
    %303 = vector.broadcast %302 : f32 to vector<20x20xf32>
    %304 = arith.mulf %303, %31 : vector<20x20xf32>
    %305 = arith.addf %301, %304 : vector<20x20xf32>
    %c105 = arith.constant 105 : index
    %306 = memref.load %arg2[%c105] : memref<432xf32, #tpu.memory_space<smem>>
    %307 = vector.broadcast %306 : f32 to vector<20x20xf32>
    %308 = arith.mulf %307, %32 : vector<20x20xf32>
    %309 = arith.addf %305, %308 : vector<20x20xf32>
    %c121 = arith.constant 121 : index
    %310 = memref.load %arg2[%c121] : memref<432xf32, #tpu.memory_space<smem>>
    %311 = vector.broadcast %310 : f32 to vector<20x20xf32>
    %312 = arith.mulf %311, %33 : vector<20x20xf32>
    %313 = arith.addf %309, %312 : vector<20x20xf32>
    %c137 = arith.constant 137 : index
    %314 = memref.load %arg2[%c137] : memref<432xf32, #tpu.memory_space<smem>>
    %315 = vector.broadcast %314 : f32 to vector<20x20xf32>
    %316 = arith.mulf %315, %34 : vector<20x20xf32>
    %317 = arith.addf %313, %316 : vector<20x20xf32>
    %c13 = arith.constant 13 : index
    %318 = memref.load %arg2[%c13] : memref<432xf32, #tpu.memory_space<smem>>
    %319 = vector.broadcast %318 : f32 to vector<20x20xf32>
    %320 = arith.mulf %319, %35 : vector<20x20xf32>
    %321 = arith.addf %317, %320 : vector<20x20xf32>
    %c29 = arith.constant 29 : index
    %322 = memref.load %arg2[%c29] : memref<432xf32, #tpu.memory_space<smem>>
    %323 = vector.broadcast %322 : f32 to vector<20x20xf32>
    %324 = arith.mulf %323, %36 : vector<20x20xf32>
    %325 = arith.addf %321, %324 : vector<20x20xf32>
    %c45 = arith.constant 45 : index
    %326 = memref.load %arg2[%c45] : memref<432xf32, #tpu.memory_space<smem>>
    %327 = vector.broadcast %326 : f32 to vector<20x20xf32>
    %328 = arith.mulf %327, %37 : vector<20x20xf32>
    %329 = arith.addf %325, %328 : vector<20x20xf32>
    %c61 = arith.constant 61 : index
    %330 = memref.load %arg2[%c61] : memref<432xf32, #tpu.memory_space<smem>>
    %331 = vector.broadcast %330 : f32 to vector<20x20xf32>
    %332 = arith.mulf %331, %38 : vector<20x20xf32>
    %333 = arith.addf %329, %332 : vector<20x20xf32>
    %c77 = arith.constant 77 : index
    %334 = memref.load %arg2[%c77] : memref<432xf32, #tpu.memory_space<smem>>
    %335 = vector.broadcast %334 : f32 to vector<20x20xf32>
    %336 = arith.mulf %335, %39 : vector<20x20xf32>
    %337 = arith.addf %333, %336 : vector<20x20xf32>
    %c93 = arith.constant 93 : index
    %338 = memref.load %arg2[%c93] : memref<432xf32, #tpu.memory_space<smem>>
    %339 = vector.broadcast %338 : f32 to vector<20x20xf32>
    %340 = arith.mulf %339, %40 : vector<20x20xf32>
    %341 = arith.addf %337, %340 : vector<20x20xf32>
    %c109 = arith.constant 109 : index
    %342 = memref.load %arg2[%c109] : memref<432xf32, #tpu.memory_space<smem>>
    %343 = vector.broadcast %342 : f32 to vector<20x20xf32>
    %344 = arith.mulf %343, %41 : vector<20x20xf32>
    %345 = arith.addf %341, %344 : vector<20x20xf32>
    %c125 = arith.constant 125 : index
    %346 = memref.load %arg2[%c125] : memref<432xf32, #tpu.memory_space<smem>>
    %347 = vector.broadcast %346 : f32 to vector<20x20xf32>
    %348 = arith.mulf %347, %42 : vector<20x20xf32>
    %349 = arith.addf %345, %348 : vector<20x20xf32>
    %c141 = arith.constant 141 : index
    %350 = memref.load %arg2[%c141] : memref<432xf32, #tpu.memory_space<smem>>
    %351 = vector.broadcast %350 : f32 to vector<20x20xf32>
    %352 = arith.mulf %351, %43 : vector<20x20xf32>
    %353 = arith.addf %349, %352 : vector<20x20xf32>
    %c1_20 = arith.constant 1 : index
    %354 = memref.load %arg3[%c1_20] : memref<12xf32, #tpu.memory_space<smem>>
    %355 = vector.broadcast %354 : f32 to vector<20x20xf32>
    %356 = arith.addf %353, %355 : vector<20x20xf32>
    %cst_21 = arith.constant 0.000000e+00 : f32
    %357 = vector.broadcast %cst_21 : f32 to vector<20x20xf32>
    %358 = arith.maximumf %356, %357 : vector<20x20xf32>
    %cst_22 = arith.constant 0.000000e+00 : f32
    %359 = vector.broadcast %cst_22 : f32 to vector<20x20xf32>
    %360 = arith.select %56, %358, %359 : vector<20x20xi1>, vector<20x20xf32>
    %cst_23 = arith.constant 0.000000e+00 : f32
    %361 = vector.broadcast %cst_23 : f32 to vector<20x20xf32>
    %c2_24 = arith.constant 2 : index
    %362 = memref.load %arg2[%c2_24] : memref<432xf32, #tpu.memory_space<smem>>
    %363 = vector.broadcast %362 : f32 to vector<20x20xf32>
    %364 = arith.mulf %363, %8 : vector<20x20xf32>
    %365 = arith.addf %361, %364 : vector<20x20xf32>
    %c18 = arith.constant 18 : index
    %366 = memref.load %arg2[%c18] : memref<432xf32, #tpu.memory_space<smem>>
    %367 = vector.broadcast %366 : f32 to vector<20x20xf32>
    %368 = arith.mulf %367, %9 : vector<20x20xf32>
    %369 = arith.addf %365, %368 : vector<20x20xf32>
    %c34 = arith.constant 34 : index
    %370 = memref.load %arg2[%c34] : memref<432xf32, #tpu.memory_space<smem>>
    %371 = vector.broadcast %370 : f32 to vector<20x20xf32>
    %372 = arith.mulf %371, %10 : vector<20x20xf32>
    %373 = arith.addf %369, %372 : vector<20x20xf32>
    %c50 = arith.constant 50 : index
    %374 = memref.load %arg2[%c50] : memref<432xf32, #tpu.memory_space<smem>>
    %375 = vector.broadcast %374 : f32 to vector<20x20xf32>
    %376 = arith.mulf %375, %11 : vector<20x20xf32>
    %377 = arith.addf %373, %376 : vector<20x20xf32>
    %c66 = arith.constant 66 : index
    %378 = memref.load %arg2[%c66] : memref<432xf32, #tpu.memory_space<smem>>
    %379 = vector.broadcast %378 : f32 to vector<20x20xf32>
    %380 = arith.mulf %379, %12 : vector<20x20xf32>
    %381 = arith.addf %377, %380 : vector<20x20xf32>
    %c82 = arith.constant 82 : index
    %382 = memref.load %arg2[%c82] : memref<432xf32, #tpu.memory_space<smem>>
    %383 = vector.broadcast %382 : f32 to vector<20x20xf32>
    %384 = arith.mulf %383, %13 : vector<20x20xf32>
    %385 = arith.addf %381, %384 : vector<20x20xf32>
    %c98 = arith.constant 98 : index
    %386 = memref.load %arg2[%c98] : memref<432xf32, #tpu.memory_space<smem>>
    %387 = vector.broadcast %386 : f32 to vector<20x20xf32>
    %388 = arith.mulf %387, %14 : vector<20x20xf32>
    %389 = arith.addf %385, %388 : vector<20x20xf32>
    %c114 = arith.constant 114 : index
    %390 = memref.load %arg2[%c114] : memref<432xf32, #tpu.memory_space<smem>>
    %391 = vector.broadcast %390 : f32 to vector<20x20xf32>
    %392 = arith.mulf %391, %15 : vector<20x20xf32>
    %393 = arith.addf %389, %392 : vector<20x20xf32>
    %c130 = arith.constant 130 : index
    %394 = memref.load %arg2[%c130] : memref<432xf32, #tpu.memory_space<smem>>
    %395 = vector.broadcast %394 : f32 to vector<20x20xf32>
    %396 = arith.mulf %395, %16 : vector<20x20xf32>
    %397 = arith.addf %393, %396 : vector<20x20xf32>
    %c6 = arith.constant 6 : index
    %398 = memref.load %arg2[%c6] : memref<432xf32, #tpu.memory_space<smem>>
    %399 = vector.broadcast %398 : f32 to vector<20x20xf32>
    %400 = arith.mulf %399, %17 : vector<20x20xf32>
    %401 = arith.addf %397, %400 : vector<20x20xf32>
    %c22 = arith.constant 22 : index
    %402 = memref.load %arg2[%c22] : memref<432xf32, #tpu.memory_space<smem>>
    %403 = vector.broadcast %402 : f32 to vector<20x20xf32>
    %404 = arith.mulf %403, %18 : vector<20x20xf32>
    %405 = arith.addf %401, %404 : vector<20x20xf32>
    %c38 = arith.constant 38 : index
    %406 = memref.load %arg2[%c38] : memref<432xf32, #tpu.memory_space<smem>>
    %407 = vector.broadcast %406 : f32 to vector<20x20xf32>
    %408 = arith.mulf %407, %19 : vector<20x20xf32>
    %409 = arith.addf %405, %408 : vector<20x20xf32>
    %c54 = arith.constant 54 : index
    %410 = memref.load %arg2[%c54] : memref<432xf32, #tpu.memory_space<smem>>
    %411 = vector.broadcast %410 : f32 to vector<20x20xf32>
    %412 = arith.mulf %411, %20 : vector<20x20xf32>
    %413 = arith.addf %409, %412 : vector<20x20xf32>
    %c70 = arith.constant 70 : index
    %414 = memref.load %arg2[%c70] : memref<432xf32, #tpu.memory_space<smem>>
    %415 = vector.broadcast %414 : f32 to vector<20x20xf32>
    %416 = arith.mulf %415, %21 : vector<20x20xf32>
    %417 = arith.addf %413, %416 : vector<20x20xf32>
    %c86 = arith.constant 86 : index
    %418 = memref.load %arg2[%c86] : memref<432xf32, #tpu.memory_space<smem>>
    %419 = vector.broadcast %418 : f32 to vector<20x20xf32>
    %420 = arith.mulf %419, %22 : vector<20x20xf32>
    %421 = arith.addf %417, %420 : vector<20x20xf32>
    %c102 = arith.constant 102 : index
    %422 = memref.load %arg2[%c102] : memref<432xf32, #tpu.memory_space<smem>>
    %423 = vector.broadcast %422 : f32 to vector<20x20xf32>
    %424 = arith.mulf %423, %23 : vector<20x20xf32>
    %425 = arith.addf %421, %424 : vector<20x20xf32>
    %c118 = arith.constant 118 : index
    %426 = memref.load %arg2[%c118] : memref<432xf32, #tpu.memory_space<smem>>
    %427 = vector.broadcast %426 : f32 to vector<20x20xf32>
    %428 = arith.mulf %427, %24 : vector<20x20xf32>
    %429 = arith.addf %425, %428 : vector<20x20xf32>
    %c134 = arith.constant 134 : index
    %430 = memref.load %arg2[%c134] : memref<432xf32, #tpu.memory_space<smem>>
    %431 = vector.broadcast %430 : f32 to vector<20x20xf32>
    %432 = arith.mulf %431, %25 : vector<20x20xf32>
    %433 = arith.addf %429, %432 : vector<20x20xf32>
    %c10 = arith.constant 10 : index
    %434 = memref.load %arg2[%c10] : memref<432xf32, #tpu.memory_space<smem>>
    %435 = vector.broadcast %434 : f32 to vector<20x20xf32>
    %436 = arith.mulf %435, %26 : vector<20x20xf32>
    %437 = arith.addf %433, %436 : vector<20x20xf32>
    %c26 = arith.constant 26 : index
    %438 = memref.load %arg2[%c26] : memref<432xf32, #tpu.memory_space<smem>>
    %439 = vector.broadcast %438 : f32 to vector<20x20xf32>
    %440 = arith.mulf %439, %27 : vector<20x20xf32>
    %441 = arith.addf %437, %440 : vector<20x20xf32>
    %c42 = arith.constant 42 : index
    %442 = memref.load %arg2[%c42] : memref<432xf32, #tpu.memory_space<smem>>
    %443 = vector.broadcast %442 : f32 to vector<20x20xf32>
    %444 = arith.mulf %443, %28 : vector<20x20xf32>
    %445 = arith.addf %441, %444 : vector<20x20xf32>
    %c58 = arith.constant 58 : index
    %446 = memref.load %arg2[%c58] : memref<432xf32, #tpu.memory_space<smem>>
    %447 = vector.broadcast %446 : f32 to vector<20x20xf32>
    %448 = arith.mulf %447, %29 : vector<20x20xf32>
    %449 = arith.addf %445, %448 : vector<20x20xf32>
    %c74 = arith.constant 74 : index
    %450 = memref.load %arg2[%c74] : memref<432xf32, #tpu.memory_space<smem>>
    %451 = vector.broadcast %450 : f32 to vector<20x20xf32>
    %452 = arith.mulf %451, %30 : vector<20x20xf32>
    %453 = arith.addf %449, %452 : vector<20x20xf32>
    %c90 = arith.constant 90 : index
    %454 = memref.load %arg2[%c90] : memref<432xf32, #tpu.memory_space<smem>>
    %455 = vector.broadcast %454 : f32 to vector<20x20xf32>
    %456 = arith.mulf %455, %31 : vector<20x20xf32>
    %457 = arith.addf %453, %456 : vector<20x20xf32>
    %c106 = arith.constant 106 : index
    %458 = memref.load %arg2[%c106] : memref<432xf32, #tpu.memory_space<smem>>
    %459 = vector.broadcast %458 : f32 to vector<20x20xf32>
    %460 = arith.mulf %459, %32 : vector<20x20xf32>
    %461 = arith.addf %457, %460 : vector<20x20xf32>
    %c122 = arith.constant 122 : index
    %462 = memref.load %arg2[%c122] : memref<432xf32, #tpu.memory_space<smem>>
    %463 = vector.broadcast %462 : f32 to vector<20x20xf32>
    %464 = arith.mulf %463, %33 : vector<20x20xf32>
    %465 = arith.addf %461, %464 : vector<20x20xf32>
    %c138 = arith.constant 138 : index
    %466 = memref.load %arg2[%c138] : memref<432xf32, #tpu.memory_space<smem>>
    %467 = vector.broadcast %466 : f32 to vector<20x20xf32>
    %468 = arith.mulf %467, %34 : vector<20x20xf32>
    %469 = arith.addf %465, %468 : vector<20x20xf32>
    %c14 = arith.constant 14 : index
    %470 = memref.load %arg2[%c14] : memref<432xf32, #tpu.memory_space<smem>>
    %471 = vector.broadcast %470 : f32 to vector<20x20xf32>
    %472 = arith.mulf %471, %35 : vector<20x20xf32>
    %473 = arith.addf %469, %472 : vector<20x20xf32>
    %c30 = arith.constant 30 : index
    %474 = memref.load %arg2[%c30] : memref<432xf32, #tpu.memory_space<smem>>
    %475 = vector.broadcast %474 : f32 to vector<20x20xf32>
    %476 = arith.mulf %475, %36 : vector<20x20xf32>
    %477 = arith.addf %473, %476 : vector<20x20xf32>
    %c46 = arith.constant 46 : index
    %478 = memref.load %arg2[%c46] : memref<432xf32, #tpu.memory_space<smem>>
    %479 = vector.broadcast %478 : f32 to vector<20x20xf32>
    %480 = arith.mulf %479, %37 : vector<20x20xf32>
    %481 = arith.addf %477, %480 : vector<20x20xf32>
    %c62 = arith.constant 62 : index
    %482 = memref.load %arg2[%c62] : memref<432xf32, #tpu.memory_space<smem>>
    %483 = vector.broadcast %482 : f32 to vector<20x20xf32>
    %484 = arith.mulf %483, %38 : vector<20x20xf32>
    %485 = arith.addf %481, %484 : vector<20x20xf32>
    %c78 = arith.constant 78 : index
    %486 = memref.load %arg2[%c78] : memref<432xf32, #tpu.memory_space<smem>>
    %487 = vector.broadcast %486 : f32 to vector<20x20xf32>
    %488 = arith.mulf %487, %39 : vector<20x20xf32>
    %489 = arith.addf %485, %488 : vector<20x20xf32>
    %c94 = arith.constant 94 : index
    %490 = memref.load %arg2[%c94] : memref<432xf32, #tpu.memory_space<smem>>
    %491 = vector.broadcast %490 : f32 to vector<20x20xf32>
    %492 = arith.mulf %491, %40 : vector<20x20xf32>
    %493 = arith.addf %489, %492 : vector<20x20xf32>
    %c110 = arith.constant 110 : index
    %494 = memref.load %arg2[%c110] : memref<432xf32, #tpu.memory_space<smem>>
    %495 = vector.broadcast %494 : f32 to vector<20x20xf32>
    %496 = arith.mulf %495, %41 : vector<20x20xf32>
    %497 = arith.addf %493, %496 : vector<20x20xf32>
    %c126 = arith.constant 126 : index
    %498 = memref.load %arg2[%c126] : memref<432xf32, #tpu.memory_space<smem>>
    %499 = vector.broadcast %498 : f32 to vector<20x20xf32>
    %500 = arith.mulf %499, %42 : vector<20x20xf32>
    %501 = arith.addf %497, %500 : vector<20x20xf32>
    %c142 = arith.constant 142 : index
    %502 = memref.load %arg2[%c142] : memref<432xf32, #tpu.memory_space<smem>>
    %503 = vector.broadcast %502 : f32 to vector<20x20xf32>
    %504 = arith.mulf %503, %43 : vector<20x20xf32>
    %505 = arith.addf %501, %504 : vector<20x20xf32>
    %c2_25 = arith.constant 2 : index
    %506 = memref.load %arg3[%c2_25] : memref<12xf32, #tpu.memory_space<smem>>
    %507 = vector.broadcast %506 : f32 to vector<20x20xf32>
    %508 = arith.addf %505, %507 : vector<20x20xf32>
    %cst_26 = arith.constant 0.000000e+00 : f32
    %509 = vector.broadcast %cst_26 : f32 to vector<20x20xf32>
    %510 = arith.maximumf %508, %509 : vector<20x20xf32>
    %cst_27 = arith.constant 0.000000e+00 : f32
    %511 = vector.broadcast %cst_27 : f32 to vector<20x20xf32>
    %512 = arith.select %56, %510, %511 : vector<20x20xi1>, vector<20x20xf32>
    %cst_28 = arith.constant 0.000000e+00 : f32
    %513 = vector.broadcast %cst_28 : f32 to vector<20x20xf32>
    %c3_29 = arith.constant 3 : index
    %514 = memref.load %arg2[%c3_29] : memref<432xf32, #tpu.memory_space<smem>>
    %515 = vector.broadcast %514 : f32 to vector<20x20xf32>
    %516 = arith.mulf %515, %8 : vector<20x20xf32>
    %517 = arith.addf %513, %516 : vector<20x20xf32>
    %c19 = arith.constant 19 : index
    %518 = memref.load %arg2[%c19] : memref<432xf32, #tpu.memory_space<smem>>
    %519 = vector.broadcast %518 : f32 to vector<20x20xf32>
    %520 = arith.mulf %519, %9 : vector<20x20xf32>
    %521 = arith.addf %517, %520 : vector<20x20xf32>
    %c35 = arith.constant 35 : index
    %522 = memref.load %arg2[%c35] : memref<432xf32, #tpu.memory_space<smem>>
    %523 = vector.broadcast %522 : f32 to vector<20x20xf32>
    %524 = arith.mulf %523, %10 : vector<20x20xf32>
    %525 = arith.addf %521, %524 : vector<20x20xf32>
    %c51 = arith.constant 51 : index
    %526 = memref.load %arg2[%c51] : memref<432xf32, #tpu.memory_space<smem>>
    %527 = vector.broadcast %526 : f32 to vector<20x20xf32>
    %528 = arith.mulf %527, %11 : vector<20x20xf32>
    %529 = arith.addf %525, %528 : vector<20x20xf32>
    %c67 = arith.constant 67 : index
    %530 = memref.load %arg2[%c67] : memref<432xf32, #tpu.memory_space<smem>>
    %531 = vector.broadcast %530 : f32 to vector<20x20xf32>
    %532 = arith.mulf %531, %12 : vector<20x20xf32>
    %533 = arith.addf %529, %532 : vector<20x20xf32>
    %c83 = arith.constant 83 : index
    %534 = memref.load %arg2[%c83] : memref<432xf32, #tpu.memory_space<smem>>
    %535 = vector.broadcast %534 : f32 to vector<20x20xf32>
    %536 = arith.mulf %535, %13 : vector<20x20xf32>
    %537 = arith.addf %533, %536 : vector<20x20xf32>
    %c99 = arith.constant 99 : index
    %538 = memref.load %arg2[%c99] : memref<432xf32, #tpu.memory_space<smem>>
    %539 = vector.broadcast %538 : f32 to vector<20x20xf32>
    %540 = arith.mulf %539, %14 : vector<20x20xf32>
    %541 = arith.addf %537, %540 : vector<20x20xf32>
    %c115 = arith.constant 115 : index
    %542 = memref.load %arg2[%c115] : memref<432xf32, #tpu.memory_space<smem>>
    %543 = vector.broadcast %542 : f32 to vector<20x20xf32>
    %544 = arith.mulf %543, %15 : vector<20x20xf32>
    %545 = arith.addf %541, %544 : vector<20x20xf32>
    %c131 = arith.constant 131 : index
    %546 = memref.load %arg2[%c131] : memref<432xf32, #tpu.memory_space<smem>>
    %547 = vector.broadcast %546 : f32 to vector<20x20xf32>
    %548 = arith.mulf %547, %16 : vector<20x20xf32>
    %549 = arith.addf %545, %548 : vector<20x20xf32>
    %c7 = arith.constant 7 : index
    %550 = memref.load %arg2[%c7] : memref<432xf32, #tpu.memory_space<smem>>
    %551 = vector.broadcast %550 : f32 to vector<20x20xf32>
    %552 = arith.mulf %551, %17 : vector<20x20xf32>
    %553 = arith.addf %549, %552 : vector<20x20xf32>
    %c23 = arith.constant 23 : index
    %554 = memref.load %arg2[%c23] : memref<432xf32, #tpu.memory_space<smem>>
    %555 = vector.broadcast %554 : f32 to vector<20x20xf32>
    %556 = arith.mulf %555, %18 : vector<20x20xf32>
    %557 = arith.addf %553, %556 : vector<20x20xf32>
    %c39 = arith.constant 39 : index
    %558 = memref.load %arg2[%c39] : memref<432xf32, #tpu.memory_space<smem>>
    %559 = vector.broadcast %558 : f32 to vector<20x20xf32>
    %560 = arith.mulf %559, %19 : vector<20x20xf32>
    %561 = arith.addf %557, %560 : vector<20x20xf32>
    %c55 = arith.constant 55 : index
    %562 = memref.load %arg2[%c55] : memref<432xf32, #tpu.memory_space<smem>>
    %563 = vector.broadcast %562 : f32 to vector<20x20xf32>
    %564 = arith.mulf %563, %20 : vector<20x20xf32>
    %565 = arith.addf %561, %564 : vector<20x20xf32>
    %c71 = arith.constant 71 : index
    %566 = memref.load %arg2[%c71] : memref<432xf32, #tpu.memory_space<smem>>
    %567 = vector.broadcast %566 : f32 to vector<20x20xf32>
    %568 = arith.mulf %567, %21 : vector<20x20xf32>
    %569 = arith.addf %565, %568 : vector<20x20xf32>
    %c87 = arith.constant 87 : index
    %570 = memref.load %arg2[%c87] : memref<432xf32, #tpu.memory_space<smem>>
    %571 = vector.broadcast %570 : f32 to vector<20x20xf32>
    %572 = arith.mulf %571, %22 : vector<20x20xf32>
    %573 = arith.addf %569, %572 : vector<20x20xf32>
    %c103 = arith.constant 103 : index
    %574 = memref.load %arg2[%c103] : memref<432xf32, #tpu.memory_space<smem>>
    %575 = vector.broadcast %574 : f32 to vector<20x20xf32>
    %576 = arith.mulf %575, %23 : vector<20x20xf32>
    %577 = arith.addf %573, %576 : vector<20x20xf32>
    %c119 = arith.constant 119 : index
    %578 = memref.load %arg2[%c119] : memref<432xf32, #tpu.memory_space<smem>>
    %579 = vector.broadcast %578 : f32 to vector<20x20xf32>
    %580 = arith.mulf %579, %24 : vector<20x20xf32>
    %581 = arith.addf %577, %580 : vector<20x20xf32>
    %c135 = arith.constant 135 : index
    %582 = memref.load %arg2[%c135] : memref<432xf32, #tpu.memory_space<smem>>
    %583 = vector.broadcast %582 : f32 to vector<20x20xf32>
    %584 = arith.mulf %583, %25 : vector<20x20xf32>
    %585 = arith.addf %581, %584 : vector<20x20xf32>
    %c11 = arith.constant 11 : index
    %586 = memref.load %arg2[%c11] : memref<432xf32, #tpu.memory_space<smem>>
    %587 = vector.broadcast %586 : f32 to vector<20x20xf32>
    %588 = arith.mulf %587, %26 : vector<20x20xf32>
    %589 = arith.addf %585, %588 : vector<20x20xf32>
    %c27 = arith.constant 27 : index
    %590 = memref.load %arg2[%c27] : memref<432xf32, #tpu.memory_space<smem>>
    %591 = vector.broadcast %590 : f32 to vector<20x20xf32>
    %592 = arith.mulf %591, %27 : vector<20x20xf32>
    %593 = arith.addf %589, %592 : vector<20x20xf32>
    %c43 = arith.constant 43 : index
    %594 = memref.load %arg2[%c43] : memref<432xf32, #tpu.memory_space<smem>>
    %595 = vector.broadcast %594 : f32 to vector<20x20xf32>
    %596 = arith.mulf %595, %28 : vector<20x20xf32>
    %597 = arith.addf %593, %596 : vector<20x20xf32>
    %c59 = arith.constant 59 : index
    %598 = memref.load %arg2[%c59] : memref<432xf32, #tpu.memory_space<smem>>
    %599 = vector.broadcast %598 : f32 to vector<20x20xf32>
    %600 = arith.mulf %599, %29 : vector<20x20xf32>
    %601 = arith.addf %597, %600 : vector<20x20xf32>
    %c75 = arith.constant 75 : index
    %602 = memref.load %arg2[%c75] : memref<432xf32, #tpu.memory_space<smem>>
    %603 = vector.broadcast %602 : f32 to vector<20x20xf32>
    %604 = arith.mulf %603, %30 : vector<20x20xf32>
    %605 = arith.addf %601, %604 : vector<20x20xf32>
    %c91 = arith.constant 91 : index
    %606 = memref.load %arg2[%c91] : memref<432xf32, #tpu.memory_space<smem>>
    %607 = vector.broadcast %606 : f32 to vector<20x20xf32>
    %608 = arith.mulf %607, %31 : vector<20x20xf32>
    %609 = arith.addf %605, %608 : vector<20x20xf32>
    %c107 = arith.constant 107 : index
    %610 = memref.load %arg2[%c107] : memref<432xf32, #tpu.memory_space<smem>>
    %611 = vector.broadcast %610 : f32 to vector<20x20xf32>
    %612 = arith.mulf %611, %32 : vector<20x20xf32>
    %613 = arith.addf %609, %612 : vector<20x20xf32>
    %c123 = arith.constant 123 : index
    %614 = memref.load %arg2[%c123] : memref<432xf32, #tpu.memory_space<smem>>
    %615 = vector.broadcast %614 : f32 to vector<20x20xf32>
    %616 = arith.mulf %615, %33 : vector<20x20xf32>
    %617 = arith.addf %613, %616 : vector<20x20xf32>
    %c139 = arith.constant 139 : index
    %618 = memref.load %arg2[%c139] : memref<432xf32, #tpu.memory_space<smem>>
    %619 = vector.broadcast %618 : f32 to vector<20x20xf32>
    %620 = arith.mulf %619, %34 : vector<20x20xf32>
    %621 = arith.addf %617, %620 : vector<20x20xf32>
    %c15 = arith.constant 15 : index
    %622 = memref.load %arg2[%c15] : memref<432xf32, #tpu.memory_space<smem>>
    %623 = vector.broadcast %622 : f32 to vector<20x20xf32>
    %624 = arith.mulf %623, %35 : vector<20x20xf32>
    %625 = arith.addf %621, %624 : vector<20x20xf32>
    %c31 = arith.constant 31 : index
    %626 = memref.load %arg2[%c31] : memref<432xf32, #tpu.memory_space<smem>>
    %627 = vector.broadcast %626 : f32 to vector<20x20xf32>
    %628 = arith.mulf %627, %36 : vector<20x20xf32>
    %629 = arith.addf %625, %628 : vector<20x20xf32>
    %c47 = arith.constant 47 : index
    %630 = memref.load %arg2[%c47] : memref<432xf32, #tpu.memory_space<smem>>
    %631 = vector.broadcast %630 : f32 to vector<20x20xf32>
    %632 = arith.mulf %631, %37 : vector<20x20xf32>
    %633 = arith.addf %629, %632 : vector<20x20xf32>
    %c63 = arith.constant 63 : index
    %634 = memref.load %arg2[%c63] : memref<432xf32, #tpu.memory_space<smem>>
    %635 = vector.broadcast %634 : f32 to vector<20x20xf32>
    %636 = arith.mulf %635, %38 : vector<20x20xf32>
    %637 = arith.addf %633, %636 : vector<20x20xf32>
    %c79 = arith.constant 79 : index
    %638 = memref.load %arg2[%c79] : memref<432xf32, #tpu.memory_space<smem>>
    %639 = vector.broadcast %638 : f32 to vector<20x20xf32>
    %640 = arith.mulf %639, %39 : vector<20x20xf32>
    %641 = arith.addf %637, %640 : vector<20x20xf32>
    %c95 = arith.constant 95 : index
    %642 = memref.load %arg2[%c95] : memref<432xf32, #tpu.memory_space<smem>>
    %643 = vector.broadcast %642 : f32 to vector<20x20xf32>
    %644 = arith.mulf %643, %40 : vector<20x20xf32>
    %645 = arith.addf %641, %644 : vector<20x20xf32>
    %c111 = arith.constant 111 : index
    %646 = memref.load %arg2[%c111] : memref<432xf32, #tpu.memory_space<smem>>
    %647 = vector.broadcast %646 : f32 to vector<20x20xf32>
    %648 = arith.mulf %647, %41 : vector<20x20xf32>
    %649 = arith.addf %645, %648 : vector<20x20xf32>
    %c127 = arith.constant 127 : index
    %650 = memref.load %arg2[%c127] : memref<432xf32, #tpu.memory_space<smem>>
    %651 = vector.broadcast %650 : f32 to vector<20x20xf32>
    %652 = arith.mulf %651, %42 : vector<20x20xf32>
    %653 = arith.addf %649, %652 : vector<20x20xf32>
    %c143 = arith.constant 143 : index
    %654 = memref.load %arg2[%c143] : memref<432xf32, #tpu.memory_space<smem>>
    %655 = vector.broadcast %654 : f32 to vector<20x20xf32>
    %656 = arith.mulf %655, %43 : vector<20x20xf32>
    %657 = arith.addf %653, %656 : vector<20x20xf32>
    %c3_30 = arith.constant 3 : index
    %658 = memref.load %arg3[%c3_30] : memref<12xf32, #tpu.memory_space<smem>>
    %659 = vector.broadcast %658 : f32 to vector<20x20xf32>
    %660 = arith.addf %657, %659 : vector<20x20xf32>
    %cst_31 = arith.constant 0.000000e+00 : f32
    %661 = vector.broadcast %cst_31 : f32 to vector<20x20xf32>
    %662 = arith.maximumf %660, %661 : vector<20x20xf32>
    %cst_32 = arith.constant 0.000000e+00 : f32
    %663 = vector.broadcast %cst_32 : f32 to vector<20x20xf32>
    %664 = arith.select %56, %662, %663 : vector<20x20xi1>, vector<20x20xf32>
    %665 = vector.extract_strided_slice %208 {offsets = [0, 0], sizes = [18, 18], strides = [1, 1]} : vector<20x20xf32> to vector<18x18xf32>
    %666 = vector.extract_strided_slice %208 {offsets = [0, 1], sizes = [18, 18], strides = [1, 1]} : vector<20x20xf32> to vector<18x18xf32>
    %667 = vector.extract_strided_slice %208 {offsets = [0, 2], sizes = [18, 18], strides = [1, 1]} : vector<20x20xf32> to vector<18x18xf32>
    %668 = vector.extract_strided_slice %208 {offsets = [1, 0], sizes = [18, 18], strides = [1, 1]} : vector<20x20xf32> to vector<18x18xf32>
    %669 = vector.extract_strided_slice %208 {offsets = [1, 1], sizes = [18, 18], strides = [1, 1]} : vector<20x20xf32> to vector<18x18xf32>
    %670 = vector.extract_strided_slice %208 {offsets = [1, 2], sizes = [18, 18], strides = [1, 1]} : vector<20x20xf32> to vector<18x18xf32>
    %671 = vector.extract_strided_slice %208 {offsets = [2, 0], sizes = [18, 18], strides = [1, 1]} : vector<20x20xf32> to vector<18x18xf32>
    %672 = vector.extract_strided_slice %208 {offsets = [2, 1], sizes = [18, 18], strides = [1, 1]} : vector<20x20xf32> to vector<18x18xf32>
    %673 = vector.extract_strided_slice %208 {offsets = [2, 2], sizes = [18, 18], strides = [1, 1]} : vector<20x20xf32> to vector<18x18xf32>
    %674 = vector.extract_strided_slice %360 {offsets = [0, 0], sizes = [18, 18], strides = [1, 1]} : vector<20x20xf32> to vector<18x18xf32>
    %675 = vector.extract_strided_slice %360 {offsets = [0, 1], sizes = [18, 18], strides = [1, 1]} : vector<20x20xf32> to vector<18x18xf32>
    %676 = vector.extract_strided_slice %360 {offsets = [0, 2], sizes = [18, 18], strides = [1, 1]} : vector<20x20xf32> to vector<18x18xf32>
    %677 = vector.extract_strided_slice %360 {offsets = [1, 0], sizes = [18, 18], strides = [1, 1]} : vector<20x20xf32> to vector<18x18xf32>
    %678 = vector.extract_strided_slice %360 {offsets = [1, 1], sizes = [18, 18], strides = [1, 1]} : vector<20x20xf32> to vector<18x18xf32>
    %679 = vector.extract_strided_slice %360 {offsets = [1, 2], sizes = [18, 18], strides = [1, 1]} : vector<20x20xf32> to vector<18x18xf32>
    %680 = vector.extract_strided_slice %360 {offsets = [2, 0], sizes = [18, 18], strides = [1, 1]} : vector<20x20xf32> to vector<18x18xf32>
    %681 = vector.extract_strided_slice %360 {offsets = [2, 1], sizes = [18, 18], strides = [1, 1]} : vector<20x20xf32> to vector<18x18xf32>
    %682 = vector.extract_strided_slice %360 {offsets = [2, 2], sizes = [18, 18], strides = [1, 1]} : vector<20x20xf32> to vector<18x18xf32>
    %683 = vector.extract_strided_slice %512 {offsets = [0, 0], sizes = [18, 18], strides = [1, 1]} : vector<20x20xf32> to vector<18x18xf32>
    %684 = vector.extract_strided_slice %512 {offsets = [0, 1], sizes = [18, 18], strides = [1, 1]} : vector<20x20xf32> to vector<18x18xf32>
    %685 = vector.extract_strided_slice %512 {offsets = [0, 2], sizes = [18, 18], strides = [1, 1]} : vector<20x20xf32> to vector<18x18xf32>
    %686 = vector.extract_strided_slice %512 {offsets = [1, 0], sizes = [18, 18], strides = [1, 1]} : vector<20x20xf32> to vector<18x18xf32>
    %687 = vector.extract_strided_slice %512 {offsets = [1, 1], sizes = [18, 18], strides = [1, 1]} : vector<20x20xf32> to vector<18x18xf32>
    %688 = vector.extract_strided_slice %512 {offsets = [1, 2], sizes = [18, 18], strides = [1, 1]} : vector<20x20xf32> to vector<18x18xf32>
    %689 = vector.extract_strided_slice %512 {offsets = [2, 0], sizes = [18, 18], strides = [1, 1]} : vector<20x20xf32> to vector<18x18xf32>
    %690 = vector.extract_strided_slice %512 {offsets = [2, 1], sizes = [18, 18], strides = [1, 1]} : vector<20x20xf32> to vector<18x18xf32>
    %691 = vector.extract_strided_slice %512 {offsets = [2, 2], sizes = [18, 18], strides = [1, 1]} : vector<20x20xf32> to vector<18x18xf32>
    %692 = vector.extract_strided_slice %664 {offsets = [0, 0], sizes = [18, 18], strides = [1, 1]} : vector<20x20xf32> to vector<18x18xf32>
    %693 = vector.extract_strided_slice %664 {offsets = [0, 1], sizes = [18, 18], strides = [1, 1]} : vector<20x20xf32> to vector<18x18xf32>
    %694 = vector.extract_strided_slice %664 {offsets = [0, 2], sizes = [18, 18], strides = [1, 1]} : vector<20x20xf32> to vector<18x18xf32>
    %695 = vector.extract_strided_slice %664 {offsets = [1, 0], sizes = [18, 18], strides = [1, 1]} : vector<20x20xf32> to vector<18x18xf32>
    %696 = vector.extract_strided_slice %664 {offsets = [1, 1], sizes = [18, 18], strides = [1, 1]} : vector<20x20xf32> to vector<18x18xf32>
    %697 = vector.extract_strided_slice %664 {offsets = [1, 2], sizes = [18, 18], strides = [1, 1]} : vector<20x20xf32> to vector<18x18xf32>
    %698 = vector.extract_strided_slice %664 {offsets = [2, 0], sizes = [18, 18], strides = [1, 1]} : vector<20x20xf32> to vector<18x18xf32>
    %699 = vector.extract_strided_slice %664 {offsets = [2, 1], sizes = [18, 18], strides = [1, 1]} : vector<20x20xf32> to vector<18x18xf32>
    %700 = vector.extract_strided_slice %664 {offsets = [2, 2], sizes = [18, 18], strides = [1, 1]} : vector<20x20xf32> to vector<18x18xf32>
    %701 = tpu.iota {dimensions = array<i32: 0>} : vector<18x18xi32>
    %702 = tpu.iota {dimensions = array<i32: 1>} : vector<18x18xi32>
    %c1_i32 = arith.constant 1 : i32
    %703 = vector.broadcast %c1_i32 : i32 to vector<18x18xi32>
    %704 = arith.cmpi sge, %701, %703 : vector<18x18xi32>
    %c17_i32 = arith.constant 17 : i32
    %705 = vector.broadcast %c17_i32 : i32 to vector<18x18xi32>
    %706 = arith.cmpi slt, %701, %705 : vector<18x18xi32>
    %707 = arith.andi %704, %706 : vector<18x18xi1>
    %c1_i32_33 = arith.constant 1 : i32
    %708 = vector.broadcast %c1_i32_33 : i32 to vector<18x18xi32>
    %709 = arith.cmpi sge, %702, %708 : vector<18x18xi32>
    %710 = arith.andi %707, %709 : vector<18x18xi1>
    %c17_i32_34 = arith.constant 17 : i32
    %711 = vector.broadcast %c17_i32_34 : i32 to vector<18x18xi32>
    %712 = arith.cmpi slt, %702, %711 : vector<18x18xi32>
    %713 = arith.andi %710, %712 : vector<18x18xi1>
    %cst_35 = arith.constant 0.000000e+00 : f32
    %714 = vector.broadcast %cst_35 : f32 to vector<18x18xf32>
    %c144 = arith.constant 144 : index
    %715 = memref.load %arg2[%c144] : memref<432xf32, #tpu.memory_space<smem>>
    %716 = vector.broadcast %715 : f32 to vector<18x18xf32>
    %717 = arith.mulf %716, %665 : vector<18x18xf32>
    %718 = arith.addf %714, %717 : vector<18x18xf32>
    %c160 = arith.constant 160 : index
    %719 = memref.load %arg2[%c160] : memref<432xf32, #tpu.memory_space<smem>>
    %720 = vector.broadcast %719 : f32 to vector<18x18xf32>
    %721 = arith.mulf %720, %666 : vector<18x18xf32>
    %722 = arith.addf %718, %721 : vector<18x18xf32>
    %c176 = arith.constant 176 : index
    %723 = memref.load %arg2[%c176] : memref<432xf32, #tpu.memory_space<smem>>
    %724 = vector.broadcast %723 : f32 to vector<18x18xf32>
    %725 = arith.mulf %724, %667 : vector<18x18xf32>
    %726 = arith.addf %722, %725 : vector<18x18xf32>
    %c192 = arith.constant 192 : index
    %727 = memref.load %arg2[%c192] : memref<432xf32, #tpu.memory_space<smem>>
    %728 = vector.broadcast %727 : f32 to vector<18x18xf32>
    %729 = arith.mulf %728, %668 : vector<18x18xf32>
    %730 = arith.addf %726, %729 : vector<18x18xf32>
    %c208 = arith.constant 208 : index
    %731 = memref.load %arg2[%c208] : memref<432xf32, #tpu.memory_space<smem>>
    %732 = vector.broadcast %731 : f32 to vector<18x18xf32>
    %733 = arith.mulf %732, %669 : vector<18x18xf32>
    %734 = arith.addf %730, %733 : vector<18x18xf32>
    %c224 = arith.constant 224 : index
    %735 = memref.load %arg2[%c224] : memref<432xf32, #tpu.memory_space<smem>>
    %736 = vector.broadcast %735 : f32 to vector<18x18xf32>
    %737 = arith.mulf %736, %670 : vector<18x18xf32>
    %738 = arith.addf %734, %737 : vector<18x18xf32>
    %c240 = arith.constant 240 : index
    %739 = memref.load %arg2[%c240] : memref<432xf32, #tpu.memory_space<smem>>
    %740 = vector.broadcast %739 : f32 to vector<18x18xf32>
    %741 = arith.mulf %740, %671 : vector<18x18xf32>
    %742 = arith.addf %738, %741 : vector<18x18xf32>
    %c256 = arith.constant 256 : index
    %743 = memref.load %arg2[%c256] : memref<432xf32, #tpu.memory_space<smem>>
    %744 = vector.broadcast %743 : f32 to vector<18x18xf32>
    %745 = arith.mulf %744, %672 : vector<18x18xf32>
    %746 = arith.addf %742, %745 : vector<18x18xf32>
    %c272 = arith.constant 272 : index
    %747 = memref.load %arg2[%c272] : memref<432xf32, #tpu.memory_space<smem>>
    %748 = vector.broadcast %747 : f32 to vector<18x18xf32>
    %749 = arith.mulf %748, %673 : vector<18x18xf32>
    %750 = arith.addf %746, %749 : vector<18x18xf32>
    %c148 = arith.constant 148 : index
    %751 = memref.load %arg2[%c148] : memref<432xf32, #tpu.memory_space<smem>>
    %752 = vector.broadcast %751 : f32 to vector<18x18xf32>
    %753 = arith.mulf %752, %674 : vector<18x18xf32>
    %754 = arith.addf %750, %753 : vector<18x18xf32>
    %c164 = arith.constant 164 : index
    %755 = memref.load %arg2[%c164] : memref<432xf32, #tpu.memory_space<smem>>
    %756 = vector.broadcast %755 : f32 to vector<18x18xf32>
    %757 = arith.mulf %756, %675 : vector<18x18xf32>
    %758 = arith.addf %754, %757 : vector<18x18xf32>
    %c180 = arith.constant 180 : index
    %759 = memref.load %arg2[%c180] : memref<432xf32, #tpu.memory_space<smem>>
    %760 = vector.broadcast %759 : f32 to vector<18x18xf32>
    %761 = arith.mulf %760, %676 : vector<18x18xf32>
    %762 = arith.addf %758, %761 : vector<18x18xf32>
    %c196 = arith.constant 196 : index
    %763 = memref.load %arg2[%c196] : memref<432xf32, #tpu.memory_space<smem>>
    %764 = vector.broadcast %763 : f32 to vector<18x18xf32>
    %765 = arith.mulf %764, %677 : vector<18x18xf32>
    %766 = arith.addf %762, %765 : vector<18x18xf32>
    %c212 = arith.constant 212 : index
    %767 = memref.load %arg2[%c212] : memref<432xf32, #tpu.memory_space<smem>>
    %768 = vector.broadcast %767 : f32 to vector<18x18xf32>
    %769 = arith.mulf %768, %678 : vector<18x18xf32>
    %770 = arith.addf %766, %769 : vector<18x18xf32>
    %c228 = arith.constant 228 : index
    %771 = memref.load %arg2[%c228] : memref<432xf32, #tpu.memory_space<smem>>
    %772 = vector.broadcast %771 : f32 to vector<18x18xf32>
    %773 = arith.mulf %772, %679 : vector<18x18xf32>
    %774 = arith.addf %770, %773 : vector<18x18xf32>
    %c244 = arith.constant 244 : index
    %775 = memref.load %arg2[%c244] : memref<432xf32, #tpu.memory_space<smem>>
    %776 = vector.broadcast %775 : f32 to vector<18x18xf32>
    %777 = arith.mulf %776, %680 : vector<18x18xf32>
    %778 = arith.addf %774, %777 : vector<18x18xf32>
    %c260 = arith.constant 260 : index
    %779 = memref.load %arg2[%c260] : memref<432xf32, #tpu.memory_space<smem>>
    %780 = vector.broadcast %779 : f32 to vector<18x18xf32>
    %781 = arith.mulf %780, %681 : vector<18x18xf32>
    %782 = arith.addf %778, %781 : vector<18x18xf32>
    %c276 = arith.constant 276 : index
    %783 = memref.load %arg2[%c276] : memref<432xf32, #tpu.memory_space<smem>>
    %784 = vector.broadcast %783 : f32 to vector<18x18xf32>
    %785 = arith.mulf %784, %682 : vector<18x18xf32>
    %786 = arith.addf %782, %785 : vector<18x18xf32>
    %c152 = arith.constant 152 : index
    %787 = memref.load %arg2[%c152] : memref<432xf32, #tpu.memory_space<smem>>
    %788 = vector.broadcast %787 : f32 to vector<18x18xf32>
    %789 = arith.mulf %788, %683 : vector<18x18xf32>
    %790 = arith.addf %786, %789 : vector<18x18xf32>
    %c168 = arith.constant 168 : index
    %791 = memref.load %arg2[%c168] : memref<432xf32, #tpu.memory_space<smem>>
    %792 = vector.broadcast %791 : f32 to vector<18x18xf32>
    %793 = arith.mulf %792, %684 : vector<18x18xf32>
    %794 = arith.addf %790, %793 : vector<18x18xf32>
    %c184 = arith.constant 184 : index
    %795 = memref.load %arg2[%c184] : memref<432xf32, #tpu.memory_space<smem>>
    %796 = vector.broadcast %795 : f32 to vector<18x18xf32>
    %797 = arith.mulf %796, %685 : vector<18x18xf32>
    %798 = arith.addf %794, %797 : vector<18x18xf32>
    %c200 = arith.constant 200 : index
    %799 = memref.load %arg2[%c200] : memref<432xf32, #tpu.memory_space<smem>>
    %800 = vector.broadcast %799 : f32 to vector<18x18xf32>
    %801 = arith.mulf %800, %686 : vector<18x18xf32>
    %802 = arith.addf %798, %801 : vector<18x18xf32>
    %c216 = arith.constant 216 : index
    %803 = memref.load %arg2[%c216] : memref<432xf32, #tpu.memory_space<smem>>
    %804 = vector.broadcast %803 : f32 to vector<18x18xf32>
    %805 = arith.mulf %804, %687 : vector<18x18xf32>
    %806 = arith.addf %802, %805 : vector<18x18xf32>
    %c232 = arith.constant 232 : index
    %807 = memref.load %arg2[%c232] : memref<432xf32, #tpu.memory_space<smem>>
    %808 = vector.broadcast %807 : f32 to vector<18x18xf32>
    %809 = arith.mulf %808, %688 : vector<18x18xf32>
    %810 = arith.addf %806, %809 : vector<18x18xf32>
    %c248 = arith.constant 248 : index
    %811 = memref.load %arg2[%c248] : memref<432xf32, #tpu.memory_space<smem>>
    %812 = vector.broadcast %811 : f32 to vector<18x18xf32>
    %813 = arith.mulf %812, %689 : vector<18x18xf32>
    %814 = arith.addf %810, %813 : vector<18x18xf32>
    %c264 = arith.constant 264 : index
    %815 = memref.load %arg2[%c264] : memref<432xf32, #tpu.memory_space<smem>>
    %816 = vector.broadcast %815 : f32 to vector<18x18xf32>
    %817 = arith.mulf %816, %690 : vector<18x18xf32>
    %818 = arith.addf %814, %817 : vector<18x18xf32>
    %c280 = arith.constant 280 : index
    %819 = memref.load %arg2[%c280] : memref<432xf32, #tpu.memory_space<smem>>
    %820 = vector.broadcast %819 : f32 to vector<18x18xf32>
    %821 = arith.mulf %820, %691 : vector<18x18xf32>
    %822 = arith.addf %818, %821 : vector<18x18xf32>
    %c156 = arith.constant 156 : index
    %823 = memref.load %arg2[%c156] : memref<432xf32, #tpu.memory_space<smem>>
    %824 = vector.broadcast %823 : f32 to vector<18x18xf32>
    %825 = arith.mulf %824, %692 : vector<18x18xf32>
    %826 = arith.addf %822, %825 : vector<18x18xf32>
    %c172 = arith.constant 172 : index
    %827 = memref.load %arg2[%c172] : memref<432xf32, #tpu.memory_space<smem>>
    %828 = vector.broadcast %827 : f32 to vector<18x18xf32>
    %829 = arith.mulf %828, %693 : vector<18x18xf32>
    %830 = arith.addf %826, %829 : vector<18x18xf32>
    %c188 = arith.constant 188 : index
    %831 = memref.load %arg2[%c188] : memref<432xf32, #tpu.memory_space<smem>>
    %832 = vector.broadcast %831 : f32 to vector<18x18xf32>
    %833 = arith.mulf %832, %694 : vector<18x18xf32>
    %834 = arith.addf %830, %833 : vector<18x18xf32>
    %c204 = arith.constant 204 : index
    %835 = memref.load %arg2[%c204] : memref<432xf32, #tpu.memory_space<smem>>
    %836 = vector.broadcast %835 : f32 to vector<18x18xf32>
    %837 = arith.mulf %836, %695 : vector<18x18xf32>
    %838 = arith.addf %834, %837 : vector<18x18xf32>
    %c220 = arith.constant 220 : index
    %839 = memref.load %arg2[%c220] : memref<432xf32, #tpu.memory_space<smem>>
    %840 = vector.broadcast %839 : f32 to vector<18x18xf32>
    %841 = arith.mulf %840, %696 : vector<18x18xf32>
    %842 = arith.addf %838, %841 : vector<18x18xf32>
    %c236 = arith.constant 236 : index
    %843 = memref.load %arg2[%c236] : memref<432xf32, #tpu.memory_space<smem>>
    %844 = vector.broadcast %843 : f32 to vector<18x18xf32>
    %845 = arith.mulf %844, %697 : vector<18x18xf32>
    %846 = arith.addf %842, %845 : vector<18x18xf32>
    %c252 = arith.constant 252 : index
    %847 = memref.load %arg2[%c252] : memref<432xf32, #tpu.memory_space<smem>>
    %848 = vector.broadcast %847 : f32 to vector<18x18xf32>
    %849 = arith.mulf %848, %698 : vector<18x18xf32>
    %850 = arith.addf %846, %849 : vector<18x18xf32>
    %c268 = arith.constant 268 : index
    %851 = memref.load %arg2[%c268] : memref<432xf32, #tpu.memory_space<smem>>
    %852 = vector.broadcast %851 : f32 to vector<18x18xf32>
    %853 = arith.mulf %852, %699 : vector<18x18xf32>
    %854 = arith.addf %850, %853 : vector<18x18xf32>
    %c284 = arith.constant 284 : index
    %855 = memref.load %arg2[%c284] : memref<432xf32, #tpu.memory_space<smem>>
    %856 = vector.broadcast %855 : f32 to vector<18x18xf32>
    %857 = arith.mulf %856, %700 : vector<18x18xf32>
    %858 = arith.addf %854, %857 : vector<18x18xf32>
    %c4_36 = arith.constant 4 : index
    %859 = memref.load %arg3[%c4_36] : memref<12xf32, #tpu.memory_space<smem>>
    %860 = vector.broadcast %859 : f32 to vector<18x18xf32>
    %861 = arith.addf %858, %860 : vector<18x18xf32>
    %cst_37 = arith.constant 0.000000e+00 : f32
    %862 = vector.broadcast %cst_37 : f32 to vector<18x18xf32>
    %863 = arith.maximumf %861, %862 : vector<18x18xf32>
    %cst_38 = arith.constant 0.000000e+00 : f32
    %864 = vector.broadcast %cst_38 : f32 to vector<18x18xf32>
    %865 = arith.select %713, %863, %864 : vector<18x18xi1>, vector<18x18xf32>
    %cst_39 = arith.constant 0.000000e+00 : f32
    %866 = vector.broadcast %cst_39 : f32 to vector<18x18xf32>
    %c145 = arith.constant 145 : index
    %867 = memref.load %arg2[%c145] : memref<432xf32, #tpu.memory_space<smem>>
    %868 = vector.broadcast %867 : f32 to vector<18x18xf32>
    %869 = arith.mulf %868, %665 : vector<18x18xf32>
    %870 = arith.addf %866, %869 : vector<18x18xf32>
    %c161 = arith.constant 161 : index
    %871 = memref.load %arg2[%c161] : memref<432xf32, #tpu.memory_space<smem>>
    %872 = vector.broadcast %871 : f32 to vector<18x18xf32>
    %873 = arith.mulf %872, %666 : vector<18x18xf32>
    %874 = arith.addf %870, %873 : vector<18x18xf32>
    %c177 = arith.constant 177 : index
    %875 = memref.load %arg2[%c177] : memref<432xf32, #tpu.memory_space<smem>>
    %876 = vector.broadcast %875 : f32 to vector<18x18xf32>
    %877 = arith.mulf %876, %667 : vector<18x18xf32>
    %878 = arith.addf %874, %877 : vector<18x18xf32>
    %c193 = arith.constant 193 : index
    %879 = memref.load %arg2[%c193] : memref<432xf32, #tpu.memory_space<smem>>
    %880 = vector.broadcast %879 : f32 to vector<18x18xf32>
    %881 = arith.mulf %880, %668 : vector<18x18xf32>
    %882 = arith.addf %878, %881 : vector<18x18xf32>
    %c209 = arith.constant 209 : index
    %883 = memref.load %arg2[%c209] : memref<432xf32, #tpu.memory_space<smem>>
    %884 = vector.broadcast %883 : f32 to vector<18x18xf32>
    %885 = arith.mulf %884, %669 : vector<18x18xf32>
    %886 = arith.addf %882, %885 : vector<18x18xf32>
    %c225 = arith.constant 225 : index
    %887 = memref.load %arg2[%c225] : memref<432xf32, #tpu.memory_space<smem>>
    %888 = vector.broadcast %887 : f32 to vector<18x18xf32>
    %889 = arith.mulf %888, %670 : vector<18x18xf32>
    %890 = arith.addf %886, %889 : vector<18x18xf32>
    %c241 = arith.constant 241 : index
    %891 = memref.load %arg2[%c241] : memref<432xf32, #tpu.memory_space<smem>>
    %892 = vector.broadcast %891 : f32 to vector<18x18xf32>
    %893 = arith.mulf %892, %671 : vector<18x18xf32>
    %894 = arith.addf %890, %893 : vector<18x18xf32>
    %c257 = arith.constant 257 : index
    %895 = memref.load %arg2[%c257] : memref<432xf32, #tpu.memory_space<smem>>
    %896 = vector.broadcast %895 : f32 to vector<18x18xf32>
    %897 = arith.mulf %896, %672 : vector<18x18xf32>
    %898 = arith.addf %894, %897 : vector<18x18xf32>
    %c273 = arith.constant 273 : index
    %899 = memref.load %arg2[%c273] : memref<432xf32, #tpu.memory_space<smem>>
    %900 = vector.broadcast %899 : f32 to vector<18x18xf32>
    %901 = arith.mulf %900, %673 : vector<18x18xf32>
    %902 = arith.addf %898, %901 : vector<18x18xf32>
    %c149 = arith.constant 149 : index
    %903 = memref.load %arg2[%c149] : memref<432xf32, #tpu.memory_space<smem>>
    %904 = vector.broadcast %903 : f32 to vector<18x18xf32>
    %905 = arith.mulf %904, %674 : vector<18x18xf32>
    %906 = arith.addf %902, %905 : vector<18x18xf32>
    %c165 = arith.constant 165 : index
    %907 = memref.load %arg2[%c165] : memref<432xf32, #tpu.memory_space<smem>>
    %908 = vector.broadcast %907 : f32 to vector<18x18xf32>
    %909 = arith.mulf %908, %675 : vector<18x18xf32>
    %910 = arith.addf %906, %909 : vector<18x18xf32>
    %c181 = arith.constant 181 : index
    %911 = memref.load %arg2[%c181] : memref<432xf32, #tpu.memory_space<smem>>
    %912 = vector.broadcast %911 : f32 to vector<18x18xf32>
    %913 = arith.mulf %912, %676 : vector<18x18xf32>
    %914 = arith.addf %910, %913 : vector<18x18xf32>
    %c197 = arith.constant 197 : index
    %915 = memref.load %arg2[%c197] : memref<432xf32, #tpu.memory_space<smem>>
    %916 = vector.broadcast %915 : f32 to vector<18x18xf32>
    %917 = arith.mulf %916, %677 : vector<18x18xf32>
    %918 = arith.addf %914, %917 : vector<18x18xf32>
    %c213 = arith.constant 213 : index
    %919 = memref.load %arg2[%c213] : memref<432xf32, #tpu.memory_space<smem>>
    %920 = vector.broadcast %919 : f32 to vector<18x18xf32>
    %921 = arith.mulf %920, %678 : vector<18x18xf32>
    %922 = arith.addf %918, %921 : vector<18x18xf32>
    %c229 = arith.constant 229 : index
    %923 = memref.load %arg2[%c229] : memref<432xf32, #tpu.memory_space<smem>>
    %924 = vector.broadcast %923 : f32 to vector<18x18xf32>
    %925 = arith.mulf %924, %679 : vector<18x18xf32>
    %926 = arith.addf %922, %925 : vector<18x18xf32>
    %c245 = arith.constant 245 : index
    %927 = memref.load %arg2[%c245] : memref<432xf32, #tpu.memory_space<smem>>
    %928 = vector.broadcast %927 : f32 to vector<18x18xf32>
    %929 = arith.mulf %928, %680 : vector<18x18xf32>
    %930 = arith.addf %926, %929 : vector<18x18xf32>
    %c261 = arith.constant 261 : index
    %931 = memref.load %arg2[%c261] : memref<432xf32, #tpu.memory_space<smem>>
    %932 = vector.broadcast %931 : f32 to vector<18x18xf32>
    %933 = arith.mulf %932, %681 : vector<18x18xf32>
    %934 = arith.addf %930, %933 : vector<18x18xf32>
    %c277 = arith.constant 277 : index
    %935 = memref.load %arg2[%c277] : memref<432xf32, #tpu.memory_space<smem>>
    %936 = vector.broadcast %935 : f32 to vector<18x18xf32>
    %937 = arith.mulf %936, %682 : vector<18x18xf32>
    %938 = arith.addf %934, %937 : vector<18x18xf32>
    %c153 = arith.constant 153 : index
    %939 = memref.load %arg2[%c153] : memref<432xf32, #tpu.memory_space<smem>>
    %940 = vector.broadcast %939 : f32 to vector<18x18xf32>
    %941 = arith.mulf %940, %683 : vector<18x18xf32>
    %942 = arith.addf %938, %941 : vector<18x18xf32>
    %c169 = arith.constant 169 : index
    %943 = memref.load %arg2[%c169] : memref<432xf32, #tpu.memory_space<smem>>
    %944 = vector.broadcast %943 : f32 to vector<18x18xf32>
    %945 = arith.mulf %944, %684 : vector<18x18xf32>
    %946 = arith.addf %942, %945 : vector<18x18xf32>
    %c185 = arith.constant 185 : index
    %947 = memref.load %arg2[%c185] : memref<432xf32, #tpu.memory_space<smem>>
    %948 = vector.broadcast %947 : f32 to vector<18x18xf32>
    %949 = arith.mulf %948, %685 : vector<18x18xf32>
    %950 = arith.addf %946, %949 : vector<18x18xf32>
    %c201 = arith.constant 201 : index
    %951 = memref.load %arg2[%c201] : memref<432xf32, #tpu.memory_space<smem>>
    %952 = vector.broadcast %951 : f32 to vector<18x18xf32>
    %953 = arith.mulf %952, %686 : vector<18x18xf32>
    %954 = arith.addf %950, %953 : vector<18x18xf32>
    %c217 = arith.constant 217 : index
    %955 = memref.load %arg2[%c217] : memref<432xf32, #tpu.memory_space<smem>>
    %956 = vector.broadcast %955 : f32 to vector<18x18xf32>
    %957 = arith.mulf %956, %687 : vector<18x18xf32>
    %958 = arith.addf %954, %957 : vector<18x18xf32>
    %c233 = arith.constant 233 : index
    %959 = memref.load %arg2[%c233] : memref<432xf32, #tpu.memory_space<smem>>
    %960 = vector.broadcast %959 : f32 to vector<18x18xf32>
    %961 = arith.mulf %960, %688 : vector<18x18xf32>
    %962 = arith.addf %958, %961 : vector<18x18xf32>
    %c249 = arith.constant 249 : index
    %963 = memref.load %arg2[%c249] : memref<432xf32, #tpu.memory_space<smem>>
    %964 = vector.broadcast %963 : f32 to vector<18x18xf32>
    %965 = arith.mulf %964, %689 : vector<18x18xf32>
    %966 = arith.addf %962, %965 : vector<18x18xf32>
    %c265 = arith.constant 265 : index
    %967 = memref.load %arg2[%c265] : memref<432xf32, #tpu.memory_space<smem>>
    %968 = vector.broadcast %967 : f32 to vector<18x18xf32>
    %969 = arith.mulf %968, %690 : vector<18x18xf32>
    %970 = arith.addf %966, %969 : vector<18x18xf32>
    %c281 = arith.constant 281 : index
    %971 = memref.load %arg2[%c281] : memref<432xf32, #tpu.memory_space<smem>>
    %972 = vector.broadcast %971 : f32 to vector<18x18xf32>
    %973 = arith.mulf %972, %691 : vector<18x18xf32>
    %974 = arith.addf %970, %973 : vector<18x18xf32>
    %c157 = arith.constant 157 : index
    %975 = memref.load %arg2[%c157] : memref<432xf32, #tpu.memory_space<smem>>
    %976 = vector.broadcast %975 : f32 to vector<18x18xf32>
    %977 = arith.mulf %976, %692 : vector<18x18xf32>
    %978 = arith.addf %974, %977 : vector<18x18xf32>
    %c173 = arith.constant 173 : index
    %979 = memref.load %arg2[%c173] : memref<432xf32, #tpu.memory_space<smem>>
    %980 = vector.broadcast %979 : f32 to vector<18x18xf32>
    %981 = arith.mulf %980, %693 : vector<18x18xf32>
    %982 = arith.addf %978, %981 : vector<18x18xf32>
    %c189 = arith.constant 189 : index
    %983 = memref.load %arg2[%c189] : memref<432xf32, #tpu.memory_space<smem>>
    %984 = vector.broadcast %983 : f32 to vector<18x18xf32>
    %985 = arith.mulf %984, %694 : vector<18x18xf32>
    %986 = arith.addf %982, %985 : vector<18x18xf32>
    %c205 = arith.constant 205 : index
    %987 = memref.load %arg2[%c205] : memref<432xf32, #tpu.memory_space<smem>>
    %988 = vector.broadcast %987 : f32 to vector<18x18xf32>
    %989 = arith.mulf %988, %695 : vector<18x18xf32>
    %990 = arith.addf %986, %989 : vector<18x18xf32>
    %c221 = arith.constant 221 : index
    %991 = memref.load %arg2[%c221] : memref<432xf32, #tpu.memory_space<smem>>
    %992 = vector.broadcast %991 : f32 to vector<18x18xf32>
    %993 = arith.mulf %992, %696 : vector<18x18xf32>
    %994 = arith.addf %990, %993 : vector<18x18xf32>
    %c237 = arith.constant 237 : index
    %995 = memref.load %arg2[%c237] : memref<432xf32, #tpu.memory_space<smem>>
    %996 = vector.broadcast %995 : f32 to vector<18x18xf32>
    %997 = arith.mulf %996, %697 : vector<18x18xf32>
    %998 = arith.addf %994, %997 : vector<18x18xf32>
    %c253 = arith.constant 253 : index
    %999 = memref.load %arg2[%c253] : memref<432xf32, #tpu.memory_space<smem>>
    %1000 = vector.broadcast %999 : f32 to vector<18x18xf32>
    %1001 = arith.mulf %1000, %698 : vector<18x18xf32>
    %1002 = arith.addf %998, %1001 : vector<18x18xf32>
    %c269 = arith.constant 269 : index
    %1003 = memref.load %arg2[%c269] : memref<432xf32, #tpu.memory_space<smem>>
    %1004 = vector.broadcast %1003 : f32 to vector<18x18xf32>
    %1005 = arith.mulf %1004, %699 : vector<18x18xf32>
    %1006 = arith.addf %1002, %1005 : vector<18x18xf32>
    %c285 = arith.constant 285 : index
    %1007 = memref.load %arg2[%c285] : memref<432xf32, #tpu.memory_space<smem>>
    %1008 = vector.broadcast %1007 : f32 to vector<18x18xf32>
    %1009 = arith.mulf %1008, %700 : vector<18x18xf32>
    %1010 = arith.addf %1006, %1009 : vector<18x18xf32>
    %c5_40 = arith.constant 5 : index
    %1011 = memref.load %arg3[%c5_40] : memref<12xf32, #tpu.memory_space<smem>>
    %1012 = vector.broadcast %1011 : f32 to vector<18x18xf32>
    %1013 = arith.addf %1010, %1012 : vector<18x18xf32>
    %cst_41 = arith.constant 0.000000e+00 : f32
    %1014 = vector.broadcast %cst_41 : f32 to vector<18x18xf32>
    %1015 = arith.maximumf %1013, %1014 : vector<18x18xf32>
    %cst_42 = arith.constant 0.000000e+00 : f32
    %1016 = vector.broadcast %cst_42 : f32 to vector<18x18xf32>
    %1017 = arith.select %713, %1015, %1016 : vector<18x18xi1>, vector<18x18xf32>
    %cst_43 = arith.constant 0.000000e+00 : f32
    %1018 = vector.broadcast %cst_43 : f32 to vector<18x18xf32>
    %c146 = arith.constant 146 : index
    %1019 = memref.load %arg2[%c146] : memref<432xf32, #tpu.memory_space<smem>>
    %1020 = vector.broadcast %1019 : f32 to vector<18x18xf32>
    %1021 = arith.mulf %1020, %665 : vector<18x18xf32>
    %1022 = arith.addf %1018, %1021 : vector<18x18xf32>
    %c162 = arith.constant 162 : index
    %1023 = memref.load %arg2[%c162] : memref<432xf32, #tpu.memory_space<smem>>
    %1024 = vector.broadcast %1023 : f32 to vector<18x18xf32>
    %1025 = arith.mulf %1024, %666 : vector<18x18xf32>
    %1026 = arith.addf %1022, %1025 : vector<18x18xf32>
    %c178 = arith.constant 178 : index
    %1027 = memref.load %arg2[%c178] : memref<432xf32, #tpu.memory_space<smem>>
    %1028 = vector.broadcast %1027 : f32 to vector<18x18xf32>
    %1029 = arith.mulf %1028, %667 : vector<18x18xf32>
    %1030 = arith.addf %1026, %1029 : vector<18x18xf32>
    %c194 = arith.constant 194 : index
    %1031 = memref.load %arg2[%c194] : memref<432xf32, #tpu.memory_space<smem>>
    %1032 = vector.broadcast %1031 : f32 to vector<18x18xf32>
    %1033 = arith.mulf %1032, %668 : vector<18x18xf32>
    %1034 = arith.addf %1030, %1033 : vector<18x18xf32>
    %c210 = arith.constant 210 : index
    %1035 = memref.load %arg2[%c210] : memref<432xf32, #tpu.memory_space<smem>>
    %1036 = vector.broadcast %1035 : f32 to vector<18x18xf32>
    %1037 = arith.mulf %1036, %669 : vector<18x18xf32>
    %1038 = arith.addf %1034, %1037 : vector<18x18xf32>
    %c226 = arith.constant 226 : index
    %1039 = memref.load %arg2[%c226] : memref<432xf32, #tpu.memory_space<smem>>
    %1040 = vector.broadcast %1039 : f32 to vector<18x18xf32>
    %1041 = arith.mulf %1040, %670 : vector<18x18xf32>
    %1042 = arith.addf %1038, %1041 : vector<18x18xf32>
    %c242 = arith.constant 242 : index
    %1043 = memref.load %arg2[%c242] : memref<432xf32, #tpu.memory_space<smem>>
    %1044 = vector.broadcast %1043 : f32 to vector<18x18xf32>
    %1045 = arith.mulf %1044, %671 : vector<18x18xf32>
    %1046 = arith.addf %1042, %1045 : vector<18x18xf32>
    %c258 = arith.constant 258 : index
    %1047 = memref.load %arg2[%c258] : memref<432xf32, #tpu.memory_space<smem>>
    %1048 = vector.broadcast %1047 : f32 to vector<18x18xf32>
    %1049 = arith.mulf %1048, %672 : vector<18x18xf32>
    %1050 = arith.addf %1046, %1049 : vector<18x18xf32>
    %c274 = arith.constant 274 : index
    %1051 = memref.load %arg2[%c274] : memref<432xf32, #tpu.memory_space<smem>>
    %1052 = vector.broadcast %1051 : f32 to vector<18x18xf32>
    %1053 = arith.mulf %1052, %673 : vector<18x18xf32>
    %1054 = arith.addf %1050, %1053 : vector<18x18xf32>
    %c150 = arith.constant 150 : index
    %1055 = memref.load %arg2[%c150] : memref<432xf32, #tpu.memory_space<smem>>
    %1056 = vector.broadcast %1055 : f32 to vector<18x18xf32>
    %1057 = arith.mulf %1056, %674 : vector<18x18xf32>
    %1058 = arith.addf %1054, %1057 : vector<18x18xf32>
    %c166 = arith.constant 166 : index
    %1059 = memref.load %arg2[%c166] : memref<432xf32, #tpu.memory_space<smem>>
    %1060 = vector.broadcast %1059 : f32 to vector<18x18xf32>
    %1061 = arith.mulf %1060, %675 : vector<18x18xf32>
    %1062 = arith.addf %1058, %1061 : vector<18x18xf32>
    %c182 = arith.constant 182 : index
    %1063 = memref.load %arg2[%c182] : memref<432xf32, #tpu.memory_space<smem>>
    %1064 = vector.broadcast %1063 : f32 to vector<18x18xf32>
    %1065 = arith.mulf %1064, %676 : vector<18x18xf32>
    %1066 = arith.addf %1062, %1065 : vector<18x18xf32>
    %c198 = arith.constant 198 : index
    %1067 = memref.load %arg2[%c198] : memref<432xf32, #tpu.memory_space<smem>>
    %1068 = vector.broadcast %1067 : f32 to vector<18x18xf32>
    %1069 = arith.mulf %1068, %677 : vector<18x18xf32>
    %1070 = arith.addf %1066, %1069 : vector<18x18xf32>
    %c214 = arith.constant 214 : index
    %1071 = memref.load %arg2[%c214] : memref<432xf32, #tpu.memory_space<smem>>
    %1072 = vector.broadcast %1071 : f32 to vector<18x18xf32>
    %1073 = arith.mulf %1072, %678 : vector<18x18xf32>
    %1074 = arith.addf %1070, %1073 : vector<18x18xf32>
    %c230 = arith.constant 230 : index
    %1075 = memref.load %arg2[%c230] : memref<432xf32, #tpu.memory_space<smem>>
    %1076 = vector.broadcast %1075 : f32 to vector<18x18xf32>
    %1077 = arith.mulf %1076, %679 : vector<18x18xf32>
    %1078 = arith.addf %1074, %1077 : vector<18x18xf32>
    %c246 = arith.constant 246 : index
    %1079 = memref.load %arg2[%c246] : memref<432xf32, #tpu.memory_space<smem>>
    %1080 = vector.broadcast %1079 : f32 to vector<18x18xf32>
    %1081 = arith.mulf %1080, %680 : vector<18x18xf32>
    %1082 = arith.addf %1078, %1081 : vector<18x18xf32>
    %c262 = arith.constant 262 : index
    %1083 = memref.load %arg2[%c262] : memref<432xf32, #tpu.memory_space<smem>>
    %1084 = vector.broadcast %1083 : f32 to vector<18x18xf32>
    %1085 = arith.mulf %1084, %681 : vector<18x18xf32>
    %1086 = arith.addf %1082, %1085 : vector<18x18xf32>
    %c278 = arith.constant 278 : index
    %1087 = memref.load %arg2[%c278] : memref<432xf32, #tpu.memory_space<smem>>
    %1088 = vector.broadcast %1087 : f32 to vector<18x18xf32>
    %1089 = arith.mulf %1088, %682 : vector<18x18xf32>
    %1090 = arith.addf %1086, %1089 : vector<18x18xf32>
    %c154 = arith.constant 154 : index
    %1091 = memref.load %arg2[%c154] : memref<432xf32, #tpu.memory_space<smem>>
    %1092 = vector.broadcast %1091 : f32 to vector<18x18xf32>
    %1093 = arith.mulf %1092, %683 : vector<18x18xf32>
    %1094 = arith.addf %1090, %1093 : vector<18x18xf32>
    %c170 = arith.constant 170 : index
    %1095 = memref.load %arg2[%c170] : memref<432xf32, #tpu.memory_space<smem>>
    %1096 = vector.broadcast %1095 : f32 to vector<18x18xf32>
    %1097 = arith.mulf %1096, %684 : vector<18x18xf32>
    %1098 = arith.addf %1094, %1097 : vector<18x18xf32>
    %c186 = arith.constant 186 : index
    %1099 = memref.load %arg2[%c186] : memref<432xf32, #tpu.memory_space<smem>>
    %1100 = vector.broadcast %1099 : f32 to vector<18x18xf32>
    %1101 = arith.mulf %1100, %685 : vector<18x18xf32>
    %1102 = arith.addf %1098, %1101 : vector<18x18xf32>
    %c202 = arith.constant 202 : index
    %1103 = memref.load %arg2[%c202] : memref<432xf32, #tpu.memory_space<smem>>
    %1104 = vector.broadcast %1103 : f32 to vector<18x18xf32>
    %1105 = arith.mulf %1104, %686 : vector<18x18xf32>
    %1106 = arith.addf %1102, %1105 : vector<18x18xf32>
    %c218 = arith.constant 218 : index
    %1107 = memref.load %arg2[%c218] : memref<432xf32, #tpu.memory_space<smem>>
    %1108 = vector.broadcast %1107 : f32 to vector<18x18xf32>
    %1109 = arith.mulf %1108, %687 : vector<18x18xf32>
    %1110 = arith.addf %1106, %1109 : vector<18x18xf32>
    %c234 = arith.constant 234 : index
    %1111 = memref.load %arg2[%c234] : memref<432xf32, #tpu.memory_space<smem>>
    %1112 = vector.broadcast %1111 : f32 to vector<18x18xf32>
    %1113 = arith.mulf %1112, %688 : vector<18x18xf32>
    %1114 = arith.addf %1110, %1113 : vector<18x18xf32>
    %c250 = arith.constant 250 : index
    %1115 = memref.load %arg2[%c250] : memref<432xf32, #tpu.memory_space<smem>>
    %1116 = vector.broadcast %1115 : f32 to vector<18x18xf32>
    %1117 = arith.mulf %1116, %689 : vector<18x18xf32>
    %1118 = arith.addf %1114, %1117 : vector<18x18xf32>
    %c266 = arith.constant 266 : index
    %1119 = memref.load %arg2[%c266] : memref<432xf32, #tpu.memory_space<smem>>
    %1120 = vector.broadcast %1119 : f32 to vector<18x18xf32>
    %1121 = arith.mulf %1120, %690 : vector<18x18xf32>
    %1122 = arith.addf %1118, %1121 : vector<18x18xf32>
    %c282 = arith.constant 282 : index
    %1123 = memref.load %arg2[%c282] : memref<432xf32, #tpu.memory_space<smem>>
    %1124 = vector.broadcast %1123 : f32 to vector<18x18xf32>
    %1125 = arith.mulf %1124, %691 : vector<18x18xf32>
    %1126 = arith.addf %1122, %1125 : vector<18x18xf32>
    %c158 = arith.constant 158 : index
    %1127 = memref.load %arg2[%c158] : memref<432xf32, #tpu.memory_space<smem>>
    %1128 = vector.broadcast %1127 : f32 to vector<18x18xf32>
    %1129 = arith.mulf %1128, %692 : vector<18x18xf32>
    %1130 = arith.addf %1126, %1129 : vector<18x18xf32>
    %c174 = arith.constant 174 : index
    %1131 = memref.load %arg2[%c174] : memref<432xf32, #tpu.memory_space<smem>>
    %1132 = vector.broadcast %1131 : f32 to vector<18x18xf32>
    %1133 = arith.mulf %1132, %693 : vector<18x18xf32>
    %1134 = arith.addf %1130, %1133 : vector<18x18xf32>
    %c190 = arith.constant 190 : index
    %1135 = memref.load %arg2[%c190] : memref<432xf32, #tpu.memory_space<smem>>
    %1136 = vector.broadcast %1135 : f32 to vector<18x18xf32>
    %1137 = arith.mulf %1136, %694 : vector<18x18xf32>
    %1138 = arith.addf %1134, %1137 : vector<18x18xf32>
    %c206 = arith.constant 206 : index
    %1139 = memref.load %arg2[%c206] : memref<432xf32, #tpu.memory_space<smem>>
    %1140 = vector.broadcast %1139 : f32 to vector<18x18xf32>
    %1141 = arith.mulf %1140, %695 : vector<18x18xf32>
    %1142 = arith.addf %1138, %1141 : vector<18x18xf32>
    %c222 = arith.constant 222 : index
    %1143 = memref.load %arg2[%c222] : memref<432xf32, #tpu.memory_space<smem>>
    %1144 = vector.broadcast %1143 : f32 to vector<18x18xf32>
    %1145 = arith.mulf %1144, %696 : vector<18x18xf32>
    %1146 = arith.addf %1142, %1145 : vector<18x18xf32>
    %c238 = arith.constant 238 : index
    %1147 = memref.load %arg2[%c238] : memref<432xf32, #tpu.memory_space<smem>>
    %1148 = vector.broadcast %1147 : f32 to vector<18x18xf32>
    %1149 = arith.mulf %1148, %697 : vector<18x18xf32>
    %1150 = arith.addf %1146, %1149 : vector<18x18xf32>
    %c254 = arith.constant 254 : index
    %1151 = memref.load %arg2[%c254] : memref<432xf32, #tpu.memory_space<smem>>
    %1152 = vector.broadcast %1151 : f32 to vector<18x18xf32>
    %1153 = arith.mulf %1152, %698 : vector<18x18xf32>
    %1154 = arith.addf %1150, %1153 : vector<18x18xf32>
    %c270 = arith.constant 270 : index
    %1155 = memref.load %arg2[%c270] : memref<432xf32, #tpu.memory_space<smem>>
    %1156 = vector.broadcast %1155 : f32 to vector<18x18xf32>
    %1157 = arith.mulf %1156, %699 : vector<18x18xf32>
    %1158 = arith.addf %1154, %1157 : vector<18x18xf32>
    %c286 = arith.constant 286 : index
    %1159 = memref.load %arg2[%c286] : memref<432xf32, #tpu.memory_space<smem>>
    %1160 = vector.broadcast %1159 : f32 to vector<18x18xf32>
    %1161 = arith.mulf %1160, %700 : vector<18x18xf32>
    %1162 = arith.addf %1158, %1161 : vector<18x18xf32>
    %c6_44 = arith.constant 6 : index
    %1163 = memref.load %arg3[%c6_44] : memref<12xf32, #tpu.memory_space<smem>>
    %1164 = vector.broadcast %1163 : f32 to vector<18x18xf32>
    %1165 = arith.addf %1162, %1164 : vector<18x18xf32>
    %cst_45 = arith.constant 0.000000e+00 : f32
    %1166 = vector.broadcast %cst_45 : f32 to vector<18x18xf32>
    %1167 = arith.maximumf %1165, %1166 : vector<18x18xf32>
    %cst_46 = arith.constant 0.000000e+00 : f32
    %1168 = vector.broadcast %cst_46 : f32 to vector<18x18xf32>
    %1169 = arith.select %713, %1167, %1168 : vector<18x18xi1>, vector<18x18xf32>
    %cst_47 = arith.constant 0.000000e+00 : f32
    %1170 = vector.broadcast %cst_47 : f32 to vector<18x18xf32>
    %c147 = arith.constant 147 : index
    %1171 = memref.load %arg2[%c147] : memref<432xf32, #tpu.memory_space<smem>>
    %1172 = vector.broadcast %1171 : f32 to vector<18x18xf32>
    %1173 = arith.mulf %1172, %665 : vector<18x18xf32>
    %1174 = arith.addf %1170, %1173 : vector<18x18xf32>
    %c163 = arith.constant 163 : index
    %1175 = memref.load %arg2[%c163] : memref<432xf32, #tpu.memory_space<smem>>
    %1176 = vector.broadcast %1175 : f32 to vector<18x18xf32>
    %1177 = arith.mulf %1176, %666 : vector<18x18xf32>
    %1178 = arith.addf %1174, %1177 : vector<18x18xf32>
    %c179 = arith.constant 179 : index
    %1179 = memref.load %arg2[%c179] : memref<432xf32, #tpu.memory_space<smem>>
    %1180 = vector.broadcast %1179 : f32 to vector<18x18xf32>
    %1181 = arith.mulf %1180, %667 : vector<18x18xf32>
    %1182 = arith.addf %1178, %1181 : vector<18x18xf32>
    %c195 = arith.constant 195 : index
    %1183 = memref.load %arg2[%c195] : memref<432xf32, #tpu.memory_space<smem>>
    %1184 = vector.broadcast %1183 : f32 to vector<18x18xf32>
    %1185 = arith.mulf %1184, %668 : vector<18x18xf32>
    %1186 = arith.addf %1182, %1185 : vector<18x18xf32>
    %c211 = arith.constant 211 : index
    %1187 = memref.load %arg2[%c211] : memref<432xf32, #tpu.memory_space<smem>>
    %1188 = vector.broadcast %1187 : f32 to vector<18x18xf32>
    %1189 = arith.mulf %1188, %669 : vector<18x18xf32>
    %1190 = arith.addf %1186, %1189 : vector<18x18xf32>
    %c227 = arith.constant 227 : index
    %1191 = memref.load %arg2[%c227] : memref<432xf32, #tpu.memory_space<smem>>
    %1192 = vector.broadcast %1191 : f32 to vector<18x18xf32>
    %1193 = arith.mulf %1192, %670 : vector<18x18xf32>
    %1194 = arith.addf %1190, %1193 : vector<18x18xf32>
    %c243 = arith.constant 243 : index
    %1195 = memref.load %arg2[%c243] : memref<432xf32, #tpu.memory_space<smem>>
    %1196 = vector.broadcast %1195 : f32 to vector<18x18xf32>
    %1197 = arith.mulf %1196, %671 : vector<18x18xf32>
    %1198 = arith.addf %1194, %1197 : vector<18x18xf32>
    %c259 = arith.constant 259 : index
    %1199 = memref.load %arg2[%c259] : memref<432xf32, #tpu.memory_space<smem>>
    %1200 = vector.broadcast %1199 : f32 to vector<18x18xf32>
    %1201 = arith.mulf %1200, %672 : vector<18x18xf32>
    %1202 = arith.addf %1198, %1201 : vector<18x18xf32>
    %c275 = arith.constant 275 : index
    %1203 = memref.load %arg2[%c275] : memref<432xf32, #tpu.memory_space<smem>>
    %1204 = vector.broadcast %1203 : f32 to vector<18x18xf32>
    %1205 = arith.mulf %1204, %673 : vector<18x18xf32>
    %1206 = arith.addf %1202, %1205 : vector<18x18xf32>
    %c151 = arith.constant 151 : index
    %1207 = memref.load %arg2[%c151] : memref<432xf32, #tpu.memory_space<smem>>
    %1208 = vector.broadcast %1207 : f32 to vector<18x18xf32>
    %1209 = arith.mulf %1208, %674 : vector<18x18xf32>
    %1210 = arith.addf %1206, %1209 : vector<18x18xf32>
    %c167 = arith.constant 167 : index
    %1211 = memref.load %arg2[%c167] : memref<432xf32, #tpu.memory_space<smem>>
    %1212 = vector.broadcast %1211 : f32 to vector<18x18xf32>
    %1213 = arith.mulf %1212, %675 : vector<18x18xf32>
    %1214 = arith.addf %1210, %1213 : vector<18x18xf32>
    %c183 = arith.constant 183 : index
    %1215 = memref.load %arg2[%c183] : memref<432xf32, #tpu.memory_space<smem>>
    %1216 = vector.broadcast %1215 : f32 to vector<18x18xf32>
    %1217 = arith.mulf %1216, %676 : vector<18x18xf32>
    %1218 = arith.addf %1214, %1217 : vector<18x18xf32>
    %c199 = arith.constant 199 : index
    %1219 = memref.load %arg2[%c199] : memref<432xf32, #tpu.memory_space<smem>>
    %1220 = vector.broadcast %1219 : f32 to vector<18x18xf32>
    %1221 = arith.mulf %1220, %677 : vector<18x18xf32>
    %1222 = arith.addf %1218, %1221 : vector<18x18xf32>
    %c215 = arith.constant 215 : index
    %1223 = memref.load %arg2[%c215] : memref<432xf32, #tpu.memory_space<smem>>
    %1224 = vector.broadcast %1223 : f32 to vector<18x18xf32>
    %1225 = arith.mulf %1224, %678 : vector<18x18xf32>
    %1226 = arith.addf %1222, %1225 : vector<18x18xf32>
    %c231 = arith.constant 231 : index
    %1227 = memref.load %arg2[%c231] : memref<432xf32, #tpu.memory_space<smem>>
    %1228 = vector.broadcast %1227 : f32 to vector<18x18xf32>
    %1229 = arith.mulf %1228, %679 : vector<18x18xf32>
    %1230 = arith.addf %1226, %1229 : vector<18x18xf32>
    %c247 = arith.constant 247 : index
    %1231 = memref.load %arg2[%c247] : memref<432xf32, #tpu.memory_space<smem>>
    %1232 = vector.broadcast %1231 : f32 to vector<18x18xf32>
    %1233 = arith.mulf %1232, %680 : vector<18x18xf32>
    %1234 = arith.addf %1230, %1233 : vector<18x18xf32>
    %c263 = arith.constant 263 : index
    %1235 = memref.load %arg2[%c263] : memref<432xf32, #tpu.memory_space<smem>>
    %1236 = vector.broadcast %1235 : f32 to vector<18x18xf32>
    %1237 = arith.mulf %1236, %681 : vector<18x18xf32>
    %1238 = arith.addf %1234, %1237 : vector<18x18xf32>
    %c279 = arith.constant 279 : index
    %1239 = memref.load %arg2[%c279] : memref<432xf32, #tpu.memory_space<smem>>
    %1240 = vector.broadcast %1239 : f32 to vector<18x18xf32>
    %1241 = arith.mulf %1240, %682 : vector<18x18xf32>
    %1242 = arith.addf %1238, %1241 : vector<18x18xf32>
    %c155 = arith.constant 155 : index
    %1243 = memref.load %arg2[%c155] : memref<432xf32, #tpu.memory_space<smem>>
    %1244 = vector.broadcast %1243 : f32 to vector<18x18xf32>
    %1245 = arith.mulf %1244, %683 : vector<18x18xf32>
    %1246 = arith.addf %1242, %1245 : vector<18x18xf32>
    %c171 = arith.constant 171 : index
    %1247 = memref.load %arg2[%c171] : memref<432xf32, #tpu.memory_space<smem>>
    %1248 = vector.broadcast %1247 : f32 to vector<18x18xf32>
    %1249 = arith.mulf %1248, %684 : vector<18x18xf32>
    %1250 = arith.addf %1246, %1249 : vector<18x18xf32>
    %c187 = arith.constant 187 : index
    %1251 = memref.load %arg2[%c187] : memref<432xf32, #tpu.memory_space<smem>>
    %1252 = vector.broadcast %1251 : f32 to vector<18x18xf32>
    %1253 = arith.mulf %1252, %685 : vector<18x18xf32>
    %1254 = arith.addf %1250, %1253 : vector<18x18xf32>
    %c203 = arith.constant 203 : index
    %1255 = memref.load %arg2[%c203] : memref<432xf32, #tpu.memory_space<smem>>
    %1256 = vector.broadcast %1255 : f32 to vector<18x18xf32>
    %1257 = arith.mulf %1256, %686 : vector<18x18xf32>
    %1258 = arith.addf %1254, %1257 : vector<18x18xf32>
    %c219 = arith.constant 219 : index
    %1259 = memref.load %arg2[%c219] : memref<432xf32, #tpu.memory_space<smem>>
    %1260 = vector.broadcast %1259 : f32 to vector<18x18xf32>
    %1261 = arith.mulf %1260, %687 : vector<18x18xf32>
    %1262 = arith.addf %1258, %1261 : vector<18x18xf32>
    %c235 = arith.constant 235 : index
    %1263 = memref.load %arg2[%c235] : memref<432xf32, #tpu.memory_space<smem>>
    %1264 = vector.broadcast %1263 : f32 to vector<18x18xf32>
    %1265 = arith.mulf %1264, %688 : vector<18x18xf32>
    %1266 = arith.addf %1262, %1265 : vector<18x18xf32>
    %c251 = arith.constant 251 : index
    %1267 = memref.load %arg2[%c251] : memref<432xf32, #tpu.memory_space<smem>>
    %1268 = vector.broadcast %1267 : f32 to vector<18x18xf32>
    %1269 = arith.mulf %1268, %689 : vector<18x18xf32>
    %1270 = arith.addf %1266, %1269 : vector<18x18xf32>
    %c267 = arith.constant 267 : index
    %1271 = memref.load %arg2[%c267] : memref<432xf32, #tpu.memory_space<smem>>
    %1272 = vector.broadcast %1271 : f32 to vector<18x18xf32>
    %1273 = arith.mulf %1272, %690 : vector<18x18xf32>
    %1274 = arith.addf %1270, %1273 : vector<18x18xf32>
    %c283 = arith.constant 283 : index
    %1275 = memref.load %arg2[%c283] : memref<432xf32, #tpu.memory_space<smem>>
    %1276 = vector.broadcast %1275 : f32 to vector<18x18xf32>
    %1277 = arith.mulf %1276, %691 : vector<18x18xf32>
    %1278 = arith.addf %1274, %1277 : vector<18x18xf32>
    %c159 = arith.constant 159 : index
    %1279 = memref.load %arg2[%c159] : memref<432xf32, #tpu.memory_space<smem>>
    %1280 = vector.broadcast %1279 : f32 to vector<18x18xf32>
    %1281 = arith.mulf %1280, %692 : vector<18x18xf32>
    %1282 = arith.addf %1278, %1281 : vector<18x18xf32>
    %c175 = arith.constant 175 : index
    %1283 = memref.load %arg2[%c175] : memref<432xf32, #tpu.memory_space<smem>>
    %1284 = vector.broadcast %1283 : f32 to vector<18x18xf32>
    %1285 = arith.mulf %1284, %693 : vector<18x18xf32>
    %1286 = arith.addf %1282, %1285 : vector<18x18xf32>
    %c191 = arith.constant 191 : index
    %1287 = memref.load %arg2[%c191] : memref<432xf32, #tpu.memory_space<smem>>
    %1288 = vector.broadcast %1287 : f32 to vector<18x18xf32>
    %1289 = arith.mulf %1288, %694 : vector<18x18xf32>
    %1290 = arith.addf %1286, %1289 : vector<18x18xf32>
    %c207 = arith.constant 207 : index
    %1291 = memref.load %arg2[%c207] : memref<432xf32, #tpu.memory_space<smem>>
    %1292 = vector.broadcast %1291 : f32 to vector<18x18xf32>
    %1293 = arith.mulf %1292, %695 : vector<18x18xf32>
    %1294 = arith.addf %1290, %1293 : vector<18x18xf32>
    %c223 = arith.constant 223 : index
    %1295 = memref.load %arg2[%c223] : memref<432xf32, #tpu.memory_space<smem>>
    %1296 = vector.broadcast %1295 : f32 to vector<18x18xf32>
    %1297 = arith.mulf %1296, %696 : vector<18x18xf32>
    %1298 = arith.addf %1294, %1297 : vector<18x18xf32>
    %c239 = arith.constant 239 : index
    %1299 = memref.load %arg2[%c239] : memref<432xf32, #tpu.memory_space<smem>>
    %1300 = vector.broadcast %1299 : f32 to vector<18x18xf32>
    %1301 = arith.mulf %1300, %697 : vector<18x18xf32>
    %1302 = arith.addf %1298, %1301 : vector<18x18xf32>
    %c255 = arith.constant 255 : index
    %1303 = memref.load %arg2[%c255] : memref<432xf32, #tpu.memory_space<smem>>
    %1304 = vector.broadcast %1303 : f32 to vector<18x18xf32>
    %1305 = arith.mulf %1304, %698 : vector<18x18xf32>
    %1306 = arith.addf %1302, %1305 : vector<18x18xf32>
    %c271 = arith.constant 271 : index
    %1307 = memref.load %arg2[%c271] : memref<432xf32, #tpu.memory_space<smem>>
    %1308 = vector.broadcast %1307 : f32 to vector<18x18xf32>
    %1309 = arith.mulf %1308, %699 : vector<18x18xf32>
    %1310 = arith.addf %1306, %1309 : vector<18x18xf32>
    %c287 = arith.constant 287 : index
    %1311 = memref.load %arg2[%c287] : memref<432xf32, #tpu.memory_space<smem>>
    %1312 = vector.broadcast %1311 : f32 to vector<18x18xf32>
    %1313 = arith.mulf %1312, %700 : vector<18x18xf32>
    %1314 = arith.addf %1310, %1313 : vector<18x18xf32>
    %c7_48 = arith.constant 7 : index
    %1315 = memref.load %arg3[%c7_48] : memref<12xf32, #tpu.memory_space<smem>>
    %1316 = vector.broadcast %1315 : f32 to vector<18x18xf32>
    %1317 = arith.addf %1314, %1316 : vector<18x18xf32>
    %cst_49 = arith.constant 0.000000e+00 : f32
    %1318 = vector.broadcast %cst_49 : f32 to vector<18x18xf32>
    %1319 = arith.maximumf %1317, %1318 : vector<18x18xf32>
    %cst_50 = arith.constant 0.000000e+00 : f32
    %1320 = vector.broadcast %cst_50 : f32 to vector<18x18xf32>
    %1321 = arith.select %713, %1319, %1320 : vector<18x18xi1>, vector<18x18xf32>
    %1322 = vector.extract_strided_slice %865 {offsets = [0, 0], sizes = [16, 16], strides = [1, 1]} : vector<18x18xf32> to vector<16x16xf32>
    %1323 = vector.extract_strided_slice %865 {offsets = [0, 1], sizes = [16, 16], strides = [1, 1]} : vector<18x18xf32> to vector<16x16xf32>
    %1324 = vector.extract_strided_slice %865 {offsets = [0, 2], sizes = [16, 16], strides = [1, 1]} : vector<18x18xf32> to vector<16x16xf32>
    %1325 = vector.extract_strided_slice %865 {offsets = [1, 0], sizes = [16, 16], strides = [1, 1]} : vector<18x18xf32> to vector<16x16xf32>
    %1326 = vector.extract_strided_slice %865 {offsets = [1, 1], sizes = [16, 16], strides = [1, 1]} : vector<18x18xf32> to vector<16x16xf32>
    %1327 = vector.extract_strided_slice %865 {offsets = [1, 2], sizes = [16, 16], strides = [1, 1]} : vector<18x18xf32> to vector<16x16xf32>
    %1328 = vector.extract_strided_slice %865 {offsets = [2, 0], sizes = [16, 16], strides = [1, 1]} : vector<18x18xf32> to vector<16x16xf32>
    %1329 = vector.extract_strided_slice %865 {offsets = [2, 1], sizes = [16, 16], strides = [1, 1]} : vector<18x18xf32> to vector<16x16xf32>
    %1330 = vector.extract_strided_slice %865 {offsets = [2, 2], sizes = [16, 16], strides = [1, 1]} : vector<18x18xf32> to vector<16x16xf32>
    %1331 = vector.extract_strided_slice %1017 {offsets = [0, 0], sizes = [16, 16], strides = [1, 1]} : vector<18x18xf32> to vector<16x16xf32>
    %1332 = vector.extract_strided_slice %1017 {offsets = [0, 1], sizes = [16, 16], strides = [1, 1]} : vector<18x18xf32> to vector<16x16xf32>
    %1333 = vector.extract_strided_slice %1017 {offsets = [0, 2], sizes = [16, 16], strides = [1, 1]} : vector<18x18xf32> to vector<16x16xf32>
    %1334 = vector.extract_strided_slice %1017 {offsets = [1, 0], sizes = [16, 16], strides = [1, 1]} : vector<18x18xf32> to vector<16x16xf32>
    %1335 = vector.extract_strided_slice %1017 {offsets = [1, 1], sizes = [16, 16], strides = [1, 1]} : vector<18x18xf32> to vector<16x16xf32>
    %1336 = vector.extract_strided_slice %1017 {offsets = [1, 2], sizes = [16, 16], strides = [1, 1]} : vector<18x18xf32> to vector<16x16xf32>
    %1337 = vector.extract_strided_slice %1017 {offsets = [2, 0], sizes = [16, 16], strides = [1, 1]} : vector<18x18xf32> to vector<16x16xf32>
    %1338 = vector.extract_strided_slice %1017 {offsets = [2, 1], sizes = [16, 16], strides = [1, 1]} : vector<18x18xf32> to vector<16x16xf32>
    %1339 = vector.extract_strided_slice %1017 {offsets = [2, 2], sizes = [16, 16], strides = [1, 1]} : vector<18x18xf32> to vector<16x16xf32>
    %1340 = vector.extract_strided_slice %1169 {offsets = [0, 0], sizes = [16, 16], strides = [1, 1]} : vector<18x18xf32> to vector<16x16xf32>
    %1341 = vector.extract_strided_slice %1169 {offsets = [0, 1], sizes = [16, 16], strides = [1, 1]} : vector<18x18xf32> to vector<16x16xf32>
    %1342 = vector.extract_strided_slice %1169 {offsets = [0, 2], sizes = [16, 16], strides = [1, 1]} : vector<18x18xf32> to vector<16x16xf32>
    %1343 = vector.extract_strided_slice %1169 {offsets = [1, 0], sizes = [16, 16], strides = [1, 1]} : vector<18x18xf32> to vector<16x16xf32>
    %1344 = vector.extract_strided_slice %1169 {offsets = [1, 1], sizes = [16, 16], strides = [1, 1]} : vector<18x18xf32> to vector<16x16xf32>
    %1345 = vector.extract_strided_slice %1169 {offsets = [1, 2], sizes = [16, 16], strides = [1, 1]} : vector<18x18xf32> to vector<16x16xf32>
    %1346 = vector.extract_strided_slice %1169 {offsets = [2, 0], sizes = [16, 16], strides = [1, 1]} : vector<18x18xf32> to vector<16x16xf32>
    %1347 = vector.extract_strided_slice %1169 {offsets = [2, 1], sizes = [16, 16], strides = [1, 1]} : vector<18x18xf32> to vector<16x16xf32>
    %1348 = vector.extract_strided_slice %1169 {offsets = [2, 2], sizes = [16, 16], strides = [1, 1]} : vector<18x18xf32> to vector<16x16xf32>
    %1349 = vector.extract_strided_slice %1321 {offsets = [0, 0], sizes = [16, 16], strides = [1, 1]} : vector<18x18xf32> to vector<16x16xf32>
    %1350 = vector.extract_strided_slice %1321 {offsets = [0, 1], sizes = [16, 16], strides = [1, 1]} : vector<18x18xf32> to vector<16x16xf32>
    %1351 = vector.extract_strided_slice %1321 {offsets = [0, 2], sizes = [16, 16], strides = [1, 1]} : vector<18x18xf32> to vector<16x16xf32>
    %1352 = vector.extract_strided_slice %1321 {offsets = [1, 0], sizes = [16, 16], strides = [1, 1]} : vector<18x18xf32> to vector<16x16xf32>
    %1353 = vector.extract_strided_slice %1321 {offsets = [1, 1], sizes = [16, 16], strides = [1, 1]} : vector<18x18xf32> to vector<16x16xf32>
    %1354 = vector.extract_strided_slice %1321 {offsets = [1, 2], sizes = [16, 16], strides = [1, 1]} : vector<18x18xf32> to vector<16x16xf32>
    %1355 = vector.extract_strided_slice %1321 {offsets = [2, 0], sizes = [16, 16], strides = [1, 1]} : vector<18x18xf32> to vector<16x16xf32>
    %1356 = vector.extract_strided_slice %1321 {offsets = [2, 1], sizes = [16, 16], strides = [1, 1]} : vector<18x18xf32> to vector<16x16xf32>
    %1357 = vector.extract_strided_slice %1321 {offsets = [2, 2], sizes = [16, 16], strides = [1, 1]} : vector<18x18xf32> to vector<16x16xf32>
    %cst_51 = arith.constant 0.000000e+00 : f32
    %1358 = vector.broadcast %cst_51 : f32 to vector<16x16xf32>
    %c288 = arith.constant 288 : index
    %1359 = memref.load %arg2[%c288] : memref<432xf32, #tpu.memory_space<smem>>
    %1360 = vector.broadcast %1359 : f32 to vector<16x16xf32>
    %1361 = arith.mulf %1360, %1322 : vector<16x16xf32>
    %1362 = arith.addf %1358, %1361 : vector<16x16xf32>
    %c304 = arith.constant 304 : index
    %1363 = memref.load %arg2[%c304] : memref<432xf32, #tpu.memory_space<smem>>
    %1364 = vector.broadcast %1363 : f32 to vector<16x16xf32>
    %1365 = arith.mulf %1364, %1323 : vector<16x16xf32>
    %1366 = arith.addf %1362, %1365 : vector<16x16xf32>
    %c320 = arith.constant 320 : index
    %1367 = memref.load %arg2[%c320] : memref<432xf32, #tpu.memory_space<smem>>
    %1368 = vector.broadcast %1367 : f32 to vector<16x16xf32>
    %1369 = arith.mulf %1368, %1324 : vector<16x16xf32>
    %1370 = arith.addf %1366, %1369 : vector<16x16xf32>
    %c336 = arith.constant 336 : index
    %1371 = memref.load %arg2[%c336] : memref<432xf32, #tpu.memory_space<smem>>
    %1372 = vector.broadcast %1371 : f32 to vector<16x16xf32>
    %1373 = arith.mulf %1372, %1325 : vector<16x16xf32>
    %1374 = arith.addf %1370, %1373 : vector<16x16xf32>
    %c352 = arith.constant 352 : index
    %1375 = memref.load %arg2[%c352] : memref<432xf32, #tpu.memory_space<smem>>
    %1376 = vector.broadcast %1375 : f32 to vector<16x16xf32>
    %1377 = arith.mulf %1376, %1326 : vector<16x16xf32>
    %1378 = arith.addf %1374, %1377 : vector<16x16xf32>
    %c368 = arith.constant 368 : index
    %1379 = memref.load %arg2[%c368] : memref<432xf32, #tpu.memory_space<smem>>
    %1380 = vector.broadcast %1379 : f32 to vector<16x16xf32>
    %1381 = arith.mulf %1380, %1327 : vector<16x16xf32>
    %1382 = arith.addf %1378, %1381 : vector<16x16xf32>
    %c384 = arith.constant 384 : index
    %1383 = memref.load %arg2[%c384] : memref<432xf32, #tpu.memory_space<smem>>
    %1384 = vector.broadcast %1383 : f32 to vector<16x16xf32>
    %1385 = arith.mulf %1384, %1328 : vector<16x16xf32>
    %1386 = arith.addf %1382, %1385 : vector<16x16xf32>
    %c400 = arith.constant 400 : index
    %1387 = memref.load %arg2[%c400] : memref<432xf32, #tpu.memory_space<smem>>
    %1388 = vector.broadcast %1387 : f32 to vector<16x16xf32>
    %1389 = arith.mulf %1388, %1329 : vector<16x16xf32>
    %1390 = arith.addf %1386, %1389 : vector<16x16xf32>
    %c416 = arith.constant 416 : index
    %1391 = memref.load %arg2[%c416] : memref<432xf32, #tpu.memory_space<smem>>
    %1392 = vector.broadcast %1391 : f32 to vector<16x16xf32>
    %1393 = arith.mulf %1392, %1330 : vector<16x16xf32>
    %1394 = arith.addf %1390, %1393 : vector<16x16xf32>
    %c292 = arith.constant 292 : index
    %1395 = memref.load %arg2[%c292] : memref<432xf32, #tpu.memory_space<smem>>
    %1396 = vector.broadcast %1395 : f32 to vector<16x16xf32>
    %1397 = arith.mulf %1396, %1331 : vector<16x16xf32>
    %1398 = arith.addf %1394, %1397 : vector<16x16xf32>
    %c308 = arith.constant 308 : index
    %1399 = memref.load %arg2[%c308] : memref<432xf32, #tpu.memory_space<smem>>
    %1400 = vector.broadcast %1399 : f32 to vector<16x16xf32>
    %1401 = arith.mulf %1400, %1332 : vector<16x16xf32>
    %1402 = arith.addf %1398, %1401 : vector<16x16xf32>
    %c324 = arith.constant 324 : index
    %1403 = memref.load %arg2[%c324] : memref<432xf32, #tpu.memory_space<smem>>
    %1404 = vector.broadcast %1403 : f32 to vector<16x16xf32>
    %1405 = arith.mulf %1404, %1333 : vector<16x16xf32>
    %1406 = arith.addf %1402, %1405 : vector<16x16xf32>
    %c340 = arith.constant 340 : index
    %1407 = memref.load %arg2[%c340] : memref<432xf32, #tpu.memory_space<smem>>
    %1408 = vector.broadcast %1407 : f32 to vector<16x16xf32>
    %1409 = arith.mulf %1408, %1334 : vector<16x16xf32>
    %1410 = arith.addf %1406, %1409 : vector<16x16xf32>
    %c356 = arith.constant 356 : index
    %1411 = memref.load %arg2[%c356] : memref<432xf32, #tpu.memory_space<smem>>
    %1412 = vector.broadcast %1411 : f32 to vector<16x16xf32>
    %1413 = arith.mulf %1412, %1335 : vector<16x16xf32>
    %1414 = arith.addf %1410, %1413 : vector<16x16xf32>
    %c372 = arith.constant 372 : index
    %1415 = memref.load %arg2[%c372] : memref<432xf32, #tpu.memory_space<smem>>
    %1416 = vector.broadcast %1415 : f32 to vector<16x16xf32>
    %1417 = arith.mulf %1416, %1336 : vector<16x16xf32>
    %1418 = arith.addf %1414, %1417 : vector<16x16xf32>
    %c388 = arith.constant 388 : index
    %1419 = memref.load %arg2[%c388] : memref<432xf32, #tpu.memory_space<smem>>
    %1420 = vector.broadcast %1419 : f32 to vector<16x16xf32>
    %1421 = arith.mulf %1420, %1337 : vector<16x16xf32>
    %1422 = arith.addf %1418, %1421 : vector<16x16xf32>
    %c404 = arith.constant 404 : index
    %1423 = memref.load %arg2[%c404] : memref<432xf32, #tpu.memory_space<smem>>
    %1424 = vector.broadcast %1423 : f32 to vector<16x16xf32>
    %1425 = arith.mulf %1424, %1338 : vector<16x16xf32>
    %1426 = arith.addf %1422, %1425 : vector<16x16xf32>
    %c420 = arith.constant 420 : index
    %1427 = memref.load %arg2[%c420] : memref<432xf32, #tpu.memory_space<smem>>
    %1428 = vector.broadcast %1427 : f32 to vector<16x16xf32>
    %1429 = arith.mulf %1428, %1339 : vector<16x16xf32>
    %1430 = arith.addf %1426, %1429 : vector<16x16xf32>
    %c296 = arith.constant 296 : index
    %1431 = memref.load %arg2[%c296] : memref<432xf32, #tpu.memory_space<smem>>
    %1432 = vector.broadcast %1431 : f32 to vector<16x16xf32>
    %1433 = arith.mulf %1432, %1340 : vector<16x16xf32>
    %1434 = arith.addf %1430, %1433 : vector<16x16xf32>
    %c312 = arith.constant 312 : index
    %1435 = memref.load %arg2[%c312] : memref<432xf32, #tpu.memory_space<smem>>
    %1436 = vector.broadcast %1435 : f32 to vector<16x16xf32>
    %1437 = arith.mulf %1436, %1341 : vector<16x16xf32>
    %1438 = arith.addf %1434, %1437 : vector<16x16xf32>
    %c328 = arith.constant 328 : index
    %1439 = memref.load %arg2[%c328] : memref<432xf32, #tpu.memory_space<smem>>
    %1440 = vector.broadcast %1439 : f32 to vector<16x16xf32>
    %1441 = arith.mulf %1440, %1342 : vector<16x16xf32>
    %1442 = arith.addf %1438, %1441 : vector<16x16xf32>
    %c344 = arith.constant 344 : index
    %1443 = memref.load %arg2[%c344] : memref<432xf32, #tpu.memory_space<smem>>
    %1444 = vector.broadcast %1443 : f32 to vector<16x16xf32>
    %1445 = arith.mulf %1444, %1343 : vector<16x16xf32>
    %1446 = arith.addf %1442, %1445 : vector<16x16xf32>
    %c360 = arith.constant 360 : index
    %1447 = memref.load %arg2[%c360] : memref<432xf32, #tpu.memory_space<smem>>
    %1448 = vector.broadcast %1447 : f32 to vector<16x16xf32>
    %1449 = arith.mulf %1448, %1344 : vector<16x16xf32>
    %1450 = arith.addf %1446, %1449 : vector<16x16xf32>
    %c376 = arith.constant 376 : index
    %1451 = memref.load %arg2[%c376] : memref<432xf32, #tpu.memory_space<smem>>
    %1452 = vector.broadcast %1451 : f32 to vector<16x16xf32>
    %1453 = arith.mulf %1452, %1345 : vector<16x16xf32>
    %1454 = arith.addf %1450, %1453 : vector<16x16xf32>
    %c392 = arith.constant 392 : index
    %1455 = memref.load %arg2[%c392] : memref<432xf32, #tpu.memory_space<smem>>
    %1456 = vector.broadcast %1455 : f32 to vector<16x16xf32>
    %1457 = arith.mulf %1456, %1346 : vector<16x16xf32>
    %1458 = arith.addf %1454, %1457 : vector<16x16xf32>
    %c408 = arith.constant 408 : index
    %1459 = memref.load %arg2[%c408] : memref<432xf32, #tpu.memory_space<smem>>
    %1460 = vector.broadcast %1459 : f32 to vector<16x16xf32>
    %1461 = arith.mulf %1460, %1347 : vector<16x16xf32>
    %1462 = arith.addf %1458, %1461 : vector<16x16xf32>
    %c424 = arith.constant 424 : index
    %1463 = memref.load %arg2[%c424] : memref<432xf32, #tpu.memory_space<smem>>
    %1464 = vector.broadcast %1463 : f32 to vector<16x16xf32>
    %1465 = arith.mulf %1464, %1348 : vector<16x16xf32>
    %1466 = arith.addf %1462, %1465 : vector<16x16xf32>
    %c300 = arith.constant 300 : index
    %1467 = memref.load %arg2[%c300] : memref<432xf32, #tpu.memory_space<smem>>
    %1468 = vector.broadcast %1467 : f32 to vector<16x16xf32>
    %1469 = arith.mulf %1468, %1349 : vector<16x16xf32>
    %1470 = arith.addf %1466, %1469 : vector<16x16xf32>
    %c316 = arith.constant 316 : index
    %1471 = memref.load %arg2[%c316] : memref<432xf32, #tpu.memory_space<smem>>
    %1472 = vector.broadcast %1471 : f32 to vector<16x16xf32>
    %1473 = arith.mulf %1472, %1350 : vector<16x16xf32>
    %1474 = arith.addf %1470, %1473 : vector<16x16xf32>
    %c332 = arith.constant 332 : index
    %1475 = memref.load %arg2[%c332] : memref<432xf32, #tpu.memory_space<smem>>
    %1476 = vector.broadcast %1475 : f32 to vector<16x16xf32>
    %1477 = arith.mulf %1476, %1351 : vector<16x16xf32>
    %1478 = arith.addf %1474, %1477 : vector<16x16xf32>
    %c348 = arith.constant 348 : index
    %1479 = memref.load %arg2[%c348] : memref<432xf32, #tpu.memory_space<smem>>
    %1480 = vector.broadcast %1479 : f32 to vector<16x16xf32>
    %1481 = arith.mulf %1480, %1352 : vector<16x16xf32>
    %1482 = arith.addf %1478, %1481 : vector<16x16xf32>
    %c364 = arith.constant 364 : index
    %1483 = memref.load %arg2[%c364] : memref<432xf32, #tpu.memory_space<smem>>
    %1484 = vector.broadcast %1483 : f32 to vector<16x16xf32>
    %1485 = arith.mulf %1484, %1353 : vector<16x16xf32>
    %1486 = arith.addf %1482, %1485 : vector<16x16xf32>
    %c380 = arith.constant 380 : index
    %1487 = memref.load %arg2[%c380] : memref<432xf32, #tpu.memory_space<smem>>
    %1488 = vector.broadcast %1487 : f32 to vector<16x16xf32>
    %1489 = arith.mulf %1488, %1354 : vector<16x16xf32>
    %1490 = arith.addf %1486, %1489 : vector<16x16xf32>
    %c396 = arith.constant 396 : index
    %1491 = memref.load %arg2[%c396] : memref<432xf32, #tpu.memory_space<smem>>
    %1492 = vector.broadcast %1491 : f32 to vector<16x16xf32>
    %1493 = arith.mulf %1492, %1355 : vector<16x16xf32>
    %1494 = arith.addf %1490, %1493 : vector<16x16xf32>
    %c412 = arith.constant 412 : index
    %1495 = memref.load %arg2[%c412] : memref<432xf32, #tpu.memory_space<smem>>
    %1496 = vector.broadcast %1495 : f32 to vector<16x16xf32>
    %1497 = arith.mulf %1496, %1356 : vector<16x16xf32>
    %1498 = arith.addf %1494, %1497 : vector<16x16xf32>
    %c428 = arith.constant 428 : index
    %1499 = memref.load %arg2[%c428] : memref<432xf32, #tpu.memory_space<smem>>
    %1500 = vector.broadcast %1499 : f32 to vector<16x16xf32>
    %1501 = arith.mulf %1500, %1357 : vector<16x16xf32>
    %1502 = arith.addf %1498, %1501 : vector<16x16xf32>
    %c8_52 = arith.constant 8 : index
    %1503 = memref.load %arg3[%c8_52] : memref<12xf32, #tpu.memory_space<smem>>
    %1504 = vector.broadcast %1503 : f32 to vector<16x16xf32>
    %1505 = arith.addf %1502, %1504 : vector<16x16xf32>
    %cst_53 = arith.constant 0.000000e+00 : f32
    %1506 = vector.broadcast %cst_53 : f32 to vector<16x16xf32>
    %1507 = arith.maximumf %1505, %1506 : vector<16x16xf32>
    %cst_54 = arith.constant 0.000000e+00 : f32
    %1508 = vector.broadcast %cst_54 : f32 to vector<16x16xf32>
    %c289 = arith.constant 289 : index
    %1509 = memref.load %arg2[%c289] : memref<432xf32, #tpu.memory_space<smem>>
    %1510 = vector.broadcast %1509 : f32 to vector<16x16xf32>
    %1511 = arith.mulf %1510, %1322 : vector<16x16xf32>
    %1512 = arith.addf %1508, %1511 : vector<16x16xf32>
    %c305 = arith.constant 305 : index
    %1513 = memref.load %arg2[%c305] : memref<432xf32, #tpu.memory_space<smem>>
    %1514 = vector.broadcast %1513 : f32 to vector<16x16xf32>
    %1515 = arith.mulf %1514, %1323 : vector<16x16xf32>
    %1516 = arith.addf %1512, %1515 : vector<16x16xf32>
    %c321 = arith.constant 321 : index
    %1517 = memref.load %arg2[%c321] : memref<432xf32, #tpu.memory_space<smem>>
    %1518 = vector.broadcast %1517 : f32 to vector<16x16xf32>
    %1519 = arith.mulf %1518, %1324 : vector<16x16xf32>
    %1520 = arith.addf %1516, %1519 : vector<16x16xf32>
    %c337 = arith.constant 337 : index
    %1521 = memref.load %arg2[%c337] : memref<432xf32, #tpu.memory_space<smem>>
    %1522 = vector.broadcast %1521 : f32 to vector<16x16xf32>
    %1523 = arith.mulf %1522, %1325 : vector<16x16xf32>
    %1524 = arith.addf %1520, %1523 : vector<16x16xf32>
    %c353 = arith.constant 353 : index
    %1525 = memref.load %arg2[%c353] : memref<432xf32, #tpu.memory_space<smem>>
    %1526 = vector.broadcast %1525 : f32 to vector<16x16xf32>
    %1527 = arith.mulf %1526, %1326 : vector<16x16xf32>
    %1528 = arith.addf %1524, %1527 : vector<16x16xf32>
    %c369 = arith.constant 369 : index
    %1529 = memref.load %arg2[%c369] : memref<432xf32, #tpu.memory_space<smem>>
    %1530 = vector.broadcast %1529 : f32 to vector<16x16xf32>
    %1531 = arith.mulf %1530, %1327 : vector<16x16xf32>
    %1532 = arith.addf %1528, %1531 : vector<16x16xf32>
    %c385 = arith.constant 385 : index
    %1533 = memref.load %arg2[%c385] : memref<432xf32, #tpu.memory_space<smem>>
    %1534 = vector.broadcast %1533 : f32 to vector<16x16xf32>
    %1535 = arith.mulf %1534, %1328 : vector<16x16xf32>
    %1536 = arith.addf %1532, %1535 : vector<16x16xf32>
    %c401 = arith.constant 401 : index
    %1537 = memref.load %arg2[%c401] : memref<432xf32, #tpu.memory_space<smem>>
    %1538 = vector.broadcast %1537 : f32 to vector<16x16xf32>
    %1539 = arith.mulf %1538, %1329 : vector<16x16xf32>
    %1540 = arith.addf %1536, %1539 : vector<16x16xf32>
    %c417 = arith.constant 417 : index
    %1541 = memref.load %arg2[%c417] : memref<432xf32, #tpu.memory_space<smem>>
    %1542 = vector.broadcast %1541 : f32 to vector<16x16xf32>
    %1543 = arith.mulf %1542, %1330 : vector<16x16xf32>
    %1544 = arith.addf %1540, %1543 : vector<16x16xf32>
    %c293 = arith.constant 293 : index
    %1545 = memref.load %arg2[%c293] : memref<432xf32, #tpu.memory_space<smem>>
    %1546 = vector.broadcast %1545 : f32 to vector<16x16xf32>
    %1547 = arith.mulf %1546, %1331 : vector<16x16xf32>
    %1548 = arith.addf %1544, %1547 : vector<16x16xf32>
    %c309 = arith.constant 309 : index
    %1549 = memref.load %arg2[%c309] : memref<432xf32, #tpu.memory_space<smem>>
    %1550 = vector.broadcast %1549 : f32 to vector<16x16xf32>
    %1551 = arith.mulf %1550, %1332 : vector<16x16xf32>
    %1552 = arith.addf %1548, %1551 : vector<16x16xf32>
    %c325 = arith.constant 325 : index
    %1553 = memref.load %arg2[%c325] : memref<432xf32, #tpu.memory_space<smem>>
    %1554 = vector.broadcast %1553 : f32 to vector<16x16xf32>
    %1555 = arith.mulf %1554, %1333 : vector<16x16xf32>
    %1556 = arith.addf %1552, %1555 : vector<16x16xf32>
    %c341 = arith.constant 341 : index
    %1557 = memref.load %arg2[%c341] : memref<432xf32, #tpu.memory_space<smem>>
    %1558 = vector.broadcast %1557 : f32 to vector<16x16xf32>
    %1559 = arith.mulf %1558, %1334 : vector<16x16xf32>
    %1560 = arith.addf %1556, %1559 : vector<16x16xf32>
    %c357 = arith.constant 357 : index
    %1561 = memref.load %arg2[%c357] : memref<432xf32, #tpu.memory_space<smem>>
    %1562 = vector.broadcast %1561 : f32 to vector<16x16xf32>
    %1563 = arith.mulf %1562, %1335 : vector<16x16xf32>
    %1564 = arith.addf %1560, %1563 : vector<16x16xf32>
    %c373 = arith.constant 373 : index
    %1565 = memref.load %arg2[%c373] : memref<432xf32, #tpu.memory_space<smem>>
    %1566 = vector.broadcast %1565 : f32 to vector<16x16xf32>
    %1567 = arith.mulf %1566, %1336 : vector<16x16xf32>
    %1568 = arith.addf %1564, %1567 : vector<16x16xf32>
    %c389 = arith.constant 389 : index
    %1569 = memref.load %arg2[%c389] : memref<432xf32, #tpu.memory_space<smem>>
    %1570 = vector.broadcast %1569 : f32 to vector<16x16xf32>
    %1571 = arith.mulf %1570, %1337 : vector<16x16xf32>
    %1572 = arith.addf %1568, %1571 : vector<16x16xf32>
    %c405 = arith.constant 405 : index
    %1573 = memref.load %arg2[%c405] : memref<432xf32, #tpu.memory_space<smem>>
    %1574 = vector.broadcast %1573 : f32 to vector<16x16xf32>
    %1575 = arith.mulf %1574, %1338 : vector<16x16xf32>
    %1576 = arith.addf %1572, %1575 : vector<16x16xf32>
    %c421 = arith.constant 421 : index
    %1577 = memref.load %arg2[%c421] : memref<432xf32, #tpu.memory_space<smem>>
    %1578 = vector.broadcast %1577 : f32 to vector<16x16xf32>
    %1579 = arith.mulf %1578, %1339 : vector<16x16xf32>
    %1580 = arith.addf %1576, %1579 : vector<16x16xf32>
    %c297 = arith.constant 297 : index
    %1581 = memref.load %arg2[%c297] : memref<432xf32, #tpu.memory_space<smem>>
    %1582 = vector.broadcast %1581 : f32 to vector<16x16xf32>
    %1583 = arith.mulf %1582, %1340 : vector<16x16xf32>
    %1584 = arith.addf %1580, %1583 : vector<16x16xf32>
    %c313 = arith.constant 313 : index
    %1585 = memref.load %arg2[%c313] : memref<432xf32, #tpu.memory_space<smem>>
    %1586 = vector.broadcast %1585 : f32 to vector<16x16xf32>
    %1587 = arith.mulf %1586, %1341 : vector<16x16xf32>
    %1588 = arith.addf %1584, %1587 : vector<16x16xf32>
    %c329 = arith.constant 329 : index
    %1589 = memref.load %arg2[%c329] : memref<432xf32, #tpu.memory_space<smem>>
    %1590 = vector.broadcast %1589 : f32 to vector<16x16xf32>
    %1591 = arith.mulf %1590, %1342 : vector<16x16xf32>
    %1592 = arith.addf %1588, %1591 : vector<16x16xf32>
    %c345 = arith.constant 345 : index
    %1593 = memref.load %arg2[%c345] : memref<432xf32, #tpu.memory_space<smem>>
    %1594 = vector.broadcast %1593 : f32 to vector<16x16xf32>
    %1595 = arith.mulf %1594, %1343 : vector<16x16xf32>
    %1596 = arith.addf %1592, %1595 : vector<16x16xf32>
    %c361 = arith.constant 361 : index
    %1597 = memref.load %arg2[%c361] : memref<432xf32, #tpu.memory_space<smem>>
    %1598 = vector.broadcast %1597 : f32 to vector<16x16xf32>
    %1599 = arith.mulf %1598, %1344 : vector<16x16xf32>
    %1600 = arith.addf %1596, %1599 : vector<16x16xf32>
    %c377 = arith.constant 377 : index
    %1601 = memref.load %arg2[%c377] : memref<432xf32, #tpu.memory_space<smem>>
    %1602 = vector.broadcast %1601 : f32 to vector<16x16xf32>
    %1603 = arith.mulf %1602, %1345 : vector<16x16xf32>
    %1604 = arith.addf %1600, %1603 : vector<16x16xf32>
    %c393 = arith.constant 393 : index
    %1605 = memref.load %arg2[%c393] : memref<432xf32, #tpu.memory_space<smem>>
    %1606 = vector.broadcast %1605 : f32 to vector<16x16xf32>
    %1607 = arith.mulf %1606, %1346 : vector<16x16xf32>
    %1608 = arith.addf %1604, %1607 : vector<16x16xf32>
    %c409 = arith.constant 409 : index
    %1609 = memref.load %arg2[%c409] : memref<432xf32, #tpu.memory_space<smem>>
    %1610 = vector.broadcast %1609 : f32 to vector<16x16xf32>
    %1611 = arith.mulf %1610, %1347 : vector<16x16xf32>
    %1612 = arith.addf %1608, %1611 : vector<16x16xf32>
    %c425 = arith.constant 425 : index
    %1613 = memref.load %arg2[%c425] : memref<432xf32, #tpu.memory_space<smem>>
    %1614 = vector.broadcast %1613 : f32 to vector<16x16xf32>
    %1615 = arith.mulf %1614, %1348 : vector<16x16xf32>
    %1616 = arith.addf %1612, %1615 : vector<16x16xf32>
    %c301 = arith.constant 301 : index
    %1617 = memref.load %arg2[%c301] : memref<432xf32, #tpu.memory_space<smem>>
    %1618 = vector.broadcast %1617 : f32 to vector<16x16xf32>
    %1619 = arith.mulf %1618, %1349 : vector<16x16xf32>
    %1620 = arith.addf %1616, %1619 : vector<16x16xf32>
    %c317 = arith.constant 317 : index
    %1621 = memref.load %arg2[%c317] : memref<432xf32, #tpu.memory_space<smem>>
    %1622 = vector.broadcast %1621 : f32 to vector<16x16xf32>
    %1623 = arith.mulf %1622, %1350 : vector<16x16xf32>
    %1624 = arith.addf %1620, %1623 : vector<16x16xf32>
    %c333 = arith.constant 333 : index
    %1625 = memref.load %arg2[%c333] : memref<432xf32, #tpu.memory_space<smem>>
    %1626 = vector.broadcast %1625 : f32 to vector<16x16xf32>
    %1627 = arith.mulf %1626, %1351 : vector<16x16xf32>
    %1628 = arith.addf %1624, %1627 : vector<16x16xf32>
    %c349 = arith.constant 349 : index
    %1629 = memref.load %arg2[%c349] : memref<432xf32, #tpu.memory_space<smem>>
    %1630 = vector.broadcast %1629 : f32 to vector<16x16xf32>
    %1631 = arith.mulf %1630, %1352 : vector<16x16xf32>
    %1632 = arith.addf %1628, %1631 : vector<16x16xf32>
    %c365 = arith.constant 365 : index
    %1633 = memref.load %arg2[%c365] : memref<432xf32, #tpu.memory_space<smem>>
    %1634 = vector.broadcast %1633 : f32 to vector<16x16xf32>
    %1635 = arith.mulf %1634, %1353 : vector<16x16xf32>
    %1636 = arith.addf %1632, %1635 : vector<16x16xf32>
    %c381 = arith.constant 381 : index
    %1637 = memref.load %arg2[%c381] : memref<432xf32, #tpu.memory_space<smem>>
    %1638 = vector.broadcast %1637 : f32 to vector<16x16xf32>
    %1639 = arith.mulf %1638, %1354 : vector<16x16xf32>
    %1640 = arith.addf %1636, %1639 : vector<16x16xf32>
    %c397 = arith.constant 397 : index
    %1641 = memref.load %arg2[%c397] : memref<432xf32, #tpu.memory_space<smem>>
    %1642 = vector.broadcast %1641 : f32 to vector<16x16xf32>
    %1643 = arith.mulf %1642, %1355 : vector<16x16xf32>
    %1644 = arith.addf %1640, %1643 : vector<16x16xf32>
    %c413 = arith.constant 413 : index
    %1645 = memref.load %arg2[%c413] : memref<432xf32, #tpu.memory_space<smem>>
    %1646 = vector.broadcast %1645 : f32 to vector<16x16xf32>
    %1647 = arith.mulf %1646, %1356 : vector<16x16xf32>
    %1648 = arith.addf %1644, %1647 : vector<16x16xf32>
    %c429 = arith.constant 429 : index
    %1649 = memref.load %arg2[%c429] : memref<432xf32, #tpu.memory_space<smem>>
    %1650 = vector.broadcast %1649 : f32 to vector<16x16xf32>
    %1651 = arith.mulf %1650, %1357 : vector<16x16xf32>
    %1652 = arith.addf %1648, %1651 : vector<16x16xf32>
    %c9_55 = arith.constant 9 : index
    %1653 = memref.load %arg3[%c9_55] : memref<12xf32, #tpu.memory_space<smem>>
    %1654 = vector.broadcast %1653 : f32 to vector<16x16xf32>
    %1655 = arith.addf %1652, %1654 : vector<16x16xf32>
    %cst_56 = arith.constant 0.000000e+00 : f32
    %1656 = vector.broadcast %cst_56 : f32 to vector<16x16xf32>
    %1657 = arith.maximumf %1655, %1656 : vector<16x16xf32>
    %cst_57 = arith.constant 0.000000e+00 : f32
    %1658 = vector.broadcast %cst_57 : f32 to vector<16x16xf32>
    %c290 = arith.constant 290 : index
    %1659 = memref.load %arg2[%c290] : memref<432xf32, #tpu.memory_space<smem>>
    %1660 = vector.broadcast %1659 : f32 to vector<16x16xf32>
    %1661 = arith.mulf %1660, %1322 : vector<16x16xf32>
    %1662 = arith.addf %1658, %1661 : vector<16x16xf32>
    %c306 = arith.constant 306 : index
    %1663 = memref.load %arg2[%c306] : memref<432xf32, #tpu.memory_space<smem>>
    %1664 = vector.broadcast %1663 : f32 to vector<16x16xf32>
    %1665 = arith.mulf %1664, %1323 : vector<16x16xf32>
    %1666 = arith.addf %1662, %1665 : vector<16x16xf32>
    %c322 = arith.constant 322 : index
    %1667 = memref.load %arg2[%c322] : memref<432xf32, #tpu.memory_space<smem>>
    %1668 = vector.broadcast %1667 : f32 to vector<16x16xf32>
    %1669 = arith.mulf %1668, %1324 : vector<16x16xf32>
    %1670 = arith.addf %1666, %1669 : vector<16x16xf32>
    %c338 = arith.constant 338 : index
    %1671 = memref.load %arg2[%c338] : memref<432xf32, #tpu.memory_space<smem>>
    %1672 = vector.broadcast %1671 : f32 to vector<16x16xf32>
    %1673 = arith.mulf %1672, %1325 : vector<16x16xf32>
    %1674 = arith.addf %1670, %1673 : vector<16x16xf32>
    %c354 = arith.constant 354 : index
    %1675 = memref.load %arg2[%c354] : memref<432xf32, #tpu.memory_space<smem>>
    %1676 = vector.broadcast %1675 : f32 to vector<16x16xf32>
    %1677 = arith.mulf %1676, %1326 : vector<16x16xf32>
    %1678 = arith.addf %1674, %1677 : vector<16x16xf32>
    %c370 = arith.constant 370 : index
    %1679 = memref.load %arg2[%c370] : memref<432xf32, #tpu.memory_space<smem>>
    %1680 = vector.broadcast %1679 : f32 to vector<16x16xf32>
    %1681 = arith.mulf %1680, %1327 : vector<16x16xf32>
    %1682 = arith.addf %1678, %1681 : vector<16x16xf32>
    %c386 = arith.constant 386 : index
    %1683 = memref.load %arg2[%c386] : memref<432xf32, #tpu.memory_space<smem>>
    %1684 = vector.broadcast %1683 : f32 to vector<16x16xf32>
    %1685 = arith.mulf %1684, %1328 : vector<16x16xf32>
    %1686 = arith.addf %1682, %1685 : vector<16x16xf32>
    %c402 = arith.constant 402 : index
    %1687 = memref.load %arg2[%c402] : memref<432xf32, #tpu.memory_space<smem>>
    %1688 = vector.broadcast %1687 : f32 to vector<16x16xf32>
    %1689 = arith.mulf %1688, %1329 : vector<16x16xf32>
    %1690 = arith.addf %1686, %1689 : vector<16x16xf32>
    %c418 = arith.constant 418 : index
    %1691 = memref.load %arg2[%c418] : memref<432xf32, #tpu.memory_space<smem>>
    %1692 = vector.broadcast %1691 : f32 to vector<16x16xf32>
    %1693 = arith.mulf %1692, %1330 : vector<16x16xf32>
    %1694 = arith.addf %1690, %1693 : vector<16x16xf32>
    %c294 = arith.constant 294 : index
    %1695 = memref.load %arg2[%c294] : memref<432xf32, #tpu.memory_space<smem>>
    %1696 = vector.broadcast %1695 : f32 to vector<16x16xf32>
    %1697 = arith.mulf %1696, %1331 : vector<16x16xf32>
    %1698 = arith.addf %1694, %1697 : vector<16x16xf32>
    %c310 = arith.constant 310 : index
    %1699 = memref.load %arg2[%c310] : memref<432xf32, #tpu.memory_space<smem>>
    %1700 = vector.broadcast %1699 : f32 to vector<16x16xf32>
    %1701 = arith.mulf %1700, %1332 : vector<16x16xf32>
    %1702 = arith.addf %1698, %1701 : vector<16x16xf32>
    %c326 = arith.constant 326 : index
    %1703 = memref.load %arg2[%c326] : memref<432xf32, #tpu.memory_space<smem>>
    %1704 = vector.broadcast %1703 : f32 to vector<16x16xf32>
    %1705 = arith.mulf %1704, %1333 : vector<16x16xf32>
    %1706 = arith.addf %1702, %1705 : vector<16x16xf32>
    %c342 = arith.constant 342 : index
    %1707 = memref.load %arg2[%c342] : memref<432xf32, #tpu.memory_space<smem>>
    %1708 = vector.broadcast %1707 : f32 to vector<16x16xf32>
    %1709 = arith.mulf %1708, %1334 : vector<16x16xf32>
    %1710 = arith.addf %1706, %1709 : vector<16x16xf32>
    %c358 = arith.constant 358 : index
    %1711 = memref.load %arg2[%c358] : memref<432xf32, #tpu.memory_space<smem>>
    %1712 = vector.broadcast %1711 : f32 to vector<16x16xf32>
    %1713 = arith.mulf %1712, %1335 : vector<16x16xf32>
    %1714 = arith.addf %1710, %1713 : vector<16x16xf32>
    %c374 = arith.constant 374 : index
    %1715 = memref.load %arg2[%c374] : memref<432xf32, #tpu.memory_space<smem>>
    %1716 = vector.broadcast %1715 : f32 to vector<16x16xf32>
    %1717 = arith.mulf %1716, %1336 : vector<16x16xf32>
    %1718 = arith.addf %1714, %1717 : vector<16x16xf32>
    %c390 = arith.constant 390 : index
    %1719 = memref.load %arg2[%c390] : memref<432xf32, #tpu.memory_space<smem>>
    %1720 = vector.broadcast %1719 : f32 to vector<16x16xf32>
    %1721 = arith.mulf %1720, %1337 : vector<16x16xf32>
    %1722 = arith.addf %1718, %1721 : vector<16x16xf32>
    %c406 = arith.constant 406 : index
    %1723 = memref.load %arg2[%c406] : memref<432xf32, #tpu.memory_space<smem>>
    %1724 = vector.broadcast %1723 : f32 to vector<16x16xf32>
    %1725 = arith.mulf %1724, %1338 : vector<16x16xf32>
    %1726 = arith.addf %1722, %1725 : vector<16x16xf32>
    %c422 = arith.constant 422 : index
    %1727 = memref.load %arg2[%c422] : memref<432xf32, #tpu.memory_space<smem>>
    %1728 = vector.broadcast %1727 : f32 to vector<16x16xf32>
    %1729 = arith.mulf %1728, %1339 : vector<16x16xf32>
    %1730 = arith.addf %1726, %1729 : vector<16x16xf32>
    %c298 = arith.constant 298 : index
    %1731 = memref.load %arg2[%c298] : memref<432xf32, #tpu.memory_space<smem>>
    %1732 = vector.broadcast %1731 : f32 to vector<16x16xf32>
    %1733 = arith.mulf %1732, %1340 : vector<16x16xf32>
    %1734 = arith.addf %1730, %1733 : vector<16x16xf32>
    %c314 = arith.constant 314 : index
    %1735 = memref.load %arg2[%c314] : memref<432xf32, #tpu.memory_space<smem>>
    %1736 = vector.broadcast %1735 : f32 to vector<16x16xf32>
    %1737 = arith.mulf %1736, %1341 : vector<16x16xf32>
    %1738 = arith.addf %1734, %1737 : vector<16x16xf32>
    %c330 = arith.constant 330 : index
    %1739 = memref.load %arg2[%c330] : memref<432xf32, #tpu.memory_space<smem>>
    %1740 = vector.broadcast %1739 : f32 to vector<16x16xf32>
    %1741 = arith.mulf %1740, %1342 : vector<16x16xf32>
    %1742 = arith.addf %1738, %1741 : vector<16x16xf32>
    %c346 = arith.constant 346 : index
    %1743 = memref.load %arg2[%c346] : memref<432xf32, #tpu.memory_space<smem>>
    %1744 = vector.broadcast %1743 : f32 to vector<16x16xf32>
    %1745 = arith.mulf %1744, %1343 : vector<16x16xf32>
    %1746 = arith.addf %1742, %1745 : vector<16x16xf32>
    %c362 = arith.constant 362 : index
    %1747 = memref.load %arg2[%c362] : memref<432xf32, #tpu.memory_space<smem>>
    %1748 = vector.broadcast %1747 : f32 to vector<16x16xf32>
    %1749 = arith.mulf %1748, %1344 : vector<16x16xf32>
    %1750 = arith.addf %1746, %1749 : vector<16x16xf32>
    %c378 = arith.constant 378 : index
    %1751 = memref.load %arg2[%c378] : memref<432xf32, #tpu.memory_space<smem>>
    %1752 = vector.broadcast %1751 : f32 to vector<16x16xf32>
    %1753 = arith.mulf %1752, %1345 : vector<16x16xf32>
    %1754 = arith.addf %1750, %1753 : vector<16x16xf32>
    %c394 = arith.constant 394 : index
    %1755 = memref.load %arg2[%c394] : memref<432xf32, #tpu.memory_space<smem>>
    %1756 = vector.broadcast %1755 : f32 to vector<16x16xf32>
    %1757 = arith.mulf %1756, %1346 : vector<16x16xf32>
    %1758 = arith.addf %1754, %1757 : vector<16x16xf32>
    %c410 = arith.constant 410 : index
    %1759 = memref.load %arg2[%c410] : memref<432xf32, #tpu.memory_space<smem>>
    %1760 = vector.broadcast %1759 : f32 to vector<16x16xf32>
    %1761 = arith.mulf %1760, %1347 : vector<16x16xf32>
    %1762 = arith.addf %1758, %1761 : vector<16x16xf32>
    %c426 = arith.constant 426 : index
    %1763 = memref.load %arg2[%c426] : memref<432xf32, #tpu.memory_space<smem>>
    %1764 = vector.broadcast %1763 : f32 to vector<16x16xf32>
    %1765 = arith.mulf %1764, %1348 : vector<16x16xf32>
    %1766 = arith.addf %1762, %1765 : vector<16x16xf32>
    %c302 = arith.constant 302 : index
    %1767 = memref.load %arg2[%c302] : memref<432xf32, #tpu.memory_space<smem>>
    %1768 = vector.broadcast %1767 : f32 to vector<16x16xf32>
    %1769 = arith.mulf %1768, %1349 : vector<16x16xf32>
    %1770 = arith.addf %1766, %1769 : vector<16x16xf32>
    %c318 = arith.constant 318 : index
    %1771 = memref.load %arg2[%c318] : memref<432xf32, #tpu.memory_space<smem>>
    %1772 = vector.broadcast %1771 : f32 to vector<16x16xf32>
    %1773 = arith.mulf %1772, %1350 : vector<16x16xf32>
    %1774 = arith.addf %1770, %1773 : vector<16x16xf32>
    %c334 = arith.constant 334 : index
    %1775 = memref.load %arg2[%c334] : memref<432xf32, #tpu.memory_space<smem>>
    %1776 = vector.broadcast %1775 : f32 to vector<16x16xf32>
    %1777 = arith.mulf %1776, %1351 : vector<16x16xf32>
    %1778 = arith.addf %1774, %1777 : vector<16x16xf32>
    %c350 = arith.constant 350 : index
    %1779 = memref.load %arg2[%c350] : memref<432xf32, #tpu.memory_space<smem>>
    %1780 = vector.broadcast %1779 : f32 to vector<16x16xf32>
    %1781 = arith.mulf %1780, %1352 : vector<16x16xf32>
    %1782 = arith.addf %1778, %1781 : vector<16x16xf32>
    %c366 = arith.constant 366 : index
    %1783 = memref.load %arg2[%c366] : memref<432xf32, #tpu.memory_space<smem>>
    %1784 = vector.broadcast %1783 : f32 to vector<16x16xf32>
    %1785 = arith.mulf %1784, %1353 : vector<16x16xf32>
    %1786 = arith.addf %1782, %1785 : vector<16x16xf32>
    %c382 = arith.constant 382 : index
    %1787 = memref.load %arg2[%c382] : memref<432xf32, #tpu.memory_space<smem>>
    %1788 = vector.broadcast %1787 : f32 to vector<16x16xf32>
    %1789 = arith.mulf %1788, %1354 : vector<16x16xf32>
    %1790 = arith.addf %1786, %1789 : vector<16x16xf32>
    %c398 = arith.constant 398 : index
    %1791 = memref.load %arg2[%c398] : memref<432xf32, #tpu.memory_space<smem>>
    %1792 = vector.broadcast %1791 : f32 to vector<16x16xf32>
    %1793 = arith.mulf %1792, %1355 : vector<16x16xf32>
    %1794 = arith.addf %1790, %1793 : vector<16x16xf32>
    %c414 = arith.constant 414 : index
    %1795 = memref.load %arg2[%c414] : memref<432xf32, #tpu.memory_space<smem>>
    %1796 = vector.broadcast %1795 : f32 to vector<16x16xf32>
    %1797 = arith.mulf %1796, %1356 : vector<16x16xf32>
    %1798 = arith.addf %1794, %1797 : vector<16x16xf32>
    %c430 = arith.constant 430 : index
    %1799 = memref.load %arg2[%c430] : memref<432xf32, #tpu.memory_space<smem>>
    %1800 = vector.broadcast %1799 : f32 to vector<16x16xf32>
    %1801 = arith.mulf %1800, %1357 : vector<16x16xf32>
    %1802 = arith.addf %1798, %1801 : vector<16x16xf32>
    %c10_58 = arith.constant 10 : index
    %1803 = memref.load %arg3[%c10_58] : memref<12xf32, #tpu.memory_space<smem>>
    %1804 = vector.broadcast %1803 : f32 to vector<16x16xf32>
    %1805 = arith.addf %1802, %1804 : vector<16x16xf32>
    %cst_59 = arith.constant 0.000000e+00 : f32
    %1806 = vector.broadcast %cst_59 : f32 to vector<16x16xf32>
    %1807 = arith.maximumf %1805, %1806 : vector<16x16xf32>
    %cst_60 = arith.constant 0.000000e+00 : f32
    %1808 = vector.broadcast %cst_60 : f32 to vector<16x16xf32>
    %c291 = arith.constant 291 : index
    %1809 = memref.load %arg2[%c291] : memref<432xf32, #tpu.memory_space<smem>>
    %1810 = vector.broadcast %1809 : f32 to vector<16x16xf32>
    %1811 = arith.mulf %1810, %1322 : vector<16x16xf32>
    %1812 = arith.addf %1808, %1811 : vector<16x16xf32>
    %c307 = arith.constant 307 : index
    %1813 = memref.load %arg2[%c307] : memref<432xf32, #tpu.memory_space<smem>>
    %1814 = vector.broadcast %1813 : f32 to vector<16x16xf32>
    %1815 = arith.mulf %1814, %1323 : vector<16x16xf32>
    %1816 = arith.addf %1812, %1815 : vector<16x16xf32>
    %c323 = arith.constant 323 : index
    %1817 = memref.load %arg2[%c323] : memref<432xf32, #tpu.memory_space<smem>>
    %1818 = vector.broadcast %1817 : f32 to vector<16x16xf32>
    %1819 = arith.mulf %1818, %1324 : vector<16x16xf32>
    %1820 = arith.addf %1816, %1819 : vector<16x16xf32>
    %c339 = arith.constant 339 : index
    %1821 = memref.load %arg2[%c339] : memref<432xf32, #tpu.memory_space<smem>>
    %1822 = vector.broadcast %1821 : f32 to vector<16x16xf32>
    %1823 = arith.mulf %1822, %1325 : vector<16x16xf32>
    %1824 = arith.addf %1820, %1823 : vector<16x16xf32>
    %c355 = arith.constant 355 : index
    %1825 = memref.load %arg2[%c355] : memref<432xf32, #tpu.memory_space<smem>>
    %1826 = vector.broadcast %1825 : f32 to vector<16x16xf32>
    %1827 = arith.mulf %1826, %1326 : vector<16x16xf32>
    %1828 = arith.addf %1824, %1827 : vector<16x16xf32>
    %c371 = arith.constant 371 : index
    %1829 = memref.load %arg2[%c371] : memref<432xf32, #tpu.memory_space<smem>>
    %1830 = vector.broadcast %1829 : f32 to vector<16x16xf32>
    %1831 = arith.mulf %1830, %1327 : vector<16x16xf32>
    %1832 = arith.addf %1828, %1831 : vector<16x16xf32>
    %c387 = arith.constant 387 : index
    %1833 = memref.load %arg2[%c387] : memref<432xf32, #tpu.memory_space<smem>>
    %1834 = vector.broadcast %1833 : f32 to vector<16x16xf32>
    %1835 = arith.mulf %1834, %1328 : vector<16x16xf32>
    %1836 = arith.addf %1832, %1835 : vector<16x16xf32>
    %c403 = arith.constant 403 : index
    %1837 = memref.load %arg2[%c403] : memref<432xf32, #tpu.memory_space<smem>>
    %1838 = vector.broadcast %1837 : f32 to vector<16x16xf32>
    %1839 = arith.mulf %1838, %1329 : vector<16x16xf32>
    %1840 = arith.addf %1836, %1839 : vector<16x16xf32>
    %c419 = arith.constant 419 : index
    %1841 = memref.load %arg2[%c419] : memref<432xf32, #tpu.memory_space<smem>>
    %1842 = vector.broadcast %1841 : f32 to vector<16x16xf32>
    %1843 = arith.mulf %1842, %1330 : vector<16x16xf32>
    %1844 = arith.addf %1840, %1843 : vector<16x16xf32>
    %c295 = arith.constant 295 : index
    %1845 = memref.load %arg2[%c295] : memref<432xf32, #tpu.memory_space<smem>>
    %1846 = vector.broadcast %1845 : f32 to vector<16x16xf32>
    %1847 = arith.mulf %1846, %1331 : vector<16x16xf32>
    %1848 = arith.addf %1844, %1847 : vector<16x16xf32>
    %c311 = arith.constant 311 : index
    %1849 = memref.load %arg2[%c311] : memref<432xf32, #tpu.memory_space<smem>>
    %1850 = vector.broadcast %1849 : f32 to vector<16x16xf32>
    %1851 = arith.mulf %1850, %1332 : vector<16x16xf32>
    %1852 = arith.addf %1848, %1851 : vector<16x16xf32>
    %c327 = arith.constant 327 : index
    %1853 = memref.load %arg2[%c327] : memref<432xf32, #tpu.memory_space<smem>>
    %1854 = vector.broadcast %1853 : f32 to vector<16x16xf32>
    %1855 = arith.mulf %1854, %1333 : vector<16x16xf32>
    %1856 = arith.addf %1852, %1855 : vector<16x16xf32>
    %c343 = arith.constant 343 : index
    %1857 = memref.load %arg2[%c343] : memref<432xf32, #tpu.memory_space<smem>>
    %1858 = vector.broadcast %1857 : f32 to vector<16x16xf32>
    %1859 = arith.mulf %1858, %1334 : vector<16x16xf32>
    %1860 = arith.addf %1856, %1859 : vector<16x16xf32>
    %c359 = arith.constant 359 : index
    %1861 = memref.load %arg2[%c359] : memref<432xf32, #tpu.memory_space<smem>>
    %1862 = vector.broadcast %1861 : f32 to vector<16x16xf32>
    %1863 = arith.mulf %1862, %1335 : vector<16x16xf32>
    %1864 = arith.addf %1860, %1863 : vector<16x16xf32>
    %c375 = arith.constant 375 : index
    %1865 = memref.load %arg2[%c375] : memref<432xf32, #tpu.memory_space<smem>>
    %1866 = vector.broadcast %1865 : f32 to vector<16x16xf32>
    %1867 = arith.mulf %1866, %1336 : vector<16x16xf32>
    %1868 = arith.addf %1864, %1867 : vector<16x16xf32>
    %c391 = arith.constant 391 : index
    %1869 = memref.load %arg2[%c391] : memref<432xf32, #tpu.memory_space<smem>>
    %1870 = vector.broadcast %1869 : f32 to vector<16x16xf32>
    %1871 = arith.mulf %1870, %1337 : vector<16x16xf32>
    %1872 = arith.addf %1868, %1871 : vector<16x16xf32>
    %c407 = arith.constant 407 : index
    %1873 = memref.load %arg2[%c407] : memref<432xf32, #tpu.memory_space<smem>>
    %1874 = vector.broadcast %1873 : f32 to vector<16x16xf32>
    %1875 = arith.mulf %1874, %1338 : vector<16x16xf32>
    %1876 = arith.addf %1872, %1875 : vector<16x16xf32>
    %c423 = arith.constant 423 : index
    %1877 = memref.load %arg2[%c423] : memref<432xf32, #tpu.memory_space<smem>>
    %1878 = vector.broadcast %1877 : f32 to vector<16x16xf32>
    %1879 = arith.mulf %1878, %1339 : vector<16x16xf32>
    %1880 = arith.addf %1876, %1879 : vector<16x16xf32>
    %c299 = arith.constant 299 : index
    %1881 = memref.load %arg2[%c299] : memref<432xf32, #tpu.memory_space<smem>>
    %1882 = vector.broadcast %1881 : f32 to vector<16x16xf32>
    %1883 = arith.mulf %1882, %1340 : vector<16x16xf32>
    %1884 = arith.addf %1880, %1883 : vector<16x16xf32>
    %c315 = arith.constant 315 : index
    %1885 = memref.load %arg2[%c315] : memref<432xf32, #tpu.memory_space<smem>>
    %1886 = vector.broadcast %1885 : f32 to vector<16x16xf32>
    %1887 = arith.mulf %1886, %1341 : vector<16x16xf32>
    %1888 = arith.addf %1884, %1887 : vector<16x16xf32>
    %c331 = arith.constant 331 : index
    %1889 = memref.load %arg2[%c331] : memref<432xf32, #tpu.memory_space<smem>>
    %1890 = vector.broadcast %1889 : f32 to vector<16x16xf32>
    %1891 = arith.mulf %1890, %1342 : vector<16x16xf32>
    %1892 = arith.addf %1888, %1891 : vector<16x16xf32>
    %c347 = arith.constant 347 : index
    %1893 = memref.load %arg2[%c347] : memref<432xf32, #tpu.memory_space<smem>>
    %1894 = vector.broadcast %1893 : f32 to vector<16x16xf32>
    %1895 = arith.mulf %1894, %1343 : vector<16x16xf32>
    %1896 = arith.addf %1892, %1895 : vector<16x16xf32>
    %c363 = arith.constant 363 : index
    %1897 = memref.load %arg2[%c363] : memref<432xf32, #tpu.memory_space<smem>>
    %1898 = vector.broadcast %1897 : f32 to vector<16x16xf32>
    %1899 = arith.mulf %1898, %1344 : vector<16x16xf32>
    %1900 = arith.addf %1896, %1899 : vector<16x16xf32>
    %c379 = arith.constant 379 : index
    %1901 = memref.load %arg2[%c379] : memref<432xf32, #tpu.memory_space<smem>>
    %1902 = vector.broadcast %1901 : f32 to vector<16x16xf32>
    %1903 = arith.mulf %1902, %1345 : vector<16x16xf32>
    %1904 = arith.addf %1900, %1903 : vector<16x16xf32>
    %c395 = arith.constant 395 : index
    %1905 = memref.load %arg2[%c395] : memref<432xf32, #tpu.memory_space<smem>>
    %1906 = vector.broadcast %1905 : f32 to vector<16x16xf32>
    %1907 = arith.mulf %1906, %1346 : vector<16x16xf32>
    %1908 = arith.addf %1904, %1907 : vector<16x16xf32>
    %c411 = arith.constant 411 : index
    %1909 = memref.load %arg2[%c411] : memref<432xf32, #tpu.memory_space<smem>>
    %1910 = vector.broadcast %1909 : f32 to vector<16x16xf32>
    %1911 = arith.mulf %1910, %1347 : vector<16x16xf32>
    %1912 = arith.addf %1908, %1911 : vector<16x16xf32>
    %c427 = arith.constant 427 : index
    %1913 = memref.load %arg2[%c427] : memref<432xf32, #tpu.memory_space<smem>>
    %1914 = vector.broadcast %1913 : f32 to vector<16x16xf32>
    %1915 = arith.mulf %1914, %1348 : vector<16x16xf32>
    %1916 = arith.addf %1912, %1915 : vector<16x16xf32>
    %c303 = arith.constant 303 : index
    %1917 = memref.load %arg2[%c303] : memref<432xf32, #tpu.memory_space<smem>>
    %1918 = vector.broadcast %1917 : f32 to vector<16x16xf32>
    %1919 = arith.mulf %1918, %1349 : vector<16x16xf32>
    %1920 = arith.addf %1916, %1919 : vector<16x16xf32>
    %c319 = arith.constant 319 : index
    %1921 = memref.load %arg2[%c319] : memref<432xf32, #tpu.memory_space<smem>>
    %1922 = vector.broadcast %1921 : f32 to vector<16x16xf32>
    %1923 = arith.mulf %1922, %1350 : vector<16x16xf32>
    %1924 = arith.addf %1920, %1923 : vector<16x16xf32>
    %c335 = arith.constant 335 : index
    %1925 = memref.load %arg2[%c335] : memref<432xf32, #tpu.memory_space<smem>>
    %1926 = vector.broadcast %1925 : f32 to vector<16x16xf32>
    %1927 = arith.mulf %1926, %1351 : vector<16x16xf32>
    %1928 = arith.addf %1924, %1927 : vector<16x16xf32>
    %c351 = arith.constant 351 : index
    %1929 = memref.load %arg2[%c351] : memref<432xf32, #tpu.memory_space<smem>>
    %1930 = vector.broadcast %1929 : f32 to vector<16x16xf32>
    %1931 = arith.mulf %1930, %1352 : vector<16x16xf32>
    %1932 = arith.addf %1928, %1931 : vector<16x16xf32>
    %c367 = arith.constant 367 : index
    %1933 = memref.load %arg2[%c367] : memref<432xf32, #tpu.memory_space<smem>>
    %1934 = vector.broadcast %1933 : f32 to vector<16x16xf32>
    %1935 = arith.mulf %1934, %1353 : vector<16x16xf32>
    %1936 = arith.addf %1932, %1935 : vector<16x16xf32>
    %c383 = arith.constant 383 : index
    %1937 = memref.load %arg2[%c383] : memref<432xf32, #tpu.memory_space<smem>>
    %1938 = vector.broadcast %1937 : f32 to vector<16x16xf32>
    %1939 = arith.mulf %1938, %1354 : vector<16x16xf32>
    %1940 = arith.addf %1936, %1939 : vector<16x16xf32>
    %c399 = arith.constant 399 : index
    %1941 = memref.load %arg2[%c399] : memref<432xf32, #tpu.memory_space<smem>>
    %1942 = vector.broadcast %1941 : f32 to vector<16x16xf32>
    %1943 = arith.mulf %1942, %1355 : vector<16x16xf32>
    %1944 = arith.addf %1940, %1943 : vector<16x16xf32>
    %c415 = arith.constant 415 : index
    %1945 = memref.load %arg2[%c415] : memref<432xf32, #tpu.memory_space<smem>>
    %1946 = vector.broadcast %1945 : f32 to vector<16x16xf32>
    %1947 = arith.mulf %1946, %1356 : vector<16x16xf32>
    %1948 = arith.addf %1944, %1947 : vector<16x16xf32>
    %c431 = arith.constant 431 : index
    %1949 = memref.load %arg2[%c431] : memref<432xf32, #tpu.memory_space<smem>>
    %1950 = vector.broadcast %1949 : f32 to vector<16x16xf32>
    %1951 = arith.mulf %1950, %1357 : vector<16x16xf32>
    %1952 = arith.addf %1948, %1951 : vector<16x16xf32>
    %c11_61 = arith.constant 11 : index
    %1953 = memref.load %arg3[%c11_61] : memref<12xf32, #tpu.memory_space<smem>>
    %1954 = vector.broadcast %1953 : f32 to vector<16x16xf32>
    %1955 = arith.addf %1952, %1954 : vector<16x16xf32>
    %cst_62 = arith.constant 0.000000e+00 : f32
    %1956 = vector.broadcast %cst_62 : f32 to vector<16x16xf32>
    %1957 = arith.maximumf %1955, %1956 : vector<16x16xf32>
    %c0_63 = arith.constant 0 : index
    %c0_64 = arith.constant 0 : index
    %1958 = vector.load %arg4[%c0_63, %c0_64] : memref<4x128xf32, #tpu.memory_space<vmem>>, vector<4x128xf32>
    %c0_65 = arith.constant 0 : index
    %c0_66 = arith.constant 0 : index
    %1959 = vector.load %arg5[%c0_65, %c0_66] : memref<1x128xf32, #tpu.memory_space<vmem>>, vector<1x128xf32>
    %cst_67 = arith.constant dense<0.000000e+00> : vector<16xf32>
    %1960 = vector.multi_reduction <add>, %1507, %cst_67 [1] : vector<16x16xf32> to vector<16xf32>
    %1961 = vector.shape_cast %1960 : vector<16xf32> to vector<16x1xf32>
    %cst_68 = arith.constant dense<0.000000e+00> : vector<1xf32>
    %1962 = vector.multi_reduction <add>, %1961, %cst_68 [0] : vector<16x1xf32> to vector<1xf32>
    %1963 = vector.shape_cast %1962 : vector<1xf32> to vector<1x1xf32>
    %cst_69 = arith.constant 3.906250e-03 : f32
    %1964 = vector.broadcast %cst_69 : f32 to vector<1x1xf32>
    %1965 = arith.mulf %1963, %1964 : vector<1x1xf32>
    %1966 = vector.extract_strided_slice %1958 {offsets = [0, 0], sizes = [1, 128], strides = [1, 1]} : vector<4x128xf32> to vector<1x128xf32>
    %1967 = vector.broadcast %1965 : vector<1x1xf32> to vector<1x128xf32>
    %1968 = arith.mulf %1967, %1966 : vector<1x128xf32>
    %1969 = arith.addf %1959, %1968 : vector<1x128xf32>
    %cst_70 = arith.constant dense<0.000000e+00> : vector<16xf32>
    %1970 = vector.multi_reduction <add>, %1657, %cst_70 [1] : vector<16x16xf32> to vector<16xf32>
    %1971 = vector.shape_cast %1970 : vector<16xf32> to vector<16x1xf32>
    %cst_71 = arith.constant dense<0.000000e+00> : vector<1xf32>
    %1972 = vector.multi_reduction <add>, %1971, %cst_71 [0] : vector<16x1xf32> to vector<1xf32>
    %1973 = vector.shape_cast %1972 : vector<1xf32> to vector<1x1xf32>
    %cst_72 = arith.constant 3.906250e-03 : f32
    %1974 = vector.broadcast %cst_72 : f32 to vector<1x1xf32>
    %1975 = arith.mulf %1973, %1974 : vector<1x1xf32>
    %1976 = vector.extract_strided_slice %1958 {offsets = [1, 0], sizes = [1, 128], strides = [1, 1]} : vector<4x128xf32> to vector<1x128xf32>
    %1977 = vector.broadcast %1975 : vector<1x1xf32> to vector<1x128xf32>
    %1978 = arith.mulf %1977, %1976 : vector<1x128xf32>
    %1979 = arith.addf %1969, %1978 : vector<1x128xf32>
    %cst_73 = arith.constant dense<0.000000e+00> : vector<16xf32>
    %1980 = vector.multi_reduction <add>, %1807, %cst_73 [1] : vector<16x16xf32> to vector<16xf32>
    %1981 = vector.shape_cast %1980 : vector<16xf32> to vector<16x1xf32>
    %cst_74 = arith.constant dense<0.000000e+00> : vector<1xf32>
    %1982 = vector.multi_reduction <add>, %1981, %cst_74 [0] : vector<16x1xf32> to vector<1xf32>
    %1983 = vector.shape_cast %1982 : vector<1xf32> to vector<1x1xf32>
    %cst_75 = arith.constant 3.906250e-03 : f32
    %1984 = vector.broadcast %cst_75 : f32 to vector<1x1xf32>
    %1985 = arith.mulf %1983, %1984 : vector<1x1xf32>
    %1986 = vector.extract_strided_slice %1958 {offsets = [2, 0], sizes = [1, 128], strides = [1, 1]} : vector<4x128xf32> to vector<1x128xf32>
    %1987 = vector.broadcast %1985 : vector<1x1xf32> to vector<1x128xf32>
    %1988 = arith.mulf %1987, %1986 : vector<1x128xf32>
    %1989 = arith.addf %1979, %1988 : vector<1x128xf32>
    %cst_76 = arith.constant dense<0.000000e+00> : vector<16xf32>
    %1990 = vector.multi_reduction <add>, %1957, %cst_76 [1] : vector<16x16xf32> to vector<16xf32>
    %1991 = vector.shape_cast %1990 : vector<16xf32> to vector<16x1xf32>
    %cst_77 = arith.constant dense<0.000000e+00> : vector<1xf32>
    %1992 = vector.multi_reduction <add>, %1991, %cst_77 [0] : vector<16x1xf32> to vector<1xf32>
    %1993 = vector.shape_cast %1992 : vector<1xf32> to vector<1x1xf32>
    %cst_78 = arith.constant 3.906250e-03 : f32
    %1994 = vector.broadcast %cst_78 : f32 to vector<1x1xf32>
    %1995 = arith.mulf %1993, %1994 : vector<1x1xf32>
    %1996 = vector.extract_strided_slice %1958 {offsets = [3, 0], sizes = [1, 128], strides = [1, 1]} : vector<4x128xf32> to vector<1x128xf32>
    %1997 = vector.broadcast %1995 : vector<1x1xf32> to vector<1x128xf32>
    %1998 = arith.mulf %1997, %1996 : vector<1x128xf32>
    %1999 = arith.addf %1989, %1998 : vector<1x128xf32>
    %c0_79 = arith.constant 0 : index
    %c0_80 = arith.constant 0 : index
    %c0_81 = arith.constant 0 : index
    %2000 = vector.load %arg6[%c0_79, %c0_80, %c0_81] : memref<1x1x128xf32, #tpu.memory_space<vmem>>, vector<1x1x128xf32>
    %2001 = vector.shape_cast %2000 : vector<1x1x128xf32> to vector<1x128xf32>
    %2002 = vector.shape_cast %1999 : vector<1x128xf32> to vector<1x1x128xf32>
    tpu.vector_store %arg6[%c0_79, %c0_80, %c0_81], %2002 {strides = array<i32>} : memref<1x1x128xf32, #tpu.memory_space<vmem>>, vector<1x1x128xf32>,
    return
  }
  func.func @transform_0(%arg0: i32) -> (i32, i32, i32, i32) {
    %c0_i32 = arith.constant 0 : i32
    %c0_i32_0 = arith.constant 0 : i32
    %c0_i32_1 = arith.constant 0 : i32
    %c0_i32_2 = arith.constant 0 : i32
    return %arg0, %c0_i32, %c0_i32_0, %c0_i32_1 : i32, i32, i32, i32
  }
  func.func @transform_1(%arg0: i32) -> i32 {
    %c0_i32 = arith.constant 0 : i32
    %c0_i32_0 = arith.constant 0 : i32
    return %c0_i32 : i32
  }
  func.func @transform_2(%arg0: i32) -> i32 {
    %c0_i32 = arith.constant 0 : i32
    %c0_i32_0 = arith.constant 0 : i32
    return %c0_i32 : i32
  }
  func.func @transform_3(%arg0: i32) -> (i32, i32) {
    %c0_i32 = arith.constant 0 : i32
    %c0_i32_0 = arith.constant 0 : i32
    %c0_i32_1 = arith.constant 0 : i32
    return %c0_i32, %c0_i32_0 : i32, i32
  }
  func.func @transform_4(%arg0: i32) -> (i32, i32) {
    %c0_i32 = arith.constant 0 : i32
    %c0_i32_0 = arith.constant 0 : i32
    %c0_i32_1 = arith.constant 0 : i32
    return %c0_i32, %c0_i32_0 : i32, i32
  }
  func.func @transform_5(%arg0: i32) -> (i32, i32, i32) {
    %c0_i32 = arith.constant 0 : i32
    %c0_i32_0 = arith.constant 0 : i32
    %c0_i32_1 = arith.constant 0 : i32
    return %arg0, %c0_i32, %c0_i32_0 : i32, i32, i32
  }
}

</mosaic_0001>

<llo_original>
// kernel: tpu_custom_call.1
$region0: #{tpu_custom_call.1}
  #allocation0 [shape = 'u32[]', space=smem, size = 0x4, offset = 0x4, fixed_abs, tag = 'smem constant byte address 0x4 - core index']
  #allocation1 [shape = 'u32[72,128]{1,0:T(1,128)}', space=vmem, size = 0x9000, scoped, tag = 'internal scratch']
  %s0 = inlined_call_operand.vmem [shape: f32[2,4,22,22], index: 0, kind: input, shape index: {}]
  %s1 = inlined_call_operand.vmem [shape: f32[432], index: 1, kind: input, shape index: {}]
  %s2 = inlined_call_operand.vmem [shape: f32[12], index: 2, kind: input, shape index: {}]
  %s3 = inlined_call_operand.vmem [shape: f32[4,128], index: 3, kind: input, shape index: {}]
  %s4 = inlined_call_operand.vmem [shape: f32[1,128], index: 4, kind: input, shape index: {}]
  %s5 = inlined_call_operand.hbm [shape: f32[2,1,128], index: 5, kind: output, shape index: {}]
  %s6 = sld [smem:[#allocation0]]
  $region61: #{tpu_custom_call.1} parent=0
    _
  %s8 = ssub.s32 1, %s6
  %s9 = scalar_select 0, %s8, %s6
  $region1: #{tpu_custom_call.1} parent=0
    #allocation2 [shape = 'u8[2048]{0}', space=smem, size = 0x800, scoped, tag = 'input window, operand 1, single buffered']
    #allocation3 [shape = 's32[2]{0}', space=sflag, size = 0x8, scoped, tag = 'scoped memory for tpu_custom_call.1']
    #allocation4 [shape = 's32[2]{0}', space=sflag, size = 0x8, scoped, tag = 'scoped memory for tpu_custom_call.1']
    #allocation5 [shape = 'u8[512]{0}', space=smem, size = 0x200, scoped, tag = 'input window, operand 2, single buffered']
    #allocation6 [shape = 's32[1]{0}', space=sflag, size = 0x4, scoped, tag = 'scoped memory for tpu_custom_call.1']
    #allocation7 [shape = 'u8[1024]{0}', space=vmem, size = 0x400, scoped, tag = 'output window, operand 0']
    %10 = vsyncpa [#allocation4], 0
    %11 = vsyncpa [#allocation6], 0
    %12 = vsyncpa [#allocation3], 0
    %s13 = scalar_lea.sflag [#allocation3], 1
    %14 = vsyncpa %s13, 0
    loop: start=0, step=1, limit=4
    $region2: #{tpu_custom_call.1} parent=1 // loop_pre_header
      _
    $region3: #{tpu_custom_call.1} parent=1 // loop_header
      %s16 = sphi 0, %s20
      %p17 = scmp.ge.s32.totalorder %s16, 4
      %s26 = sphi 0, %s28
      %s29 = sphi 0, %s26
      %s30 = sphi 0, %s29
      %s46 = sphi 0, %s30
      %s50 = sphi 0, %s50
      %s52 = sphi 0, %s50
      %s53 = sphi 0, %s52
      %s67 = sphi 0, %s53
      %s71 = sphi 0, %s71
      %s73 = sphi 0, %s71
      %s74 = sphi 0, %s73
      %s88 = sphi 0, %s74
      %s92 = sphi 0, %s92
      %s94 = sphi 0, %s92
      %s95 = sphi 0, %s94
      %s109 = sphi 0, %s95
      %s113 = sphi 0, %s113
      %s115 = sphi 0, %s113
      %s116 = sphi 0, %s115
      %s130 = sphi 0, %s116
      %s136 = sphi 0, %s138
      %s139 = sphi 0, %s136
      %s140 = sphi 0, %s139
      %s156 = sphi 0, %s140
    $region4: #{tpu_custom_call.1} parent=1 // loop_header_branch
      %19 = sbr.rel (%p17) target = $region8
    $region5: #{tpu_custom_call.1} parent=1 // loop_body
      %s21 = ssub.s32 %s16, 1
      %s22 = ssub.s32 %s16, 2
      %s23 = sadd.s32 %s16, 1
      %s24 = ssub.s32 %s16, %s23
      %p25 = scmp.eq.s32.totalorder %s24, 0
      %s27 = sadd.s32 %s26, 1
      %s28 = scalar_select %p25, %s26, %s27
      %p31 = pneg %p25
      %p32 = scmp.eq.s32.totalorder %s16, 1
      %p33 = por %p31, %p32
      %p34 = scmp.ne.s32.totalorder %s26, %s29
      %p35 = scmp.eq.s32.totalorder %s16, 0
      %p36 = por %p34, %p35
      %p37 = scmp.ne.s32.totalorder %s26, %s29
      %p38 = scmp.eq.s32.totalorder %s21, 1
      %p39 = por %p37, %p38
      %p40 = scmp.ne.s32.totalorder %s29, %s30
      %p41 = scmp.eq.s32.totalorder %s21, 0
      %p42 = por %p40, %p41
      %p43 = scmp.ne.s32.totalorder %s29, %s30
      %p44 = scmp.eq.s32.totalorder %s22, 1
      %p45 = por %p43, %p44
      %p47 = scmp.ne.s32.totalorder %s30, %s46
      %p48 = scmp.eq.s32.totalorder %s22, 0
      %p49 = por %p47, %p48
      %s51 = sadd.s32 %s50, 1
      %p54 = scmp.eq.s32.totalorder %s16, 1
      %p55 = scmp.ne.s32.totalorder %s50, %s52
      %p56 = scmp.eq.s32.totalorder %s16, 0
      %p57 = por %p55, %p56
      %p58 = scmp.ne.s32.totalorder %s50, %s52
      %p59 = scmp.eq.s32.totalorder %s21, 1
      %p60 = por %p58, %p59
      %p61 = scmp.ne.s32.totalorder %s52, %s53
      %p62 = scmp.eq.s32.totalorder %s21, 0
      %p63 = por %p61, %p62
      %p64 = scmp.ne.s32.totalorder %s52, %s53
      %p65 = scmp.eq.s32.totalorder %s22, 1
      %p66 = por %p64, %p65
      %p68 = scmp.ne.s32.totalorder %s53, %s67
      %p69 = scmp.eq.s32.totalorder %s22, 0
      %p70 = por %p68, %p69
      %s72 = sadd.s32 %s71, 1
      %p75 = scmp.eq.s32.totalorder %s16, 1
      %p76 = scmp.ne.s32.totalorder %s71, %s73
      %p77 = scmp.eq.s32.totalorder %s16, 0
      %p78 = por %p76, %p77
      %p79 = scmp.ne.s32.totalorder %s71, %s73
      %p80 = scmp.eq.s32.totalorder %s21, 1
      %p81 = por %p79, %p80
      %p82 = scmp.ne.s32.totalorder %s73, %s74
      %p83 = scmp.eq.s32.totalorder %s21, 0
      %p84 = por %p82, %p83
      %p85 = scmp.ne.s32.totalorder %s73, %s74
      %p86 = scmp.eq.s32.totalorder %s22, 1
      %p87 = por %p85, %p86
      %p89 = scmp.ne.s32.totalorder %s74, %s88
      %p90 = scmp.eq.s32.totalorder %s22, 0
      %p91 = por %p89, %p90
      %s93 = sadd.s32 %s92, 1
      %p96 = scmp.eq.s32.totalorder %s16, 1
      %p97 = scmp.ne.s32.totalorder %s92, %s94
      %p98 = scmp.eq.s32.totalorder %s16, 0
      %p99 = por %p97, %p98
      %p100 = scmp.ne.s32.totalorder %s92, %s94
      %p101 = scmp.eq.s32.totalorder %s21, 1
      %p102 = por %p100, %p101
      %p103 = scmp.ne.s32.totalorder %s94, %s95
      %p104 = scmp.eq.s32.totalorder %s21, 0
      %p105 = por %p103, %p104
      %p106 = scmp.ne.s32.totalorder %s94, %s95
      %p107 = scmp.eq.s32.totalorder %s22, 1
      %p108 = por %p106, %p107
      %p110 = scmp.ne.s32.totalorder %s95, %s109
      %p111 = scmp.eq.s32.totalorder %s22, 0
      %p112 = por %p110, %p111
      %s114 = sadd.s32 %s113, 1
      %p117 = scmp.eq.s32.totalorder %s16, 1
      %p118 = scmp.ne.s32.totalorder %s113, %s115
      %p119 = scmp.eq.s32.totalorder %s16, 0
      %p120 = por %p118, %p119
      %p121 = scmp.ne.s32.totalorder %s113, %s115
      %p122 = scmp.eq.s32.totalorder %s21, 1
      %p123 = por %p121, %p122
      %p124 = scmp.ne.s32.totalorder %s115, %s116
      %p125 = scmp.eq.s32.totalorder %s21, 0
      %p126 = por %p124, %p125
      %p127 = scmp.ne.s32.totalorder %s115, %s116
      %p128 = scmp.eq.s32.totalorder %s22, 1
      %p129 = por %p127, %p128
      %p131 = scmp.ne.s32.totalorder %s116, %s130
      %p132 = scmp.eq.s32.totalorder %s22, 0
      %p133 = por %p131, %p132
      %s134 = ssub.s32 %s16, %s23
      %p135 = scmp.eq.s32.totalorder %s134, 0
      %s137 = sadd.s32 %s136, 1
      %s138 = scalar_select %p135, %s136, %s137
      %p141 = pneg %p135
      %p142 = scmp.eq.s32.totalorder %s16, 1
      %p143 = por %p141, %p142
      %p144 = scmp.ne.s32.totalorder %s136, %s139
      %p145 = scmp.eq.s32.totalorder %s16, 0
      %p146 = por %p144, %p145
      %p147 = scmp.ne.s32.totalorder %s136, %s139
      %p148 = scmp.eq.s32.totalorder %s21, 1
      %p149 = por %p147, %p148
      %p150 = scmp.ne.s32.totalorder %s139, %s140
      %p151 = scmp.eq.s32.totalorder %s21, 0
      %p152 = por %p150, %p151
      %p153 = scmp.ne.s32.totalorder %s139, %s140
      %p154 = scmp.eq.s32.totalorder %s22, 1
      %p155 = por %p153, %p154
      %p157 = scmp.ne.s32.totalorder %s140, %s156
      %p158 = scmp.eq.s32.totalorder %s22, 0
      %p159 = por %p157, %p158
      %p160 = scmp.le.s32.totalorder 1, %s16
      %p161 = scmp.lt.s32.totalorder %s16, 3
      %p162 = pnand %p160, %p161
      %p163 = pneg %p162
      // Predicated region
      $region9: #{tpu_custom_call.1} parent=5 // pred_check
        _
      $region10: #{tpu_custom_call.1} parent=5 // pred_check_branch
        %165 = sbr.rel (%p162) target = $region12
      $region11: #{tpu_custom_call.1} parent=5 // pred_region
        %s166 = ssub.s32 %s16, 1
        // Predicated region
        $region13: #{tpu_custom_call.1} parent=11 // pred_check
          %p167 = pneg %p63
        $region14: #{tpu_custom_call.1} parent=11 // pred_check_branch
          %169 = sbr.rel (%p167) target = $region16
        $region15: #{tpu_custom_call.1} parent=11 // pred_region
          %171 = vsyncadd [#allocation4], 0
          %s173 = sshll.u32 %s1, 4
          %s174 = int_to_ptr.vmem [resolvable:$true] %s173
          %176 = dma.vmem_to_smem %s174, 64, [#allocation2], [#allocation4]
        $region16: #{tpu_custom_call.1} parent=11 // pred_fallthru
          _
        // Predicated region
        $region17: #{tpu_custom_call.1} parent=11 // pred_check
          %p177 = pneg %p84
        $region18: #{tpu_custom_call.1} parent=11 // pred_check_branch
          %179 = sbr.rel (%p177) target = $region20
        $region19: #{tpu_custom_call.1} parent=11 // pred_region
          %181 = vsyncadd [#allocation6], 0
          %s183 = sshll.u32 %s2, 4
          %s184 = int_to_ptr.vmem [resolvable:$true] %s183
          %186 = dma.vmem_to_smem %s184, 16, [#allocation5], [#allocation6]
        $region20: #{tpu_custom_call.1} parent=11 // pred_fallthru
          _
        // Predicated region
        $region21: #{tpu_custom_call.1} parent=11 // pred_check
          %p187 = pneg %p105
        $region22: #{tpu_custom_call.1} parent=11 // pred_check_branch
          %189 = sbr.rel (%p187) target = $region24
        $region23: #{tpu_custom_call.1} parent=11 // pred_region
          _
        $region24: #{tpu_custom_call.1} parent=11 // pred_fallthru
          _
        // Predicated region
        $region25: #{tpu_custom_call.1} parent=11 // pred_check
          %p190 = pneg %p126
        $region26: #{tpu_custom_call.1} parent=11 // pred_check_branch
          %192 = sbr.rel (%p190) target = $region28
        $region27: #{tpu_custom_call.1} parent=11 // pred_region
          _
        $region28: #{tpu_custom_call.1} parent=11 // pred_fallthru
          _
      $region12: #{tpu_custom_call.1} parent=5 // pred_fallthru
        _
      %p193 = scmp.lt.s32.totalorder %s16, 2
      // Predicated region
      $region29: #{tpu_custom_call.1} parent=5 // pred_check
        %p194 = pneg %p193
      $region30: #{tpu_custom_call.1} parent=5 // pred_check_branch
        %196 = sbr.rel (%p194) target = $region32
      $region31: #{tpu_custom_call.1} parent=5 // pred_region
        // Predicated region
        $region33: #{tpu_custom_call.1} parent=31 // pred_check
          %p197 = pneg %p36
        $region34: #{tpu_custom_call.1} parent=31 // pred_check_branch
          %199 = sbr.rel (%p197) target = $region36
        $region35: #{tpu_custom_call.1} parent=31 // pred_region
          %p200 = scmp.lt.s32.totalorder %s16, 1
          %s201 = scalar_select %p200, %s16, 1
          %s202 = smul.addr %s201, 12
          %s203 = smul.addr %s202, 8
          %s204 = scalar_lea.vmem %s0, %s203
        $region36: #{tpu_custom_call.1} parent=31 // pred_fallthru
          _
      $region32: #{tpu_custom_call.1} parent=5 // pred_fallthru
        _
      %p205 = scmp.le.s32.totalorder 1, %s16
      %p206 = scmp.lt.s32.totalorder %s16, 3
      %p207 = pnand %p205, %p206
      %p208 = pneg %p207
      // Predicated region
      $region37: #{tpu_custom_call.1} parent=5 // pred_check
        _
      $region38: #{tpu_custom_call.1} parent=5 // pred_check_branch
        %210 = sbr.rel (%p207) target = $region40
      $region39: #{tpu_custom_call.1} parent=5 // pred_region
        %s211 = ssub.s32 %s16, 1
        // Predicated region
        $region41: #{tpu_custom_call.1} parent=39 // pred_check
          %p212 = pneg %p63
        $region42: #{tpu_custom_call.1} parent=39 // pred_check_branch
          %214 = sbr.rel (%p212) target = $region44
        $region43: #{tpu_custom_call.1} parent=39 // pred_region
          %216 = dma.done [#allocation4], 64
        $region44: #{tpu_custom_call.1} parent=39 // pred_fallthru
          _
        // Predicated region
        $region45: #{tpu_custom_call.1} parent=39 // pred_check
          %p217 = pneg %p84
        $region46: #{tpu_custom_call.1} parent=39 // pred_check_branch
          %219 = sbr.rel (%p217) target = $region48
        $region47: #{tpu_custom_call.1} parent=39 // pred_region
          %221 = dma.done [#allocation6], 16
        $region48: #{tpu_custom_call.1} parent=39 // pred_fallthru
          _
        %222 = sfence
        %p223 = scmp.lt.s32.totalorder %s21, 1
        %s224 = scalar_select %p223, %s21, 1
        %s225 = smul.addr %s224, 12
        %s226 = smul.addr %s225, 8
        %s227 = scalar_lea.vmem %s0, %s226
        %p228 = pneg %p42
        %p229 = pneg %p39
        %p230 = pneg %p63
        %p231 = pneg %p60
        %p232 = pneg %p84
        %p233 = pneg %p81
        %p234 = pneg %p105
        %p235 = pneg %p102
        %p236 = pneg %p126
        %p237 = pneg %p123
        %p238 = pneg %p152
        %p239 = pneg %p149
        %s240 = sand.u32 %s139, 1
        %s241 = scalar_lea.sflag [#allocation3], %s240
        %s242 = sand.u32 %s139, 1
        %s243 = scalar_lea.vmem [#allocation7], %s242
        %p244 = scmp.lt.s32.totalorder %s21, 1
        %s245 = scalar_select %p244, %s21, 1
        %s246 = smul.addr %s245, 12
        %s247 = smul.addr %s246, 8
        %s248 = scalar_lea.vmem %s0, %s247
        %v249 = vld [vmem:[%s248] sm:$0xff]
        %v250 = vld [vmem:[%s248 + $0x8] sm:$0xff]
        %v251 = vld [vmem:[%s248 + $0x10] sm:$0x3f]
        %s252 = scalar_lea.vmem %s248, 24
        %v253 = vld [vmem:[%s252] sm:$0xff]
        %v254 = vld [vmem:[%s252 + $0x8] sm:$0xff]
        %v255 = vld [vmem:[%s252 + $0x10] sm:$0x3f]
        %s256 = scalar_lea.vmem %s248, 48
        %v257 = vld [vmem:[%s256] sm:$0xff]
        %v258 = vld [vmem:[%s256 + $0x8] sm:$0xff]
        %v259 = vld [vmem:[%s256 + $0x10] sm:$0x3f]
        %s260 = scalar_lea.vmem %s248, 72
        %v261 = vld [vmem:[%s260] sm:$0xff]
        %v262 = vld [vmem:[%s260 + $0x8] sm:$0xff]
        %v263 = vld [vmem:[%s260 + $0x10] sm:$0x3f]
        %v264 = vlaneseq
        %v265 = vshrl.u32 %v264, 7
        %v266 = vadd.s32 %v265, 8
        %v267 = vadd.s32 %v265, 16
        %v268 = vlaneseq
        %v269 = vand.u32 %v268, 127
        %vm270 = vcmp.ge.s32.totalorder %v265, 2
        %vm271 = vcmp.ge.s32.totalorder %v266, 2
        %vm272 = vcmp.ge.s32.totalorder %v267, 2
        %vm273 = vcmp.lt.s32.totalorder %v265, 18
        %vm274 = vcmp.lt.s32.totalorder %v266, 18
        %vm275 = vcmp.lt.s32.totalorder %v267, 18
        %vm276 = vmand %vm270, %vm273
        %vm277 = vmand %vm271, %vm274
        %vm278 = vmand %vm272, %vm275
        %vm279 = vcmp.ge.s32.totalorder %v269, 2
        %vm280 = vmand %vm276, %vm279
        %vm281 = vmand %vm277, %vm279
        %vm282 = vmand %vm278, %vm279
        %vm283 = vcmp.lt.s32.totalorder %v269, 18
        %vm284 = vmand %vm280, %vm283
        %vm285 = vmand %vm281, %vm283
        %vm286 = vmand %vm282, %vm283
        %s287 = sld [smem:[#allocation2]]
        %v288 = vstv %s287
        %v289 = vmul.f32 %v288, %v249
        %v290 = vmul.f32 %v288, %v250
        %v291 = vmul.f32 %v288, %v251
        %v292 = vadd.f32 %v289, 0.0
        %v293 = vadd.f32 %v290, 0.0
        %v294 = vadd.f32 %v291, 0.0
        %s295 = sld [smem:[#allocation2 + $0x10]]
        %v296 = vstv %s295
        %v297 = vmul.f32 %v296, %v249
        %v298 = vmul.f32 %v296, %v250
        %v299 = vmul.f32 %v296, %v251
        %303 = vrot.lane.b32.xlu0 %v297, 127
        %v304 = vpop.permute.xlu0 %303
        %305 = vrot.lane.b32.xlu0 %v298, 127
        %v306 = vpop.permute.xlu0 %305
        %307 = vrot.lane.b32.xlu0 %v299, 127
        %v308 = vpop.permute.xlu0 %307
        %v312 = vadd.f32 %v292, %v304
        %v313 = vadd.f32 %v293, %v306
        %v314 = vadd.f32 %v294, %v308
        %s315 = sld [smem:[#allocation2 + $0x20]]
        %v316 = vstv %s315
        %v317 = vmul.f32 %v316, %v249
        %v318 = vmul.f32 %v316, %v250
        %v319 = vmul.f32 %v316, %v251
        %323 = vrot.lane.b32.xlu0 %v317, 126
        %v324 = vpop.permute.xlu0 %323
        %325 = vrot.lane.b32.xlu0 %v318, 126
        %v326 = vpop.permute.xlu0 %325
        %327 = vrot.lane.b32.xlu0 %v319, 126
        %v328 = vpop.permute.xlu0 %327
        %v332 = vadd.f32 %v312, %v324
        %v333 = vadd.f32 %v313, %v326
        %v334 = vadd.f32 %v314, %v328
        %s335 = sld [smem:[#allocation2 + $0x30]]
        %v336 = vstv %s335
        %v337 = vmul.f32 %v336, %v249
        %v338 = vmul.f32 %v336, %v250
        %v339 = vmul.f32 %v336, %v251
        %vm343 = vcmask 1046528
        %v344 = vrot.slane %v337, 1
        %v345 = vrot.slane %v338, 1
        %v346 = vsel %vm343, %v344, %v345
        %v347 = vrot.slane %v339, 1
        %v348 = vsel %vm343, %v345, %v347
        %v352 = vadd.f32 %v332, %v346
        %v353 = vadd.f32 %v333, %v348
        %v354 = vadd.f32 %v334, %v347
        %s355 = sld [smem:[#allocation2 + $0x40]]
        %v356 = vstv %s355
        %v357 = vmul.f32 %v356, %v249
        %v358 = vmul.f32 %v356, %v250
        %v359 = vmul.f32 %v356, %v251
        %v363 = vrot.slane %v357, 1
        %v364 = vrot.slane %v358, 1
        %v365 = vsel %vm343, %v363, %v364
        %v366 = vrot.slane %v359, 1
        %v367 = vsel %vm343, %v364, %v366
        %368 = vrot.lane.b32.xlu0 %v365, 127
        %v369 = vpop.permute.xlu0 %368
        %370 = vrot.lane.b32.xlu0 %v367, 127
        %v371 = vpop.permute.xlu0 %370
        %372 = vrot.lane.b32.xlu0 %v366, 127
        %v373 = vpop.permute.xlu0 %372
        %v377 = vadd.f32 %v352, %v369
        %v378 = vadd.f32 %v353, %v371
        %v379 = vadd.f32 %v354, %v373
        %s380 = sld [smem:[#allocation2 + $0x50]]
        %v381 = vstv %s380
        %v382 = vmul.f32 %v381, %v249
        %v383 = vmul.f32 %v381, %v250
        %v384 = vmul.f32 %v381, %v251
        %v388 = vrot.slane %v382, 1
        %v389 = vrot.slane %v383, 1
        %v390 = vsel %vm343, %v388, %v389
        %v391 = vrot.slane %v384, 1
        %v392 = vsel %vm343, %v389, %v391
        %393 = vrot.lane.b32.xlu0 %v390, 126
        %v394 = vpop.permute.xlu0 %393
        %395 = vrot.lane.b32.xlu0 %v392, 126
        %v396 = vpop.permute.xlu0 %395
        %397 = vrot.lane.b32.xlu0 %v391, 126
        %v398 = vpop.permute.xlu0 %397
        %v402 = vadd.f32 %v377, %v394
        %v403 = vadd.f32 %v378, %v396
        %v404 = vadd.f32 %v379, %v398
        %s405 = sld [smem:[#allocation2 + $0x60]]
        %v406 = vstv %s405
        %v407 = vmul.f32 %v406, %v249
        %v408 = vmul.f32 %v406, %v250
        %v409 = vmul.f32 %v406, %v251
        %vm413 = vcmask 1045504
        %v414 = vrot.slane %v407, 2
        %v415 = vrot.slane %v408, 2
        %v416 = vsel %vm413, %v414, %v415
        %v417 = vrot.slane %v409, 2
        %v418 = vsel %vm413, %v415, %v417
        %v422 = vadd.f32 %v402, %v416
        %v423 = vadd.f32 %v403, %v418
        %v424 = vadd.f32 %v404, %v417
        %s425 = sld [smem:[#allocation2 + $0x70]]
        %v426 = vstv %s425
        %v427 = vmul.f32 %v426, %v249
        %v428 = vmul.f32 %v426, %v250
        %v429 = vmul.f32 %v426, %v251
        %v433 = vrot.slane %v427, 2
        %v434 = vrot.slane %v428, 2
        %v435 = vsel %vm413, %v433, %v434
        %v436 = vrot.slane %v429, 2
        %v437 = vsel %vm413, %v434, %v436
        %438 = vrot.lane.b32.xlu0 %v435, 127
        %v439 = vpop.permute.xlu0 %438
        %440 = vrot.lane.b32.xlu0 %v437, 127
        %v441 = vpop.permute.xlu0 %440
        %442 = vrot.lane.b32.xlu0 %v436, 127
        %v443 = vpop.permute.xlu0 %442
        %v447 = vadd.f32 %v422, %v439
        %v448 = vadd.f32 %v423, %v441
        %v449 = vadd.f32 %v424, %v443
        %s450 = sld [smem:[#allocation2 + $0x80]]
        %v451 = vstv %s450
        %v452 = vmul.f32 %v451, %v249
        %v453 = vmul.f32 %v451, %v250
        %v454 = vmul.f32 %v451, %v251
        %v458 = vrot.slane %v452, 2
        %v459 = vrot.slane %v453, 2
        %v460 = vsel %vm413, %v458, %v459
        %v461 = vrot.slane %v454, 2
        %v462 = vsel %vm413, %v459, %v461
        %463 = vrot.lane.b32.xlu0 %v460, 126
        %v464 = vpop.permute.xlu0 %463
        %465 = vrot.lane.b32.xlu0 %v462, 126
        %v466 = vpop.permute.xlu0 %465
        %467 = vrot.lane.b32.xlu0 %v461, 126
        %v468 = vpop.permute.xlu0 %467
        %v472 = vadd.f32 %v447, %v464
        %v473 = vadd.f32 %v448, %v466
        %v474 = vadd.f32 %v449, %v468
        %s475 = sld [smem:[#allocation2 + $0x4]]
        %v476 = vstv %s475
        %v477 = vmul.f32 %v476, %v253
        %v478 = vmul.f32 %v476, %v254
        %v479 = vmul.f32 %v476, %v255
        %v480 = vadd.f32 %v472, %v477
        %v481 = vadd.f32 %v473, %v478
        %v482 = vadd.f32 %v474, %v479
        %s483 = sld [smem:[#allocation2 + $0x14]]
        %v484 = vstv %s483
        %v485 = vmul.f32 %v484, %v253
        %v486 = vmul.f32 %v484, %v254
        %v487 = vmul.f32 %v484, %v255
        %491 = vrot.lane.b32.xlu0 %v485, 127
        %v492 = vpop.permute.xlu0 %491
        %493 = vrot.lane.b32.xlu0 %v486, 127
        %v494 = vpop.permute.xlu0 %493
        %495 = vrot.lane.b32.xlu0 %v487, 127
        %v496 = vpop.permute.xlu0 %495
        %v500 = vadd.f32 %v480, %v492
        %v501 = vadd.f32 %v481, %v494
        %v502 = vadd.f32 %v482, %v496
        %s503 = sld [smem:[#allocation2 + $0x24]]
        %v504 = vstv %s503
        %v505 = vmul.f32 %v504, %v253
        %v506 = vmul.f32 %v504, %v254
        %v507 = vmul.f32 %v504, %v255
        %511 = vrot.lane.b32.xlu0 %v505, 126
        %v512 = vpop.permute.xlu0 %511
        %513 = vrot.lane.b32.xlu0 %v506, 126
        %v514 = vpop.permute.xlu0 %513
        %515 = vrot.lane.b32.xlu0 %v507, 126
        %v516 = vpop.permute.xlu0 %515
        %v520 = vadd.f32 %v500, %v512
        %v521 = vadd.f32 %v501, %v514
        %v522 = vadd.f32 %v502, %v516
        %s523 = sld [smem:[#allocation2 + $0x34]]
        %v524 = vstv %s523
        %v525 = vmul.f32 %v524, %v253
        %v526 = vmul.f32 %v524, %v254
        %v527 = vmul.f32 %v524, %v255
        %v531 = vrot.slane %v525, 1
        %v532 = vrot.slane %v526, 1
        %v533 = vsel %vm343, %v531, %v532
        %v534 = vrot.slane %v527, 1
        %v535 = vsel %vm343, %v532, %v534
        %v539 = vadd.f32 %v520, %v533
        %v540 = vadd.f32 %v521, %v535
        %v541 = vadd.f32 %v522, %v534
        %s542 = sld [smem:[#allocation2 + $0x44]]
        %v543 = vstv %s542
        %v544 = vmul.f32 %v543, %v253
        %v545 = vmul.f32 %v543, %v254
        %v546 = vmul.f32 %v543, %v255
        %v550 = vrot.slane %v544, 1
        %v551 = vrot.slane %v545, 1
        %v552 = vsel %vm343, %v550, %v551
        %v553 = vrot.slane %v546, 1
        %v554 = vsel %vm343, %v551, %v553
        %555 = vrot.lane.b32.xlu0 %v552, 127
        %v556 = vpop.permute.xlu0 %555
        %557 = vrot.lane.b32.xlu0 %v554, 127
        %v558 = vpop.permute.xlu0 %557
        %559 = vrot.lane.b32.xlu0 %v553, 127
        %v560 = vpop.permute.xlu0 %559
        %v564 = vadd.f32 %v539, %v556
        %v565 = vadd.f32 %v540, %v558
        %v566 = vadd.f32 %v541, %v560
        %s567 = sld [smem:[#allocation2 + $0x54]]
        %v568 = vstv %s567
        %v569 = vmul.f32 %v568, %v253
        %v570 = vmul.f32 %v568, %v254
        %v571 = vmul.f32 %v568, %v255
        %v575 = vrot.slane %v569, 1
        %v576 = vrot.slane %v570, 1
        %v577 = vsel %vm343, %v575, %v576
        %v578 = vrot.slane %v571, 1
        %v579 = vsel %vm343, %v576, %v578
        %580 = vrot.lane.b32.xlu0 %v577, 126
        %v581 = vpop.permute.xlu0 %580
        %582 = vrot.lane.b32.xlu0 %v579, 126
        %v583 = vpop.permute.xlu0 %582
        %584 = vrot.lane.b32.xlu0 %v578, 126
        %v585 = vpop.permute.xlu0 %584
        %v589 = vadd.f32 %v564, %v581
        %v590 = vadd.f32 %v565, %v583
        %v591 = vadd.f32 %v566, %v585
        %s592 = sld [smem:[#allocation2 + $0x64]]
        %v593 = vstv %s592
        %v594 = vmul.f32 %v593, %v253
        %v595 = vmul.f32 %v593, %v254
        %v596 = vmul.f32 %v593, %v255
        %v600 = vrot.slane %v594, 2
        %v601 = vrot.slane %v595, 2
        %v602 = vsel %vm413, %v600, %v601
        %v603 = vrot.slane %v596, 2
        %v604 = vsel %vm413, %v601, %v603
        %v608 = vadd.f32 %v589, %v602
        %v609 = vadd.f32 %v590, %v604
        %v610 = vadd.f32 %v591, %v603
        %s611 = sld [smem:[#allocation2 + $0x74]]
        %v612 = vstv %s611
        %v613 = vmul.f32 %v612, %v253
        %v614 = vmul.f32 %v612, %v254
        %v615 = vmul.f32 %v612, %v255
        %v619 = vrot.slane %v613, 2
        %v620 = vrot.slane %v614, 2
        %v621 = vsel %vm413, %v619, %v620
        %v622 = vrot.slane %v615, 2
        %v623 = vsel %vm413, %v620, %v622
        %624 = vrot.lane.b32.xlu0 %v621, 127
        %v625 = vpop.permute.xlu0 %624
        %626 = vrot.lane.b32.xlu0 %v623, 127
        %v627 = vpop.permute.xlu0 %626
        %628 = vrot.lane.b32.xlu0 %v622, 127
        %v629 = vpop.permute.xlu0 %628
        %v633 = vadd.f32 %v608, %v625
        %v634 = vadd.f32 %v609, %v627
        %v635 = vadd.f32 %v610, %v629
        %s636 = sld [smem:[#allocation2 + $0x84]]
        %v637 = vstv %s636
        %v638 = vmul.f32 %v637, %v253
        %v639 = vmul.f32 %v637, %v254
        %v640 = vmul.f32 %v637, %v255
        %v644 = vrot.slane %v638, 2
        %v645 = vrot.slane %v639, 2
        %v646 = vsel %vm413, %v644, %v645
        %v647 = vrot.slane %v640, 2
        %v648 = vsel %vm413, %v645, %v647
        %649 = vrot.lane.b32.xlu0 %v646, 126
        %v650 = vpop.permute.xlu0 %649
        %651 = vrot.lane.b32.xlu0 %v648, 126
        %v652 = vpop.permute.xlu0 %651
        %653 = vrot.lane.b32.xlu0 %v647, 126
        %v654 = vpop.permute.xlu0 %653
        %v658 = vadd.f32 %v633, %v650
        %v659 = vadd.f32 %v634, %v652
        %v660 = vadd.f32 %v635, %v654
        %s661 = sld [smem:[#allocation2 + $0x8]]
        %v662 = vstv %s661
        %v663 = vmul.f32 %v662, %v257
        %v664 = vmul.f32 %v662, %v258
        %v665 = vmul.f32 %v662, %v259
        %v666 = vadd.f32 %v658, %v663
        %v667 = vadd.f32 %v659, %v664
        %v668 = vadd.f32 %v660, %v665
        %s669 = sld [smem:[#allocation2 + $0x18]]
        %v670 = vstv %s669
        %v671 = vmul.f32 %v670, %v257
        %v672 = vmul.f32 %v670, %v258
        %v673 = vmul.f32 %v670, %v259
        %677 = vrot.lane.b32.xlu0 %v671, 127
        %v678 = vpop.permute.xlu0 %677
        %679 = vrot.lane.b32.xlu0 %v672, 127
        %v680 = vpop.permute.xlu0 %679
        %681 = vrot.lane.b32.xlu0 %v673, 127
        %v682 = vpop.permute.xlu0 %681
        %v686 = vadd.f32 %v666, %v678
        %v687 = vadd.f32 %v667, %v680
        %v688 = vadd.f32 %v668, %v682
        %s689 = sld [smem:[#allocation2 + $0x28]]
        %v690 = vstv %s689
        %v691 = vmul.f32 %v690, %v257
        %v692 = vmul.f32 %v690, %v258
        %v693 = vmul.f32 %v690, %v259
        %697 = vrot.lane.b32.xlu0 %v691, 126
        %v698 = vpop.permute.xlu0 %697
        %699 = vrot.lane.b32.xlu0 %v692, 126
        %v700 = vpop.permute.xlu0 %699
        %701 = vrot.lane.b32.xlu0 %v693, 126
        %v702 = vpop.permute.xlu0 %701
        %v706 = vadd.f32 %v686, %v698
        %v707 = vadd.f32 %v687, %v700
        %v708 = vadd.f32 %v688, %v702
        %s709 = sld [smem:[#allocation2 + $0x38]]
        %v710 = vstv %s709
        %v711 = vmul.f32 %v710, %v257
        %v712 = vmul.f32 %v710, %v258
        %v713 = vmul.f32 %v710, %v259
        %v717 = vrot.slane %v711, 1
        %v718 = vrot.slane %v712, 1
        %v719 = vsel %vm343, %v717, %v718
        %v720 = vrot.slane %v713, 1
        %v721 = vsel %vm343, %v718, %v720
        %v725 = vadd.f32 %v706, %v719
        %v726 = vadd.f32 %v707, %v721
        %v727 = vadd.f32 %v708, %v720
        %s728 = sld [smem:[#allocation2 + $0x48]]
        %v729 = vstv %s728
        %v730 = vmul.f32 %v729, %v257
        %v731 = vmul.f32 %v729, %v258
        %v732 = vmul.f32 %v729, %v259
        %v736 = vrot.slane %v730, 1
        %v737 = vrot.slane %v731, 1
        %v738 = vsel %vm343, %v736, %v737
        %v739 = vrot.slane %v732, 1
        %v740 = vsel %vm343, %v737, %v739
        %741 = vrot.lane.b32.xlu0 %v738, 127
        %v742 = vpop.permute.xlu0 %741
        %743 = vrot.lane.b32.xlu0 %v740, 127
        %v744 = vpop.permute.xlu0 %743
        %745 = vrot.lane.b32.xlu0 %v739, 127
        %v746 = vpop.permute.xlu0 %745
        %v750 = vadd.f32 %v725, %v742
        %v751 = vadd.f32 %v726, %v744
        %v752 = vadd.f32 %v727, %v746
        %s753 = sld [smem:[#allocation2 + $0x58]]
        %v754 = vstv %s753
        %v755 = vmul.f32 %v754, %v257
        %v756 = vmul.f32 %v754, %v258
        %v757 = vmul.f32 %v754, %v259
        %v761 = vrot.slane %v755, 1
        %v762 = vrot.slane %v756, 1
        %v763 = vsel %vm343, %v761, %v762
        %v764 = vrot.slane %v757, 1
        %v765 = vsel %vm343, %v762, %v764
        %766 = vrot.lane.b32.xlu0 %v763, 126
        %v767 = vpop.permute.xlu0 %766
        %768 = vrot.lane.b32.xlu0 %v765, 126
        %v769 = vpop.permute.xlu0 %768
        %770 = vrot.lane.b32.xlu0 %v764, 126
        %v771 = vpop.permute.xlu0 %770
        %v775 = vadd.f32 %v750, %v767
        %v776 = vadd.f32 %v751, %v769
        %v777 = vadd.f32 %v752, %v771
        %s778 = sld [smem:[#allocation2 + $0x68]]
        %v779 = vstv %s778
        %v780 = vmul.f32 %v779, %v257
        %v781 = vmul.f32 %v779, %v258
        %v782 = vmul.f32 %v779, %v259
        %v786 = vrot.slane %v780, 2
        %v787 = vrot.slane %v781, 2
        %v788 = vsel %vm413, %v786, %v787
        %v789 = vrot.slane %v782, 2
        %v790 = vsel %vm413, %v787, %v789
        %v794 = vadd.f32 %v775, %v788
        %v795 = vadd.f32 %v776, %v790
        %v796 = vadd.f32 %v777, %v789
        %s797 = sld [smem:[#allocation2 + $0x78]]
        %v798 = vstv %s797
        %v799 = vmul.f32 %v798, %v257
        %v800 = vmul.f32 %v798, %v258
        %v801 = vmul.f32 %v798, %v259
        %v805 = vrot.slane %v799, 2
        %v806 = vrot.slane %v800, 2
        %v807 = vsel %vm413, %v805, %v806
        %v808 = vrot.slane %v801, 2
        %v809 = vsel %vm413, %v806, %v808
        %810 = vrot.lane.b32.xlu0 %v807, 127
        %v811 = vpop.permute.xlu0 %810
        %812 = vrot.lane.b32.xlu0 %v809, 127
        %v813 = vpop.permute.xlu0 %812
        %814 = vrot.lane.b32.xlu0 %v808, 127
        %v815 = vpop.permute.xlu0 %814
        %v819 = vadd.f32 %v794, %v811
        %v820 = vadd.f32 %v795, %v813
        %v821 = vadd.f32 %v796, %v815
        %s822 = sld [smem:[#allocation2 + $0x88]]
        %v823 = vstv %s822
        %v824 = vmul.f32 %v823, %v257
        %v825 = vmul.f32 %v823, %v258
        %v826 = vmul.f32 %v823, %v259
        %v830 = vrot.slane %v824, 2
        %v831 = vrot.slane %v825, 2
        %v832 = vsel %vm413, %v830, %v831
        %v833 = vrot.slane %v826, 2
        %v834 = vsel %vm413, %v831, %v833
        %835 = vrot.lane.b32.xlu0 %v832, 126
        %v836 = vpop.permute.xlu0 %835
        %837 = vrot.lane.b32.xlu0 %v834, 126
        %v838 = vpop.permute.xlu0 %837
        %839 = vrot.lane.b32.xlu0 %v833, 126
        %v840 = vpop.permute.xlu0 %839
        %v844 = vadd.f32 %v819, %v836
        %v845 = vadd.f32 %v820, %v838
        %v846 = vadd.f32 %v821, %v840
        %s847 = sld [smem:[#allocation2 + $0xc]]
        %v848 = vstv %s847
        %v849 = vmul.f32 %v848, %v261
        %v850 = vmul.f32 %v848, %v262
        %v851 = vmul.f32 %v848, %v263
        %v852 = vadd.f32 %v844, %v849
        %v853 = vadd.f32 %v845, %v850
        %v854 = vadd.f32 %v846, %v851
        %s855 = sld [smem:[#allocation2 + $0x1c]]
        %v856 = vstv %s855
        %v857 = vmul.f32 %v856, %v261
        %v858 = vmul.f32 %v856, %v262
        %v859 = vmul.f32 %v856, %v263
        %863 = vrot.lane.b32.xlu0 %v857, 127
        %v864 = vpop.permute.xlu0 %863
        %865 = vrot.lane.b32.xlu0 %v858, 127
        %v866 = vpop.permute.xlu0 %865
        %867 = vrot.lane.b32.xlu0 %v859, 127
        %v868 = vpop.permute.xlu0 %867
        %v872 = vadd.f32 %v852, %v864
        %v873 = vadd.f32 %v853, %v866
        %v874 = vadd.f32 %v854, %v868
        %s875 = sld [smem:[#allocation2 + $0x2c]]
        %v876 = vstv %s875
        %v877 = vmul.f32 %v876, %v261
        %v878 = vmul.f32 %v876, %v262
        %v879 = vmul.f32 %v876, %v263
        %883 = vrot.lane.b32.xlu0 %v877, 126
        %v884 = vpop.permute.xlu0 %883
        %885 = vrot.lane.b32.xlu0 %v878, 126
        %v886 = vpop.permute.xlu0 %885
        %887 = vrot.lane.b32.xlu0 %v879, 126
        %v888 = vpop.permute.xlu0 %887
        %v892 = vadd.f32 %v872, %v884
        %v893 = vadd.f32 %v873, %v886
        %v894 = vadd.f32 %v874, %v888
        %s895 = sld [smem:[#allocation2 + $0x3c]]
        %v896 = vstv %s895
        %v897 = vmul.f32 %v896, %v261
        %v898 = vmul.f32 %v896, %v262
        %v899 = vmul.f32 %v896, %v263
        %v903 = vrot.slane %v897, 1
        %v904 = vrot.slane %v898, 1
        %v905 = vsel %vm343, %v903, %v904
        %v906 = vrot.slane %v899, 1
        %v907 = vsel %vm343, %v904, %v906
        %v911 = vadd.f32 %v892, %v905
        %v912 = vadd.f32 %v893, %v907
        %v913 = vadd.f32 %v894, %v906
        %s914 = sld [smem:[#allocation2 + $0x4c]]
        %v915 = vstv %s914
        %v916 = vmul.f32 %v915, %v261
        %v917 = vmul.f32 %v915, %v262
        %v918 = vmul.f32 %v915, %v263
        %v922 = vrot.slane %v916, 1
        %v923 = vrot.slane %v917, 1
        %v924 = vsel %vm343, %v922, %v923
        %v925 = vrot.slane %v918, 1
        %v926 = vsel %vm343, %v923, %v925
        %927 = vrot.lane.b32.xlu0 %v924, 127
        %v928 = vpop.permute.xlu0 %927
        %929 = vrot.lane.b32.xlu0 %v926, 127
        %v930 = vpop.permute.xlu0 %929
        %931 = vrot.lane.b32.xlu0 %v925, 127
        %v932 = vpop.permute.xlu0 %931
        %v936 = vadd.f32 %v911, %v928
        %v937 = vadd.f32 %v912, %v930
        %v938 = vadd.f32 %v913, %v932
        %s939 = sld [smem:[#allocation2 + $0x5c]]
        %v940 = vstv %s939
        %v941 = vmul.f32 %v940, %v261
        %v942 = vmul.f32 %v940, %v262
        %v943 = vmul.f32 %v940, %v263
        %v947 = vrot.slane %v941, 1
        %v948 = vrot.slane %v942, 1
        %v949 = vsel %vm343, %v947, %v948
        %v950 = vrot.slane %v943, 1
        %v951 = vsel %vm343, %v948, %v950
        %952 = vrot.lane.b32.xlu0 %v949, 126
        %v953 = vpop.permute.xlu0 %952
        %954 = vrot.lane.b32.xlu0 %v951, 126
        %v955 = vpop.permute.xlu0 %954
        %956 = vrot.lane.b32.xlu0 %v950, 126
        %v957 = vpop.permute.xlu0 %956
        %v961 = vadd.f32 %v936, %v953
        %v962 = vadd.f32 %v937, %v955
        %v963 = vadd.f32 %v938, %v957
        %s964 = sld [smem:[#allocation2 + $0x6c]]
        %v965 = vstv %s964
        %v966 = vmul.f32 %v965, %v261
        %v967 = vmul.f32 %v965, %v262
        %v968 = vmul.f32 %v965, %v263
        %v972 = vrot.slane %v966, 2
        %v973 = vrot.slane %v967, 2
        %v974 = vsel %vm413, %v972, %v973
        %v975 = vrot.slane %v968, 2
        %v976 = vsel %vm413, %v973, %v975
        %v980 = vadd.f32 %v961, %v974
        %v981 = vadd.f32 %v962, %v976
        %v982 = vadd.f32 %v963, %v975
        %s983 = sld [smem:[#allocation2 + $0x7c]]
        %v984 = vstv %s983
        %v985 = vmul.f32 %v984, %v261
        %v986 = vmul.f32 %v984, %v262
        %v987 = vmul.f32 %v984, %v263
        %v991 = vrot.slane %v985, 2
        %v992 = vrot.slane %v986, 2
        %v993 = vsel %vm413, %v991, %v992
        %v994 = vrot.slane %v987, 2
        %v995 = vsel %vm413, %v992, %v994
        %996 = vrot.lane.b32.xlu0 %v993, 127
        %v997 = vpop.permute.xlu0 %996
        %998 = vrot.lane.b32.xlu0 %v995, 127
        %v999 = vpop.permute.xlu0 %998
        %1000 = vrot.lane.b32.xlu0 %v994, 127
        %v1001 = vpop.permute.xlu0 %1000
        %v1005 = vadd.f32 %v980, %v997
        %v1006 = vadd.f32 %v981, %v999
        %v1007 = vadd.f32 %v982, %v1001
        %s1008 = sld [smem:[#allocation2 + $0x8c]]
        %v1009 = vstv %s1008
        %v1010 = vmul.f32 %v1009, %v261
        %v1011 = vmul.f32 %v1009, %v262
        %v1012 = vmul.f32 %v1009, %v263
        %v1016 = vrot.slane %v1010, 2
        %v1017 = vrot.slane %v1011, 2
        %v1018 = vsel %vm413, %v1016, %v1017
        %v1019 = vrot.slane %v1012, 2
        %v1020 = vsel %vm413, %v1017, %v1019
        %1021 = vrot.lane.b32.xlu0 %v1018, 126
        %v1022 = vpop.permute.xlu0 %1021
        %1023 = vrot.lane.b32.xlu0 %v1020, 126
        %v1024 = vpop.permute.xlu0 %1023
        %1025 = vrot.lane.b32.xlu0 %v1019, 126
        %v1026 = vpop.permute.xlu0 %1025
        %v1030 = vadd.f32 %v1005, %v1022
        %v1031 = vadd.f32 %v1006, %v1024
        %v1032 = vadd.f32 %v1007, %v1026
        %s1033 = sld [smem:[#allocation5]]
        %v1034 = vstv %s1033
        %v1035 = vadd.f32 %v1030, %v1034
        %v1036 = vadd.f32 %v1031, %v1034
        %v1037 = vadd.f32 %v1032, %v1034
        %v1038 = vmax.f32 %v1035, 0.0
        %v1039 = vmax.f32 %v1036, 0.0
        %v1040 = vmax.f32 %v1037, 0.0
        %v1041 = vsel %vm284, %v1038, 0.0
        %v1042 = vsel %vm285, %v1039, 0.0
        %v1043 = vsel %vm286, %v1040, 0.0
        %s1044 = sld [smem:[#allocation2 + $0x1]]
        %v1045 = vstv %s1044
        %v1046 = vmul.f32 %v1045, %v249
        %v1047 = vmul.f32 %v1045, %v250
        %v1048 = vmul.f32 %v1045, %v251
        %v1049 = vadd.f32 %v1046, 0.0
        %v1050 = vadd.f32 %v1047, 0.0
        %v1051 = vadd.f32 %v1048, 0.0
        %s1052 = sld [smem:[#allocation2 + $0x11]]
        %v1053 = vstv %s1052
        %v1054 = vmul.f32 %v1053, %v249
        %v1055 = vmul.f32 %v1053, %v250
        %v1056 = vmul.f32 %v1053, %v251
        %1060 = vrot.lane.b32.xlu0 %v1054, 127
        %v1061 = vpop.permute.xlu0 %1060
        %1062 = vrot.lane.b32.xlu0 %v1055, 127
        %v1063 = vpop.permute.xlu0 %1062
        %1064 = vrot.lane.b32.xlu0 %v1056, 127
        %v1065 = vpop.permute.xlu0 %1064
        %v1069 = vadd.f32 %v1049, %v1061
        %v1070 = vadd.f32 %v1050, %v1063
        %v1071 = vadd.f32 %v1051, %v1065
        %s1072 = sld [smem:[#allocation2 + $0x21]]
        %v1073 = vstv %s1072
        %v1074 = vmul.f32 %v1073, %v249
        %v1075 = vmul.f32 %v1073, %v250
        %v1076 = vmul.f32 %v1073, %v251
        %1080 = vrot.lane.b32.xlu0 %v1074, 126
        %v1081 = vpop.permute.xlu0 %1080
        %1082 = vrot.lane.b32.xlu0 %v1075, 126
        %v1083 = vpop.permute.xlu0 %1082
        %1084 = vrot.lane.b32.xlu0 %v1076, 126
        %v1085 = vpop.permute.xlu0 %1084
        %v1089 = vadd.f32 %v1069, %v1081
        %v1090 = vadd.f32 %v1070, %v1083
        %v1091 = vadd.f32 %v1071, %v1085
        %s1092 = sld [smem:[#allocation2 + $0x31]]
        %v1093 = vstv %s1092
        %v1094 = vmul.f32 %v1093, %v249
        %v1095 = vmul.f32 %v1093, %v250
        %v1096 = vmul.f32 %v1093, %v251
        %v1100 = vrot.slane %v1094, 1
        %v1101 = vrot.slane %v1095, 1
        %v1102 = vsel %vm343, %v1100, %v1101
        %v1103 = vrot.slane %v1096, 1
        %v1104 = vsel %vm343, %v1101, %v1103
        %v1108 = vadd.f32 %v1089, %v1102
        %v1109 = vadd.f32 %v1090, %v1104
        %v1110 = vadd.f32 %v1091, %v1103
        %s1111 = sld [smem:[#allocation2 + $0x41]]
        %v1112 = vstv %s1111
        %v1113 = vmul.f32 %v1112, %v249
        %v1114 = vmul.f32 %v1112, %v250
        %v1115 = vmul.f32 %v1112, %v251
        %v1119 = vrot.slane %v1113, 1
        %v1120 = vrot.slane %v1114, 1
        %v1121 = vsel %vm343, %v1119, %v1120
        %v1122 = vrot.slane %v1115, 1
        %v1123 = vsel %vm343, %v1120, %v1122
        %1124 = vrot.lane.b32.xlu0 %v1121, 127
        %v1125 = vpop.permute.xlu0 %1124
        %1126 = vrot.lane.b32.xlu0 %v1123, 127
        %v1127 = vpop.permute.xlu0 %1126
        %1128 = vrot.lane.b32.xlu0 %v1122, 127
        %v1129 = vpop.permute.xlu0 %1128
        %v1133 = vadd.f32 %v1108, %v1125
        %v1134 = vadd.f32 %v1109, %v1127
        %v1135 = vadd.f32 %v1110, %v1129
        %s1136 = sld [smem:[#allocation2 + $0x51]]
        %v1137 = vstv %s1136
        %v1138 = vmul.f32 %v1137, %v249
        %v1139 = vmul.f32 %v1137, %v250
        %v1140 = vmul.f32 %v1137, %v251
        %v1144 = vrot.slane %v1138, 1
        %v1145 = vrot.slane %v1139, 1
        %v1146 = vsel %vm343, %v1144, %v1145
        %v1147 = vrot.slane %v1140, 1
        %v1148 = vsel %vm343, %v1145, %v1147
        %1149 = vrot.lane.b32.xlu0 %v1146, 126
        %v1150 = vpop.permute.xlu0 %1149
        %1151 = vrot.lane.b32.xlu0 %v1148, 126
        %v1152 = vpop.permute.xlu0 %1151
        %1153 = vrot.lane.b32.xlu0 %v1147, 126
        %v1154 = vpop.permute.xlu0 %1153
        %v1158 = vadd.f32 %v1133, %v1150
        %v1159 = vadd.f32 %v1134, %v1152
        %v1160 = vadd.f32 %v1135, %v1154
        %s1161 = sld [smem:[#allocation2 + $0x61]]
        %v1162 = vstv %s1161
        %v1163 = vmul.f32 %v1162, %v249
        %v1164 = vmul.f32 %v1162, %v250
        %v1165 = vmul.f32 %v1162, %v251
        %v1169 = vrot.slane %v1163, 2
        %v1170 = vrot.slane %v1164, 2
        %v1171 = vsel %vm413, %v1169, %v1170
        %v1172 = vrot.slane %v1165, 2
        %v1173 = vsel %vm413, %v1170, %v1172
        %v1177 = vadd.f32 %v1158, %v1171
        %v1178 = vadd.f32 %v1159, %v1173
        %v1179 = vadd.f32 %v1160, %v1172
        %s1180 = sld [smem:[#allocation2 + $0x71]]
        %v1181 = vstv %s1180
        %v1182 = vmul.f32 %v1181, %v249
        %v1183 = vmul.f32 %v1181, %v250
        %v1184 = vmul.f32 %v1181, %v251
        %v1188 = vrot.slane %v1182, 2
        %v1189 = vrot.slane %v1183, 2
        %v1190 = vsel %vm413, %v1188, %v1189
        %v1191 = vrot.slane %v1184, 2
        %v1192 = vsel %vm413, %v1189, %v1191
        %1193 = vrot.lane.b32.xlu0 %v1190, 127
        %v1194 = vpop.permute.xlu0 %1193
        %1195 = vrot.lane.b32.xlu0 %v1192, 127
        %v1196 = vpop.permute.xlu0 %1195
        %1197 = vrot.lane.b32.xlu0 %v1191, 127
        %v1198 = vpop.permute.xlu0 %1197
        %v1202 = vadd.f32 %v1177, %v1194
        %v1203 = vadd.f32 %v1178, %v1196
        %v1204 = vadd.f32 %v1179, %v1198
        %s1205 = sld [smem:[#allocation2 + $0x81]]
        %v1206 = vstv %s1205
        %v1207 = vmul.f32 %v1206, %v249
        %v1208 = vmul.f32 %v1206, %v250
        %v1209 = vmul.f32 %v1206, %v251
        %v1213 = vrot.slane %v1207, 2
        %v1214 = vrot.slane %v1208, 2
        %v1215 = vsel %vm413, %v1213, %v1214
        %v1216 = vrot.slane %v1209, 2
        %v1217 = vsel %vm413, %v1214, %v1216
        %1218 = vrot.lane.b32.xlu0 %v1215, 126
        %v1219 = vpop.permute.xlu0 %1218
        %1220 = vrot.lane.b32.xlu0 %v1217, 126
        %v1221 = vpop.permute.xlu0 %1220
        %1222 = vrot.lane.b32.xlu0 %v1216, 126
        %v1223 = vpop.permute.xlu0 %1222
        %v1227 = vadd.f32 %v1202, %v1219
        %v1228 = vadd.f32 %v1203, %v1221
        %v1229 = vadd.f32 %v1204, %v1223
        %s1230 = sld [smem:[#allocation2 + $0x5]]
        %v1231 = vstv %s1230
        %v1232 = vmul.f32 %v1231, %v253
        %v1233 = vmul.f32 %v1231, %v254
        %v1234 = vmul.f32 %v1231, %v255
        %v1235 = vadd.f32 %v1227, %v1232
        %v1236 = vadd.f32 %v1228, %v1233
        %v1237 = vadd.f32 %v1229, %v1234
        %s1238 = sld [smem:[#allocation2 + $0x15]]
        %v1239 = vstv %s1238
        %v1240 = vmul.f32 %v1239, %v253
        %v1241 = vmul.f32 %v1239, %v254
        %v1242 = vmul.f32 %v1239, %v255
        %1246 = vrot.lane.b32.xlu0 %v1240, 127
        %v1247 = vpop.permute.xlu0 %1246
        %1248 = vrot.lane.b32.xlu0 %v1241, 127
        %v1249 = vpop.permute.xlu0 %1248
        %1250 = vrot.lane.b32.xlu0 %v1242, 127
        %v1251 = vpop.permute.xlu0 %1250
        %v1255 = vadd.f32 %v1235, %v1247
        %v1256 = vadd.f32 %v1236, %v1249
        %v1257 = vadd.f32 %v1237, %v1251
        %s1258 = sld [smem:[#allocation2 + $0x25]]
        %v1259 = vstv %s1258
        %v1260 = vmul.f32 %v1259, %v253
        %v1261 = vmul.f32 %v1259, %v254
        %v1262 = vmul.f32 %v1259, %v255
        %1266 = vrot.lane.b32.xlu0 %v1260, 126
        %v1267 = vpop.permute.xlu0 %1266
        %1268 = vrot.lane.b32.xlu0 %v1261, 126
        %v1269 = vpop.permute.xlu0 %1268
        %1270 = vrot.lane.b32.xlu0 %v1262, 126
        %v1271 = vpop.permute.xlu0 %1270
        %v1275 = vadd.f32 %v1255, %v1267
        %v1276 = vadd.f32 %v1256, %v1269
        %v1277 = vadd.f32 %v1257, %v1271
        %s1278 = sld [smem:[#allocation2 + $0x35]]
        %v1279 = vstv %s1278
        %v1280 = vmul.f32 %v1279, %v253
        %v1281 = vmul.f32 %v1279, %v254
        %v1282 = vmul.f32 %v1279, %v255
        %v1286 = vrot.slane %v1280, 1
        %v1287 = vrot.slane %v1281, 1
        %v1288 = vsel %vm343, %v1286, %v1287
        %v1289 = vrot.slane %v1282, 1
        %v1290 = vsel %vm343, %v1287, %v1289
        %v1294 = vadd.f32 %v1275, %v1288
        %v1295 = vadd.f32 %v1276, %v1290
        %v1296 = vadd.f32 %v1277, %v1289
        %s1297 = sld [smem:[#allocation2 + $0x45]]
        %v1298 = vstv %s1297
        %v1299 = vmul.f32 %v1298, %v253
        %v1300 = vmul.f32 %v1298, %v254
        %v1301 = vmul.f32 %v1298, %v255
        %v1305 = vrot.slane %v1299, 1
        %v1306 = vrot.slane %v1300, 1
        %v1307 = vsel %vm343, %v1305, %v1306
        %v1308 = vrot.slane %v1301, 1
        %v1309 = vsel %vm343, %v1306, %v1308
        %1310 = vrot.lane.b32.xlu0 %v1307, 127
        %v1311 = vpop.permute.xlu0 %1310
        %1312 = vrot.lane.b32.xlu0 %v1309, 127
        %v1313 = vpop.permute.xlu0 %1312
        %1314 = vrot.lane.b32.xlu0 %v1308, 127
        %v1315 = vpop.permute.xlu0 %1314
        %v1319 = vadd.f32 %v1294, %v1311
        %v1320 = vadd.f32 %v1295, %v1313
        %v1321 = vadd.f32 %v1296, %v1315
        %s1322 = sld [smem:[#allocation2 + $0x55]]
        %v1323 = vstv %s1322
        %v1324 = vmul.f32 %v1323, %v253
        %v1325 = vmul.f32 %v1323, %v254
        %v1326 = vmul.f32 %v1323, %v255
        %v1330 = vrot.slane %v1324, 1
        %v1331 = vrot.slane %v1325, 1
        %v1332 = vsel %vm343, %v1330, %v1331
        %v1333 = vrot.slane %v1326, 1
        %v1334 = vsel %vm343, %v1331, %v1333
        %1335 = vrot.lane.b32.xlu0 %v1332, 126
        %v1336 = vpop.permute.xlu0 %1335
        %1337 = vrot.lane.b32.xlu0 %v1334, 126
        %v1338 = vpop.permute.xlu0 %1337
        %1339 = vrot.lane.b32.xlu0 %v1333, 126
        %v1340 = vpop.permute.xlu0 %1339
        %v1344 = vadd.f32 %v1319, %v1336
        %v1345 = vadd.f32 %v1320, %v1338
        %v1346 = vadd.f32 %v1321, %v1340
        %s1347 = sld [smem:[#allocation2 + $0x65]]
        %v1348 = vstv %s1347
        %v1349 = vmul.f32 %v1348, %v253
        %v1350 = vmul.f32 %v1348, %v254
        %v1351 = vmul.f32 %v1348, %v255
        %v1355 = vrot.slane %v1349, 2
        %v1356 = vrot.slane %v1350, 2
        %v1357 = vsel %vm413, %v1355, %v1356
        %v1358 = vrot.slane %v1351, 2
        %v1359 = vsel %vm413, %v1356, %v1358
        %v1363 = vadd.f32 %v1344, %v1357
        %v1364 = vadd.f32 %v1345, %v1359
        %v1365 = vadd.f32 %v1346, %v1358
        %s1366 = sld [smem:[#allocation2 + $0x75]]
        %v1367 = vstv %s1366
        %v1368 = vmul.f32 %v1367, %v253
        %v1369 = vmul.f32 %v1367, %v254
        %v1370 = vmul.f32 %v1367, %v255
        %v1374 = vrot.slane %v1368, 2
        %v1375 = vrot.slane %v1369, 2
        %v1376 = vsel %vm413, %v1374, %v1375
        %v1377 = vrot.slane %v1370, 2
        %v1378 = vsel %vm413, %v1375, %v1377
        %1379 = vrot.lane.b32.xlu0 %v1376, 127
        %v1380 = vpop.permute.xlu0 %1379
        %1381 = vrot.lane.b32.xlu0 %v1378, 127
        %v1382 = vpop.permute.xlu0 %1381
        %1383 = vrot.lane.b32.xlu0 %v1377, 127
        %v1384 = vpop.permute.xlu0 %1383
        %v1388 = vadd.f32 %v1363, %v1380
        %v1389 = vadd.f32 %v1364, %v1382
        %v1390 = vadd.f32 %v1365, %v1384
        %s1391 = sld [smem:[#allocation2 + $0x85]]
        %v1392 = vstv %s1391
        %v1393 = vmul.f32 %v1392, %v253
        %v1394 = vmul.f32 %v1392, %v254
        %v1395 = vmul.f32 %v1392, %v255
        %v1399 = vrot.slane %v1393, 2
        %v1400 = vrot.slane %v1394, 2
        %v1401 = vsel %vm413, %v1399, %v1400
        %v1402 = vrot.slane %v1395, 2
        %v1403 = vsel %vm413, %v1400, %v1402
        %1404 = vrot.lane.b32.xlu0 %v1401, 126
        %v1405 = vpop.permute.xlu0 %1404
        %1406 = vrot.lane.b32.xlu0 %v1403, 126
        %v1407 = vpop.permute.xlu0 %1406
        %1408 = vrot.lane.b32.xlu0 %v1402, 126
        %v1409 = vpop.permute.xlu0 %1408
        %v1413 = vadd.f32 %v1388, %v1405
        %v1414 = vadd.f32 %v1389, %v1407
        %v1415 = vadd.f32 %v1390, %v1409
        %s1416 = sld [smem:[#allocation2 + $0x9]]
        %v1417 = vstv %s1416
        %v1418 = vmul.f32 %v1417, %v257
        %v1419 = vmul.f32 %v1417, %v258
        %v1420 = vmul.f32 %v1417, %v259
        %v1421 = vadd.f32 %v1413, %v1418
        %v1422 = vadd.f32 %v1414, %v1419
        %v1423 = vadd.f32 %v1415, %v1420
        %s1424 = sld [smem:[#allocation2 + $0x19]]
        %v1425 = vstv %s1424
        %v1426 = vmul.f32 %v1425, %v257
        %v1427 = vmul.f32 %v1425, %v258
        %v1428 = vmul.f32 %v1425, %v259
        %1432 = vrot.lane.b32.xlu0 %v1426, 127
        %v1433 = vpop.permute.xlu0 %1432
        %1434 = vrot.lane.b32.xlu0 %v1427, 127
        %v1435 = vpop.permute.xlu0 %1434
        %1436 = vrot.lane.b32.xlu0 %v1428, 127
        %v1437 = vpop.permute.xlu0 %1436
        %v1441 = vadd.f32 %v1421, %v1433
        %v1442 = vadd.f32 %v1422, %v1435
        %v1443 = vadd.f32 %v1423, %v1437
        %s1444 = sld [smem:[#allocation2 + $0x29]]
        %v1445 = vstv %s1444
        %v1446 = vmul.f32 %v1445, %v257
        %v1447 = vmul.f32 %v1445, %v258
        %v1448 = vmul.f32 %v1445, %v259
        %1452 = vrot.lane.b32.xlu0 %v1446, 126
        %v1453 = vpop.permute.xlu0 %1452
        %1454 = vrot.lane.b32.xlu0 %v1447, 126
        %v1455 = vpop.permute.xlu0 %1454
        %1456 = vrot.lane.b32.xlu0 %v1448, 126
        %v1457 = vpop.permute.xlu0 %1456
        %v1461 = vadd.f32 %v1441, %v1453
        %v1462 = vadd.f32 %v1442, %v1455
        %v1463 = vadd.f32 %v1443, %v1457
        %s1464 = sld [smem:[#allocation2 + $0x39]]
        %v1465 = vstv %s1464
        %v1466 = vmul.f32 %v1465, %v257
        %v1467 = vmul.f32 %v1465, %v258
        %v1468 = vmul.f32 %v1465, %v259
        %v1472 = vrot.slane %v1466, 1
        %v1473 = vrot.slane %v1467, 1
        %v1474 = vsel %vm343, %v1472, %v1473
        %v1475 = vrot.slane %v1468, 1
        %v1476 = vsel %vm343, %v1473, %v1475
        %v1480 = vadd.f32 %v1461, %v1474
        %v1481 = vadd.f32 %v1462, %v1476
        %v1482 = vadd.f32 %v1463, %v1475
        %s1483 = sld [smem:[#allocation2 + $0x49]]
        %v1484 = vstv %s1483
        %v1485 = vmul.f32 %v1484, %v257
        %v1486 = vmul.f32 %v1484, %v258
        %v1487 = vmul.f32 %v1484, %v259
        %v1491 = vrot.slane %v1485, 1
        %v1492 = vrot.slane %v1486, 1
        %v1493 = vsel %vm343, %v1491, %v1492
        %v1494 = vrot.slane %v1487, 1
        %v1495 = vsel %vm343, %v1492, %v1494
        %1496 = vrot.lane.b32.xlu0 %v1493, 127
        %v1497 = vpop.permute.xlu0 %1496
        %1498 = vrot.lane.b32.xlu0 %v1495, 127
        %v1499 = vpop.permute.xlu0 %1498
        %1500 = vrot.lane.b32.xlu0 %v1494, 127
        %v1501 = vpop.permute.xlu0 %1500
        %v1505 = vadd.f32 %v1480, %v1497
        %v1506 = vadd.f32 %v1481, %v1499
        %v1507 = vadd.f32 %v1482, %v1501
        %s1508 = sld [smem:[#allocation2 + $0x59]]
        %v1509 = vstv %s1508
        %v1510 = vmul.f32 %v1509, %v257
        %v1511 = vmul.f32 %v1509, %v258
        %v1512 = vmul.f32 %v1509, %v259
        %v1516 = vrot.slane %v1510, 1
        %v1517 = vrot.slane %v1511, 1
        %v1518 = vsel %vm343, %v1516, %v1517
        %v1519 = vrot.slane %v1512, 1
        %v1520 = vsel %vm343, %v1517, %v1519
        %1521 = vrot.lane.b32.xlu0 %v1518, 126
        %v1522 = vpop.permute.xlu0 %1521
        %1523 = vrot.lane.b32.xlu0 %v1520, 126
        %v1524 = vpop.permute.xlu0 %1523
        %1525 = vrot.lane.b32.xlu0 %v1519, 126
        %v1526 = vpop.permute.xlu0 %1525
        %v1530 = vadd.f32 %v1505, %v1522
        %v1531 = vadd.f32 %v1506, %v1524
        %v1532 = vadd.f32 %v1507, %v1526
        %s1533 = sld [smem:[#allocation2 + $0x69]]
        %v1534 = vstv %s1533
        %v1535 = vmul.f32 %v1534, %v257
        %v1536 = vmul.f32 %v1534, %v258
        %v1537 = vmul.f32 %v1534, %v259
        %v1541 = vrot.slane %v1535, 2
        %v1542 = vrot.slane %v1536, 2
        %v1543 = vsel %vm413, %v1541, %v1542
        %v1544 = vrot.slane %v1537, 2
        %v1545 = vsel %vm413, %v1542, %v1544
        %v1549 = vadd.f32 %v1530, %v1543
        %v1550 = vadd.f32 %v1531, %v1545
        %v1551 = vadd.f32 %v1532, %v1544
        %s1552 = sld [smem:[#allocation2 + $0x79]]
        %v1553 = vstv %s1552
        %v1554 = vmul.f32 %v1553, %v257
        %v1555 = vmul.f32 %v1553, %v258
        %v1556 = vmul.f32 %v1553, %v259
        %v1560 = vrot.slane %v1554, 2
        %v1561 = vrot.slane %v1555, 2
        %v1562 = vsel %vm413, %v1560, %v1561
        %v1563 = vrot.slane %v1556, 2
        %v1564 = vsel %vm413, %v1561, %v1563
        %1565 = vrot.lane.b32.xlu0 %v1562, 127
        %v1566 = vpop.permute.xlu0 %1565
        %1567 = vrot.lane.b32.xlu0 %v1564, 127
        %v1568 = vpop.permute.xlu0 %1567
        %1569 = vrot.lane.b32.xlu0 %v1563, 127
        %v1570 = vpop.permute.xlu0 %1569
        %v1574 = vadd.f32 %v1549, %v1566
        %v1575 = vadd.f32 %v1550, %v1568
        %v1576 = vadd.f32 %v1551, %v1570
        %s1577 = sld [smem:[#allocation2 + $0x89]]
        %v1578 = vstv %s1577
        %v1579 = vmul.f32 %v1578, %v257
        %v1580 = vmul.f32 %v1578, %v258
        %v1581 = vmul.f32 %v1578, %v259
        %v1585 = vrot.slane %v1579, 2
        %v1586 = vrot.slane %v1580, 2
        %v1587 = vsel %vm413, %v1585, %v1586
        %v1588 = vrot.slane %v1581, 2
        %v1589 = vsel %vm413, %v1586, %v1588
        %1590 = vrot.lane.b32.xlu0 %v1587, 126
        %v1591 = vpop.permute.xlu0 %1590
        %1592 = vrot.lane.b32.xlu0 %v1589, 126
        %v1593 = vpop.permute.xlu0 %1592
        %1594 = vrot.lane.b32.xlu0 %v1588, 126
        %v1595 = vpop.permute.xlu0 %1594
        %v1599 = vadd.f32 %v1574, %v1591
        %v1600 = vadd.f32 %v1575, %v1593
        %v1601 = vadd.f32 %v1576, %v1595
        %s1602 = sld [smem:[#allocation2 + $0xd]]
        %v1603 = vstv %s1602
        %v1604 = vmul.f32 %v1603, %v261
        %v1605 = vmul.f32 %v1603, %v262
        %v1606 = vmul.f32 %v1603, %v263
        %v1607 = vadd.f32 %v1599, %v1604
        %v1608 = vadd.f32 %v1600, %v1605
        %v1609 = vadd.f32 %v1601, %v1606
        %s1610 = sld [smem:[#allocation2 + $0x1d]]
        %v1611 = vstv %s1610
        %v1612 = vmul.f32 %v1611, %v261
        %v1613 = vmul.f32 %v1611, %v262
        %v1614 = vmul.f32 %v1611, %v263
        %1618 = vrot.lane.b32.xlu0 %v1612, 127
        %v1619 = vpop.permute.xlu0 %1618
        %1620 = vrot.lane.b32.xlu0 %v1613, 127
        %v1621 = vpop.permute.xlu0 %1620
        %1622 = vrot.lane.b32.xlu0 %v1614, 127
        %v1623 = vpop.permute.xlu0 %1622
        %v1627 = vadd.f32 %v1607, %v1619
        %v1628 = vadd.f32 %v1608, %v1621
        %v1629 = vadd.f32 %v1609, %v1623
        %s1630 = sld [smem:[#allocation2 + $0x2d]]
        %v1631 = vstv %s1630
        %v1632 = vmul.f32 %v1631, %v261
        %v1633 = vmul.f32 %v1631, %v262
        %v1634 = vmul.f32 %v1631, %v263
        %1638 = vrot.lane.b32.xlu0 %v1632, 126
        %v1639 = vpop.permute.xlu0 %1638
        %1640 = vrot.lane.b32.xlu0 %v1633, 126
        %v1641 = vpop.permute.xlu0 %1640
        %1642 = vrot.lane.b32.xlu0 %v1634, 126
        %v1643 = vpop.permute.xlu0 %1642
        %v1647 = vadd.f32 %v1627, %v1639
        %v1648 = vadd.f32 %v1628, %v1641
        %v1649 = vadd.f32 %v1629, %v1643
        %s1650 = sld [smem:[#allocation2 + $0x3d]]
        %v1651 = vstv %s1650
        %v1652 = vmul.f32 %v1651, %v261
        %v1653 = vmul.f32 %v1651, %v262
        %v1654 = vmul.f32 %v1651, %v263
        %v1658 = vrot.slane %v1652, 1
        %v1659 = vrot.slane %v1653, 1
        %v1660 = vsel %vm343, %v1658, %v1659
        %v1661 = vrot.slane %v1654, 1
        %v1662 = vsel %vm343, %v1659, %v1661
        %v1666 = vadd.f32 %v1647, %v1660
        %v1667 = vadd.f32 %v1648, %v1662
        %v1668 = vadd.f32 %v1649, %v1661
        %s1669 = sld [smem:[#allocation2 + $0x4d]]
        %v1670 = vstv %s1669
        %v1671 = vmul.f32 %v1670, %v261
        %v1672 = vmul.f32 %v1670, %v262
        %v1673 = vmul.f32 %v1670, %v263
        %v1677 = vrot.slane %v1671, 1
        %v1678 = vrot.slane %v1672, 1
        %v1679 = vsel %vm343, %v1677, %v1678
        %v1680 = vrot.slane %v1673, 1
        %v1681 = vsel %vm343, %v1678, %v1680
        %1682 = vrot.lane.b32.xlu0 %v1679, 127
        %v1683 = vpop.permute.xlu0 %1682
        %1684 = vrot.lane.b32.xlu0 %v1681, 127
        %v1685 = vpop.permute.xlu0 %1684
        %1686 = vrot.lane.b32.xlu0 %v1680, 127
        %v1687 = vpop.permute.xlu0 %1686
        %v1691 = vadd.f32 %v1666, %v1683
        %v1692 = vadd.f32 %v1667, %v1685
        %v1693 = vadd.f32 %v1668, %v1687
        %s1694 = sld [smem:[#allocation2 + $0x5d]]
        %v1695 = vstv %s1694
        %v1696 = vmul.f32 %v1695, %v261
        %v1697 = vmul.f32 %v1695, %v262
        %v1698 = vmul.f32 %v1695, %v263
        %v1702 = vrot.slane %v1696, 1
        %v1703 = vrot.slane %v1697, 1
        %v1704 = vsel %vm343, %v1702, %v1703
        %v1705 = vrot.slane %v1698, 1
        %v1706 = vsel %vm343, %v1703, %v1705
        %1707 = vrot.lane.b32.xlu0 %v1704, 126
        %v1708 = vpop.permute.xlu0 %1707
        %1709 = vrot.lane.b32.xlu0 %v1706, 126
        %v1710 = vpop.permute.xlu0 %1709
        %1711 = vrot.lane.b32.xlu0 %v1705, 126
        %v1712 = vpop.permute.xlu0 %1711
        %v1716 = vadd.f32 %v1691, %v1708
        %v1717 = vadd.f32 %v1692, %v1710
        %v1718 = vadd.f32 %v1693, %v1712
        %s1719 = sld [smem:[#allocation2 + $0x6d]]
        %v1720 = vstv %s1719
        %v1721 = vmul.f32 %v1720, %v261
        %v1722 = vmul.f32 %v1720, %v262
        %v1723 = vmul.f32 %v1720, %v263
        %v1727 = vrot.slane %v1721, 2
        %v1728 = vrot.slane %v1722, 2
        %v1729 = vsel %vm413, %v1727, %v1728
        %v1730 = vrot.slane %v1723, 2
        %v1731 = vsel %vm413, %v1728, %v1730
        %v1735 = vadd.f32 %v1716, %v1729
        %v1736 = vadd.f32 %v1717, %v1731
        %v1737 = vadd.f32 %v1718, %v1730
        %s1738 = sld [smem:[#allocation2 + $0x7d]]
        %v1739 = vstv %s1738
        %v1740 = vmul.f32 %v1739, %v261
        %v1741 = vmul.f32 %v1739, %v262
        %v1742 = vmul.f32 %v1739, %v263
        %v1746 = vrot.slane %v1740, 2
        %v1747 = vrot.slane %v1741, 2
        %v1748 = vsel %vm413, %v1746, %v1747
        %v1749 = vrot.slane %v1742, 2
        %v1750 = vsel %vm413, %v1747, %v1749
        %1751 = vrot.lane.b32.xlu0 %v1748, 127
        %v1752 = vpop.permute.xlu0 %1751
        %1753 = vrot.lane.b32.xlu0 %v1750, 127
        %v1754 = vpop.permute.xlu0 %1753
        %1755 = vrot.lane.b32.xlu0 %v1749, 127
        %v1756 = vpop.permute.xlu0 %1755
        %v1760 = vadd.f32 %v1735, %v1752
        %v1761 = vadd.f32 %v1736, %v1754
        %v1762 = vadd.f32 %v1737, %v1756
        %s1763 = sld [smem:[#allocation2 + $0x8d]]
        %v1764 = vstv %s1763
        %v1765 = vmul.f32 %v1764, %v261
        %v1766 = vmul.f32 %v1764, %v262
        %v1767 = vmul.f32 %v1764, %v263
        %v1771 = vrot.slane %v1765, 2
        %v1772 = vrot.slane %v1766, 2
        %v1773 = vsel %vm413, %v1771, %v1772
        %v1774 = vrot.slane %v1767, 2
        %v1775 = vsel %vm413, %v1772, %v1774
        %1776 = vrot.lane.b32.xlu0 %v1773, 126
        %v1777 = vpop.permute.xlu0 %1776
        %1778 = vrot.lane.b32.xlu0 %v1775, 126
        %v1779 = vpop.permute.xlu0 %1778
        %1780 = vrot.lane.b32.xlu0 %v1774, 126
        %v1781 = vpop.permute.xlu0 %1780
        %v1785 = vadd.f32 %v1760, %v1777
        %v1786 = vadd.f32 %v1761, %v1779
        %v1787 = vadd.f32 %v1762, %v1781
        %s1788 = sld [smem:[#allocation5 + $0x1]]
        %v1789 = vstv %s1788
        %v1790 = vadd.f32 %v1785, %v1789
        %v1791 = vadd.f32 %v1786, %v1789
        %v1792 = vadd.f32 %v1787, %v1789
        %v1793 = vmax.f32 %v1790, 0.0
        %v1794 = vmax.f32 %v1791, 0.0
        %v1795 = vmax.f32 %v1792, 0.0
        %v1796 = vsel %vm284, %v1793, 0.0
        %v1797 = vsel %vm285, %v1794, 0.0
        %v1798 = vsel %vm286, %v1795, 0.0
        %s1799 = sld [smem:[#allocation2 + $0x2]]
        %v1800 = vstv %s1799
        %v1801 = vmul.f32 %v1800, %v249
        %v1802 = vmul.f32 %v1800, %v250
        %v1803 = vmul.f32 %v1800, %v251
        %v1804 = vadd.f32 %v1801, 0.0
        %v1805 = vadd.f32 %v1802, 0.0
        %v1806 = vadd.f32 %v1803, 0.0
        %s1807 = sld [smem:[#allocation2 + $0x12]]
        %v1808 = vstv %s1807
        %v1809 = vmul.f32 %v1808, %v249
        %v1810 = vmul.f32 %v1808, %v250
        %v1811 = vmul.f32 %v1808, %v251
        %1815 = vrot.lane.b32.xlu0 %v1809, 127
        %v1816 = vpop.permute.xlu0 %1815
        %1817 = vrot.lane.b32.xlu0 %v1810, 127
        %v1818 = vpop.permute.xlu0 %1817
        %1819 = vrot.lane.b32.xlu0 %v1811, 127
        %v1820 = vpop.permute.xlu0 %1819
        %v1824 = vadd.f32 %v1804, %v1816
        %v1825 = vadd.f32 %v1805, %v1818
        %v1826 = vadd.f32 %v1806, %v1820
        %s1827 = sld [smem:[#allocation2 + $0x22]]
        %v1828 = vstv %s1827
        %v1829 = vmul.f32 %v1828, %v249
        %v1830 = vmul.f32 %v1828, %v250
        %v1831 = vmul.f32 %v1828, %v251
        %1835 = vrot.lane.b32.xlu0 %v1829, 126
        %v1836 = vpop.permute.xlu0 %1835
        %1837 = vrot.lane.b32.xlu0 %v1830, 126
        %v1838 = vpop.permute.xlu0 %1837
        %1839 = vrot.lane.b32.xlu0 %v1831, 126
        %v1840 = vpop.permute.xlu0 %1839
        %v1844 = vadd.f32 %v1824, %v1836
        %v1845 = vadd.f32 %v1825, %v1838
        %v1846 = vadd.f32 %v1826, %v1840
        %s1847 = sld [smem:[#allocation2 + $0x32]]
        %v1848 = vstv %s1847
        %v1849 = vmul.f32 %v1848, %v249
        %v1850 = vmul.f32 %v1848, %v250
        %v1851 = vmul.f32 %v1848, %v251
        %v1855 = vrot.slane %v1849, 1
        %v1856 = vrot.slane %v1850, 1
        %v1857 = vsel %vm343, %v1855, %v1856
        %v1858 = vrot.slane %v1851, 1
        %v1859 = vsel %vm343, %v1856, %v1858
        %v1863 = vadd.f32 %v1844, %v1857
        %v1864 = vadd.f32 %v1845, %v1859
        %v1865 = vadd.f32 %v1846, %v1858
        %s1866 = sld [smem:[#allocation2 + $0x42]]
        %v1867 = vstv %s1866
        %v1868 = vmul.f32 %v1867, %v249
        %v1869 = vmul.f32 %v1867, %v250
        %v1870 = vmul.f32 %v1867, %v251
        %v1874 = vrot.slane %v1868, 1
        %v1875 = vrot.slane %v1869, 1
        %v1876 = vsel %vm343, %v1874, %v1875
        %v1877 = vrot.slane %v1870, 1
        %v1878 = vsel %vm343, %v1875, %v1877
        %1879 = vrot.lane.b32.xlu0 %v1876, 127
        %v1880 = vpop.permute.xlu0 %1879
        %1881 = vrot.lane.b32.xlu0 %v1878, 127
        %v1882 = vpop.permute.xlu0 %1881
        %1883 = vrot.lane.b32.xlu0 %v1877, 127
        %v1884 = vpop.permute.xlu0 %1883
        %v1888 = vadd.f32 %v1863, %v1880
        %v1889 = vadd.f32 %v1864, %v1882
        %v1890 = vadd.f32 %v1865, %v1884
        %s1891 = sld [smem:[#allocation2 + $0x52]]
        %v1892 = vstv %s1891
        %v1893 = vmul.f32 %v1892, %v249
        %v1894 = vmul.f32 %v1892, %v250
        %v1895 = vmul.f32 %v1892, %v251
        %v1899 = vrot.slane %v1893, 1
        %v1900 = vrot.slane %v1894, 1
        %v1901 = vsel %vm343, %v1899, %v1900
        %v1902 = vrot.slane %v1895, 1
        %v1903 = vsel %vm343, %v1900, %v1902
        %1904 = vrot.lane.b32.xlu0 %v1901, 126
        %v1905 = vpop.permute.xlu0 %1904
        %1906 = vrot.lane.b32.xlu0 %v1903, 126
        %v1907 = vpop.permute.xlu0 %1906
        %1908 = vrot.lane.b32.xlu0 %v1902, 126
        %v1909 = vpop.permute.xlu0 %1908
        %v1913 = vadd.f32 %v1888, %v1905
        %v1914 = vadd.f32 %v1889, %v1907
        %v1915 = vadd.f32 %v1890, %v1909
        %s1916 = sld [smem:[#allocation2 + $0x62]]
        %v1917 = vstv %s1916
        %v1918 = vmul.f32 %v1917, %v249
        %v1919 = vmul.f32 %v1917, %v250
        %v1920 = vmul.f32 %v1917, %v251
        %v1924 = vrot.slane %v1918, 2
        %v1925 = vrot.slane %v1919, 2
        %v1926 = vsel %vm413, %v1924, %v1925
        %v1927 = vrot.slane %v1920, 2
        %v1928 = vsel %vm413, %v1925, %v1927
        %v1932 = vadd.f32 %v1913, %v1926
        %v1933 = vadd.f32 %v1914, %v1928
        %v1934 = vadd.f32 %v1915, %v1927
        %s1935 = sld [smem:[#allocation2 + $0x72]]
        %v1936 = vstv %s1935
        %v1937 = vmul.f32 %v1936, %v249
        %v1938 = vmul.f32 %v1936, %v250
        %v1939 = vmul.f32 %v1936, %v251
        %v1943 = vrot.slane %v1937, 2
        %v1944 = vrot.slane %v1938, 2
        %v1945 = vsel %vm413, %v1943, %v1944
        %v1946 = vrot.slane %v1939, 2
        %v1947 = vsel %vm413, %v1944, %v1946
        %1948 = vrot.lane.b32.xlu0 %v1945, 127
        %v1949 = vpop.permute.xlu0 %1948
        %1950 = vrot.lane.b32.xlu0 %v1947, 127
        %v1951 = vpop.permute.xlu0 %1950
        %1952 = vrot.lane.b32.xlu0 %v1946, 127
        %v1953 = vpop.permute.xlu0 %1952
        %v1957 = vadd.f32 %v1932, %v1949
        %v1958 = vadd.f32 %v1933, %v1951
        %v1959 = vadd.f32 %v1934, %v1953
        %s1960 = sld [smem:[#allocation2 + $0x82]]
        %v1961 = vstv %s1960
        %v1962 = vmul.f32 %v1961, %v249
        %v1963 = vmul.f32 %v1961, %v250
        %v1964 = vmul.f32 %v1961, %v251
        %v1968 = vrot.slane %v1962, 2
        %v1969 = vrot.slane %v1963, 2
        %v1970 = vsel %vm413, %v1968, %v1969
        %v1971 = vrot.slane %v1964, 2
        %v1972 = vsel %vm413, %v1969, %v1971
        %1973 = vrot.lane.b32.xlu0 %v1970, 126
        %v1974 = vpop.permute.xlu0 %1973
        %1975 = vrot.lane.b32.xlu0 %v1972, 126
        %v1976 = vpop.permute.xlu0 %1975
        %1977 = vrot.lane.b32.xlu0 %v1971, 126
        %v1978 = vpop.permute.xlu0 %1977
        %v1982 = vadd.f32 %v1957, %v1974
        %v1983 = vadd.f32 %v1958, %v1976
        %v1984 = vadd.f32 %v1959, %v1978
        %s1985 = sld [smem:[#allocation2 + $0x6]]
        %v1986 = vstv %s1985
        %v1987 = vmul.f32 %v1986, %v253
        %v1988 = vmul.f32 %v1986, %v254
        %v1989 = vmul.f32 %v1986, %v255
        %v1990 = vadd.f32 %v1982, %v1987
        %v1991 = vadd.f32 %v1983, %v1988
        %v1992 = vadd.f32 %v1984, %v1989
        %s1993 = sld [smem:[#allocation2 + $0x16]]
        %v1994 = vstv %s1993
        %v1995 = vmul.f32 %v1994, %v253
        %v1996 = vmul.f32 %v1994, %v254
        %v1997 = vmul.f32 %v1994, %v255
        %2001 = vrot.lane.b32.xlu0 %v1995, 127
        %v2002 = vpop.permute.xlu0 %2001
        %2003 = vrot.lane.b32.xlu0 %v1996, 127
        %v2004 = vpop.permute.xlu0 %2003
        %2005 = vrot.lane.b32.xlu0 %v1997, 127
        %v2006 = vpop.permute.xlu0 %2005
        %v2010 = vadd.f32 %v1990, %v2002
        %v2011 = vadd.f32 %v1991, %v2004
        %v2012 = vadd.f32 %v1992, %v2006
        %s2013 = sld [smem:[#allocation2 + $0x26]]
        %v2014 = vstv %s2013
        %v2015 = vmul.f32 %v2014, %v253
        %v2016 = vmul.f32 %v2014, %v254
        %v2017 = vmul.f32 %v2014, %v255
        %2021 = vrot.lane.b32.xlu0 %v2015, 126
        %v2022 = vpop.permute.xlu0 %2021
        %2023 = vrot.lane.b32.xlu0 %v2016, 126
        %v2024 = vpop.permute.xlu0 %2023
        %2025 = vrot.lane.b32.xlu0 %v2017, 126
        %v2026 = vpop.permute.xlu0 %2025
        %v2030 = vadd.f32 %v2010, %v2022
        %v2031 = vadd.f32 %v2011, %v2024
        %v2032 = vadd.f32 %v2012, %v2026
        %s2033 = sld [smem:[#allocation2 + $0x36]]
        %v2034 = vstv %s2033
        %v2035 = vmul.f32 %v2034, %v253
        %v2036 = vmul.f32 %v2034, %v254
        %v2037 = vmul.f32 %v2034, %v255
        %v2041 = vrot.slane %v2035, 1
        %v2042 = vrot.slane %v2036, 1
        %v2043 = vsel %vm343, %v2041, %v2042
        %v2044 = vrot.slane %v2037, 1
        %v2045 = vsel %vm343, %v2042, %v2044
        %v2049 = vadd.f32 %v2030, %v2043
        %v2050 = vadd.f32 %v2031, %v2045
        %v2051 = vadd.f32 %v2032, %v2044
        %s2052 = sld [smem:[#allocation2 + $0x46]]
        %v2053 = vstv %s2052
        %v2054 = vmul.f32 %v2053, %v253
        %v2055 = vmul.f32 %v2053, %v254
        %v2056 = vmul.f32 %v2053, %v255
        %v2060 = vrot.slane %v2054, 1
        %v2061 = vrot.slane %v2055, 1
        %v2062 = vsel %vm343, %v2060, %v2061
        %v2063 = vrot.slane %v2056, 1
        %v2064 = vsel %vm343, %v2061, %v2063
        %2065 = vrot.lane.b32.xlu0 %v2062, 127
        %v2066 = vpop.permute.xlu0 %2065
        %2067 = vrot.lane.b32.xlu0 %v2064, 127
        %v2068 = vpop.permute.xlu0 %2067
        %2069 = vrot.lane.b32.xlu0 %v2063, 127
        %v2070 = vpop.permute.xlu0 %2069
        %v2074 = vadd.f32 %v2049, %v2066
        %v2075 = vadd.f32 %v2050, %v2068
        %v2076 = vadd.f32 %v2051, %v2070
        %s2077 = sld [smem:[#allocation2 + $0x56]]
        %v2078 = vstv %s2077
        %v2079 = vmul.f32 %v2078, %v253
        %v2080 = vmul.f32 %v2078, %v254
        %v2081 = vmul.f32 %v2078, %v255
        %v2085 = vrot.slane %v2079, 1
        %v2086 = vrot.slane %v2080, 1
        %v2087 = vsel %vm343, %v2085, %v2086
        %v2088 = vrot.slane %v2081, 1
        %v2089 = vsel %vm343, %v2086, %v2088
        %2090 = vrot.lane.b32.xlu0 %v2087, 126
        %v2091 = vpop.permute.xlu0 %2090
        %2092 = vrot.lane.b32.xlu0 %v2089, 126
        %v2093 = vpop.permute.xlu0 %2092
        %2094 = vrot.lane.b32.xlu0 %v2088, 126
        %v2095 = vpop.permute.xlu0 %2094
        %v2099 = vadd.f32 %v2074, %v2091
        %v2100 = vadd.f32 %v2075, %v2093
        %v2101 = vadd.f32 %v2076, %v2095
        %s2102 = sld [smem:[#allocation2 + $0x66]]
        %v2103 = vstv %s2102
        %v2104 = vmul.f32 %v2103, %v253
        %v2105 = vmul.f32 %v2103, %v254
        %v2106 = vmul.f32 %v2103, %v255
        %v2110 = vrot.slane %v2104, 2
        %v2111 = vrot.slane %v2105, 2
        %v2112 = vsel %vm413, %v2110, %v2111
        %v2113 = vrot.slane %v2106, 2
        %v2114 = vsel %vm413, %v2111, %v2113
        %v2118 = vadd.f32 %v2099, %v2112
        %v2119 = vadd.f32 %v2100, %v2114
        %v2120 = vadd.f32 %v2101, %v2113
        %s2121 = sld [smem:[#allocation2 + $0x76]]
        %v2122 = vstv %s2121
        %v2123 = vmul.f32 %v2122, %v253
        %v2124 = vmul.f32 %v2122, %v254
        %v2125 = vmul.f32 %v2122, %v255
        %v2129 = vrot.slane %v2123, 2
        %v2130 = vrot.slane %v2124, 2
        %v2131 = vsel %vm413, %v2129, %v2130
        %v2132 = vrot.slane %v2125, 2
        %v2133 = vsel %vm413, %v2130, %v2132
        %2134 = vrot.lane.b32.xlu0 %v2131, 127
        %v2135 = vpop.permute.xlu0 %2134
        %2136 = vrot.lane.b32.xlu0 %v2133, 127
        %v2137 = vpop.permute.xlu0 %2136
        %2138 = vrot.lane.b32.xlu0 %v2132, 127
        %v2139 = vpop.permute.xlu0 %2138
        %v2143 = vadd.f32 %v2118, %v2135
        %v2144 = vadd.f32 %v2119, %v2137
        %v2145 = vadd.f32 %v2120, %v2139
        %s2146 = sld [smem:[#allocation2 + $0x86]]
        %v2147 = vstv %s2146
        %v2148 = vmul.f32 %v2147, %v253
        %v2149 = vmul.f32 %v2147, %v254
        %v2150 = vmul.f32 %v2147, %v255
        %v2154 = vrot.slane %v2148, 2
        %v2155 = vrot.slane %v2149, 2
        %v2156 = vsel %vm413, %v2154, %v2155
        %v2157 = vrot.slane %v2150, 2
        %v2158 = vsel %vm413, %v2155, %v2157
        %2159 = vrot.lane.b32.xlu0 %v2156, 126
        %v2160 = vpop.permute.xlu0 %2159
        %2161 = vrot.lane.b32.xlu0 %v2158, 126
        %v2162 = vpop.permute.xlu0 %2161
        %2163 = vrot.lane.b32.xlu0 %v2157, 126
        %v2164 = vpop.permute.xlu0 %2163
        %v2168 = vadd.f32 %v2143, %v2160
        %v2169 = vadd.f32 %v2144, %v2162
        %v2170 = vadd.f32 %v2145, %v2164
        %s2171 = sld [smem:[#allocation2 + $0xa]]
        %v2172 = vstv %s2171
        %v2173 = vmul.f32 %v2172, %v257
        %v2174 = vmul.f32 %v2172, %v258
        %v2175 = vmul.f32 %v2172, %v259
        %v2176 = vadd.f32 %v2168, %v2173
        %v2177 = vadd.f32 %v2169, %v2174
        %v2178 = vadd.f32 %v2170, %v2175
        %s2179 = sld [smem:[#allocation2 + $0x1a]]
        %v2180 = vstv %s2179
        %v2181 = vmul.f32 %v2180, %v257
        %v2182 = vmul.f32 %v2180, %v258
        %v2183 = vmul.f32 %v2180, %v259
        %2187 = vrot.lane.b32.xlu0 %v2181, 127
        %v2188 = vpop.permute.xlu0 %2187
        %2189 = vrot.lane.b32.xlu0 %v2182, 127
        %v2190 = vpop.permute.xlu0 %2189
        %2191 = vrot.lane.b32.xlu0 %v2183, 127
        %v2192 = vpop.permute.xlu0 %2191
        %v2196 = vadd.f32 %v2176, %v2188
        %v2197 = vadd.f32 %v2177, %v2190
        %v2198 = vadd.f32 %v2178, %v2192
        %s2199 = sld [smem:[#allocation2 + $0x2a]]
        %v2200 = vstv %s2199
        %v2201 = vmul.f32 %v2200, %v257
        %v2202 = vmul.f32 %v2200, %v258
        %v2203 = vmul.f32 %v2200, %v259
        %2207 = vrot.lane.b32.xlu0 %v2201, 126
        %v2208 = vpop.permute.xlu0 %2207
        %2209 = vrot.lane.b32.xlu0 %v2202, 126
        %v2210 = vpop.permute.xlu0 %2209
        %2211 = vrot.lane.b32.xlu0 %v2203, 126
        %v2212 = vpop.permute.xlu0 %2211
        %v2216 = vadd.f32 %v2196, %v2208
        %v2217 = vadd.f32 %v2197, %v2210
        %v2218 = vadd.f32 %v2198, %v2212
        %s2219 = sld [smem:[#allocation2 + $0x3a]]
        %v2220 = vstv %s2219
        %v2221 = vmul.f32 %v2220, %v257
        %v2222 = vmul.f32 %v2220, %v258
        %v2223 = vmul.f32 %v2220, %v259
        %v2227 = vrot.slane %v2221, 1
        %v2228 = vrot.slane %v2222, 1
        %v2229 = vsel %vm343, %v2227, %v2228
        %v2230 = vrot.slane %v2223, 1
        %v2231 = vsel %vm343, %v2228, %v2230
        %v2235 = vadd.f32 %v2216, %v2229
        %v2236 = vadd.f32 %v2217, %v2231
        %v2237 = vadd.f32 %v2218, %v2230
        %s2238 = sld [smem:[#allocation2 + $0x4a]]
        %v2239 = vstv %s2238
        %v2240 = vmul.f32 %v2239, %v257
        %v2241 = vmul.f32 %v2239, %v258
        %v2242 = vmul.f32 %v2239, %v259
        %v2246 = vrot.slane %v2240, 1
        %v2247 = vrot.slane %v2241, 1
        %v2248 = vsel %vm343, %v2246, %v2247
        %v2249 = vrot.slane %v2242, 1
        %v2250 = vsel %vm343, %v2247, %v2249
        %2251 = vrot.lane.b32.xlu0 %v2248, 127
        %v2252 = vpop.permute.xlu0 %2251
        %2253 = vrot.lane.b32.xlu0 %v2250, 127
        %v2254 = vpop.permute.xlu0 %2253
        %2255 = vrot.lane.b32.xlu0 %v2249, 127
        %v2256 = vpop.permute.xlu0 %2255
        %v2260 = vadd.f32 %v2235, %v2252
        %v2261 = vadd.f32 %v2236, %v2254
        %v2262 = vadd.f32 %v2237, %v2256
        %s2263 = sld [smem:[#allocation2 + $0x5a]]
        %v2264 = vstv %s2263
        %v2265 = vmul.f32 %v2264, %v257
        %v2266 = vmul.f32 %v2264, %v258
        %v2267 = vmul.f32 %v2264, %v259
        %v2271 = vrot.slane %v2265, 1
        %v2272 = vrot.slane %v2266, 1
        %v2273 = vsel %vm343, %v2271, %v2272
        %v2274 = vrot.slane %v2267, 1
        %v2275 = vsel %vm343, %v2272, %v2274
        %2276 = vrot.lane.b32.xlu0 %v2273, 126
        %v2277 = vpop.permute.xlu0 %2276
        %2278 = vrot.lane.b32.xlu0 %v2275, 126
        %v2279 = vpop.permute.xlu0 %2278
        %2280 = vrot.lane.b32.xlu0 %v2274, 126
        %v2281 = vpop.permute.xlu0 %2280
        %v2285 = vadd.f32 %v2260, %v2277
        %v2286 = vadd.f32 %v2261, %v2279
        %v2287 = vadd.f32 %v2262, %v2281
        %s2288 = sld [smem:[#allocation2 + $0x6a]]
        %v2289 = vstv %s2288
        %v2290 = vmul.f32 %v2289, %v257
        %v2291 = vmul.f32 %v2289, %v258
        %v2292 = vmul.f32 %v2289, %v259
        %v2296 = vrot.slane %v2290, 2
        %v2297 = vrot.slane %v2291, 2
        %v2298 = vsel %vm413, %v2296, %v2297
        %v2299 = vrot.slane %v2292, 2
        %v2300 = vsel %vm413, %v2297, %v2299
        %v2304 = vadd.f32 %v2285, %v2298
        %v2305 = vadd.f32 %v2286, %v2300
        %v2306 = vadd.f32 %v2287, %v2299
        %s2307 = sld [smem:[#allocation2 + $0x7a]]
        %v2308 = vstv %s2307
        %v2309 = vmul.f32 %v2308, %v257
        %v2310 = vmul.f32 %v2308, %v258
        %v2311 = vmul.f32 %v2308, %v259
        %v2315 = vrot.slane %v2309, 2
        %v2316 = vrot.slane %v2310, 2
        %v2317 = vsel %vm413, %v2315, %v2316
        %v2318 = vrot.slane %v2311, 2
        %v2319 = vsel %vm413, %v2316, %v2318
        %2320 = vrot.lane.b32.xlu0 %v2317, 127
        %v2321 = vpop.permute.xlu0 %2320
        %2322 = vrot.lane.b32.xlu0 %v2319, 127
        %v2323 = vpop.permute.xlu0 %2322
        %2324 = vrot.lane.b32.xlu0 %v2318, 127
        %v2325 = vpop.permute.xlu0 %2324
        %v2329 = vadd.f32 %v2304, %v2321
        %v2330 = vadd.f32 %v2305, %v2323
        %v2331 = vadd.f32 %v2306, %v2325
        %s2332 = sld [smem:[#allocation2 + $0x8a]]
        %v2333 = vstv %s2332
        %v2334 = vmul.f32 %v2333, %v257
        %v2335 = vmul.f32 %v2333, %v258
        %v2336 = vmul.f32 %v2333, %v259
        %v2340 = vrot.slane %v2334, 2
        %v2341 = vrot.slane %v2335, 2
        %v2342 = vsel %vm413, %v2340, %v2341
        %v2343 = vrot.slane %v2336, 2
        %v2344 = vsel %vm413, %v2341, %v2343
        %2345 = vrot.lane.b32.xlu0 %v2342, 126
        %v2346 = vpop.permute.xlu0 %2345
        %2347 = vrot.lane.b32.xlu0 %v2344, 126
        %v2348 = vpop.permute.xlu0 %2347
        %2349 = vrot.lane.b32.xlu0 %v2343, 126
        %v2350 = vpop.permute.xlu0 %2349
        %v2354 = vadd.f32 %v2329, %v2346
        %v2355 = vadd.f32 %v2330, %v2348
        %v2356 = vadd.f32 %v2331, %v2350
        %s2357 = sld [smem:[#allocation2 + $0xe]]
        %v2358 = vstv %s2357
        %v2359 = vmul.f32 %v2358, %v261
        %v2360 = vmul.f32 %v2358, %v262
        %v2361 = vmul.f32 %v2358, %v263
        %v2362 = vadd.f32 %v2354, %v2359
        %v2363 = vadd.f32 %v2355, %v2360
        %v2364 = vadd.f32 %v2356, %v2361
        %s2365 = sld [smem:[#allocation2 + $0x1e]]
        %v2366 = vstv %s2365
        %v2367 = vmul.f32 %v2366, %v261
        %v2368 = vmul.f32 %v2366, %v262
        %v2369 = vmul.f32 %v2366, %v263
        %2373 = vrot.lane.b32.xlu0 %v2367, 127
        %v2374 = vpop.permute.xlu0 %2373
        %2375 = vrot.lane.b32.xlu0 %v2368, 127
        %v2376 = vpop.permute.xlu0 %2375
        %2377 = vrot.lane.b32.xlu0 %v2369, 127
        %v2378 = vpop.permute.xlu0 %2377
        %v2382 = vadd.f32 %v2362, %v2374
        %v2383 = vadd.f32 %v2363, %v2376
        %v2384 = vadd.f32 %v2364, %v2378
        %s2385 = sld [smem:[#allocation2 + $0x2e]]
        %v2386 = vstv %s2385
        %v2387 = vmul.f32 %v2386, %v261
        %v2388 = vmul.f32 %v2386, %v262
        %v2389 = vmul.f32 %v2386, %v263
        %2393 = vrot.lane.b32.xlu0 %v2387, 126
        %v2394 = vpop.permute.xlu0 %2393
        %2395 = vrot.lane.b32.xlu0 %v2388, 126
        %v2396 = vpop.permute.xlu0 %2395
        %2397 = vrot.lane.b32.xlu0 %v2389, 126
        %v2398 = vpop.permute.xlu0 %2397
        %v2402 = vadd.f32 %v2382, %v2394
        %v2403 = vadd.f32 %v2383, %v2396
        %v2404 = vadd.f32 %v2384, %v2398
        %s2405 = sld [smem:[#allocation2 + $0x3e]]
        %v2406 = vstv %s2405
        %v2407 = vmul.f32 %v2406, %v261
        %v2408 = vmul.f32 %v2406, %v262
        %v2409 = vmul.f32 %v2406, %v263
        %v2413 = vrot.slane %v2407, 1
        %v2414 = vrot.slane %v2408, 1
        %v2415 = vsel %vm343, %v2413, %v2414
        %v2416 = vrot.slane %v2409, 1
        %v2417 = vsel %vm343, %v2414, %v2416
        %v2421 = vadd.f32 %v2402, %v2415
        %v2422 = vadd.f32 %v2403, %v2417
        %v2423 = vadd.f32 %v2404, %v2416
        %s2424 = sld [smem:[#allocation2 + $0x4e]]
        %v2425 = vstv %s2424
        %v2426 = vmul.f32 %v2425, %v261
        %v2427 = vmul.f32 %v2425, %v262
        %v2428 = vmul.f32 %v2425, %v263
        %v2432 = vrot.slane %v2426, 1
        %v2433 = vrot.slane %v2427, 1
        %v2434 = vsel %vm343, %v2432, %v2433
        %v2435 = vrot.slane %v2428, 1
        %v2436 = vsel %vm343, %v2433, %v2435
        %2437 = vrot.lane.b32.xlu0 %v2434, 127
        %v2438 = vpop.permute.xlu0 %2437
        %2439 = vrot.lane.b32.xlu0 %v2436, 127
        %v2440 = vpop.permute.xlu0 %2439
        %2441 = vrot.lane.b32.xlu0 %v2435, 127
        %v2442 = vpop.permute.xlu0 %2441
        %v2446 = vadd.f32 %v2421, %v2438
        %v2447 = vadd.f32 %v2422, %v2440
        %v2448 = vadd.f32 %v2423, %v2442
        %s2449 = sld [smem:[#allocation2 + $0x5e]]
        %v2450 = vstv %s2449
        %v2451 = vmul.f32 %v2450, %v261
        %v2452 = vmul.f32 %v2450, %v262
        %v2453 = vmul.f32 %v2450, %v263
        %v2457 = vrot.slane %v2451, 1
        %v2458 = vrot.slane %v2452, 1
        %v2459 = vsel %vm343, %v2457, %v2458
        %v2460 = vrot.slane %v2453, 1
        %v2461 = vsel %vm343, %v2458, %v2460
        %2462 = vrot.lane.b32.xlu0 %v2459, 126
        %v2463 = vpop.permute.xlu0 %2462
        %2464 = vrot.lane.b32.xlu0 %v2461, 126
        %v2465 = vpop.permute.xlu0 %2464
        %2466 = vrot.lane.b32.xlu0 %v2460, 126
        %v2467 = vpop.permute.xlu0 %2466
        %v2471 = vadd.f32 %v2446, %v2463
        %v2472 = vadd.f32 %v2447, %v2465
        %v2473 = vadd.f32 %v2448, %v2467
        %s2474 = sld [smem:[#allocation2 + $0x6e]]
        %v2475 = vstv %s2474
        %v2476 = vmul.f32 %v2475, %v261
        %v2477 = vmul.f32 %v2475, %v262
        %v2478 = vmul.f32 %v2475, %v263
        %v2482 = vrot.slane %v2476, 2
        %v2483 = vrot.slane %v2477, 2
        %v2484 = vsel %vm413, %v2482, %v2483
        %v2485 = vrot.slane %v2478, 2
        %v2486 = vsel %vm413, %v2483, %v2485
        %v2490 = vadd.f32 %v2471, %v2484
        %v2491 = vadd.f32 %v2472, %v2486
        %v2492 = vadd.f32 %v2473, %v2485
        %s2493 = sld [smem:[#allocation2 + $0x7e]]
        %v2494 = vstv %s2493
        %v2495 = vmul.f32 %v2494, %v261
        %v2496 = vmul.f32 %v2494, %v262
        %v2497 = vmul.f32 %v2494, %v263
        %v2501 = vrot.slane %v2495, 2
        %v2502 = vrot.slane %v2496, 2
        %v2503 = vsel %vm413, %v2501, %v2502
        %v2504 = vrot.slane %v2497, 2
        %v2505 = vsel %vm413, %v2502, %v2504
        %2506 = vrot.lane.b32.xlu0 %v2503, 127
        %v2507 = vpop.permute.xlu0 %2506
        %2508 = vrot.lane.b32.xlu0 %v2505, 127
        %v2509 = vpop.permute.xlu0 %2508
        %2510 = vrot.lane.b32.xlu0 %v2504, 127
        %v2511 = vpop.permute.xlu0 %2510
        %v2515 = vadd.f32 %v2490, %v2507
        %v2516 = vadd.f32 %v2491, %v2509
        %v2517 = vadd.f32 %v2492, %v2511
        %s2518 = sld [smem:[#allocation2 + $0x8e]]
        %v2519 = vstv %s2518
        %v2520 = vmul.f32 %v2519, %v261
        %v2521 = vmul.f32 %v2519, %v262
        %v2522 = vmul.f32 %v2519, %v263
        %v2526 = vrot.slane %v2520, 2
        %v2527 = vrot.slane %v2521, 2
        %v2528 = vsel %vm413, %v2526, %v2527
        %v2529 = vrot.slane %v2522, 2
        %v2530 = vsel %vm413, %v2527, %v2529
        %2531 = vrot.lane.b32.xlu0 %v2528, 126
        %v2532 = vpop.permute.xlu0 %2531
        %2533 = vrot.lane.b32.xlu0 %v2530, 126
        %v2534 = vpop.permute.xlu0 %2533
        %2535 = vrot.lane.b32.xlu0 %v2529, 126
        %v2536 = vpop.permute.xlu0 %2535
        %v2540 = vadd.f32 %v2515, %v2532
        %v2541 = vadd.f32 %v2516, %v2534
        %v2542 = vadd.f32 %v2517, %v2536
        %s2543 = sld [smem:[#allocation5 + $0x2]]
        %v2544 = vstv %s2543
        %v2545 = vadd.f32 %v2540, %v2544
        %v2546 = vadd.f32 %v2541, %v2544
        %v2547 = vadd.f32 %v2542, %v2544
        %v2548 = vmax.f32 %v2545, 0.0
        %v2549 = vmax.f32 %v2546, 0.0
        %v2550 = vmax.f32 %v2547, 0.0
        %v2551 = vsel %vm284, %v2548, 0.0
        %v2552 = vsel %vm285, %v2549, 0.0
        %v2553 = vsel %vm286, %v2550, 0.0
        %s2554 = sld [smem:[#allocation2 + $0x3]]
        %v2555 = vstv %s2554
        %v2556 = vmul.f32 %v2555, %v249
        %v2557 = vmul.f32 %v2555, %v250
        %v2558 = vmul.f32 %v2555, %v251
        %v2559 = vadd.f32 %v2556, 0.0
        %v2560 = vadd.f32 %v2557, 0.0
        %v2561 = vadd.f32 %v2558, 0.0
        %s2562 = sld [smem:[#allocation2 + $0x13]]
        %v2563 = vstv %s2562
        %v2564 = vmul.f32 %v2563, %v249
        %v2565 = vmul.f32 %v2563, %v250
        %v2566 = vmul.f32 %v2563, %v251
        %2570 = vrot.lane.b32.xlu0 %v2564, 127
        %v2571 = vpop.permute.xlu0 %2570
        %2572 = vrot.lane.b32.xlu0 %v2565, 127
        %v2573 = vpop.permute.xlu0 %2572
        %2574 = vrot.lane.b32.xlu0 %v2566, 127
        %v2575 = vpop.permute.xlu0 %2574
        %v2579 = vadd.f32 %v2559, %v2571
        %v2580 = vadd.f32 %v2560, %v2573
        %v2581 = vadd.f32 %v2561, %v2575
        %s2582 = sld [smem:[#allocation2 + $0x23]]
        %v2583 = vstv %s2582
        %v2584 = vmul.f32 %v2583, %v249
        %v2585 = vmul.f32 %v2583, %v250
        %v2586 = vmul.f32 %v2583, %v251
        %2590 = vrot.lane.b32.xlu0 %v2584, 126
        %v2591 = vpop.permute.xlu0 %2590
        %2592 = vrot.lane.b32.xlu0 %v2585, 126
        %v2593 = vpop.permute.xlu0 %2592
        %2594 = vrot.lane.b32.xlu0 %v2586, 126
        %v2595 = vpop.permute.xlu0 %2594
        %v2599 = vadd.f32 %v2579, %v2591
        %v2600 = vadd.f32 %v2580, %v2593
        %v2601 = vadd.f32 %v2581, %v2595
        %s2602 = sld [smem:[#allocation2 + $0x33]]
        %v2603 = vstv %s2602
        %v2604 = vmul.f32 %v2603, %v249
        %v2605 = vmul.f32 %v2603, %v250
        %v2606 = vmul.f32 %v2603, %v251
        %v2610 = vrot.slane %v2604, 1
        %v2611 = vrot.slane %v2605, 1
        %v2612 = vsel %vm343, %v2610, %v2611
        %v2613 = vrot.slane %v2606, 1
        %v2614 = vsel %vm343, %v2611, %v2613
        %v2618 = vadd.f32 %v2599, %v2612
        %v2619 = vadd.f32 %v2600, %v2614
        %v2620 = vadd.f32 %v2601, %v2613
        %s2621 = sld [smem:[#allocation2 + $0x43]]
        %v2622 = vstv %s2621
        %v2623 = vmul.f32 %v2622, %v249
        %v2624 = vmul.f32 %v2622, %v250
        %v2625 = vmul.f32 %v2622, %v251
        %v2629 = vrot.slane %v2623, 1
        %v2630 = vrot.slane %v2624, 1
        %v2631 = vsel %vm343, %v2629, %v2630
        %v2632 = vrot.slane %v2625, 1
        %v2633 = vsel %vm343, %v2630, %v2632
        %2634 = vrot.lane.b32.xlu0 %v2631, 127
        %v2635 = vpop.permute.xlu0 %2634
        %2636 = vrot.lane.b32.xlu0 %v2633, 127
        %v2637 = vpop.permute.xlu0 %2636
        %2638 = vrot.lane.b32.xlu0 %v2632, 127
        %v2639 = vpop.permute.xlu0 %2638
        %v2643 = vadd.f32 %v2618, %v2635
        %v2644 = vadd.f32 %v2619, %v2637
        %v2645 = vadd.f32 %v2620, %v2639
        %s2646 = sld [smem:[#allocation2 + $0x53]]
        %v2647 = vstv %s2646
        %v2648 = vmul.f32 %v2647, %v249
        %v2649 = vmul.f32 %v2647, %v250
        %v2650 = vmul.f32 %v2647, %v251
        %v2654 = vrot.slane %v2648, 1
        %v2655 = vrot.slane %v2649, 1
        %v2656 = vsel %vm343, %v2654, %v2655
        %v2657 = vrot.slane %v2650, 1
        %v2658 = vsel %vm343, %v2655, %v2657
        %2659 = vrot.lane.b32.xlu0 %v2656, 126
        %v2660 = vpop.permute.xlu0 %2659
        %2661 = vrot.lane.b32.xlu0 %v2658, 126
        %v2662 = vpop.permute.xlu0 %2661
        %2663 = vrot.lane.b32.xlu0 %v2657, 126
        %v2664 = vpop.permute.xlu0 %2663
        %v2668 = vadd.f32 %v2643, %v2660
        %v2669 = vadd.f32 %v2644, %v2662
        %v2670 = vadd.f32 %v2645, %v2664
        %s2671 = sld [smem:[#allocation2 + $0x63]]
        %v2672 = vstv %s2671
        %v2673 = vmul.f32 %v2672, %v249
        %v2674 = vmul.f32 %v2672, %v250
        %v2675 = vmul.f32 %v2672, %v251
        %v2679 = vrot.slane %v2673, 2
        %v2680 = vrot.slane %v2674, 2
        %v2681 = vsel %vm413, %v2679, %v2680
        %v2682 = vrot.slane %v2675, 2
        %v2683 = vsel %vm413, %v2680, %v2682
        %v2687 = vadd.f32 %v2668, %v2681
        %v2688 = vadd.f32 %v2669, %v2683
        %v2689 = vadd.f32 %v2670, %v2682
        %s2690 = sld [smem:[#allocation2 + $0x73]]
        %v2691 = vstv %s2690
        %v2692 = vmul.f32 %v2691, %v249
        %v2693 = vmul.f32 %v2691, %v250
        %v2694 = vmul.f32 %v2691, %v251
        %v2698 = vrot.slane %v2692, 2
        %v2699 = vrot.slane %v2693, 2
        %v2700 = vsel %vm413, %v2698, %v2699
        %v2701 = vrot.slane %v2694, 2
        %v2702 = vsel %vm413, %v2699, %v2701
        %2703 = vrot.lane.b32.xlu0 %v2700, 127
        %v2704 = vpop.permute.xlu0 %2703
        %2705 = vrot.lane.b32.xlu0 %v2702, 127
        %v2706 = vpop.permute.xlu0 %2705
        %2707 = vrot.lane.b32.xlu0 %v2701, 127
        %v2708 = vpop.permute.xlu0 %2707
        %v2712 = vadd.f32 %v2687, %v2704
        %v2713 = vadd.f32 %v2688, %v2706
        %v2714 = vadd.f32 %v2689, %v2708
        %s2715 = sld [smem:[#allocation2 + $0x83]]
        %v2716 = vstv %s2715
        %v2717 = vmul.f32 %v2716, %v249
        %v2718 = vmul.f32 %v2716, %v250
        %v2719 = vmul.f32 %v2716, %v251
        %v2723 = vrot.slane %v2717, 2
        %v2724 = vrot.slane %v2718, 2
        %v2725 = vsel %vm413, %v2723, %v2724
        %v2726 = vrot.slane %v2719, 2
        %v2727 = vsel %vm413, %v2724, %v2726
        %2728 = vrot.lane.b32.xlu0 %v2725, 126
        %v2729 = vpop.permute.xlu0 %2728
        %2730 = vrot.lane.b32.xlu0 %v2727, 126
        %v2731 = vpop.permute.xlu0 %2730
        %2732 = vrot.lane.b32.xlu0 %v2726, 126
        %v2733 = vpop.permute.xlu0 %2732
        %v2737 = vadd.f32 %v2712, %v2729
        %v2738 = vadd.f32 %v2713, %v2731
        %v2739 = vadd.f32 %v2714, %v2733
        %s2740 = sld [smem:[#allocation2 + $0x7]]
        %v2741 = vstv %s2740
        %v2742 = vmul.f32 %v2741, %v253
        %v2743 = vmul.f32 %v2741, %v254
        %v2744 = vmul.f32 %v2741, %v255
        %v2745 = vadd.f32 %v2737, %v2742
        %v2746 = vadd.f32 %v2738, %v2743
        %v2747 = vadd.f32 %v2739, %v2744
        %s2748 = sld [smem:[#allocation2 + $0x17]]
        %v2749 = vstv %s2748
        %v2750 = vmul.f32 %v2749, %v253
        %v2751 = vmul.f32 %v2749, %v254
        %v2752 = vmul.f32 %v2749, %v255
        %2756 = vrot.lane.b32.xlu0 %v2750, 127
        %v2757 = vpop.permute.xlu0 %2756
        %2758 = vrot.lane.b32.xlu0 %v2751, 127
        %v2759 = vpop.permute.xlu0 %2758
        %2760 = vrot.lane.b32.xlu0 %v2752, 127
        %v2761 = vpop.permute.xlu0 %2760
        %v2765 = vadd.f32 %v2745, %v2757
        %v2766 = vadd.f32 %v2746, %v2759
        %v2767 = vadd.f32 %v2747, %v2761
        %s2768 = sld [smem:[#allocation2 + $0x27]]
        %v2769 = vstv %s2768
        %v2770 = vmul.f32 %v2769, %v253
        %v2771 = vmul.f32 %v2769, %v254
        %v2772 = vmul.f32 %v2769, %v255
        %2776 = vrot.lane.b32.xlu0 %v2770, 126
        %v2777 = vpop.permute.xlu0 %2776
        %2778 = vrot.lane.b32.xlu0 %v2771, 126
        %v2779 = vpop.permute.xlu0 %2778
        %2780 = vrot.lane.b32.xlu0 %v2772, 126
        %v2781 = vpop.permute.xlu0 %2780
        %v2785 = vadd.f32 %v2765, %v2777
        %v2786 = vadd.f32 %v2766, %v2779
        %v2787 = vadd.f32 %v2767, %v2781
        %s2788 = sld [smem:[#allocation2 + $0x37]]
        %v2789 = vstv %s2788
        %v2790 = vmul.f32 %v2789, %v253
        %v2791 = vmul.f32 %v2789, %v254
        %v2792 = vmul.f32 %v2789, %v255
        %v2796 = vrot.slane %v2790, 1
        %v2797 = vrot.slane %v2791, 1
        %v2798 = vsel %vm343, %v2796, %v2797
        %v2799 = vrot.slane %v2792, 1
        %v2800 = vsel %vm343, %v2797, %v2799
        %v2804 = vadd.f32 %v2785, %v2798
        %v2805 = vadd.f32 %v2786, %v2800
        %v2806 = vadd.f32 %v2787, %v2799
        %s2807 = sld [smem:[#allocation2 + $0x47]]
        %v2808 = vstv %s2807
        %v2809 = vmul.f32 %v2808, %v253
        %v2810 = vmul.f32 %v2808, %v254
        %v2811 = vmul.f32 %v2808, %v255
        %v2815 = vrot.slane %v2809, 1
        %v2816 = vrot.slane %v2810, 1
        %v2817 = vsel %vm343, %v2815, %v2816
        %v2818 = vrot.slane %v2811, 1
        %v2819 = vsel %vm343, %v2816, %v2818
        %2820 = vrot.lane.b32.xlu0 %v2817, 127
        %v2821 = vpop.permute.xlu0 %2820
        %2822 = vrot.lane.b32.xlu0 %v2819, 127
        %v2823 = vpop.permute.xlu0 %2822
        %2824 = vrot.lane.b32.xlu0 %v2818, 127
        %v2825 = vpop.permute.xlu0 %2824
        %v2829 = vadd.f32 %v2804, %v2821
        %v2830 = vadd.f32 %v2805, %v2823
        %v2831 = vadd.f32 %v2806, %v2825
        %s2832 = sld [smem:[#allocation2 + $0x57]]
        %v2833 = vstv %s2832
        %v2834 = vmul.f32 %v2833, %v253
        %v2835 = vmul.f32 %v2833, %v254
        %v2836 = vmul.f32 %v2833, %v255
        %v2840 = vrot.slane %v2834, 1
        %v2841 = vrot.slane %v2835, 1
        %v2842 = vsel %vm343, %v2840, %v2841
        %v2843 = vrot.slane %v2836, 1
        %v2844 = vsel %vm343, %v2841, %v2843
        %2845 = vrot.lane.b32.xlu0 %v2842, 126
        %v2846 = vpop.permute.xlu0 %2845
        %2847 = vrot.lane.b32.xlu0 %v2844, 126
        %v2848 = vpop.permute.xlu0 %2847
        %2849 = vrot.lane.b32.xlu0 %v2843, 126
        %v2850 = vpop.permute.xlu0 %2849
        %v2854 = vadd.f32 %v2829, %v2846
        %v2855 = vadd.f32 %v2830, %v2848
        %v2856 = vadd.f32 %v2831, %v2850
        %s2857 = sld [smem:[#allocation2 + $0x67]]
        %v2858 = vstv %s2857
        %v2859 = vmul.f32 %v2858, %v253
        %v2860 = vmul.f32 %v2858, %v254
        %v2861 = vmul.f32 %v2858, %v255
        %v2865 = vrot.slane %v2859, 2
        %v2866 = vrot.slane %v2860, 2
        %v2867 = vsel %vm413, %v2865, %v2866
        %v2868 = vrot.slane %v2861, 2
        %v2869 = vsel %vm413, %v2866, %v2868
        %v2873 = vadd.f32 %v2854, %v2867
        %v2874 = vadd.f32 %v2855, %v2869
        %v2875 = vadd.f32 %v2856, %v2868
        %s2876 = sld [smem:[#allocation2 + $0x77]]
        %v2877 = vstv %s2876
        %v2878 = vmul.f32 %v2877, %v253
        %v2879 = vmul.f32 %v2877, %v254
        %v2880 = vmul.f32 %v2877, %v255
        %v2884 = vrot.slane %v2878, 2
        %v2885 = vrot.slane %v2879, 2
        %v2886 = vsel %vm413, %v2884, %v2885
        %v2887 = vrot.slane %v2880, 2
        %v2888 = vsel %vm413, %v2885, %v2887
        %2889 = vrot.lane.b32.xlu0 %v2886, 127
        %v2890 = vpop.permute.xlu0 %2889
        %2891 = vrot.lane.b32.xlu0 %v2888, 127
        %v2892 = vpop.permute.xlu0 %2891
        %2893 = vrot.lane.b32.xlu0 %v2887, 127
        %v2894 = vpop.permute.xlu0 %2893
        %v2898 = vadd.f32 %v2873, %v2890
        %v2899 = vadd.f32 %v2874, %v2892
        %v2900 = vadd.f32 %v2875, %v2894
        %s2901 = sld [smem:[#allocation2 + $0x87]]
        %v2902 = vstv %s2901
        %v2903 = vmul.f32 %v2902, %v253
        %v2904 = vmul.f32 %v2902, %v254
        %v2905 = vmul.f32 %v2902, %v255
        %v2909 = vrot.slane %v2903, 2
        %v2910 = vrot.slane %v2904, 2
        %v2911 = vsel %vm413, %v2909, %v2910
        %v2912 = vrot.slane %v2905, 2
        %v2913 = vsel %vm413, %v2910, %v2912
        %2914 = vrot.lane.b32.xlu0 %v2911, 126
        %v2915 = vpop.permute.xlu0 %2914
        %2916 = vrot.lane.b32.xlu0 %v2913, 126
        %v2917 = vpop.permute.xlu0 %2916
        %2918 = vrot.lane.b32.xlu0 %v2912, 126
        %v2919 = vpop.permute.xlu0 %2918
        %v2923 = vadd.f32 %v2898, %v2915
        %v2924 = vadd.f32 %v2899, %v2917
        %v2925 = vadd.f32 %v2900, %v2919
        %s2926 = sld [smem:[#allocation2 + $0xb]]
        %v2927 = vstv %s2926
        %v2928 = vmul.f32 %v2927, %v257
        %v2929 = vmul.f32 %v2927, %v258
        %v2930 = vmul.f32 %v2927, %v259
        %v2931 = vadd.f32 %v2923, %v2928
        %v2932 = vadd.f32 %v2924, %v2929
        %v2933 = vadd.f32 %v2925, %v2930
        %s2934 = sld [smem:[#allocation2 + $0x1b]]
        %v2935 = vstv %s2934
        %v2936 = vmul.f32 %v2935, %v257
        %v2937 = vmul.f32 %v2935, %v258
        %v2938 = vmul.f32 %v2935, %v259
        %2942 = vrot.lane.b32.xlu0 %v2936, 127
        %v2943 = vpop.permute.xlu0 %2942
        %2944 = vrot.lane.b32.xlu0 %v2937, 127
        %v2945 = vpop.permute.xlu0 %2944
        %2946 = vrot.lane.b32.xlu0 %v2938, 127
        %v2947 = vpop.permute.xlu0 %2946
        %v2951 = vadd.f32 %v2931, %v2943
        %v2952 = vadd.f32 %v2932, %v2945
        %v2953 = vadd.f32 %v2933, %v2947
        %s2954 = sld [smem:[#allocation2 + $0x2b]]
        %v2955 = vstv %s2954
        %v2956 = vmul.f32 %v2955, %v257
        %v2957 = vmul.f32 %v2955, %v258
        %v2958 = vmul.f32 %v2955, %v259
        %2962 = vrot.lane.b32.xlu0 %v2956, 126
        %v2963 = vpop.permute.xlu0 %2962
        %2964 = vrot.lane.b32.xlu0 %v2957, 126
        %v2965 = vpop.permute.xlu0 %2964
        %2966 = vrot.lane.b32.xlu0 %v2958, 126
        %v2967 = vpop.permute.xlu0 %2966
        %v2971 = vadd.f32 %v2951, %v2963
        %v2972 = vadd.f32 %v2952, %v2965
        %v2973 = vadd.f32 %v2953, %v2967
        %s2974 = sld [smem:[#allocation2 + $0x3b]]
        %v2975 = vstv %s2974
        %v2976 = vmul.f32 %v2975, %v257
        %v2977 = vmul.f32 %v2975, %v258
        %v2978 = vmul.f32 %v2975, %v259
        %v2982 = vrot.slane %v2976, 1
        %v2983 = vrot.slane %v2977, 1
        %v2984 = vsel %vm343, %v2982, %v2983
        %v2985 = vrot.slane %v2978, 1
        %v2986 = vsel %vm343, %v2983, %v2985
        %v2990 = vadd.f32 %v2971, %v2984
        %v2991 = vadd.f32 %v2972, %v2986
        %v2992 = vadd.f32 %v2973, %v2985
        %s2993 = sld [smem:[#allocation2 + $0x4b]]
        %v2994 = vstv %s2993
        %v2995 = vmul.f32 %v2994, %v257
        %v2996 = vmul.f32 %v2994, %v258
        %v2997 = vmul.f32 %v2994, %v259
        %v3001 = vrot.slane %v2995, 1
        %v3002 = vrot.slane %v2996, 1
        %v3003 = vsel %vm343, %v3001, %v3002
        %v3004 = vrot.slane %v2997, 1
        %v3005 = vsel %vm343, %v3002, %v3004
        %3006 = vrot.lane.b32.xlu0 %v3003, 127
        %v3007 = vpop.permute.xlu0 %3006
        %3008 = vrot.lane.b32.xlu0 %v3005, 127
        %v3009 = vpop.permute.xlu0 %3008
        %3010 = vrot.lane.b32.xlu0 %v3004, 127
        %v3011 = vpop.permute.xlu0 %3010
        %v3015 = vadd.f32 %v2990, %v3007
        %v3016 = vadd.f32 %v2991, %v3009
        %v3017 = vadd.f32 %v2992, %v3011
        %s3018 = sld [smem:[#allocation2 + $0x5b]]
        %v3019 = vstv %s3018
        %v3020 = vmul.f32 %v3019, %v257
        %v3021 = vmul.f32 %v3019, %v258
        %v3022 = vmul.f32 %v3019, %v259
        %v3026 = vrot.slane %v3020, 1
        %v3027 = vrot.slane %v3021, 1
        %v3028 = vsel %vm343, %v3026, %v3027
        %v3029 = vrot.slane %v3022, 1
        %v3030 = vsel %vm343, %v3027, %v3029
        %3031 = vrot.lane.b32.xlu0 %v3028, 126
        %v3032 = vpop.permute.xlu0 %3031
        %3033 = vrot.lane.b32.xlu0 %v3030, 126
        %v3034 = vpop.permute.xlu0 %3033
        %3035 = vrot.lane.b32.xlu0 %v3029, 126
        %v3036 = vpop.permute.xlu0 %3035
        %v3040 = vadd.f32 %v3015, %v3032
        %v3041 = vadd.f32 %v3016, %v3034
        %v3042 = vadd.f32 %v3017, %v3036
        %s3043 = sld [smem:[#allocation2 + $0x6b]]
        %v3044 = vstv %s3043
        %v3045 = vmul.f32 %v3044, %v257
        %v3046 = vmul.f32 %v3044, %v258
        %v3047 = vmul.f32 %v3044, %v259
        %v3051 = vrot.slane %v3045, 2
        %v3052 = vrot.slane %v3046, 2
        %v3053 = vsel %vm413, %v3051, %v3052
        %v3054 = vrot.slane %v3047, 2
        %v3055 = vsel %vm413, %v3052, %v3054
        %v3059 = vadd.f32 %v3040, %v3053
        %v3060 = vadd.f32 %v3041, %v3055
        %v3061 = vadd.f32 %v3042, %v3054
        %s3062 = sld [smem:[#allocation2 + $0x7b]]
        %v3063 = vstv %s3062
        %v3064 = vmul.f32 %v3063, %v257
        %v3065 = vmul.f32 %v3063, %v258
        %v3066 = vmul.f32 %v3063, %v259
        %v3070 = vrot.slane %v3064, 2
        %v3071 = vrot.slane %v3065, 2
        %v3072 = vsel %vm413, %v3070, %v3071
        %v3073 = vrot.slane %v3066, 2
        %v3074 = vsel %vm413, %v3071, %v3073
        %3075 = vrot.lane.b32.xlu0 %v3072, 127
        %v3076 = vpop.permute.xlu0 %3075
        %3077 = vrot.lane.b32.xlu0 %v3074, 127
        %v3078 = vpop.permute.xlu0 %3077
        %3079 = vrot.lane.b32.xlu0 %v3073, 127
        %v3080 = vpop.permute.xlu0 %3079
        %v3084 = vadd.f32 %v3059, %v3076
        %v3085 = vadd.f32 %v3060, %v3078
        %v3086 = vadd.f32 %v3061, %v3080
        %s3087 = sld [smem:[#allocation2 + $0x8b]]
        %v3088 = vstv %s3087
        %v3089 = vmul.f32 %v3088, %v257
        %v3090 = vmul.f32 %v3088, %v258
        %v3091 = vmul.f32 %v3088, %v259
        %v3095 = vrot.slane %v3089, 2
        %v3096 = vrot.slane %v3090, 2
        %v3097 = vsel %vm413, %v3095, %v3096
        %v3098 = vrot.slane %v3091, 2
        %v3099 = vsel %vm413, %v3096, %v3098
        %3100 = vrot.lane.b32.xlu0 %v3097, 126
        %v3101 = vpop.permute.xlu0 %3100
        %3102 = vrot.lane.b32.xlu0 %v3099, 126
        %v3103 = vpop.permute.xlu0 %3102
        %3104 = vrot.lane.b32.xlu0 %v3098, 126
        %v3105 = vpop.permute.xlu0 %3104
        %v3109 = vadd.f32 %v3084, %v3101
        %v3110 = vadd.f32 %v3085, %v3103
        %v3111 = vadd.f32 %v3086, %v3105
        %s3112 = sld [smem:[#allocation2 + $0xf]]
        %v3113 = vstv %s3112
        %v3114 = vmul.f32 %v3113, %v261
        %v3115 = vmul.f32 %v3113, %v262
        %v3116 = vmul.f32 %v3113, %v263
        %v3117 = vadd.f32 %v3109, %v3114
        %v3118 = vadd.f32 %v3110, %v3115
        %v3119 = vadd.f32 %v3111, %v3116
        %s3120 = sld [smem:[#allocation2 + $0x1f]]
        %v3121 = vstv %s3120
        %v3122 = vmul.f32 %v3121, %v261
        %v3123 = vmul.f32 %v3121, %v262
        %v3124 = vmul.f32 %v3121, %v263
        %3128 = vrot.lane.b32.xlu0 %v3122, 127
        %v3129 = vpop.permute.xlu0 %3128
        %3130 = vrot.lane.b32.xlu0 %v3123, 127
        %v3131 = vpop.permute.xlu0 %3130
        %3132 = vrot.lane.b32.xlu0 %v3124, 127
        %v3133 = vpop.permute.xlu0 %3132
        %v3137 = vadd.f32 %v3117, %v3129
        %v3138 = vadd.f32 %v3118, %v3131
        %v3139 = vadd.f32 %v3119, %v3133
        %s3140 = sld [smem:[#allocation2 + $0x2f]]
        %v3141 = vstv %s3140
        %v3142 = vmul.f32 %v3141, %v261
        %v3143 = vmul.f32 %v3141, %v262
        %v3144 = vmul.f32 %v3141, %v263
        %3148 = vrot.lane.b32.xlu0 %v3142, 126
        %v3149 = vpop.permute.xlu0 %3148
        %3150 = vrot.lane.b32.xlu0 %v3143, 126
        %v3151 = vpop.permute.xlu0 %3150
        %3152 = vrot.lane.b32.xlu0 %v3144, 126
        %v3153 = vpop.permute.xlu0 %3152
        %v3157 = vadd.f32 %v3137, %v3149
        %v3158 = vadd.f32 %v3138, %v3151
        %v3159 = vadd.f32 %v3139, %v3153
        %s3160 = sld [smem:[#allocation2 + $0x3f]]
        %v3161 = vstv %s3160
        %v3162 = vmul.f32 %v3161, %v261
        %v3163 = vmul.f32 %v3161, %v262
        %v3164 = vmul.f32 %v3161, %v263
        %v3168 = vrot.slane %v3162, 1
        %v3169 = vrot.slane %v3163, 1
        %v3170 = vsel %vm343, %v3168, %v3169
        %v3171 = vrot.slane %v3164, 1
        %v3172 = vsel %vm343, %v3169, %v3171
        %v3176 = vadd.f32 %v3157, %v3170
        %v3177 = vadd.f32 %v3158, %v3172
        %v3178 = vadd.f32 %v3159, %v3171
        %s3179 = sld [smem:[#allocation2 + $0x4f]]
        %v3180 = vstv %s3179
        %v3181 = vmul.f32 %v3180, %v261
        %v3182 = vmul.f32 %v3180, %v262
        %v3183 = vmul.f32 %v3180, %v263
        %v3187 = vrot.slane %v3181, 1
        %v3188 = vrot.slane %v3182, 1
        %v3189 = vsel %vm343, %v3187, %v3188
        %v3190 = vrot.slane %v3183, 1
        %v3191 = vsel %vm343, %v3188, %v3190
        %3192 = vrot.lane.b32.xlu0 %v3189, 127
        %v3193 = vpop.permute.xlu0 %3192
        %3194 = vrot.lane.b32.xlu0 %v3191, 127
        %v3195 = vpop.permute.xlu0 %3194
        %3196 = vrot.lane.b32.xlu0 %v3190, 127
        %v3197 = vpop.permute.xlu0 %3196
        %v3201 = vadd.f32 %v3176, %v3193
        %v3202 = vadd.f32 %v3177, %v3195
        %v3203 = vadd.f32 %v3178, %v3197
        %s3204 = sld [smem:[#allocation2 + $0x5f]]
        %v3205 = vstv %s3204
        %v3206 = vmul.f32 %v3205, %v261
        %v3207 = vmul.f32 %v3205, %v262
        %v3208 = vmul.f32 %v3205, %v263
        %v3212 = vrot.slane %v3206, 1
        %v3213 = vrot.slane %v3207, 1
        %v3214 = vsel %vm343, %v3212, %v3213
        %v3215 = vrot.slane %v3208, 1
        %v3216 = vsel %vm343, %v3213, %v3215
        %3217 = vrot.lane.b32.xlu0 %v3214, 126
        %v3218 = vpop.permute.xlu0 %3217
        %3219 = vrot.lane.b32.xlu0 %v3216, 126
        %v3220 = vpop.permute.xlu0 %3219
        %3221 = vrot.lane.b32.xlu0 %v3215, 126
        %v3222 = vpop.permute.xlu0 %3221
        %v3226 = vadd.f32 %v3201, %v3218
        %v3227 = vadd.f32 %v3202, %v3220
        %v3228 = vadd.f32 %v3203, %v3222
        %s3229 = sld [smem:[#allocation2 + $0x6f]]
        %v3230 = vstv %s3229
        %v3231 = vmul.f32 %v3230, %v261
        %v3232 = vmul.f32 %v3230, %v262
        %v3233 = vmul.f32 %v3230, %v263
        %v3237 = vrot.slane %v3231, 2
        %v3238 = vrot.slane %v3232, 2
        %v3239 = vsel %vm413, %v3237, %v3238
        %v3240 = vrot.slane %v3233, 2
        %v3241 = vsel %vm413, %v3238, %v3240
        %v3245 = vadd.f32 %v3226, %v3239
        %v3246 = vadd.f32 %v3227, %v3241
        %v3247 = vadd.f32 %v3228, %v3240
        %s3248 = sld [smem:[#allocation2 + $0x7f]]
        %v3249 = vstv %s3248
        %v3250 = vmul.f32 %v3249, %v261
        %v3251 = vmul.f32 %v3249, %v262
        %v3252 = vmul.f32 %v3249, %v263
        %v3256 = vrot.slane %v3250, 2
        %v3257 = vrot.slane %v3251, 2
        %v3258 = vsel %vm413, %v3256, %v3257
        %v3259 = vrot.slane %v3252, 2
        %v3260 = vsel %vm413, %v3257, %v3259
        %3261 = vrot.lane.b32.xlu0 %v3258, 127
        %v3262 = vpop.permute.xlu0 %3261
        %3263 = vrot.lane.b32.xlu0 %v3260, 127
        %v3264 = vpop.permute.xlu0 %3263
        %3265 = vrot.lane.b32.xlu0 %v3259, 127
        %v3266 = vpop.permute.xlu0 %3265
        %v3270 = vadd.f32 %v3245, %v3262
        %v3271 = vadd.f32 %v3246, %v3264
        %v3272 = vadd.f32 %v3247, %v3266
        %s3273 = sld [smem:[#allocation2 + $0x8f]]
        %v3274 = vstv %s3273
        %v3275 = vmul.f32 %v3274, %v261
        %v3276 = vmul.f32 %v3274, %v262
        %v3277 = vmul.f32 %v3274, %v263
        %v3281 = vrot.slane %v3275, 2
        %v3282 = vrot.slane %v3276, 2
        %v3283 = vsel %vm413, %v3281, %v3282
        %v3284 = vrot.slane %v3277, 2
        %v3285 = vsel %vm413, %v3282, %v3284
        %3286 = vrot.lane.b32.xlu0 %v3283, 126
        %v3287 = vpop.permute.xlu0 %3286
        %3288 = vrot.lane.b32.xlu0 %v3285, 126
        %v3289 = vpop.permute.xlu0 %3288
        %3290 = vrot.lane.b32.xlu0 %v3284, 126
        %v3291 = vpop.permute.xlu0 %3290
        %v3295 = vadd.f32 %v3270, %v3287
        %v3296 = vadd.f32 %v3271, %v3289
        %v3297 = vadd.f32 %v3272, %v3291
        %s3298 = sld [smem:[#allocation5 + $0x3]]
        %v3299 = vstv %s3298
        %v3300 = vadd.f32 %v3295, %v3299
        %v3301 = vadd.f32 %v3296, %v3299
        %v3302 = vadd.f32 %v3297, %v3299
        %v3303 = vmax.f32 %v3300, 0.0
        %v3304 = vmax.f32 %v3301, 0.0
        %v3305 = vmax.f32 %v3302, 0.0
        %v3306 = vsel %vm284, %v3303, 0.0
        %v3307 = vsel %vm285, %v3304, 0.0
        %v3308 = vsel %vm286, %v3305, 0.0
        %vm3309 = vcmp.ge.s32.totalorder %v265, 1
        %vm3310 = vcmp.ge.s32.totalorder %v266, 1
        %vm3311 = vcmp.ge.s32.totalorder %v267, 1
        %vm3312 = vcmp.lt.s32.totalorder %v265, 17
        %vm3313 = vcmp.lt.s32.totalorder %v266, 17
        %vm3314 = vcmp.lt.s32.totalorder %v267, 17
        %vm3315 = vmand %vm3309, %vm3312
        %vm3316 = vmand %vm3310, %vm3313
        %vm3317 = vmand %vm3311, %vm3314
        %vm3318 = vcmp.ge.s32.totalorder %v269, 1
        %vm3319 = vmand %vm3315, %vm3318
        %vm3320 = vmand %vm3316, %vm3318
        %vm3321 = vmand %vm3317, %vm3318
        %vm3322 = vcmp.lt.s32.totalorder %v269, 17
        %vm3323 = vmand %vm3319, %vm3322
        %vm3324 = vmand %vm3320, %vm3322
        %vm3325 = vmand %vm3321, %vm3322
        %s3326 = sld [smem:[#allocation2 + $0x90]]
        %v3327 = vstv %s3326
        %v3328 = vmul.f32 %v3327, %v1041
        %v3329 = vmul.f32 %v3327, %v1042
        %v3330 = vmul.f32 %v3327, %v1043
        %v3331 = vadd.f32 %v3328, 0.0
        %v3332 = vadd.f32 %v3329, 0.0
        %v3333 = vadd.f32 %v3330, 0.0
        %s3334 = sld [smem:[#allocation2 + $0xa0]]
        %v3335 = vstv %s3334
        %v3336 = vmul.f32 %v3335, %v1041
        %v3337 = vmul.f32 %v3335, %v1042
        %v3338 = vmul.f32 %v3335, %v1043
        %3342 = vrot.lane.b32.xlu0 %v3336, 127
        %v3343 = vpop.permute.xlu0 %3342
        %3344 = vrot.lane.b32.xlu0 %v3337, 127
        %v3345 = vpop.permute.xlu0 %3344
        %3346 = vrot.lane.b32.xlu0 %v3338, 127
        %v3347 = vpop.permute.xlu0 %3346
        %v3351 = vadd.f32 %v3331, %v3343
        %v3352 = vadd.f32 %v3332, %v3345
        %v3353 = vadd.f32 %v3333, %v3347
        %s3354 = sld [smem:[#allocation2 + $0xb0]]
        %v3355 = vstv %s3354
        %v3356 = vmul.f32 %v3355, %v1041
        %v3357 = vmul.f32 %v3355, %v1042
        %v3358 = vmul.f32 %v3355, %v1043
        %3362 = vrot.lane.b32.xlu0 %v3356, 126
        %v3363 = vpop.permute.xlu0 %3362
        %3364 = vrot.lane.b32.xlu0 %v3357, 126
        %v3365 = vpop.permute.xlu0 %3364
        %3366 = vrot.lane.b32.xlu0 %v3358, 126
        %v3367 = vpop.permute.xlu0 %3366
        %v3371 = vadd.f32 %v3351, %v3363
        %v3372 = vadd.f32 %v3352, %v3365
        %v3373 = vadd.f32 %v3353, %v3367
        %s3374 = sld [smem:[#allocation2 + $0xc0]]
        %v3375 = vstv %s3374
        %v3376 = vmul.f32 %v3375, %v1041
        %v3377 = vmul.f32 %v3375, %v1042
        %v3378 = vmul.f32 %v3375, %v1043
        %v3382 = vrot.slane %v3376, 1
        %v3383 = vrot.slane %v3377, 1
        %v3384 = vsel %vm343, %v3382, %v3383
        %v3385 = vrot.slane %v3378, 1
        %v3386 = vsel %vm343, %v3383, %v3385
        %v3390 = vadd.f32 %v3371, %v3384
        %v3391 = vadd.f32 %v3372, %v3386
        %v3392 = vadd.f32 %v3373, %v3385
        %s3393 = sld [smem:[#allocation2 + $0xd0]]
        %v3394 = vstv %s3393
        %v3395 = vmul.f32 %v3394, %v1041
        %v3396 = vmul.f32 %v3394, %v1042
        %v3397 = vmul.f32 %v3394, %v1043
        %v3401 = vrot.slane %v3395, 1
        %v3402 = vrot.slane %v3396, 1
        %v3403 = vsel %vm343, %v3401, %v3402
        %v3404 = vrot.slane %v3397, 1
        %v3405 = vsel %vm343, %v3402, %v3404
        %3406 = vrot.lane.b32.xlu0 %v3403, 127
        %v3407 = vpop.permute.xlu0 %3406
        %3408 = vrot.lane.b32.xlu0 %v3405, 127
        %v3409 = vpop.permute.xlu0 %3408
        %3410 = vrot.lane.b32.xlu0 %v3404, 127
        %v3411 = vpop.permute.xlu0 %3410
        %v3415 = vadd.f32 %v3390, %v3407
        %v3416 = vadd.f32 %v3391, %v3409
        %v3417 = vadd.f32 %v3392, %v3411
        %s3418 = sld [smem:[#allocation2 + $0xe0]]
        %v3419 = vstv %s3418
        %v3420 = vmul.f32 %v3419, %v1041
        %v3421 = vmul.f32 %v3419, %v1042
        %v3422 = vmul.f32 %v3419, %v1043
        %v3426 = vrot.slane %v3420, 1
        %v3427 = vrot.slane %v3421, 1
        %v3428 = vsel %vm343, %v3426, %v3427
        %v3429 = vrot.slane %v3422, 1
        %v3430 = vsel %vm343, %v3427, %v3429
        %3431 = vrot.lane.b32.xlu0 %v3428, 126
        %v3432 = vpop.permute.xlu0 %3431
        %3433 = vrot.lane.b32.xlu0 %v3430, 126
        %v3434 = vpop.permute.xlu0 %3433
        %3435 = vrot.lane.b32.xlu0 %v3429, 126
        %v3436 = vpop.permute.xlu0 %3435
        %v3440 = vadd.f32 %v3415, %v3432
        %v3441 = vadd.f32 %v3416, %v3434
        %v3442 = vadd.f32 %v3417, %v3436
        %s3443 = sld [smem:[#allocation2 + $0xf0]]
        %v3444 = vstv %s3443
        %v3445 = vmul.f32 %v3444, %v1041
        %v3446 = vmul.f32 %v3444, %v1042
        %v3447 = vmul.f32 %v3444, %v1043
        %v3451 = vrot.slane %v3445, 2
        %v3452 = vrot.slane %v3446, 2
        %v3453 = vsel %vm413, %v3451, %v3452
        %v3454 = vrot.slane %v3447, 2
        %v3455 = vsel %vm413, %v3452, %v3454
        %v3459 = vadd.f32 %v3440, %v3453
        %v3460 = vadd.f32 %v3441, %v3455
        %v3461 = vadd.f32 %v3442, %v3454
        %s3462 = sld [smem:[#allocation2 + $0x100]]
        %v3463 = vstv %s3462
        %v3464 = vmul.f32 %v3463, %v1041
        %v3465 = vmul.f32 %v3463, %v1042
        %v3466 = vmul.f32 %v3463, %v1043
        %v3470 = vrot.slane %v3464, 2
        %v3471 = vrot.slane %v3465, 2
        %v3472 = vsel %vm413, %v3470, %v3471
        %v3473 = vrot.slane %v3466, 2
        %v3474 = vsel %vm413, %v3471, %v3473
        %3475 = vrot.lane.b32.xlu0 %v3472, 127
        %v3476 = vpop.permute.xlu0 %3475
        %3477 = vrot.lane.b32.xlu0 %v3474, 127
        %v3478 = vpop.permute.xlu0 %3477
        %3479 = vrot.lane.b32.xlu0 %v3473, 127
        %v3480 = vpop.permute.xlu0 %3479
        %v3484 = vadd.f32 %v3459, %v3476
        %v3485 = vadd.f32 %v3460, %v3478
        %v3486 = vadd.f32 %v3461, %v3480
        %s3487 = sld [smem:[#allocation2 + $0x110]]
        %v3488 = vstv %s3487
        %v3489 = vmul.f32 %v3488, %v1041
        %v3490 = vmul.f32 %v3488, %v1042
        %v3491 = vmul.f32 %v3488, %v1043
        %v3495 = vrot.slane %v3489, 2
        %v3496 = vrot.slane %v3490, 2
        %v3497 = vsel %vm413, %v3495, %v3496
        %v3498 = vrot.slane %v3491, 2
        %v3499 = vsel %vm413, %v3496, %v3498
        %3500 = vrot.lane.b32.xlu0 %v3497, 126
        %v3501 = vpop.permute.xlu0 %3500
        %3502 = vrot.lane.b32.xlu0 %v3499, 126
        %v3503 = vpop.permute.xlu0 %3502
        %3504 = vrot.lane.b32.xlu0 %v3498, 126
        %v3505 = vpop.permute.xlu0 %3504
        %v3509 = vadd.f32 %v3484, %v3501
        %v3510 = vadd.f32 %v3485, %v3503
        %v3511 = vadd.f32 %v3486, %v3505
        %s3512 = sld [smem:[#allocation2 + $0x94]]
        %v3513 = vstv %s3512
        %v3514 = vmul.f32 %v3513, %v1796
        %v3515 = vmul.f32 %v3513, %v1797
        %v3516 = vmul.f32 %v3513, %v1798
        %v3517 = vadd.f32 %v3509, %v3514
        %v3518 = vadd.f32 %v3510, %v3515
        %v3519 = vadd.f32 %v3511, %v3516
        %s3520 = sld [smem:[#allocation2 + $0xa4]]
        %v3521 = vstv %s3520
        %v3522 = vmul.f32 %v3521, %v1796
        %v3523 = vmul.f32 %v3521, %v1797
        %v3524 = vmul.f32 %v3521, %v1798
        %3528 = vrot.lane.b32.xlu0 %v3522, 127
        %v3529 = vpop.permute.xlu0 %3528
        %3530 = vrot.lane.b32.xlu0 %v3523, 127
        %v3531 = vpop.permute.xlu0 %3530
        %3532 = vrot.lane.b32.xlu0 %v3524, 127
        %v3533 = vpop.permute.xlu0 %3532
        %v3537 = vadd.f32 %v3517, %v3529
        %v3538 = vadd.f32 %v3518, %v3531
        %v3539 = vadd.f32 %v3519, %v3533
        %s3540 = sld [smem:[#allocation2 + $0xb4]]
        %v3541 = vstv %s3540
        %v3542 = vmul.f32 %v3541, %v1796
        %v3543 = vmul.f32 %v3541, %v1797
        %v3544 = vmul.f32 %v3541, %v1798
        %3548 = vrot.lane.b32.xlu0 %v3542, 126
        %v3549 = vpop.permute.xlu0 %3548
        %3550 = vrot.lane.b32.xlu0 %v3543, 126
        %v3551 = vpop.permute.xlu0 %3550
        %3552 = vrot.lane.b32.xlu0 %v3544, 126
        %v3553 = vpop.permute.xlu0 %3552
        %v3557 = vadd.f32 %v3537, %v3549
        %v3558 = vadd.f32 %v3538, %v3551
        %v3559 = vadd.f32 %v3539, %v3553
        %s3560 = sld [smem:[#allocation2 + $0xc4]]
        %v3561 = vstv %s3560
        %v3562 = vmul.f32 %v3561, %v1796
        %v3563 = vmul.f32 %v3561, %v1797
        %v3564 = vmul.f32 %v3561, %v1798
        %v3568 = vrot.slane %v3562, 1
        %v3569 = vrot.slane %v3563, 1
        %v3570 = vsel %vm343, %v3568, %v3569
        %v3571 = vrot.slane %v3564, 1
        %v3572 = vsel %vm343, %v3569, %v3571
        %v3576 = vadd.f32 %v3557, %v3570
        %v3577 = vadd.f32 %v3558, %v3572
        %v3578 = vadd.f32 %v3559, %v3571
        %s3579 = sld [smem:[#allocation2 + $0xd4]]
        %v3580 = vstv %s3579
        %v3581 = vmul.f32 %v3580, %v1796
        %v3582 = vmul.f32 %v3580, %v1797
        %v3583 = vmul.f32 %v3580, %v1798
        %v3587 = vrot.slane %v3581, 1
        %v3588 = vrot.slane %v3582, 1
        %v3589 = vsel %vm343, %v3587, %v3588
        %v3590 = vrot.slane %v3583, 1
        %v3591 = vsel %vm343, %v3588, %v3590
        %3592 = vrot.lane.b32.xlu0 %v3589, 127
        %v3593 = vpop.permute.xlu0 %3592
        %3594 = vrot.lane.b32.xlu0 %v3591, 127
        %v3595 = vpop.permute.xlu0 %3594
        %3596 = vrot.lane.b32.xlu0 %v3590, 127
        %v3597 = vpop.permute.xlu0 %3596
        %v3601 = vadd.f32 %v3576, %v3593
        %v3602 = vadd.f32 %v3577, %v3595
        %v3603 = vadd.f32 %v3578, %v3597
        %s3604 = sld [smem:[#allocation2 + $0xe4]]
        %v3605 = vstv %s3604
        %v3606 = vmul.f32 %v3605, %v1796
        %v3607 = vmul.f32 %v3605, %v1797
        %v3608 = vmul.f32 %v3605, %v1798
        %v3612 = vrot.slane %v3606, 1
        %v3613 = vrot.slane %v3607, 1
        %v3614 = vsel %vm343, %v3612, %v3613
        %v3615 = vrot.slane %v3608, 1
        %v3616 = vsel %vm343, %v3613, %v3615
        %3617 = vrot.lane.b32.xlu0 %v3614, 126
        %v3618 = vpop.permute.xlu0 %3617
        %3619 = vrot.lane.b32.xlu0 %v3616, 126
        %v3620 = vpop.permute.xlu0 %3619
        %3621 = vrot.lane.b32.xlu0 %v3615, 126
        %v3622 = vpop.permute.xlu0 %3621
        %v3626 = vadd.f32 %v3601, %v3618
        %v3627 = vadd.f32 %v3602, %v3620
        %v3628 = vadd.f32 %v3603, %v3622
        %s3629 = sld [smem:[#allocation2 + $0xf4]]
        %v3630 = vstv %s3629
        %v3631 = vmul.f32 %v3630, %v1796
        %v3632 = vmul.f32 %v3630, %v1797
        %v3633 = vmul.f32 %v3630, %v1798
        %v3637 = vrot.slane %v3631, 2
        %v3638 = vrot.slane %v3632, 2
        %v3639 = vsel %vm413, %v3637, %v3638
        %v3640 = vrot.slane %v3633, 2
        %v3641 = vsel %vm413, %v3638, %v3640
        %v3645 = vadd.f32 %v3626, %v3639
        %v3646 = vadd.f32 %v3627, %v3641
        %v3647 = vadd.f32 %v3628, %v3640
        %s3648 = sld [smem:[#allocation2 + $0x104]]
        %v3649 = vstv %s3648
        %v3650 = vmul.f32 %v3649, %v1796
        %v3651 = vmul.f32 %v3649, %v1797
        %v3652 = vmul.f32 %v3649, %v1798
        %v3656 = vrot.slane %v3650, 2
        %v3657 = vrot.slane %v3651, 2
        %v3658 = vsel %vm413, %v3656, %v3657
        %v3659 = vrot.slane %v3652, 2
        %v3660 = vsel %vm413, %v3657, %v3659
        %3661 = vrot.lane.b32.xlu0 %v3658, 127
        %v3662 = vpop.permute.xlu0 %3661
        %3663 = vrot.lane.b32.xlu0 %v3660, 127
        %v3664 = vpop.permute.xlu0 %3663
        %3665 = vrot.lane.b32.xlu0 %v3659, 127
        %v3666 = vpop.permute.xlu0 %3665
        %v3670 = vadd.f32 %v3645, %v3662
        %v3671 = vadd.f32 %v3646, %v3664
        %v3672 = vadd.f32 %v3647, %v3666
        %s3673 = sld [smem:[#allocation2 + $0x114]]
        %v3674 = vstv %s3673
        %v3675 = vmul.f32 %v3674, %v1796
        %v3676 = vmul.f32 %v3674, %v1797
        %v3677 = vmul.f32 %v3674, %v1798
        %v3681 = vrot.slane %v3675, 2
        %v3682 = vrot.slane %v3676, 2
        %v3683 = vsel %vm413, %v3681, %v3682
        %v3684 = vrot.slane %v3677, 2
        %v3685 = vsel %vm413, %v3682, %v3684
        %3686 = vrot.lane.b32.xlu0 %v3683, 126
        %v3687 = vpop.permute.xlu0 %3686
        %3688 = vrot.lane.b32.xlu0 %v3685, 126
        %v3689 = vpop.permute.xlu0 %3688
        %3690 = vrot.lane.b32.xlu0 %v3684, 126
        %v3691 = vpop.permute.xlu0 %3690
        %v3695 = vadd.f32 %v3670, %v3687
        %v3696 = vadd.f32 %v3671, %v3689
        %v3697 = vadd.f32 %v3672, %v3691
        %s3698 = sld [smem:[#allocation2 + $0x98]]
        %v3699 = vstv %s3698
        %v3700 = vmul.f32 %v3699, %v2551
        %v3701 = vmul.f32 %v3699, %v2552
        %v3702 = vmul.f32 %v3699, %v2553
        %v3703 = vadd.f32 %v3695, %v3700
        %v3704 = vadd.f32 %v3696, %v3701
        %v3705 = vadd.f32 %v3697, %v3702
        %s3706 = sld [smem:[#allocation2 + $0xa8]]
        %v3707 = vstv %s3706
        %v3708 = vmul.f32 %v3707, %v2551
        %v3709 = vmul.f32 %v3707, %v2552
        %v3710 = vmul.f32 %v3707, %v2553
        %3714 = vrot.lane.b32.xlu0 %v3708, 127
        %v3715 = vpop.permute.xlu0 %3714
        %3716 = vrot.lane.b32.xlu0 %v3709, 127
        %v3717 = vpop.permute.xlu0 %3716
        %3718 = vrot.lane.b32.xlu0 %v3710, 127
        %v3719 = vpop.permute.xlu0 %3718
        %v3723 = vadd.f32 %v3703, %v3715
        %v3724 = vadd.f32 %v3704, %v3717
        %v3725 = vadd.f32 %v3705, %v3719
        %s3726 = sld [smem:[#allocation2 + $0xb8]]
        %v3727 = vstv %s3726
        %v3728 = vmul.f32 %v3727, %v2551
        %v3729 = vmul.f32 %v3727, %v2552
        %v3730 = vmul.f32 %v3727, %v2553
        %3734 = vrot.lane.b32.xlu0 %v3728, 126
        %v3735 = vpop.permute.xlu0 %3734
        %3736 = vrot.lane.b32.xlu0 %v3729, 126
        %v3737 = vpop.permute.xlu0 %3736
        %3738 = vrot.lane.b32.xlu0 %v3730, 126
        %v3739 = vpop.permute.xlu0 %3738
        %v3743 = vadd.f32 %v3723, %v3735
        %v3744 = vadd.f32 %v3724, %v3737
        %v3745 = vadd.f32 %v3725, %v3739
        %s3746 = sld [smem:[#allocation2 + $0xc8]]
        %v3747 = vstv %s3746
        %v3748 = vmul.f32 %v3747, %v2551
        %v3749 = vmul.f32 %v3747, %v2552
        %v3750 = vmul.f32 %v3747, %v2553
        %v3754 = vrot.slane %v3748, 1
        %v3755 = vrot.slane %v3749, 1
        %v3756 = vsel %vm343, %v3754, %v3755
        %v3757 = vrot.slane %v3750, 1
        %v3758 = vsel %vm343, %v3755, %v3757
        %v3762 = vadd.f32 %v3743, %v3756
        %v3763 = vadd.f32 %v3744, %v3758
        %v3764 = vadd.f32 %v3745, %v3757
        %s3765 = sld [smem:[#allocation2 + $0xd8]]
        %v3766 = vstv %s3765
        %v3767 = vmul.f32 %v3766, %v2551
        %v3768 = vmul.f32 %v3766, %v2552
        %v3769 = vmul.f32 %v3766, %v2553
        %v3773 = vrot.slane %v3767, 1
        %v3774 = vrot.slane %v3768, 1
        %v3775 = vsel %vm343, %v3773, %v3774
        %v3776 = vrot.slane %v3769, 1
        %v3777 = vsel %vm343, %v3774, %v3776
        %3778 = vrot.lane.b32.xlu0 %v3775, 127
        %v3779 = vpop.permute.xlu0 %3778
        %3780 = vrot.lane.b32.xlu0 %v3777, 127
        %v3781 = vpop.permute.xlu0 %3780
        %3782 = vrot.lane.b32.xlu0 %v3776, 127
        %v3783 = vpop.permute.xlu0 %3782
        %v3787 = vadd.f32 %v3762, %v3779
        %v3788 = vadd.f32 %v3763, %v3781
        %v3789 = vadd.f32 %v3764, %v3783
        %s3790 = sld [smem:[#allocation2 + $0xe8]]
        %v3791 = vstv %s3790
        %v3792 = vmul.f32 %v3791, %v2551
        %v3793 = vmul.f32 %v3791, %v2552
        %v3794 = vmul.f32 %v3791, %v2553
        %v3798 = vrot.slane %v3792, 1
        %v3799 = vrot.slane %v3793, 1
        %v3800 = vsel %vm343, %v3798, %v3799
        %v3801 = vrot.slane %v3794, 1
        %v3802 = vsel %vm343, %v3799, %v3801
        %3803 = vrot.lane.b32.xlu0 %v3800, 126
        %v3804 = vpop.permute.xlu0 %3803
        %3805 = vrot.lane.b32.xlu0 %v3802, 126
        %v3806 = vpop.permute.xlu0 %3805
        %3807 = vrot.lane.b32.xlu0 %v3801, 126
        %v3808 = vpop.permute.xlu0 %3807
        %v3812 = vadd.f32 %v3787, %v3804
        %v3813 = vadd.f32 %v3788, %v3806
        %v3814 = vadd.f32 %v3789, %v3808
        %s3815 = sld [smem:[#allocation2 + $0xf8]]
        %v3816 = vstv %s3815
        %v3817 = vmul.f32 %v3816, %v2551
        %v3818 = vmul.f32 %v3816, %v2552
        %v3819 = vmul.f32 %v3816, %v2553
        %v3823 = vrot.slane %v3817, 2
        %v3824 = vrot.slane %v3818, 2
        %v3825 = vsel %vm413, %v3823, %v3824
        %v3826 = vrot.slane %v3819, 2
        %v3827 = vsel %vm413, %v3824, %v3826
        %v3831 = vadd.f32 %v3812, %v3825
        %v3832 = vadd.f32 %v3813, %v3827
        %v3833 = vadd.f32 %v3814, %v3826
        %s3834 = sld [smem:[#allocation2 + $0x108]]
        %v3835 = vstv %s3834
        %v3836 = vmul.f32 %v3835, %v2551
        %v3837 = vmul.f32 %v3835, %v2552
        %v3838 = vmul.f32 %v3835, %v2553
        %v3842 = vrot.slane %v3836, 2
        %v3843 = vrot.slane %v3837, 2
        %v3844 = vsel %vm413, %v3842, %v3843
        %v3845 = vrot.slane %v3838, 2
        %v3846 = vsel %vm413, %v3843, %v3845
        %3847 = vrot.lane.b32.xlu0 %v3844, 127
        %v3848 = vpop.permute.xlu0 %3847
        %3849 = vrot.lane.b32.xlu0 %v3846, 127
        %v3850 = vpop.permute.xlu0 %3849
        %3851 = vrot.lane.b32.xlu0 %v3845, 127
        %v3852 = vpop.permute.xlu0 %3851
        %v3856 = vadd.f32 %v3831, %v3848
        %v3857 = vadd.f32 %v3832, %v3850
        %v3858 = vadd.f32 %v3833, %v3852
        %s3859 = sld [smem:[#allocation2 + $0x118]]
        %v3860 = vstv %s3859
        %v3861 = vmul.f32 %v3860, %v2551
        %v3862 = vmul.f32 %v3860, %v2552
        %v3863 = vmul.f32 %v3860, %v2553
        %v3867 = vrot.slane %v3861, 2
        %v3868 = vrot.slane %v3862, 2
        %v3869 = vsel %vm413, %v3867, %v3868
        %v3870 = vrot.slane %v3863, 2
        %v3871 = vsel %vm413, %v3868, %v3870
        %3872 = vrot.lane.b32.xlu0 %v3869, 126
        %v3873 = vpop.permute.xlu0 %3872
        %3874 = vrot.lane.b32.xlu0 %v3871, 126
        %v3875 = vpop.permute.xlu0 %3874
        %3876 = vrot.lane.b32.xlu0 %v3870, 126
        %v3877 = vpop.permute.xlu0 %3876
        %v3881 = vadd.f32 %v3856, %v3873
        %v3882 = vadd.f32 %v3857, %v3875
        %v3883 = vadd.f32 %v3858, %v3877
        %s3884 = sld [smem:[#allocation2 + $0x9c]]
        %v3885 = vstv %s3884
        %v3886 = vmul.f32 %v3885, %v3306
        %v3887 = vmul.f32 %v3885, %v3307
        %v3888 = vmul.f32 %v3885, %v3308
        %v3889 = vadd.f32 %v3881, %v3886
        %v3890 = vadd.f32 %v3882, %v3887
        %v3891 = vadd.f32 %v3883, %v3888
        %s3892 = sld [smem:[#allocation2 + $0xac]]
        %v3893 = vstv %s3892
        %v3894 = vmul.f32 %v3893, %v3306
        %v3895 = vmul.f32 %v3893, %v3307
        %v3896 = vmul.f32 %v3893, %v3308
        %3900 = vrot.lane.b32.xlu0 %v3894, 127
        %v3901 = vpop.permute.xlu0 %3900
        %3902 = vrot.lane.b32.xlu0 %v3895, 127
        %v3903 = vpop.permute.xlu0 %3902
        %3904 = vrot.lane.b32.xlu0 %v3896, 127
        %v3905 = vpop.permute.xlu0 %3904
        %v3909 = vadd.f32 %v3889, %v3901
        %v3910 = vadd.f32 %v3890, %v3903
        %v3911 = vadd.f32 %v3891, %v3905
        %s3912 = sld [smem:[#allocation2 + $0xbc]]
        %v3913 = vstv %s3912
        %v3914 = vmul.f32 %v3913, %v3306
        %v3915 = vmul.f32 %v3913, %v3307
        %v3916 = vmul.f32 %v3913, %v3308
        %3920 = vrot.lane.b32.xlu0 %v3914, 126
        %v3921 = vpop.permute.xlu0 %3920
        %3922 = vrot.lane.b32.xlu0 %v3915, 126
        %v3923 = vpop.permute.xlu0 %3922
        %3924 = vrot.lane.b32.xlu0 %v3916, 126
        %v3925 = vpop.permute.xlu0 %3924
        %v3929 = vadd.f32 %v3909, %v3921
        %v3930 = vadd.f32 %v3910, %v3923
        %v3931 = vadd.f32 %v3911, %v3925
        %s3932 = sld [smem:[#allocation2 + $0xcc]]
        %v3933 = vstv %s3932
        %v3934 = vmul.f32 %v3933, %v3306
        %v3935 = vmul.f32 %v3933, %v3307
        %v3936 = vmul.f32 %v3933, %v3308
        %v3940 = vrot.slane %v3934, 1
        %v3941 = vrot.slane %v3935, 1
        %v3942 = vsel %vm343, %v3940, %v3941
        %v3943 = vrot.slane %v3936, 1
        %v3944 = vsel %vm343, %v3941, %v3943
        %v3948 = vadd.f32 %v3929, %v3942
        %v3949 = vadd.f32 %v3930, %v3944
        %v3950 = vadd.f32 %v3931, %v3943
        %s3951 = sld [smem:[#allocation2 + $0xdc]]
        %v3952 = vstv %s3951
        %v3953 = vmul.f32 %v3952, %v3306
        %v3954 = vmul.f32 %v3952, %v3307
        %v3955 = vmul.f32 %v3952, %v3308
        %v3959 = vrot.slane %v3953, 1
        %v3960 = vrot.slane %v3954, 1
        %v3961 = vsel %vm343, %v3959, %v3960
        %v3962 = vrot.slane %v3955, 1
        %v3963 = vsel %vm343, %v3960, %v3962
        %3964 = vrot.lane.b32.xlu0 %v3961, 127
        %v3965 = vpop.permute.xlu0 %3964
        %3966 = vrot.lane.b32.xlu0 %v3963, 127
        %v3967 = vpop.permute.xlu0 %3966
        %3968 = vrot.lane.b32.xlu0 %v3962, 127
        %v3969 = vpop.permute.xlu0 %3968
        %v3973 = vadd.f32 %v3948, %v3965
        %v3974 = vadd.f32 %v3949, %v3967
        %v3975 = vadd.f32 %v3950, %v3969
        %s3976 = sld [smem:[#allocation2 + $0xec]]
        %v3977 = vstv %s3976
        %v3978 = vmul.f32 %v3977, %v3306
        %v3979 = vmul.f32 %v3977, %v3307
        %v3980 = vmul.f32 %v3977, %v3308
        %v3984 = vrot.slane %v3978, 1
        %v3985 = vrot.slane %v3979, 1
        %v3986 = vsel %vm343, %v3984, %v3985
        %v3987 = vrot.slane %v3980, 1
        %v3988 = vsel %vm343, %v3985, %v3987
        %3989 = vrot.lane.b32.xlu0 %v3986, 126
        %v3990 = vpop.permute.xlu0 %3989
        %3991 = vrot.lane.b32.xlu0 %v3988, 126
        %v3992 = vpop.permute.xlu0 %3991
        %3993 = vrot.lane.b32.xlu0 %v3987, 126
        %v3994 = vpop.permute.xlu0 %3993
        %v3998 = vadd.f32 %v3973, %v3990
        %v3999 = vadd.f32 %v3974, %v3992
        %v4000 = vadd.f32 %v3975, %v3994
        %s4001 = sld [smem:[#allocation2 + $0xfc]]
        %v4002 = vstv %s4001
        %v4003 = vmul.f32 %v4002, %v3306
        %v4004 = vmul.f32 %v4002, %v3307
        %v4005 = vmul.f32 %v4002, %v3308
        %v4009 = vrot.slane %v4003, 2
        %v4010 = vrot.slane %v4004, 2
        %v4011 = vsel %vm413, %v4009, %v4010
        %v4012 = vrot.slane %v4005, 2
        %v4013 = vsel %vm413, %v4010, %v4012
        %v4017 = vadd.f32 %v3998, %v4011
        %v4018 = vadd.f32 %v3999, %v4013
        %v4019 = vadd.f32 %v4000, %v4012
        %s4020 = sld [smem:[#allocation2 + $0x10c]]
        %v4021 = vstv %s4020
        %v4022 = vmul.f32 %v4021, %v3306
        %v4023 = vmul.f32 %v4021, %v3307
        %v4024 = vmul.f32 %v4021, %v3308
        %v4028 = vrot.slane %v4022, 2
        %v4029 = vrot.slane %v4023, 2
        %v4030 = vsel %vm413, %v4028, %v4029
        %v4031 = vrot.slane %v4024, 2
        %v4032 = vsel %vm413, %v4029, %v4031
        %4033 = vrot.lane.b32.xlu0 %v4030, 127
        %v4034 = vpop.permute.xlu0 %4033
        %4035 = vrot.lane.b32.xlu0 %v4032, 127
        %v4036 = vpop.permute.xlu0 %4035
        %4037 = vrot.lane.b32.xlu0 %v4031, 127
        %v4038 = vpop.permute.xlu0 %4037
        %v4042 = vadd.f32 %v4017, %v4034
        %v4043 = vadd.f32 %v4018, %v4036
        %v4044 = vadd.f32 %v4019, %v4038
        %s4045 = sld [smem:[#allocation2 + $0x11c]]
        %v4046 = vstv %s4045
        %v4047 = vmul.f32 %v4046, %v3306
        %v4048 = vmul.f32 %v4046, %v3307
        %v4049 = vmul.f32 %v4046, %v3308
        %v4053 = vrot.slane %v4047, 2
        %v4054 = vrot.slane %v4048, 2
        %v4055 = vsel %vm413, %v4053, %v4054
        %v4056 = vrot.slane %v4049, 2
        %v4057 = vsel %vm413, %v4054, %v4056
        %4058 = vrot.lane.b32.xlu0 %v4055, 126
        %v4059 = vpop.permute.xlu0 %4058
        %4060 = vrot.lane.b32.xlu0 %v4057, 126
        %v4061 = vpop.permute.xlu0 %4060
        %4062 = vrot.lane.b32.xlu0 %v4056, 126
        %v4063 = vpop.permute.xlu0 %4062
        %v4067 = vadd.f32 %v4042, %v4059
        %v4068 = vadd.f32 %v4043, %v4061
        %v4069 = vadd.f32 %v4044, %v4063
        %s4070 = sld [smem:[#allocation5 + $0x4]]
        %v4071 = vstv %s4070
        %v4072 = vadd.f32 %v4067, %v4071
        %v4073 = vadd.f32 %v4068, %v4071
        %v4074 = vadd.f32 %v4069, %v4071
        %v4075 = vmax.f32 %v4072, 0.0
        %v4076 = vmax.f32 %v4073, 0.0
        %v4077 = vmax.f32 %v4074, 0.0
        %v4078 = vsel %vm3323, %v4075, 0.0
        %v4079 = vsel %vm3324, %v4076, 0.0
        %v4080 = vsel %vm3325, %v4077, 0.0
        %s4081 = sld [smem:[#allocation2 + $0x91]]
        %v4082 = vstv %s4081
        %v4083 = vmul.f32 %v4082, %v1041
        %v4084 = vmul.f32 %v4082, %v1042
        %v4085 = vmul.f32 %v4082, %v1043
        %v4086 = vadd.f32 %v4083, 0.0
        %v4087 = vadd.f32 %v4084, 0.0
        %v4088 = vadd.f32 %v4085, 0.0
        %s4089 = sld [smem:[#allocation2 + $0xa1]]
        %v4090 = vstv %s4089
        %v4091 = vmul.f32 %v4090, %v1041
        %v4092 = vmul.f32 %v4090, %v1042
        %v4093 = vmul.f32 %v4090, %v1043
        %4097 = vrot.lane.b32.xlu0 %v4091, 127
        %v4098 = vpop.permute.xlu0 %4097
        %4099 = vrot.lane.b32.xlu0 %v4092, 127
        %v4100 = vpop.permute.xlu0 %4099
        %4101 = vrot.lane.b32.xlu0 %v4093, 127
        %v4102 = vpop.permute.xlu0 %4101
        %v4106 = vadd.f32 %v4086, %v4098
        %v4107 = vadd.f32 %v4087, %v4100
        %v4108 = vadd.f32 %v4088, %v4102
        %s4109 = sld [smem:[#allocation2 + $0xb1]]
        %v4110 = vstv %s4109
        %v4111 = vmul.f32 %v4110, %v1041
        %v4112 = vmul.f32 %v4110, %v1042
        %v4113 = vmul.f32 %v4110, %v1043
        %4117 = vrot.lane.b32.xlu0 %v4111, 126
        %v4118 = vpop.permute.xlu0 %4117
        %4119 = vrot.lane.b32.xlu0 %v4112, 126
        %v4120 = vpop.permute.xlu0 %4119
        %4121 = vrot.lane.b32.xlu0 %v4113, 126
        %v4122 = vpop.permute.xlu0 %4121
        %v4126 = vadd.f32 %v4106, %v4118
        %v4127 = vadd.f32 %v4107, %v4120
        %v4128 = vadd.f32 %v4108, %v4122
        %s4129 = sld [smem:[#allocation2 + $0xc1]]
        %v4130 = vstv %s4129
        %v4131 = vmul.f32 %v4130, %v1041
        %v4132 = vmul.f32 %v4130, %v1042
        %v4133 = vmul.f32 %v4130, %v1043
        %v4137 = vrot.slane %v4131, 1
        %v4138 = vrot.slane %v4132, 1
        %v4139 = vsel %vm343, %v4137, %v4138
        %v4140 = vrot.slane %v4133, 1
        %v4141 = vsel %vm343, %v4138, %v4140
        %v4145 = vadd.f32 %v4126, %v4139
        %v4146 = vadd.f32 %v4127, %v4141
        %v4147 = vadd.f32 %v4128, %v4140
        %s4148 = sld [smem:[#allocation2 + $0xd1]]
        %v4149 = vstv %s4148
        %v4150 = vmul.f32 %v4149, %v1041
        %v4151 = vmul.f32 %v4149, %v1042
        %v4152 = vmul.f32 %v4149, %v1043
        %v4156 = vrot.slane %v4150, 1
        %v4157 = vrot.slane %v4151, 1
        %v4158 = vsel %vm343, %v4156, %v4157
        %v4159 = vrot.slane %v4152, 1
        %v4160 = vsel %vm343, %v4157, %v4159
        %4161 = vrot.lane.b32.xlu0 %v4158, 127
        %v4162 = vpop.permute.xlu0 %4161
        %4163 = vrot.lane.b32.xlu0 %v4160, 127
        %v4164 = vpop.permute.xlu0 %4163
        %4165 = vrot.lane.b32.xlu0 %v4159, 127
        %v4166 = vpop.permute.xlu0 %4165
        %v4170 = vadd.f32 %v4145, %v4162
        %v4171 = vadd.f32 %v4146, %v4164
        %v4172 = vadd.f32 %v4147, %v4166
        %s4173 = sld [smem:[#allocation2 + $0xe1]]
        %v4174 = vstv %s4173
        %v4175 = vmul.f32 %v4174, %v1041
        %v4176 = vmul.f32 %v4174, %v1042
        %v4177 = vmul.f32 %v4174, %v1043
        %v4181 = vrot.slane %v4175, 1
        %v4182 = vrot.slane %v4176, 1
        %v4183 = vsel %vm343, %v4181, %v4182
        %v4184 = vrot.slane %v4177, 1
        %v4185 = vsel %vm343, %v4182, %v4184
        %4186 = vrot.lane.b32.xlu0 %v4183, 126
        %v4187 = vpop.permute.xlu0 %4186
        %4188 = vrot.lane.b32.xlu0 %v4185, 126
        %v4189 = vpop.permute.xlu0 %4188
        %4190 = vrot.lane.b32.xlu0 %v4184, 126
        %v4191 = vpop.permute.xlu0 %4190
        %v4195 = vadd.f32 %v4170, %v4187
        %v4196 = vadd.f32 %v4171, %v4189
        %v4197 = vadd.f32 %v4172, %v4191
        %s4198 = sld [smem:[#allocation2 + $0xf1]]
        %v4199 = vstv %s4198
        %v4200 = vmul.f32 %v4199, %v1041
        %v4201 = vmul.f32 %v4199, %v1042
        %v4202 = vmul.f32 %v4199, %v1043
        %v4206 = vrot.slane %v4200, 2
        %v4207 = vrot.slane %v4201, 2
        %v4208 = vsel %vm413, %v4206, %v4207
        %v4209 = vrot.slane %v4202, 2
        %v4210 = vsel %vm413, %v4207, %v4209
        %v4214 = vadd.f32 %v4195, %v4208
        %v4215 = vadd.f32 %v4196, %v4210
        %v4216 = vadd.f32 %v4197, %v4209
        %s4217 = sld [smem:[#allocation2 + $0x101]]
        %v4218 = vstv %s4217
        %v4219 = vmul.f32 %v4218, %v1041
        %v4220 = vmul.f32 %v4218, %v1042
        %v4221 = vmul.f32 %v4218, %v1043
        %v4225 = vrot.slane %v4219, 2
        %v4226 = vrot.slane %v4220, 2
        %v4227 = vsel %vm413, %v4225, %v4226
        %v4228 = vrot.slane %v4221, 2
        %v4229 = vsel %vm413, %v4226, %v4228
        %4230 = vrot.lane.b32.xlu0 %v4227, 127
        %v4231 = vpop.permute.xlu0 %4230
        %4232 = vrot.lane.b32.xlu0 %v4229, 127
        %v4233 = vpop.permute.xlu0 %4232
        %4234 = vrot.lane.b32.xlu0 %v4228, 127
        %v4235 = vpop.permute.xlu0 %4234
        %v4239 = vadd.f32 %v4214, %v4231
        %v4240 = vadd.f32 %v4215, %v4233
        %v4241 = vadd.f32 %v4216, %v4235
        %s4242 = sld [smem:[#allocation2 + $0x111]]
        %v4243 = vstv %s4242
        %v4244 = vmul.f32 %v4243, %v1041
        %v4245 = vmul.f32 %v4243, %v1042
        %v4246 = vmul.f32 %v4243, %v1043
        %v4250 = vrot.slane %v4244, 2
        %v4251 = vrot.slane %v4245, 2
        %v4252 = vsel %vm413, %v4250, %v4251
        %v4253 = vrot.slane %v4246, 2
        %v4254 = vsel %vm413, %v4251, %v4253
        %4255 = vrot.lane.b32.xlu0 %v4252, 126
        %v4256 = vpop.permute.xlu0 %4255
        %4257 = vrot.lane.b32.xlu0 %v4254, 126
        %v4258 = vpop.permute.xlu0 %4257
        %4259 = vrot.lane.b32.xlu0 %v4253, 126
        %v4260 = vpop.permute.xlu0 %4259
        %v4264 = vadd.f32 %v4239, %v4256
        %v4265 = vadd.f32 %v4240, %v4258
        %v4266 = vadd.f32 %v4241, %v4260
        %s4267 = sld [smem:[#allocation2 + $0x95]]
        %v4268 = vstv %s4267
        %v4269 = vmul.f32 %v4268, %v1796
        %v4270 = vmul.f32 %v4268, %v1797
        %v4271 = vmul.f32 %v4268, %v1798
        %v4272 = vadd.f32 %v4264, %v4269
        %v4273 = vadd.f32 %v4265, %v4270
        %v4274 = vadd.f32 %v4266, %v4271
        %s4275 = sld [smem:[#allocation2 + $0xa5]]
        %v4276 = vstv %s4275
        %v4277 = vmul.f32 %v4276, %v1796
        %v4278 = vmul.f32 %v4276, %v1797
        %v4279 = vmul.f32 %v4276, %v1798
        %4283 = vrot.lane.b32.xlu0 %v4277, 127
        %v4284 = vpop.permute.xlu0 %4283
        %4285 = vrot.lane.b32.xlu0 %v4278, 127
        %v4286 = vpop.permute.xlu0 %4285
        %4287 = vrot.lane.b32.xlu0 %v4279, 127
        %v4288 = vpop.permute.xlu0 %4287
        %v4292 = vadd.f32 %v4272, %v4284
        %v4293 = vadd.f32 %v4273, %v4286
        %v4294 = vadd.f32 %v4274, %v4288
        %s4295 = sld [smem:[#allocation2 + $0xb5]]
        %v4296 = vstv %s4295
        %v4297 = vmul.f32 %v4296, %v1796
        %v4298 = vmul.f32 %v4296, %v1797
        %v4299 = vmul.f32 %v4296, %v1798
        %4303 = vrot.lane.b32.xlu0 %v4297, 126
        %v4304 = vpop.permute.xlu0 %4303
        %4305 = vrot.lane.b32.xlu0 %v4298, 126
        %v4306 = vpop.permute.xlu0 %4305
        %4307 = vrot.lane.b32.xlu0 %v4299, 126
        %v4308 = vpop.permute.xlu0 %4307
        %v4312 = vadd.f32 %v4292, %v4304
        %v4313 = vadd.f32 %v4293, %v4306
        %v4314 = vadd.f32 %v4294, %v4308
        %s4315 = sld [smem:[#allocation2 + $0xc5]]
        %v4316 = vstv %s4315
        %v4317 = vmul.f32 %v4316, %v1796
        %v4318 = vmul.f32 %v4316, %v1797
        %v4319 = vmul.f32 %v4316, %v1798
        %v4323 = vrot.slane %v4317, 1
        %v4324 = vrot.slane %v4318, 1
        %v4325 = vsel %vm343, %v4323, %v4324
        %v4326 = vrot.slane %v4319, 1
        %v4327 = vsel %vm343, %v4324, %v4326
        %v4331 = vadd.f32 %v4312, %v4325
        %v4332 = vadd.f32 %v4313, %v4327
        %v4333 = vadd.f32 %v4314, %v4326
        %s4334 = sld [smem:[#allocation2 + $0xd5]]
        %v4335 = vstv %s4334
        %v4336 = vmul.f32 %v4335, %v1796
        %v4337 = vmul.f32 %v4335, %v1797
        %v4338 = vmul.f32 %v4335, %v1798
        %v4342 = vrot.slane %v4336, 1
        %v4343 = vrot.slane %v4337, 1
        %v4344 = vsel %vm343, %v4342, %v4343
        %v4345 = vrot.slane %v4338, 1
        %v4346 = vsel %vm343, %v4343, %v4345
        %4347 = vrot.lane.b32.xlu0 %v4344, 127
        %v4348 = vpop.permute.xlu0 %4347
        %4349 = vrot.lane.b32.xlu0 %v4346, 127
        %v4350 = vpop.permute.xlu0 %4349
        %4351 = vrot.lane.b32.xlu0 %v4345, 127
        %v4352 = vpop.permute.xlu0 %4351
        %v4356 = vadd.f32 %v4331, %v4348
        %v4357 = vadd.f32 %v4332, %v4350
        %v4358 = vadd.f32 %v4333, %v4352
        %s4359 = sld [smem:[#allocation2 + $0xe5]]
        %v4360 = vstv %s4359
        %v4361 = vmul.f32 %v4360, %v1796
        %v4362 = vmul.f32 %v4360, %v1797
        %v4363 = vmul.f32 %v4360, %v1798
        %v4367 = vrot.slane %v4361, 1
        %v4368 = vrot.slane %v4362, 1
        %v4369 = vsel %vm343, %v4367, %v4368
        %v4370 = vrot.slane %v4363, 1
        %v4371 = vsel %vm343, %v4368, %v4370
        %4372 = vrot.lane.b32.xlu0 %v4369, 126
        %v4373 = vpop.permute.xlu0 %4372
        %4374 = vrot.lane.b32.xlu0 %v4371, 126
        %v4375 = vpop.permute.xlu0 %4374
        %4376 = vrot.lane.b32.xlu0 %v4370, 126
        %v4377 = vpop.permute.xlu0 %4376
        %v4381 = vadd.f32 %v4356, %v4373
        %v4382 = vadd.f32 %v4357, %v4375
        %v4383 = vadd.f32 %v4358, %v4377
        %s4384 = sld [smem:[#allocation2 + $0xf5]]
        %v4385 = vstv %s4384
        %v4386 = vmul.f32 %v4385, %v1796
        %v4387 = vmul.f32 %v4385, %v1797
        %v4388 = vmul.f32 %v4385, %v1798
        %v4392 = vrot.slane %v4386, 2
        %v4393 = vrot.slane %v4387, 2
        %v4394 = vsel %vm413, %v4392, %v4393
        %v4395 = vrot.slane %v4388, 2
        %v4396 = vsel %vm413, %v4393, %v4395
        %v4400 = vadd.f32 %v4381, %v4394
        %v4401 = vadd.f32 %v4382, %v4396
        %v4402 = vadd.f32 %v4383, %v4395
        %s4403 = sld [smem:[#allocation2 + $0x105]]
        %v4404 = vstv %s4403
        %v4405 = vmul.f32 %v4404, %v1796
        %v4406 = vmul.f32 %v4404, %v1797
        %v4407 = vmul.f32 %v4404, %v1798
        %v4411 = vrot.slane %v4405, 2
        %v4412 = vrot.slane %v4406, 2
        %v4413 = vsel %vm413, %v4411, %v4412
        %v4414 = vrot.slane %v4407, 2
        %v4415 = vsel %vm413, %v4412, %v4414
        %4416 = vrot.lane.b32.xlu0 %v4413, 127
        %v4417 = vpop.permute.xlu0 %4416
        %4418 = vrot.lane.b32.xlu0 %v4415, 127
        %v4419 = vpop.permute.xlu0 %4418
        %4420 = vrot.lane.b32.xlu0 %v4414, 127
        %v4421 = vpop.permute.xlu0 %4420
        %v4425 = vadd.f32 %v4400, %v4417
        %v4426 = vadd.f32 %v4401, %v4419
        %v4427 = vadd.f32 %v4402, %v4421
        %s4428 = sld [smem:[#allocation2 + $0x115]]
        %v4429 = vstv %s4428
        %v4430 = vmul.f32 %v4429, %v1796
        %v4431 = vmul.f32 %v4429, %v1797
        %v4432 = vmul.f32 %v4429, %v1798
        %v4436 = vrot.slane %v4430, 2
        %v4437 = vrot.slane %v4431, 2
        %v4438 = vsel %vm413, %v4436, %v4437
        %v4439 = vrot.slane %v4432, 2
        %v4440 = vsel %vm413, %v4437, %v4439
        %4441 = vrot.lane.b32.xlu0 %v4438, 126
        %v4442 = vpop.permute.xlu0 %4441
        %4443 = vrot.lane.b32.xlu0 %v4440, 126
        %v4444 = vpop.permute.xlu0 %4443
        %4445 = vrot.lane.b32.xlu0 %v4439, 126
        %v4446 = vpop.permute.xlu0 %4445
        %v4450 = vadd.f32 %v4425, %v4442
        %v4451 = vadd.f32 %v4426, %v4444
        %v4452 = vadd.f32 %v4427, %v4446
        %s4453 = sld [smem:[#allocation2 + $0x99]]
        %v4454 = vstv %s4453
        %v4455 = vmul.f32 %v4454, %v2551
        %v4456 = vmul.f32 %v4454, %v2552
        %v4457 = vmul.f32 %v4454, %v2553
        %v4458 = vadd.f32 %v4450, %v4455
        %v4459 = vadd.f32 %v4451, %v4456
        %v4460 = vadd.f32 %v4452, %v4457
        %s4461 = sld [smem:[#allocation2 + $0xa9]]
        %v4462 = vstv %s4461
        %v4463 = vmul.f32 %v4462, %v2551
        %v4464 = vmul.f32 %v4462, %v2552
        %v4465 = vmul.f32 %v4462, %v2553
        %4469 = vrot.lane.b32.xlu0 %v4463, 127
        %v4470 = vpop.permute.xlu0 %4469
        %4471 = vrot.lane.b32.xlu0 %v4464, 127
        %v4472 = vpop.permute.xlu0 %4471
        %4473 = vrot.lane.b32.xlu0 %v4465, 127
        %v4474 = vpop.permute.xlu0 %4473
        %v4478 = vadd.f32 %v4458, %v4470
        %v4479 = vadd.f32 %v4459, %v4472
        %v4480 = vadd.f32 %v4460, %v4474
        %s4481 = sld [smem:[#allocation2 + $0xb9]]
        %v4482 = vstv %s4481
        %v4483 = vmul.f32 %v4482, %v2551
        %v4484 = vmul.f32 %v4482, %v2552
        %v4485 = vmul.f32 %v4482, %v2553
        %4489 = vrot.lane.b32.xlu0 %v4483, 126
        %v4490 = vpop.permute.xlu0 %4489
        %4491 = vrot.lane.b32.xlu0 %v4484, 126
        %v4492 = vpop.permute.xlu0 %4491
        %4493 = vrot.lane.b32.xlu0 %v4485, 126
        %v4494 = vpop.permute.xlu0 %4493
        %v4498 = vadd.f32 %v4478, %v4490
        %v4499 = vadd.f32 %v4479, %v4492
        %v4500 = vadd.f32 %v4480, %v4494
        %s4501 = sld [smem:[#allocation2 + $0xc9]]
        %v4502 = vstv %s4501
        %v4503 = vmul.f32 %v4502, %v2551
        %v4504 = vmul.f32 %v4502, %v2552
        %v4505 = vmul.f32 %v4502, %v2553
        %v4509 = vrot.slane %v4503, 1
        %v4510 = vrot.slane %v4504, 1
        %v4511 = vsel %vm343, %v4509, %v4510
        %v4512 = vrot.slane %v4505, 1
        %v4513 = vsel %vm343, %v4510, %v4512
        %v4517 = vadd.f32 %v4498, %v4511
        %v4518 = vadd.f32 %v4499, %v4513
        %v4519 = vadd.f32 %v4500, %v4512
        %s4520 = sld [smem:[#allocation2 + $0xd9]]
        %v4521 = vstv %s4520
        %v4522 = vmul.f32 %v4521, %v2551
        %v4523 = vmul.f32 %v4521, %v2552
        %v4524 = vmul.f32 %v4521, %v2553
        %v4528 = vrot.slane %v4522, 1
        %v4529 = vrot.slane %v4523, 1
        %v4530 = vsel %vm343, %v4528, %v4529
        %v4531 = vrot.slane %v4524, 1
        %v4532 = vsel %vm343, %v4529, %v4531
        %4533 = vrot.lane.b32.xlu0 %v4530, 127
        %v4534 = vpop.permute.xlu0 %4533
        %4535 = vrot.lane.b32.xlu0 %v4532, 127
        %v4536 = vpop.permute.xlu0 %4535
        %4537 = vrot.lane.b32.xlu0 %v4531, 127
        %v4538 = vpop.permute.xlu0 %4537
        %v4542 = vadd.f32 %v4517, %v4534
        %v4543 = vadd.f32 %v4518, %v4536
        %v4544 = vadd.f32 %v4519, %v4538
        %s4545 = sld [smem:[#allocation2 + $0xe9]]
        %v4546 = vstv %s4545
        %v4547 = vmul.f32 %v4546, %v2551
        %v4548 = vmul.f32 %v4546, %v2552
        %v4549 = vmul.f32 %v4546, %v2553
        %v4553 = vrot.slane %v4547, 1
        %v4554 = vrot.slane %v4548, 1
        %v4555 = vsel %vm343, %v4553, %v4554
        %v4556 = vrot.slane %v4549, 1
        %v4557 = vsel %vm343, %v4554, %v4556
        %4558 = vrot.lane.b32.xlu0 %v4555, 126
        %v4559 = vpop.permute.xlu0 %4558
        %4560 = vrot.lane.b32.xlu0 %v4557, 126
        %v4561 = vpop.permute.xlu0 %4560
        %4562 = vrot.lane.b32.xlu0 %v4556, 126
        %v4563 = vpop.permute.xlu0 %4562
        %v4567 = vadd.f32 %v4542, %v4559
        %v4568 = vadd.f32 %v4543, %v4561
        %v4569 = vadd.f32 %v4544, %v4563
        %s4570 = sld [smem:[#allocation2 + $0xf9]]
        %v4571 = vstv %s4570
        %v4572 = vmul.f32 %v4571, %v2551
        %v4573 = vmul.f32 %v4571, %v2552
        %v4574 = vmul.f32 %v4571, %v2553
        %v4578 = vrot.slane %v4572, 2
        %v4579 = vrot.slane %v4573, 2
        %v4580 = vsel %vm413, %v4578, %v4579
        %v4581 = vrot.slane %v4574, 2
        %v4582 = vsel %vm413, %v4579, %v4581
        %v4586 = vadd.f32 %v4567, %v4580
        %v4587 = vadd.f32 %v4568, %v4582
        %v4588 = vadd.f32 %v4569, %v4581
        %s4589 = sld [smem:[#allocation2 + $0x109]]
        %v4590 = vstv %s4589
        %v4591 = vmul.f32 %v4590, %v2551
        %v4592 = vmul.f32 %v4590, %v2552
        %v4593 = vmul.f32 %v4590, %v2553
        %v4597 = vrot.slane %v4591, 2
        %v4598 = vrot.slane %v4592, 2
        %v4599 = vsel %vm413, %v4597, %v4598
        %v4600 = vrot.slane %v4593, 2
        %v4601 = vsel %vm413, %v4598, %v4600
        %4602 = vrot.lane.b32.xlu0 %v4599, 127
        %v4603 = vpop.permute.xlu0 %4602
        %4604 = vrot.lane.b32.xlu0 %v4601, 127
        %v4605 = vpop.permute.xlu0 %4604
        %4606 = vrot.lane.b32.xlu0 %v4600, 127
        %v4607 = vpop.permute.xlu0 %4606
        %v4611 = vadd.f32 %v4586, %v4603
        %v4612 = vadd.f32 %v4587, %v4605
        %v4613 = vadd.f32 %v4588, %v4607
        %s4614 = sld [smem:[#allocation2 + $0x119]]
        %v4615 = vstv %s4614
        %v4616 = vmul.f32 %v4615, %v2551
        %v4617 = vmul.f32 %v4615, %v2552
        %v4618 = vmul.f32 %v4615, %v2553
        %v4622 = vrot.slane %v4616, 2
        %v4623 = vrot.slane %v4617, 2
        %v4624 = vsel %vm413, %v4622, %v4623
        %v4625 = vrot.slane %v4618, 2
        %v4626 = vsel %vm413, %v4623, %v4625
        %4627 = vrot.lane.b32.xlu0 %v4624, 126
        %v4628 = vpop.permute.xlu0 %4627
        %4629 = vrot.lane.b32.xlu0 %v4626, 126
        %v4630 = vpop.permute.xlu0 %4629
        %4631 = vrot.lane.b32.xlu0 %v4625, 126
        %v4632 = vpop.permute.xlu0 %4631
        %v4636 = vadd.f32 %v4611, %v4628
        %v4637 = vadd.f32 %v4612, %v4630
        %v4638 = vadd.f32 %v4613, %v4632
        %s4639 = sld [smem:[#allocation2 + $0x9d]]
        %v4640 = vstv %s4639
        %v4641 = vmul.f32 %v4640, %v3306
        %v4642 = vmul.f32 %v4640, %v3307
        %v4643 = vmul.f32 %v4640, %v3308
        %v4644 = vadd.f32 %v4636, %v4641
        %v4645 = vadd.f32 %v4637, %v4642
        %v4646 = vadd.f32 %v4638, %v4643
        %s4647 = sld [smem:[#allocation2 + $0xad]]
        %v4648 = vstv %s4647
        %v4649 = vmul.f32 %v4648, %v3306
        %v4650 = vmul.f32 %v4648, %v3307
        %v4651 = vmul.f32 %v4648, %v3308
        %4655 = vrot.lane.b32.xlu0 %v4649, 127
        %v4656 = vpop.permute.xlu0 %4655
        %4657 = vrot.lane.b32.xlu0 %v4650, 127
        %v4658 = vpop.permute.xlu0 %4657
        %4659 = vrot.lane.b32.xlu0 %v4651, 127
        %v4660 = vpop.permute.xlu0 %4659
        %v4664 = vadd.f32 %v4644, %v4656
        %v4665 = vadd.f32 %v4645, %v4658
        %v4666 = vadd.f32 %v4646, %v4660
        %s4667 = sld [smem:[#allocation2 + $0xbd]]
        %v4668 = vstv %s4667
        %v4669 = vmul.f32 %v4668, %v3306
        %v4670 = vmul.f32 %v4668, %v3307
        %v4671 = vmul.f32 %v4668, %v3308
        %4675 = vrot.lane.b32.xlu0 %v4669, 126
        %v4676 = vpop.permute.xlu0 %4675
        %4677 = vrot.lane.b32.xlu0 %v4670, 126
        %v4678 = vpop.permute.xlu0 %4677
        %4679 = vrot.lane.b32.xlu0 %v4671, 126
        %v4680 = vpop.permute.xlu0 %4679
        %v4684 = vadd.f32 %v4664, %v4676
        %v4685 = vadd.f32 %v4665, %v4678
        %v4686 = vadd.f32 %v4666, %v4680
        %s4687 = sld [smem:[#allocation2 + $0xcd]]
        %v4688 = vstv %s4687
        %v4689 = vmul.f32 %v4688, %v3306
        %v4690 = vmul.f32 %v4688, %v3307
        %v4691 = vmul.f32 %v4688, %v3308
        %v4695 = vrot.slane %v4689, 1
        %v4696 = vrot.slane %v4690, 1
        %v4697 = vsel %vm343, %v4695, %v4696
        %v4698 = vrot.slane %v4691, 1
        %v4699 = vsel %vm343, %v4696, %v4698
        %v4703 = vadd.f32 %v4684, %v4697
        %v4704 = vadd.f32 %v4685, %v4699
        %v4705 = vadd.f32 %v4686, %v4698
        %s4706 = sld [smem:[#allocation2 + $0xdd]]
        %v4707 = vstv %s4706
        %v4708 = vmul.f32 %v4707, %v3306
        %v4709 = vmul.f32 %v4707, %v3307
        %v4710 = vmul.f32 %v4707, %v3308
        %v4714 = vrot.slane %v4708, 1
        %v4715 = vrot.slane %v4709, 1
        %v4716 = vsel %vm343, %v4714, %v4715
        %v4717 = vrot.slane %v4710, 1
        %v4718 = vsel %vm343, %v4715, %v4717
        %4719 = vrot.lane.b32.xlu0 %v4716, 127
        %v4720 = vpop.permute.xlu0 %4719
        %4721 = vrot.lane.b32.xlu0 %v4718, 127
        %v4722 = vpop.permute.xlu0 %4721
        %4723 = vrot.lane.b32.xlu0 %v4717, 127
        %v4724 = vpop.permute.xlu0 %4723
        %v4728 = vadd.f32 %v4703, %v4720
        %v4729 = vadd.f32 %v4704, %v4722
        %v4730 = vadd.f32 %v4705, %v4724
        %s4731 = sld [smem:[#allocation2 + $0xed]]
        %v4732 = vstv %s4731
        %v4733 = vmul.f32 %v4732, %v3306
        %v4734 = vmul.f32 %v4732, %v3307
        %v4735 = vmul.f32 %v4732, %v3308
        %v4739 = vrot.slane %v4733, 1
        %v4740 = vrot.slane %v4734, 1
        %v4741 = vsel %vm343, %v4739, %v4740
        %v4742 = vrot.slane %v4735, 1
        %v4743 = vsel %vm343, %v4740, %v4742
        %4744 = vrot.lane.b32.xlu0 %v4741, 126
        %v4745 = vpop.permute.xlu0 %4744
        %4746 = vrot.lane.b32.xlu0 %v4743, 126
        %v4747 = vpop.permute.xlu0 %4746
        %4748 = vrot.lane.b32.xlu0 %v4742, 126
        %v4749 = vpop.permute.xlu0 %4748
        %v4753 = vadd.f32 %v4728, %v4745
        %v4754 = vadd.f32 %v4729, %v4747
        %v4755 = vadd.f32 %v4730, %v4749
        %s4756 = sld [smem:[#allocation2 + $0xfd]]
        %v4757 = vstv %s4756
        %v4758 = vmul.f32 %v4757, %v3306
        %v4759 = vmul.f32 %v4757, %v3307
        %v4760 = vmul.f32 %v4757, %v3308
        %v4764 = vrot.slane %v4758, 2
        %v4765 = vrot.slane %v4759, 2
        %v4766 = vsel %vm413, %v4764, %v4765
        %v4767 = vrot.slane %v4760, 2
        %v4768 = vsel %vm413, %v4765, %v4767
        %v4772 = vadd.f32 %v4753, %v4766
        %v4773 = vadd.f32 %v4754, %v4768
        %v4774 = vadd.f32 %v4755, %v4767
        %s4775 = sld [smem:[#allocation2 + $0x10d]]
        %v4776 = vstv %s4775
        %v4777 = vmul.f32 %v4776, %v3306
        %v4778 = vmul.f32 %v4776, %v3307
        %v4779 = vmul.f32 %v4776, %v3308
        %v4783 = vrot.slane %v4777, 2
        %v4784 = vrot.slane %v4778, 2
        %v4785 = vsel %vm413, %v4783, %v4784
        %v4786 = vrot.slane %v4779, 2
        %v4787 = vsel %vm413, %v4784, %v4786
        %4788 = vrot.lane.b32.xlu0 %v4785, 127
        %v4789 = vpop.permute.xlu0 %4788
        %4790 = vrot.lane.b32.xlu0 %v4787, 127
        %v4791 = vpop.permute.xlu0 %4790
        %4792 = vrot.lane.b32.xlu0 %v4786, 127
        %v4793 = vpop.permute.xlu0 %4792
        %v4797 = vadd.f32 %v4772, %v4789
        %v4798 = vadd.f32 %v4773, %v4791
        %v4799 = vadd.f32 %v4774, %v4793
        %s4800 = sld [smem:[#allocation2 + $0x11d]]
        %v4801 = vstv %s4800
        %v4802 = vmul.f32 %v4801, %v3306
        %v4803 = vmul.f32 %v4801, %v3307
        %v4804 = vmul.f32 %v4801, %v3308
        %v4808 = vrot.slane %v4802, 2
        %v4809 = vrot.slane %v4803, 2
        %v4810 = vsel %vm413, %v4808, %v4809
        %v4811 = vrot.slane %v4804, 2
        %v4812 = vsel %vm413, %v4809, %v4811
        %4813 = vrot.lane.b32.xlu0 %v4810, 126
        %v4814 = vpop.permute.xlu0 %4813
        %4815 = vrot.lane.b32.xlu0 %v4812, 126
        %v4816 = vpop.permute.xlu0 %4815
        %4817 = vrot.lane.b32.xlu0 %v4811, 126
        %v4818 = vpop.permute.xlu0 %4817
        %v4822 = vadd.f32 %v4797, %v4814
        %v4823 = vadd.f32 %v4798, %v4816
        %v4824 = vadd.f32 %v4799, %v4818
        %s4825 = sld [smem:[#allocation5 + $0x5]]
        %v4826 = vstv %s4825
        %v4827 = vadd.f32 %v4822, %v4826
        %v4828 = vadd.f32 %v4823, %v4826
        %v4829 = vadd.f32 %v4824, %v4826
        %v4830 = vmax.f32 %v4827, 0.0
        %v4831 = vmax.f32 %v4828, 0.0
        %v4832 = vmax.f32 %v4829, 0.0
        %v4833 = vsel %vm3323, %v4830, 0.0
        %v4834 = vsel %vm3324, %v4831, 0.0
        %v4835 = vsel %vm3325, %v4832, 0.0
        %s4836 = sld [smem:[#allocation2 + $0x92]]
        %v4837 = vstv %s4836
        %v4838 = vmul.f32 %v4837, %v1041
        %v4839 = vmul.f32 %v4837, %v1042
        %v4840 = vmul.f32 %v4837, %v1043
        %v4841 = vadd.f32 %v4838, 0.0
        %v4842 = vadd.f32 %v4839, 0.0
        %v4843 = vadd.f32 %v4840, 0.0
        %s4844 = sld [smem:[#allocation2 + $0xa2]]
        %v4845 = vstv %s4844
        %v4846 = vmul.f32 %v4845, %v1041
        %v4847 = vmul.f32 %v4845, %v1042
        %v4848 = vmul.f32 %v4845, %v1043
        %4852 = vrot.lane.b32.xlu0 %v4846, 127
        %v4853 = vpop.permute.xlu0 %4852
        %4854 = vrot.lane.b32.xlu0 %v4847, 127
        %v4855 = vpop.permute.xlu0 %4854
        %4856 = vrot.lane.b32.xlu0 %v4848, 127
        %v4857 = vpop.permute.xlu0 %4856
        %v4861 = vadd.f32 %v4841, %v4853
        %v4862 = vadd.f32 %v4842, %v4855
        %v4863 = vadd.f32 %v4843, %v4857
        %s4864 = sld [smem:[#allocation2 + $0xb2]]
        %v4865 = vstv %s4864
        %v4866 = vmul.f32 %v4865, %v1041
        %v4867 = vmul.f32 %v4865, %v1042
        %v4868 = vmul.f32 %v4865, %v1043
        %4872 = vrot.lane.b32.xlu0 %v4866, 126
        %v4873 = vpop.permute.xlu0 %4872
        %4874 = vrot.lane.b32.xlu0 %v4867, 126
        %v4875 = vpop.permute.xlu0 %4874
        %4876 = vrot.lane.b32.xlu0 %v4868, 126
        %v4877 = vpop.permute.xlu0 %4876
        %v4881 = vadd.f32 %v4861, %v4873
        %v4882 = vadd.f32 %v4862, %v4875
        %v4883 = vadd.f32 %v4863, %v4877
        %s4884 = sld [smem:[#allocation2 + $0xc2]]
        %v4885 = vstv %s4884
        %v4886 = vmul.f32 %v4885, %v1041
        %v4887 = vmul.f32 %v4885, %v1042
        %v4888 = vmul.f32 %v4885, %v1043
        %v4892 = vrot.slane %v4886, 1
        %v4893 = vrot.slane %v4887, 1
        %v4894 = vsel %vm343, %v4892, %v4893
        %v4895 = vrot.slane %v4888, 1
        %v4896 = vsel %vm343, %v4893, %v4895
        %v4900 = vadd.f32 %v4881, %v4894
        %v4901 = vadd.f32 %v4882, %v4896
        %v4902 = vadd.f32 %v4883, %v4895
        %s4903 = sld [smem:[#allocation2 + $0xd2]]
        %v4904 = vstv %s4903
        %v4905 = vmul.f32 %v4904, %v1041
        %v4906 = vmul.f32 %v4904, %v1042
        %v4907 = vmul.f32 %v4904, %v1043
        %v4911 = vrot.slane %v4905, 1
        %v4912 = vrot.slane %v4906, 1
        %v4913 = vsel %vm343, %v4911, %v4912
        %v4914 = vrot.slane %v4907, 1
        %v4915 = vsel %vm343, %v4912, %v4914
        %4916 = vrot.lane.b32.xlu0 %v4913, 127
        %v4917 = vpop.permute.xlu0 %4916
        %4918 = vrot.lane.b32.xlu0 %v4915, 127
        %v4919 = vpop.permute.xlu0 %4918
        %4920 = vrot.lane.b32.xlu0 %v4914, 127
        %v4921 = vpop.permute.xlu0 %4920
        %v4925 = vadd.f32 %v4900, %v4917
        %v4926 = vadd.f32 %v4901, %v4919
        %v4927 = vadd.f32 %v4902, %v4921
        %s4928 = sld [smem:[#allocation2 + $0xe2]]
        %v4929 = vstv %s4928
        %v4930 = vmul.f32 %v4929, %v1041
        %v4931 = vmul.f32 %v4929, %v1042
        %v4932 = vmul.f32 %v4929, %v1043
        %v4936 = vrot.slane %v4930, 1
        %v4937 = vrot.slane %v4931, 1
        %v4938 = vsel %vm343, %v4936, %v4937
        %v4939 = vrot.slane %v4932, 1
        %v4940 = vsel %vm343, %v4937, %v4939
        %4941 = vrot.lane.b32.xlu0 %v4938, 126
        %v4942 = vpop.permute.xlu0 %4941
        %4943 = vrot.lane.b32.xlu0 %v4940, 126
        %v4944 = vpop.permute.xlu0 %4943
        %4945 = vrot.lane.b32.xlu0 %v4939, 126
        %v4946 = vpop.permute.xlu0 %4945
        %v4950 = vadd.f32 %v4925, %v4942
        %v4951 = vadd.f32 %v4926, %v4944
        %v4952 = vadd.f32 %v4927, %v4946
        %s4953 = sld [smem:[#allocation2 + $0xf2]]
        %v4954 = vstv %s4953
        %v4955 = vmul.f32 %v4954, %v1041
        %v4956 = vmul.f32 %v4954, %v1042
        %v4957 = vmul.f32 %v4954, %v1043
        %v4961 = vrot.slane %v4955, 2
        %v4962 = vrot.slane %v4956, 2
        %v4963 = vsel %vm413, %v4961, %v4962
        %v4964 = vrot.slane %v4957, 2
        %v4965 = vsel %vm413, %v4962, %v4964
        %v4969 = vadd.f32 %v4950, %v4963
        %v4970 = vadd.f32 %v4951, %v4965
        %v4971 = vadd.f32 %v4952, %v4964
        %s4972 = sld [smem:[#allocation2 + $0x102]]
        %v4973 = vstv %s4972
        %v4974 = vmul.f32 %v4973, %v1041
        %v4975 = vmul.f32 %v4973, %v1042
        %v4976 = vmul.f32 %v4973, %v1043
        %v4980 = vrot.slane %v4974, 2
        %v4981 = vrot.slane %v4975, 2
        %v4982 = vsel %vm413, %v4980, %v4981
        %v4983 = vrot.slane %v4976, 2
        %v4984 = vsel %vm413, %v4981, %v4983
        %4985 = vrot.lane.b32.xlu0 %v4982, 127
        %v4986 = vpop.permute.xlu0 %4985
        %4987 = vrot.lane.b32.xlu0 %v4984, 127
        %v4988 = vpop.permute.xlu0 %4987
        %4989 = vrot.lane.b32.xlu0 %v4983, 127
        %v4990 = vpop.permute.xlu0 %4989
        %v4994 = vadd.f32 %v4969, %v4986
        %v4995 = vadd.f32 %v4970, %v4988
        %v4996 = vadd.f32 %v4971, %v4990
        %s4997 = sld [smem:[#allocation2 + $0x112]]
        %v4998 = vstv %s4997
        %v4999 = vmul.f32 %v4998, %v1041
        %v5000 = vmul.f32 %v4998, %v1042
        %v5001 = vmul.f32 %v4998, %v1043
        %v5005 = vrot.slane %v4999, 2
        %v5006 = vrot.slane %v5000, 2
        %v5007 = vsel %vm413, %v5005, %v5006
        %v5008 = vrot.slane %v5001, 2
        %v5009 = vsel %vm413, %v5006, %v5008
        %5010 = vrot.lane.b32.xlu0 %v5007, 126
        %v5011 = vpop.permute.xlu0 %5010
        %5012 = vrot.lane.b32.xlu0 %v5009, 126
        %v5013 = vpop.permute.xlu0 %5012
        %5014 = vrot.lane.b32.xlu0 %v5008, 126
        %v5015 = vpop.permute.xlu0 %5014
        %v5019 = vadd.f32 %v4994, %v5011
        %v5020 = vadd.f32 %v4995, %v5013
        %v5021 = vadd.f32 %v4996, %v5015
        %s5022 = sld [smem:[#allocation2 + $0x96]]
        %v5023 = vstv %s5022
        %v5024 = vmul.f32 %v5023, %v1796
        %v5025 = vmul.f32 %v5023, %v1797
        %v5026 = vmul.f32 %v5023, %v1798
        %v5027 = vadd.f32 %v5019, %v5024
        %v5028 = vadd.f32 %v5020, %v5025
        %v5029 = vadd.f32 %v5021, %v5026
        %s5030 = sld [smem:[#allocation2 + $0xa6]]
        %v5031 = vstv %s5030
        %v5032 = vmul.f32 %v5031, %v1796
        %v5033 = vmul.f32 %v5031, %v1797
        %v5034 = vmul.f32 %v5031, %v1798
        %5038 = vrot.lane.b32.xlu0 %v5032, 127
        %v5039 = vpop.permute.xlu0 %5038
        %5040 = vrot.lane.b32.xlu0 %v5033, 127
        %v5041 = vpop.permute.xlu0 %5040
        %5042 = vrot.lane.b32.xlu0 %v5034, 127
        %v5043 = vpop.permute.xlu0 %5042
        %v5047 = vadd.f32 %v5027, %v5039
        %v5048 = vadd.f32 %v5028, %v5041
        %v5049 = vadd.f32 %v5029, %v5043
        %s5050 = sld [smem:[#allocation2 + $0xb6]]
        %v5051 = vstv %s5050
        %v5052 = vmul.f32 %v5051, %v1796
        %v5053 = vmul.f32 %v5051, %v1797
        %v5054 = vmul.f32 %v5051, %v1798
        %5058 = vrot.lane.b32.xlu0 %v5052, 126
        %v5059 = vpop.permute.xlu0 %5058
        %5060 = vrot.lane.b32.xlu0 %v5053, 126
        %v5061 = vpop.permute.xlu0 %5060
        %5062 = vrot.lane.b32.xlu0 %v5054, 126
        %v5063 = vpop.permute.xlu0 %5062
        %v5067 = vadd.f32 %v5047, %v5059
        %v5068 = vadd.f32 %v5048, %v5061
        %v5069 = vadd.f32 %v5049, %v5063
        %s5070 = sld [smem:[#allocation2 + $0xc6]]
        %v5071 = vstv %s5070
        %v5072 = vmul.f32 %v5071, %v1796
        %v5073 = vmul.f32 %v5071, %v1797
        %v5074 = vmul.f32 %v5071, %v1798
        %v5078 = vrot.slane %v5072, 1
        %v5079 = vrot.slane %v5073, 1
        %v5080 = vsel %vm343, %v5078, %v5079
        %v5081 = vrot.slane %v5074, 1
        %v5082 = vsel %vm343, %v5079, %v5081
        %v5086 = vadd.f32 %v5067, %v5080
        %v5087 = vadd.f32 %v5068, %v5082
        %v5088 = vadd.f32 %v5069, %v5081
        %s5089 = sld [smem:[#allocation2 + $0xd6]]
        %v5090 = vstv %s5089
        %v5091 = vmul.f32 %v5090, %v1796
        %v5092 = vmul.f32 %v5090, %v1797
        %v5093 = vmul.f32 %v5090, %v1798
        %v5097 = vrot.slane %v5091, 1
        %v5098 = vrot.slane %v5092, 1
        %v5099 = vsel %vm343, %v5097, %v5098
        %v5100 = vrot.slane %v5093, 1
        %v5101 = vsel %vm343, %v5098, %v5100
        %5102 = vrot.lane.b32.xlu0 %v5099, 127
        %v5103 = vpop.permute.xlu0 %5102
        %5104 = vrot.lane.b32.xlu0 %v5101, 127
        %v5105 = vpop.permute.xlu0 %5104
        %5106 = vrot.lane.b32.xlu0 %v5100, 127
        %v5107 = vpop.permute.xlu0 %5106
        %v5111 = vadd.f32 %v5086, %v5103
        %v5112 = vadd.f32 %v5087, %v5105
        %v5113 = vadd.f32 %v5088, %v5107
        %s5114 = sld [smem:[#allocation2 + $0xe6]]
        %v5115 = vstv %s5114
        %v5116 = vmul.f32 %v5115, %v1796
        %v5117 = vmul.f32 %v5115, %v1797
        %v5118 = vmul.f32 %v5115, %v1798
        %v5122 = vrot.slane %v5116, 1
        %v5123 = vrot.slane %v5117, 1
        %v5124 = vsel %vm343, %v5122, %v5123
        %v5125 = vrot.slane %v5118, 1
        %v5126 = vsel %vm343, %v5123, %v5125
        %5127 = vrot.lane.b32.xlu0 %v5124, 126
        %v5128 = vpop.permute.xlu0 %5127
        %5129 = vrot.lane.b32.xlu0 %v5126, 126
        %v5130 = vpop.permute.xlu0 %5129
        %5131 = vrot.lane.b32.xlu0 %v5125, 126
        %v5132 = vpop.permute.xlu0 %5131
        %v5136 = vadd.f32 %v5111, %v5128
        %v5137 = vadd.f32 %v5112, %v5130
        %v5138 = vadd.f32 %v5113, %v5132
        %s5139 = sld [smem:[#allocation2 + $0xf6]]
        %v5140 = vstv %s5139
        %v5141 = vmul.f32 %v5140, %v1796
        %v5142 = vmul.f32 %v5140, %v1797
        %v5143 = vmul.f32 %v5140, %v1798
        %v5147 = vrot.slane %v5141, 2
        %v5148 = vrot.slane %v5142, 2
        %v5149 = vsel %vm413, %v5147, %v5148
        %v5150 = vrot.slane %v5143, 2
        %v5151 = vsel %vm413, %v5148, %v5150
        %v5155 = vadd.f32 %v5136, %v5149
        %v5156 = vadd.f32 %v5137, %v5151
        %v5157 = vadd.f32 %v5138, %v5150
        %s5158 = sld [smem:[#allocation2 + $0x106]]
        %v5159 = vstv %s5158
        %v5160 = vmul.f32 %v5159, %v1796
        %v5161 = vmul.f32 %v5159, %v1797
        %v5162 = vmul.f32 %v5159, %v1798
        %v5166 = vrot.slane %v5160, 2
        %v5167 = vrot.slane %v5161, 2
        %v5168 = vsel %vm413, %v5166, %v5167
        %v5169 = vrot.slane %v5162, 2
        %v5170 = vsel %vm413, %v5167, %v5169
        %5171 = vrot.lane.b32.xlu0 %v5168, 127
        %v5172 = vpop.permute.xlu0 %5171
        %5173 = vrot.lane.b32.xlu0 %v5170, 127
        %v5174 = vpop.permute.xlu0 %5173
        %5175 = vrot.lane.b32.xlu0 %v5169, 127
        %v5176 = vpop.permute.xlu0 %5175
        %v5180 = vadd.f32 %v5155, %v5172
        %v5181 = vadd.f32 %v5156, %v5174
        %v5182 = vadd.f32 %v5157, %v5176
        %s5183 = sld [smem:[#allocation2 + $0x116]]
        %v5184 = vstv %s5183
        %v5185 = vmul.f32 %v5184, %v1796
        %v5186 = vmul.f32 %v5184, %v1797
        %v5187 = vmul.f32 %v5184, %v1798
        %v5191 = vrot.slane %v5185, 2
        %v5192 = vrot.slane %v5186, 2
        %v5193 = vsel %vm413, %v5191, %v5192
        %v5194 = vrot.slane %v5187, 2
        %v5195 = vsel %vm413, %v5192, %v5194
        %5196 = vrot.lane.b32.xlu0 %v5193, 126
        %v5197 = vpop.permute.xlu0 %5196
        %5198 = vrot.lane.b32.xlu0 %v5195, 126
        %v5199 = vpop.permute.xlu0 %5198
        %5200 = vrot.lane.b32.xlu0 %v5194, 126
        %v5201 = vpop.permute.xlu0 %5200
        %v5205 = vadd.f32 %v5180, %v5197
        %v5206 = vadd.f32 %v5181, %v5199
        %v5207 = vadd.f32 %v5182, %v5201
        %s5208 = sld [smem:[#allocation2 + $0x9a]]
        %v5209 = vstv %s5208
        %v5210 = vmul.f32 %v5209, %v2551
        %v5211 = vmul.f32 %v5209, %v2552
        %v5212 = vmul.f32 %v5209, %v2553
        %v5213 = vadd.f32 %v5205, %v5210
        %v5214 = vadd.f32 %v5206, %v5211
        %v5215 = vadd.f32 %v5207, %v5212
        %s5216 = sld [smem:[#allocation2 + $0xaa]]
        %v5217 = vstv %s5216
        %v5218 = vmul.f32 %v5217, %v2551
        %v5219 = vmul.f32 %v5217, %v2552
        %v5220 = vmul.f32 %v5217, %v2553
        %5224 = vrot.lane.b32.xlu0 %v5218, 127
        %v5225 = vpop.permute.xlu0 %5224
        %5226 = vrot.lane.b32.xlu0 %v5219, 127
        %v5227 = vpop.permute.xlu0 %5226
        %5228 = vrot.lane.b32.xlu0 %v5220, 127
        %v5229 = vpop.permute.xlu0 %5228
        %v5233 = vadd.f32 %v5213, %v5225
        %v5234 = vadd.f32 %v5214, %v5227
        %v5235 = vadd.f32 %v5215, %v5229
        %s5236 = sld [smem:[#allocation2 + $0xba]]
        %v5237 = vstv %s5236
        %v5238 = vmul.f32 %v5237, %v2551
        %v5239 = vmul.f32 %v5237, %v2552
        %v5240 = vmul.f32 %v5237, %v2553
        %5244 = vrot.lane.b32.xlu0 %v5238, 126
        %v5245 = vpop.permute.xlu0 %5244
        %5246 = vrot.lane.b32.xlu0 %v5239, 126
        %v5247 = vpop.permute.xlu0 %5246
        %5248 = vrot.lane.b32.xlu0 %v5240, 126
        %v5249 = vpop.permute.xlu0 %5248
        %v5253 = vadd.f32 %v5233, %v5245
        %v5254 = vadd.f32 %v5234, %v5247
        %v5255 = vadd.f32 %v5235, %v5249
        %s5256 = sld [smem:[#allocation2 + $0xca]]
        %v5257 = vstv %s5256
        %v5258 = vmul.f32 %v5257, %v2551
        %v5259 = vmul.f32 %v5257, %v2552
        %v5260 = vmul.f32 %v5257, %v2553
        %v5264 = vrot.slane %v5258, 1
        %v5265 = vrot.slane %v5259, 1
        %v5266 = vsel %vm343, %v5264, %v5265
        %v5267 = vrot.slane %v5260, 1
        %v5268 = vsel %vm343, %v5265, %v5267
        %v5272 = vadd.f32 %v5253, %v5266
        %v5273 = vadd.f32 %v5254, %v5268
        %v5274 = vadd.f32 %v5255, %v5267
        %s5275 = sld [smem:[#allocation2 + $0xda]]
        %v5276 = vstv %s5275
        %v5277 = vmul.f32 %v5276, %v2551
        %v5278 = vmul.f32 %v5276, %v2552
        %v5279 = vmul.f32 %v5276, %v2553
        %v5283 = vrot.slane %v5277, 1
        %v5284 = vrot.slane %v5278, 1
        %v5285 = vsel %vm343, %v5283, %v5284
        %v5286 = vrot.slane %v5279, 1
        %v5287 = vsel %vm343, %v5284, %v5286
        %5288 = vrot.lane.b32.xlu0 %v5285, 127
        %v5289 = vpop.permute.xlu0 %5288
        %5290 = vrot.lane.b32.xlu0 %v5287, 127
        %v5291 = vpop.permute.xlu0 %5290
        %5292 = vrot.lane.b32.xlu0 %v5286, 127
        %v5293 = vpop.permute.xlu0 %5292
        %v5297 = vadd.f32 %v5272, %v5289
        %v5298 = vadd.f32 %v5273, %v5291
        %v5299 = vadd.f32 %v5274, %v5293
        %s5300 = sld [smem:[#allocation2 + $0xea]]
        %v5301 = vstv %s5300
        %v5302 = vmul.f32 %v5301, %v2551
        %v5303 = vmul.f32 %v5301, %v2552
        %v5304 = vmul.f32 %v5301, %v2553
        %v5308 = vrot.slane %v5302, 1
        %v5309 = vrot.slane %v5303, 1
        %v5310 = vsel %vm343, %v5308, %v5309
        %v5311 = vrot.slane %v5304, 1
        %v5312 = vsel %vm343, %v5309, %v5311
        %5313 = vrot.lane.b32.xlu0 %v5310, 126
        %v5314 = vpop.permute.xlu0 %5313
        %5315 = vrot.lane.b32.xlu0 %v5312, 126
        %v5316 = vpop.permute.xlu0 %5315
        %5317 = vrot.lane.b32.xlu0 %v5311, 126
        %v5318 = vpop.permute.xlu0 %5317
        %v5322 = vadd.f32 %v5297, %v5314
        %v5323 = vadd.f32 %v5298, %v5316
        %v5324 = vadd.f32 %v5299, %v5318
        %s5325 = sld [smem:[#allocation2 + $0xfa]]
        %v5326 = vstv %s5325
        %v5327 = vmul.f32 %v5326, %v2551
        %v5328 = vmul.f32 %v5326, %v2552
        %v5329 = vmul.f32 %v5326, %v2553
        %v5333 = vrot.slane %v5327, 2
        %v5334 = vrot.slane %v5328, 2
        %v5335 = vsel %vm413, %v5333, %v5334
        %v5336 = vrot.slane %v5329, 2
        %v5337 = vsel %vm413, %v5334, %v5336
        %v5341 = vadd.f32 %v5322, %v5335
        %v5342 = vadd.f32 %v5323, %v5337
        %v5343 = vadd.f32 %v5324, %v5336
        %s5344 = sld [smem:[#allocation2 + $0x10a]]
        %v5345 = vstv %s5344
        %v5346 = vmul.f32 %v5345, %v2551
        %v5347 = vmul.f32 %v5345, %v2552
        %v5348 = vmul.f32 %v5345, %v2553
        %v5352 = vrot.slane %v5346, 2
        %v5353 = vrot.slane %v5347, 2
        %v5354 = vsel %vm413, %v5352, %v5353
        %v5355 = vrot.slane %v5348, 2
        %v5356 = vsel %vm413, %v5353, %v5355
        %5357 = vrot.lane.b32.xlu0 %v5354, 127
        %v5358 = vpop.permute.xlu0 %5357
        %5359 = vrot.lane.b32.xlu0 %v5356, 127
        %v5360 = vpop.permute.xlu0 %5359
        %5361 = vrot.lane.b32.xlu0 %v5355, 127
        %v5362 = vpop.permute.xlu0 %5361
        %v5366 = vadd.f32 %v5341, %v5358
        %v5367 = vadd.f32 %v5342, %v5360
        %v5368 = vadd.f32 %v5343, %v5362
        %s5369 = sld [smem:[#allocation2 + $0x11a]]
        %v5370 = vstv %s5369
        %v5371 = vmul.f32 %v5370, %v2551
        %v5372 = vmul.f32 %v5370, %v2552
        %v5373 = vmul.f32 %v5370, %v2553
        %v5377 = vrot.slane %v5371, 2
        %v5378 = vrot.slane %v5372, 2
        %v5379 = vsel %vm413, %v5377, %v5378
        %v5380 = vrot.slane %v5373, 2
        %v5381 = vsel %vm413, %v5378, %v5380
        %5382 = vrot.lane.b32.xlu0 %v5379, 126
        %v5383 = vpop.permute.xlu0 %5382
        %5384 = vrot.lane.b32.xlu0 %v5381, 126
        %v5385 = vpop.permute.xlu0 %5384
        %5386 = vrot.lane.b32.xlu0 %v5380, 126
        %v5387 = vpop.permute.xlu0 %5386
        %v5391 = vadd.f32 %v5366, %v5383
        %v5392 = vadd.f32 %v5367, %v5385
        %v5393 = vadd.f32 %v5368, %v5387
        %s5394 = sld [smem:[#allocation2 + $0x9e]]
        %v5395 = vstv %s5394
        %v5396 = vmul.f32 %v5395, %v3306
        %v5397 = vmul.f32 %v5395, %v3307
        %v5398 = vmul.f32 %v5395, %v3308
        %v5399 = vadd.f32 %v5391, %v5396
        %v5400 = vadd.f32 %v5392, %v5397
        %v5401 = vadd.f32 %v5393, %v5398
        %s5402 = sld [smem:[#allocation2 + $0xae]]
        %v5403 = vstv %s5402
        %v5404 = vmul.f32 %v5403, %v3306
        %v5405 = vmul.f32 %v5403, %v3307
        %v5406 = vmul.f32 %v5403, %v3308
        %5410 = vrot.lane.b32.xlu0 %v5404, 127
        %v5411 = vpop.permute.xlu0 %5410
        %5412 = vrot.lane.b32.xlu0 %v5405, 127
        %v5413 = vpop.permute.xlu0 %5412
        %5414 = vrot.lane.b32.xlu0 %v5406, 127
        %v5415 = vpop.permute.xlu0 %5414
        %v5419 = vadd.f32 %v5399, %v5411
        %v5420 = vadd.f32 %v5400, %v5413
        %v5421 = vadd.f32 %v5401, %v5415
        %s5422 = sld [smem:[#allocation2 + $0xbe]]
        %v5423 = vstv %s5422
        %v5424 = vmul.f32 %v5423, %v3306
        %v5425 = vmul.f32 %v5423, %v3307
        %v5426 = vmul.f32 %v5423, %v3308
        %5430 = vrot.lane.b32.xlu0 %v5424, 126
        %v5431 = vpop.permute.xlu0 %5430
        %5432 = vrot.lane.b32.xlu0 %v5425, 126
        %v5433 = vpop.permute.xlu0 %5432
        %5434 = vrot.lane.b32.xlu0 %v5426, 126
        %v5435 = vpop.permute.xlu0 %5434
        %v5439 = vadd.f32 %v5419, %v5431
        %v5440 = vadd.f32 %v5420, %v5433
        %v5441 = vadd.f32 %v5421, %v5435
        %s5442 = sld [smem:[#allocation2 + $0xce]]
        %v5443 = vstv %s5442
        %v5444 = vmul.f32 %v5443, %v3306
        %v5445 = vmul.f32 %v5443, %v3307
        %v5446 = vmul.f32 %v5443, %v3308
        %v5450 = vrot.slane %v5444, 1
        %v5451 = vrot.slane %v5445, 1
        %v5452 = vsel %vm343, %v5450, %v5451
        %v5453 = vrot.slane %v5446, 1
        %v5454 = vsel %vm343, %v5451, %v5453
        %v5458 = vadd.f32 %v5439, %v5452
        %v5459 = vadd.f32 %v5440, %v5454
        %v5460 = vadd.f32 %v5441, %v5453
        %s5461 = sld [smem:[#allocation2 + $0xde]]
        %v5462 = vstv %s5461
        %v5463 = vmul.f32 %v5462, %v3306
        %v5464 = vmul.f32 %v5462, %v3307
        %v5465 = vmul.f32 %v5462, %v3308
        %v5469 = vrot.slane %v5463, 1
        %v5470 = vrot.slane %v5464, 1
        %v5471 = vsel %vm343, %v5469, %v5470
        %v5472 = vrot.slane %v5465, 1
        %v5473 = vsel %vm343, %v5470, %v5472
        %5474 = vrot.lane.b32.xlu0 %v5471, 127
        %v5475 = vpop.permute.xlu0 %5474
        %5476 = vrot.lane.b32.xlu0 %v5473, 127
        %v5477 = vpop.permute.xlu0 %5476
        %5478 = vrot.lane.b32.xlu0 %v5472, 127
        %v5479 = vpop.permute.xlu0 %5478
        %v5483 = vadd.f32 %v5458, %v5475
        %v5484 = vadd.f32 %v5459, %v5477
        %v5485 = vadd.f32 %v5460, %v5479
        %s5486 = sld [smem:[#allocation2 + $0xee]]
        %v5487 = vstv %s5486
        %v5488 = vmul.f32 %v5487, %v3306
        %v5489 = vmul.f32 %v5487, %v3307
        %v5490 = vmul.f32 %v5487, %v3308
        %v5494 = vrot.slane %v5488, 1
        %v5495 = vrot.slane %v5489, 1
        %v5496 = vsel %vm343, %v5494, %v5495
        %v5497 = vrot.slane %v5490, 1
        %v5498 = vsel %vm343, %v5495, %v5497
        %5499 = vrot.lane.b32.xlu0 %v5496, 126
        %v5500 = vpop.permute.xlu0 %5499
        %5501 = vrot.lane.b32.xlu0 %v5498, 126
        %v5502 = vpop.permute.xlu0 %5501
        %5503 = vrot.lane.b32.xlu0 %v5497, 126
        %v5504 = vpop.permute.xlu0 %5503
        %v5508 = vadd.f32 %v5483, %v5500
        %v5509 = vadd.f32 %v5484, %v5502
        %v5510 = vadd.f32 %v5485, %v5504
        %s5511 = sld [smem:[#allocation2 + $0xfe]]
        %v5512 = vstv %s5511
        %v5513 = vmul.f32 %v5512, %v3306
        %v5514 = vmul.f32 %v5512, %v3307
        %v5515 = vmul.f32 %v5512, %v3308
        %v5519 = vrot.slane %v5513, 2
        %v5520 = vrot.slane %v5514, 2
        %v5521 = vsel %vm413, %v5519, %v5520
        %v5522 = vrot.slane %v5515, 2
        %v5523 = vsel %vm413, %v5520, %v5522
        %v5527 = vadd.f32 %v5508, %v5521
        %v5528 = vadd.f32 %v5509, %v5523
        %v5529 = vadd.f32 %v5510, %v5522
        %s5530 = sld [smem:[#allocation2 + $0x10e]]
        %v5531 = vstv %s5530
        %v5532 = vmul.f32 %v5531, %v3306
        %v5533 = vmul.f32 %v5531, %v3307
        %v5534 = vmul.f32 %v5531, %v3308
        %v5538 = vrot.slane %v5532, 2
        %v5539 = vrot.slane %v5533, 2
        %v5540 = vsel %vm413, %v5538, %v5539
        %v5541 = vrot.slane %v5534, 2
        %v5542 = vsel %vm413, %v5539, %v5541
        %5543 = vrot.lane.b32.xlu0 %v5540, 127
        %v5544 = vpop.permute.xlu0 %5543
        %5545 = vrot.lane.b32.xlu0 %v5542, 127
        %v5546 = vpop.permute.xlu0 %5545
        %5547 = vrot.lane.b32.xlu0 %v5541, 127
        %v5548 = vpop.permute.xlu0 %5547
        %v5552 = vadd.f32 %v5527, %v5544
        %v5553 = vadd.f32 %v5528, %v5546
        %v5554 = vadd.f32 %v5529, %v5548
        %s5555 = sld [smem:[#allocation2 + $0x11e]]
        %v5556 = vstv %s5555
        %v5557 = vmul.f32 %v5556, %v3306
        %v5558 = vmul.f32 %v5556, %v3307
        %v5559 = vmul.f32 %v5556, %v3308
        %v5563 = vrot.slane %v5557, 2
        %v5564 = vrot.slane %v5558, 2
        %v5565 = vsel %vm413, %v5563, %v5564
        %v5566 = vrot.slane %v5559, 2
        %v5567 = vsel %vm413, %v5564, %v5566
        %5568 = vrot.lane.b32.xlu0 %v5565, 126
        %v5569 = vpop.permute.xlu0 %5568
        %5570 = vrot.lane.b32.xlu0 %v5567, 126
        %v5571 = vpop.permute.xlu0 %5570
        %5572 = vrot.lane.b32.xlu0 %v5566, 126
        %v5573 = vpop.permute.xlu0 %5572
        %v5577 = vadd.f32 %v5552, %v5569
        %v5578 = vadd.f32 %v5553, %v5571
        %v5579 = vadd.f32 %v5554, %v5573
        %s5580 = sld [smem:[#allocation5 + $0x6]]
        %v5581 = vstv %s5580
        %v5582 = vadd.f32 %v5577, %v5581
        %v5583 = vadd.f32 %v5578, %v5581
        %v5584 = vadd.f32 %v5579, %v5581
        %v5585 = vmax.f32 %v5582, 0.0
        %v5586 = vmax.f32 %v5583, 0.0
        %v5587 = vmax.f32 %v5584, 0.0
        %v5588 = vsel %vm3323, %v5585, 0.0
        %v5589 = vsel %vm3324, %v5586, 0.0
        %v5590 = vsel %vm3325, %v5587, 0.0
        %s5591 = sld [smem:[#allocation2 + $0x93]]
        %v5592 = vstv %s5591
        %v5593 = vmul.f32 %v5592, %v1041
        %v5594 = vmul.f32 %v5592, %v1042
        %v5595 = vmul.f32 %v5592, %v1043
        %v5596 = vadd.f32 %v5593, 0.0
        %v5597 = vadd.f32 %v5594, 0.0
        %v5598 = vadd.f32 %v5595, 0.0
        %s5599 = sld [smem:[#allocation2 + $0xa3]]
        %v5600 = vstv %s5599
        %v5601 = vmul.f32 %v5600, %v1041
        %v5602 = vmul.f32 %v5600, %v1042
        %v5603 = vmul.f32 %v5600, %v1043
        %5607 = vrot.lane.b32.xlu0 %v5601, 127
        %v5608 = vpop.permute.xlu0 %5607
        %5609 = vrot.lane.b32.xlu0 %v5602, 127
        %v5610 = vpop.permute.xlu0 %5609
        %5611 = vrot.lane.b32.xlu0 %v5603, 127
        %v5612 = vpop.permute.xlu0 %5611
        %v5616 = vadd.f32 %v5596, %v5608
        %v5617 = vadd.f32 %v5597, %v5610
        %v5618 = vadd.f32 %v5598, %v5612
        %s5619 = sld [smem:[#allocation2 + $0xb3]]
        %v5620 = vstv %s5619
        %v5621 = vmul.f32 %v5620, %v1041
        %v5622 = vmul.f32 %v5620, %v1042
        %v5623 = vmul.f32 %v5620, %v1043
        %5627 = vrot.lane.b32.xlu0 %v5621, 126
        %v5628 = vpop.permute.xlu0 %5627
        %5629 = vrot.lane.b32.xlu0 %v5622, 126
        %v5630 = vpop.permute.xlu0 %5629
        %5631 = vrot.lane.b32.xlu0 %v5623, 126
        %v5632 = vpop.permute.xlu0 %5631
        %v5636 = vadd.f32 %v5616, %v5628
        %v5637 = vadd.f32 %v5617, %v5630
        %v5638 = vadd.f32 %v5618, %v5632
        %s5639 = sld [smem:[#allocation2 + $0xc3]]
        %v5640 = vstv %s5639
        %v5641 = vmul.f32 %v5640, %v1041
        %v5642 = vmul.f32 %v5640, %v1042
        %v5643 = vmul.f32 %v5640, %v1043
        %v5647 = vrot.slane %v5641, 1
        %v5648 = vrot.slane %v5642, 1
        %v5649 = vsel %vm343, %v5647, %v5648
        %v5650 = vrot.slane %v5643, 1
        %v5651 = vsel %vm343, %v5648, %v5650
        %v5655 = vadd.f32 %v5636, %v5649
        %v5656 = vadd.f32 %v5637, %v5651
        %v5657 = vadd.f32 %v5638, %v5650
        %s5658 = sld [smem:[#allocation2 + $0xd3]]
        %v5659 = vstv %s5658
        %v5660 = vmul.f32 %v5659, %v1041
        %v5661 = vmul.f32 %v5659, %v1042
        %v5662 = vmul.f32 %v5659, %v1043
        %v5666 = vrot.slane %v5660, 1
        %v5667 = vrot.slane %v5661, 1
        %v5668 = vsel %vm343, %v5666, %v5667
        %v5669 = vrot.slane %v5662, 1
        %v5670 = vsel %vm343, %v5667, %v5669
        %5671 = vrot.lane.b32.xlu0 %v5668, 127
        %v5672 = vpop.permute.xlu0 %5671
        %5673 = vrot.lane.b32.xlu0 %v5670, 127
        %v5674 = vpop.permute.xlu0 %5673
        %5675 = vrot.lane.b32.xlu0 %v5669, 127
        %v5676 = vpop.permute.xlu0 %5675
        %v5680 = vadd.f32 %v5655, %v5672
        %v5681 = vadd.f32 %v5656, %v5674
        %v5682 = vadd.f32 %v5657, %v5676
        %s5683 = sld [smem:[#allocation2 + $0xe3]]
        %v5684 = vstv %s5683
        %v5685 = vmul.f32 %v5684, %v1041
        %v5686 = vmul.f32 %v5684, %v1042
        %v5687 = vmul.f32 %v5684, %v1043
        %v5691 = vrot.slane %v5685, 1
        %v5692 = vrot.slane %v5686, 1
        %v5693 = vsel %vm343, %v5691, %v5692
        %v5694 = vrot.slane %v5687, 1
        %v5695 = vsel %vm343, %v5692, %v5694
        %5696 = vrot.lane.b32.xlu0 %v5693, 126
        %v5697 = vpop.permute.xlu0 %5696
        %5698 = vrot.lane.b32.xlu0 %v5695, 126
        %v5699 = vpop.permute.xlu0 %5698
        %5700 = vrot.lane.b32.xlu0 %v5694, 126
        %v5701 = vpop.permute.xlu0 %5700
        %v5705 = vadd.f32 %v5680, %v5697
        %v5706 = vadd.f32 %v5681, %v5699
        %v5707 = vadd.f32 %v5682, %v5701
        %s5708 = sld [smem:[#allocation2 + $0xf3]]
        %v5709 = vstv %s5708
        %v5710 = vmul.f32 %v5709, %v1041
        %v5711 = vmul.f32 %v5709, %v1042
        %v5712 = vmul.f32 %v5709, %v1043
        %v5716 = vrot.slane %v5710, 2
        %v5717 = vrot.slane %v5711, 2
        %v5718 = vsel %vm413, %v5716, %v5717
        %v5719 = vrot.slane %v5712, 2
        %v5720 = vsel %vm413, %v5717, %v5719
        %v5724 = vadd.f32 %v5705, %v5718
        %v5725 = vadd.f32 %v5706, %v5720
        %v5726 = vadd.f32 %v5707, %v5719
        %s5727 = sld [smem:[#allocation2 + $0x103]]
        %v5728 = vstv %s5727
        %v5729 = vmul.f32 %v5728, %v1041
        %v5730 = vmul.f32 %v5728, %v1042
        %v5731 = vmul.f32 %v5728, %v1043
        %v5735 = vrot.slane %v5729, 2
        %v5736 = vrot.slane %v5730, 2
        %v5737 = vsel %vm413, %v5735, %v5736
        %v5738 = vrot.slane %v5731, 2
        %v5739 = vsel %vm413, %v5736, %v5738
        %5740 = vrot.lane.b32.xlu0 %v5737, 127
        %v5741 = vpop.permute.xlu0 %5740
        %5742 = vrot.lane.b32.xlu0 %v5739, 127
        %v5743 = vpop.permute.xlu0 %5742
        %5744 = vrot.lane.b32.xlu0 %v5738, 127
        %v5745 = vpop.permute.xlu0 %5744
        %v5749 = vadd.f32 %v5724, %v5741
        %v5750 = vadd.f32 %v5725, %v5743
        %v5751 = vadd.f32 %v5726, %v5745
        %s5752 = sld [smem:[#allocation2 + $0x113]]
        %v5753 = vstv %s5752
        %v5754 = vmul.f32 %v5753, %v1041
        %v5755 = vmul.f32 %v5753, %v1042
        %v5756 = vmul.f32 %v5753, %v1043
        %v5760 = vrot.slane %v5754, 2
        %v5761 = vrot.slane %v5755, 2
        %v5762 = vsel %vm413, %v5760, %v5761
        %v5763 = vrot.slane %v5756, 2
        %v5764 = vsel %vm413, %v5761, %v5763
        %5765 = vrot.lane.b32.xlu0 %v5762, 126
        %v5766 = vpop.permute.xlu0 %5765
        %5767 = vrot.lane.b32.xlu0 %v5764, 126
        %v5768 = vpop.permute.xlu0 %5767
        %5769 = vrot.lane.b32.xlu0 %v5763, 126
        %v5770 = vpop.permute.xlu0 %5769
        %v5774 = vadd.f32 %v5749, %v5766
        %v5775 = vadd.f32 %v5750, %v5768
        %v5776 = vadd.f32 %v5751, %v5770
        %s5777 = sld [smem:[#allocation2 + $0x97]]
        %v5778 = vstv %s5777
        %v5779 = vmul.f32 %v5778, %v1796
        %v5780 = vmul.f32 %v5778, %v1797
        %v5781 = vmul.f32 %v5778, %v1798
        %v5782 = vadd.f32 %v5774, %v5779
        %v5783 = vadd.f32 %v5775, %v5780
        %v5784 = vadd.f32 %v5776, %v5781
        %s5785 = sld [smem:[#allocation2 + $0xa7]]
        %v5786 = vstv %s5785
        %v5787 = vmul.f32 %v5786, %v1796
        %v5788 = vmul.f32 %v5786, %v1797
        %v5789 = vmul.f32 %v5786, %v1798
        %5793 = vrot.lane.b32.xlu0 %v5787, 127
        %v5794 = vpop.permute.xlu0 %5793
        %5795 = vrot.lane.b32.xlu0 %v5788, 127
        %v5796 = vpop.permute.xlu0 %5795
        %5797 = vrot.lane.b32.xlu0 %v5789, 127
        %v5798 = vpop.permute.xlu0 %5797
        %v5802 = vadd.f32 %v5782, %v5794
        %v5803 = vadd.f32 %v5783, %v5796
        %v5804 = vadd.f32 %v5784, %v5798
        %s5805 = sld [smem:[#allocation2 + $0xb7]]
        %v5806 = vstv %s5805
        %v5807 = vmul.f32 %v5806, %v1796
        %v5808 = vmul.f32 %v5806, %v1797
        %v5809 = vmul.f32 %v5806, %v1798
        %5813 = vrot.lane.b32.xlu0 %v5807, 126
        %v5814 = vpop.permute.xlu0 %5813
        %5815 = vrot.lane.b32.xlu0 %v5808, 126
        %v5816 = vpop.permute.xlu0 %5815
        %5817 = vrot.lane.b32.xlu0 %v5809, 126
        %v5818 = vpop.permute.xlu0 %5817
        %v5822 = vadd.f32 %v5802, %v5814
        %v5823 = vadd.f32 %v5803, %v5816
        %v5824 = vadd.f32 %v5804, %v5818
        %s5825 = sld [smem:[#allocation2 + $0xc7]]
        %v5826 = vstv %s5825
        %v5827 = vmul.f32 %v5826, %v1796
        %v5828 = vmul.f32 %v5826, %v1797
        %v5829 = vmul.f32 %v5826, %v1798
        %v5833 = vrot.slane %v5827, 1
        %v5834 = vrot.slane %v5828, 1
        %v5835 = vsel %vm343, %v5833, %v5834
        %v5836 = vrot.slane %v5829, 1
        %v5837 = vsel %vm343, %v5834, %v5836
        %v5841 = vadd.f32 %v5822, %v5835
        %v5842 = vadd.f32 %v5823, %v5837
        %v5843 = vadd.f32 %v5824, %v5836
        %s5844 = sld [smem:[#allocation2 + $0xd7]]
        %v5845 = vstv %s5844
        %v5846 = vmul.f32 %v5845, %v1796
        %v5847 = vmul.f32 %v5845, %v1797
        %v5848 = vmul.f32 %v5845, %v1798
        %v5852 = vrot.slane %v5846, 1
        %v5853 = vrot.slane %v5847, 1
        %v5854 = vsel %vm343, %v5852, %v5853
        %v5855 = vrot.slane %v5848, 1
        %v5856 = vsel %vm343, %v5853, %v5855
        %5857 = vrot.lane.b32.xlu0 %v5854, 127
        %v5858 = vpop.permute.xlu0 %5857
        %5859 = vrot.lane.b32.xlu0 %v5856, 127
        %v5860 = vpop.permute.xlu0 %5859
        %5861 = vrot.lane.b32.xlu0 %v5855, 127
        %v5862 = vpop.permute.xlu0 %5861
        %v5866 = vadd.f32 %v5841, %v5858
        %v5867 = vadd.f32 %v5842, %v5860
        %v5868 = vadd.f32 %v5843, %v5862
        %s5869 = sld [smem:[#allocation2 + $0xe7]]
        %v5870 = vstv %s5869
        %v5871 = vmul.f32 %v5870, %v1796
        %v5872 = vmul.f32 %v5870, %v1797
        %v5873 = vmul.f32 %v5870, %v1798
        %v5877 = vrot.slane %v5871, 1
        %v5878 = vrot.slane %v5872, 1
        %v5879 = vsel %vm343, %v5877, %v5878
        %v5880 = vrot.slane %v5873, 1
        %v5881 = vsel %vm343, %v5878, %v5880
        %5882 = vrot.lane.b32.xlu0 %v5879, 126
        %v5883 = vpop.permute.xlu0 %5882
        %5884 = vrot.lane.b32.xlu0 %v5881, 126
        %v5885 = vpop.permute.xlu0 %5884
        %5886 = vrot.lane.b32.xlu0 %v5880, 126
        %v5887 = vpop.permute.xlu0 %5886
        %v5891 = vadd.f32 %v5866, %v5883
        %v5892 = vadd.f32 %v5867, %v5885
        %v5893 = vadd.f32 %v5868, %v5887
        %s5894 = sld [smem:[#allocation2 + $0xf7]]
        %v5895 = vstv %s5894
        %v5896 = vmul.f32 %v5895, %v1796
        %v5897 = vmul.f32 %v5895, %v1797
        %v5898 = vmul.f32 %v5895, %v1798
        %v5902 = vrot.slane %v5896, 2
        %v5903 = vrot.slane %v5897, 2
        %v5904 = vsel %vm413, %v5902, %v5903
        %v5905 = vrot.slane %v5898, 2
        %v5906 = vsel %vm413, %v5903, %v5905
        %v5910 = vadd.f32 %v5891, %v5904
        %v5911 = vadd.f32 %v5892, %v5906
        %v5912 = vadd.f32 %v5893, %v5905
        %s5913 = sld [smem:[#allocation2 + $0x107]]
        %v5914 = vstv %s5913
        %v5915 = vmul.f32 %v5914, %v1796
        %v5916 = vmul.f32 %v5914, %v1797
        %v5917 = vmul.f32 %v5914, %v1798
        %v5921 = vrot.slane %v5915, 2
        %v5922 = vrot.slane %v5916, 2
        %v5923 = vsel %vm413, %v5921, %v5922
        %v5924 = vrot.slane %v5917, 2
        %v5925 = vsel %vm413, %v5922, %v5924
        %5926 = vrot.lane.b32.xlu0 %v5923, 127
        %v5927 = vpop.permute.xlu0 %5926
        %5928 = vrot.lane.b32.xlu0 %v5925, 127
        %v5929 = vpop.permute.xlu0 %5928
        %5930 = vrot.lane.b32.xlu0 %v5924, 127
        %v5931 = vpop.permute.xlu0 %5930
        %v5935 = vadd.f32 %v5910, %v5927
        %v5936 = vadd.f32 %v5911, %v5929
        %v5937 = vadd.f32 %v5912, %v5931
        %s5938 = sld [smem:[#allocation2 + $0x117]]
        %v5939 = vstv %s5938
        %v5940 = vmul.f32 %v5939, %v1796
        %v5941 = vmul.f32 %v5939, %v1797
        %v5942 = vmul.f32 %v5939, %v1798
        %v5946 = vrot.slane %v5940, 2
        %v5947 = vrot.slane %v5941, 2
        %v5948 = vsel %vm413, %v5946, %v5947
        %v5949 = vrot.slane %v5942, 2
        %v5950 = vsel %vm413, %v5947, %v5949
        %5951 = vrot.lane.b32.xlu0 %v5948, 126
        %v5952 = vpop.permute.xlu0 %5951
        %5953 = vrot.lane.b32.xlu0 %v5950, 126
        %v5954 = vpop.permute.xlu0 %5953
        %5955 = vrot.lane.b32.xlu0 %v5949, 126
        %v5956 = vpop.permute.xlu0 %5955
        %v5960 = vadd.f32 %v5935, %v5952
        %v5961 = vadd.f32 %v5936, %v5954
        %v5962 = vadd.f32 %v5937, %v5956
        %s5963 = sld [smem:[#allocation2 + $0x9b]]
        %v5964 = vstv %s5963
        %v5965 = vmul.f32 %v5964, %v2551
        %v5966 = vmul.f32 %v5964, %v2552
        %v5967 = vmul.f32 %v5964, %v2553
        %v5968 = vadd.f32 %v5960, %v5965
        %v5969 = vadd.f32 %v5961, %v5966
        %v5970 = vadd.f32 %v5962, %v5967
        %s5971 = sld [smem:[#allocation2 + $0xab]]
        %v5972 = vstv %s5971
        %v5973 = vmul.f32 %v5972, %v2551
        %v5974 = vmul.f32 %v5972, %v2552
        %v5975 = vmul.f32 %v5972, %v2553
        %5979 = vrot.lane.b32.xlu0 %v5973, 127
        %v5980 = vpop.permute.xlu0 %5979
        %5981 = vrot.lane.b32.xlu0 %v5974, 127
        %v5982 = vpop.permute.xlu0 %5981
        %5983 = vrot.lane.b32.xlu0 %v5975, 127
        %v5984 = vpop.permute.xlu0 %5983
        %v5988 = vadd.f32 %v5968, %v5980
        %v5989 = vadd.f32 %v5969, %v5982
        %v5990 = vadd.f32 %v5970, %v5984
        %s5991 = sld [smem:[#allocation2 + $0xbb]]
        %v5992 = vstv %s5991
        %v5993 = vmul.f32 %v5992, %v2551
        %v5994 = vmul.f32 %v5992, %v2552
        %v5995 = vmul.f32 %v5992, %v2553
        %5999 = vrot.lane.b32.xlu0 %v5993, 126
        %v6000 = vpop.permute.xlu0 %5999
        %6001 = vrot.lane.b32.xlu0 %v5994, 126
        %v6002 = vpop.permute.xlu0 %6001
        %6003 = vrot.lane.b32.xlu0 %v5995, 126
        %v6004 = vpop.permute.xlu0 %6003
        %v6008 = vadd.f32 %v5988, %v6000
        %v6009 = vadd.f32 %v5989, %v6002
        %v6010 = vadd.f32 %v5990, %v6004
        %s6011 = sld [smem:[#allocation2 + $0xcb]]
        %v6012 = vstv %s6011
        %v6013 = vmul.f32 %v6012, %v2551
        %v6014 = vmul.f32 %v6012, %v2552
        %v6015 = vmul.f32 %v6012, %v2553
        %v6019 = vrot.slane %v6013, 1
        %v6020 = vrot.slane %v6014, 1
        %v6021 = vsel %vm343, %v6019, %v6020
        %v6022 = vrot.slane %v6015, 1
        %v6023 = vsel %vm343, %v6020, %v6022
        %v6027 = vadd.f32 %v6008, %v6021
        %v6028 = vadd.f32 %v6009, %v6023
        %v6029 = vadd.f32 %v6010, %v6022
        %s6030 = sld [smem:[#allocation2 + $0xdb]]
        %v6031 = vstv %s6030
        %v6032 = vmul.f32 %v6031, %v2551
        %v6033 = vmul.f32 %v6031, %v2552
        %v6034 = vmul.f32 %v6031, %v2553
        %v6038 = vrot.slane %v6032, 1
        %v6039 = vrot.slane %v6033, 1
        %v6040 = vsel %vm343, %v6038, %v6039
        %v6041 = vrot.slane %v6034, 1
        %v6042 = vsel %vm343, %v6039, %v6041
        %6043 = vrot.lane.b32.xlu0 %v6040, 127
        %v6044 = vpop.permute.xlu0 %6043
        %6045 = vrot.lane.b32.xlu0 %v6042, 127
        %v6046 = vpop.permute.xlu0 %6045
        %6047 = vrot.lane.b32.xlu0 %v6041, 127
        %v6048 = vpop.permute.xlu0 %6047
        %v6052 = vadd.f32 %v6027, %v6044
        %v6053 = vadd.f32 %v6028, %v6046
        %v6054 = vadd.f32 %v6029, %v6048
        %s6055 = sld [smem:[#allocation2 + $0xeb]]
        %v6056 = vstv %s6055
        %v6057 = vmul.f32 %v6056, %v2551
        %v6058 = vmul.f32 %v6056, %v2552
        %v6059 = vmul.f32 %v6056, %v2553
        %v6063 = vrot.slane %v6057, 1
        %v6064 = vrot.slane %v6058, 1
        %v6065 = vsel %vm343, %v6063, %v6064
        %v6066 = vrot.slane %v6059, 1
        %v6067 = vsel %vm343, %v6064, %v6066
        %6068 = vrot.lane.b32.xlu0 %v6065, 126
        %v6069 = vpop.permute.xlu0 %6068
        %6070 = vrot.lane.b32.xlu0 %v6067, 126
        %v6071 = vpop.permute.xlu0 %6070
        %6072 = vrot.lane.b32.xlu0 %v6066, 126
        %v6073 = vpop.permute.xlu0 %6072
        %v6077 = vadd.f32 %v6052, %v6069
        %v6078 = vadd.f32 %v6053, %v6071
        %v6079 = vadd.f32 %v6054, %v6073
        %s6080 = sld [smem:[#allocation2 + $0xfb]]
        %v6081 = vstv %s6080
        %v6082 = vmul.f32 %v6081, %v2551
        %v6083 = vmul.f32 %v6081, %v2552
        %v6084 = vmul.f32 %v6081, %v2553
        %v6088 = vrot.slane %v6082, 2
        %v6089 = vrot.slane %v6083, 2
        %v6090 = vsel %vm413, %v6088, %v6089
        %v6091 = vrot.slane %v6084, 2
        %v6092 = vsel %vm413, %v6089, %v6091
        %v6096 = vadd.f32 %v6077, %v6090
        %v6097 = vadd.f32 %v6078, %v6092
        %v6098 = vadd.f32 %v6079, %v6091
        %s6099 = sld [smem:[#allocation2 + $0x10b]]
        %v6100 = vstv %s6099
        %v6101 = vmul.f32 %v6100, %v2551
        %v6102 = vmul.f32 %v6100, %v2552
        %v6103 = vmul.f32 %v6100, %v2553
        %v6107 = vrot.slane %v6101, 2
        %v6108 = vrot.slane %v6102, 2
        %v6109 = vsel %vm413, %v6107, %v6108
        %v6110 = vrot.slane %v6103, 2
        %v6111 = vsel %vm413, %v6108, %v6110
        %6112 = vrot.lane.b32.xlu0 %v6109, 127
        %v6113 = vpop.permute.xlu0 %6112
        %6114 = vrot.lane.b32.xlu0 %v6111, 127
        %v6115 = vpop.permute.xlu0 %6114
        %6116 = vrot.lane.b32.xlu0 %v6110, 127
        %v6117 = vpop.permute.xlu0 %6116
        %v6121 = vadd.f32 %v6096, %v6113
        %v6122 = vadd.f32 %v6097, %v6115
        %v6123 = vadd.f32 %v6098, %v6117
        %s6124 = sld [smem:[#allocation2 + $0x11b]]
        %v6125 = vstv %s6124
        %v6126 = vmul.f32 %v6125, %v2551
        %v6127 = vmul.f32 %v6125, %v2552
        %v6128 = vmul.f32 %v6125, %v2553
        %v6132 = vrot.slane %v6126, 2
        %v6133 = vrot.slane %v6127, 2
        %v6134 = vsel %vm413, %v6132, %v6133
        %v6135 = vrot.slane %v6128, 2
        %v6136 = vsel %vm413, %v6133, %v6135
        %6137 = vrot.lane.b32.xlu0 %v6134, 126
        %v6138 = vpop.permute.xlu0 %6137
        %6139 = vrot.lane.b32.xlu0 %v6136, 126
        %v6140 = vpop.permute.xlu0 %6139
        %6141 = vrot.lane.b32.xlu0 %v6135, 126
        %v6142 = vpop.permute.xlu0 %6141
        %v6146 = vadd.f32 %v6121, %v6138
        %v6147 = vadd.f32 %v6122, %v6140
        %v6148 = vadd.f32 %v6123, %v6142
        %s6149 = sld [smem:[#allocation2 + $0x9f]]
        %v6150 = vstv %s6149
        %v6151 = vmul.f32 %v6150, %v3306
        %v6152 = vmul.f32 %v6150, %v3307
        %v6153 = vmul.f32 %v6150, %v3308
        %v6154 = vadd.f32 %v6146, %v6151
        %v6155 = vadd.f32 %v6147, %v6152
        %v6156 = vadd.f32 %v6148, %v6153
        %s6157 = sld [smem:[#allocation2 + $0xaf]]
        %v6158 = vstv %s6157
        %v6159 = vmul.f32 %v6158, %v3306
        %v6160 = vmul.f32 %v6158, %v3307
        %v6161 = vmul.f32 %v6158, %v3308
        %6165 = vrot.lane.b32.xlu0 %v6159, 127
        %v6166 = vpop.permute.xlu0 %6165
        %6167 = vrot.lane.b32.xlu0 %v6160, 127
        %v6168 = vpop.permute.xlu0 %6167
        %6169 = vrot.lane.b32.xlu0 %v6161, 127
        %v6170 = vpop.permute.xlu0 %6169
        %v6174 = vadd.f32 %v6154, %v6166
        %v6175 = vadd.f32 %v6155, %v6168
        %v6176 = vadd.f32 %v6156, %v6170
        %s6177 = sld [smem:[#allocation2 + $0xbf]]
        %v6178 = vstv %s6177
        %v6179 = vmul.f32 %v6178, %v3306
        %v6180 = vmul.f32 %v6178, %v3307
        %v6181 = vmul.f32 %v6178, %v3308
        %6185 = vrot.lane.b32.xlu0 %v6179, 126
        %v6186 = vpop.permute.xlu0 %6185
        %6187 = vrot.lane.b32.xlu0 %v6180, 126
        %v6188 = vpop.permute.xlu0 %6187
        %6189 = vrot.lane.b32.xlu0 %v6181, 126
        %v6190 = vpop.permute.xlu0 %6189
        %v6194 = vadd.f32 %v6174, %v6186
        %v6195 = vadd.f32 %v6175, %v6188
        %v6196 = vadd.f32 %v6176, %v6190
        %s6197 = sld [smem:[#allocation2 + $0xcf]]
        %v6198 = vstv %s6197
        %v6199 = vmul.f32 %v6198, %v3306
        %v6200 = vmul.f32 %v6198, %v3307
        %v6201 = vmul.f32 %v6198, %v3308
        %v6205 = vrot.slane %v6199, 1
        %v6206 = vrot.slane %v6200, 1
        %v6207 = vsel %vm343, %v6205, %v6206
        %v6208 = vrot.slane %v6201, 1
        %v6209 = vsel %vm343, %v6206, %v6208
        %v6213 = vadd.f32 %v6194, %v6207
        %v6214 = vadd.f32 %v6195, %v6209
        %v6215 = vadd.f32 %v6196, %v6208
        %s6216 = sld [smem:[#allocation2 + $0xdf]]
        %v6217 = vstv %s6216
        %v6218 = vmul.f32 %v6217, %v3306
        %v6219 = vmul.f32 %v6217, %v3307
        %v6220 = vmul.f32 %v6217, %v3308
        %v6224 = vrot.slane %v6218, 1
        %v6225 = vrot.slane %v6219, 1
        %v6226 = vsel %vm343, %v6224, %v6225
        %v6227 = vrot.slane %v6220, 1
        %v6228 = vsel %vm343, %v6225, %v6227
        %6229 = vrot.lane.b32.xlu0 %v6226, 127
        %v6230 = vpop.permute.xlu0 %6229
        %6231 = vrot.lane.b32.xlu0 %v6228, 127
        %v6232 = vpop.permute.xlu0 %6231
        %6233 = vrot.lane.b32.xlu0 %v6227, 127
        %v6234 = vpop.permute.xlu0 %6233
        %v6238 = vadd.f32 %v6213, %v6230
        %v6239 = vadd.f32 %v6214, %v6232
        %v6240 = vadd.f32 %v6215, %v6234
        %s6241 = sld [smem:[#allocation2 + $0xef]]
        %v6242 = vstv %s6241
        %v6243 = vmul.f32 %v6242, %v3306
        %v6244 = vmul.f32 %v6242, %v3307
        %v6245 = vmul.f32 %v6242, %v3308
        %v6249 = vrot.slane %v6243, 1
        %v6250 = vrot.slane %v6244, 1
        %v6251 = vsel %vm343, %v6249, %v6250
        %v6252 = vrot.slane %v6245, 1
        %v6253 = vsel %vm343, %v6250, %v6252
        %6254 = vrot.lane.b32.xlu0 %v6251, 126
        %v6255 = vpop.permute.xlu0 %6254
        %6256 = vrot.lane.b32.xlu0 %v6253, 126
        %v6257 = vpop.permute.xlu0 %6256
        %6258 = vrot.lane.b32.xlu0 %v6252, 126
        %v6259 = vpop.permute.xlu0 %6258
        %v6263 = vadd.f32 %v6238, %v6255
        %v6264 = vadd.f32 %v6239, %v6257
        %v6265 = vadd.f32 %v6240, %v6259
        %s6266 = sld [smem:[#allocation2 + $0xff]]
        %v6267 = vstv %s6266
        %v6268 = vmul.f32 %v6267, %v3306
        %v6269 = vmul.f32 %v6267, %v3307
        %v6270 = vmul.f32 %v6267, %v3308
        %v6274 = vrot.slane %v6268, 2
        %v6275 = vrot.slane %v6269, 2
        %v6276 = vsel %vm413, %v6274, %v6275
        %v6277 = vrot.slane %v6270, 2
        %v6278 = vsel %vm413, %v6275, %v6277
        %v6282 = vadd.f32 %v6263, %v6276
        %v6283 = vadd.f32 %v6264, %v6278
        %v6284 = vadd.f32 %v6265, %v6277
        %s6285 = sld [smem:[#allocation2 + $0x10f]]
        %v6286 = vstv %s6285
        %v6287 = vmul.f32 %v6286, %v3306
        %v6288 = vmul.f32 %v6286, %v3307
        %v6289 = vmul.f32 %v6286, %v3308
        %v6293 = vrot.slane %v6287, 2
        %v6294 = vrot.slane %v6288, 2
        %v6295 = vsel %vm413, %v6293, %v6294
        %v6296 = vrot.slane %v6289, 2
        %v6297 = vsel %vm413, %v6294, %v6296
        %6298 = vrot.lane.b32.xlu0 %v6295, 127
        %v6299 = vpop.permute.xlu0 %6298
        %6300 = vrot.lane.b32.xlu0 %v6297, 127
        %v6301 = vpop.permute.xlu0 %6300
        %6302 = vrot.lane.b32.xlu0 %v6296, 127
        %v6303 = vpop.permute.xlu0 %6302
        %v6307 = vadd.f32 %v6282, %v6299
        %v6308 = vadd.f32 %v6283, %v6301
        %v6309 = vadd.f32 %v6284, %v6303
        %s6310 = sld [smem:[#allocation2 + $0x11f]]
        %v6311 = vstv %s6310
        %v6312 = vmul.f32 %v6311, %v3306
        %v6313 = vmul.f32 %v6311, %v3307
        %v6314 = vmul.f32 %v6311, %v3308
        %v6318 = vrot.slane %v6312, 2
        %v6319 = vrot.slane %v6313, 2
        %v6320 = vsel %vm413, %v6318, %v6319
        %v6321 = vrot.slane %v6314, 2
        %v6322 = vsel %vm413, %v6319, %v6321
        %6323 = vrot.lane.b32.xlu0 %v6320, 126
        %v6324 = vpop.permute.xlu0 %6323
        %6325 = vrot.lane.b32.xlu0 %v6322, 126
        %v6326 = vpop.permute.xlu0 %6325
        %6327 = vrot.lane.b32.xlu0 %v6321, 126
        %v6328 = vpop.permute.xlu0 %6327
        %v6332 = vadd.f32 %v6307, %v6324
        %v6333 = vadd.f32 %v6308, %v6326
        %v6334 = vadd.f32 %v6309, %v6328
        %s6335 = sld [smem:[#allocation5 + $0x7]]
        %v6336 = vstv %s6335
        %v6337 = vadd.f32 %v6332, %v6336
        %v6338 = vadd.f32 %v6333, %v6336
        %v6339 = vadd.f32 %v6334, %v6336
        %v6340 = vmax.f32 %v6337, 0.0
        %v6341 = vmax.f32 %v6338, 0.0
        %v6342 = vmax.f32 %v6339, 0.0
        %v6343 = vsel %vm3323, %v6340, 0.0
        %v6344 = vsel %vm3324, %v6341, 0.0
        %v6345 = vsel %vm3325, %v6342, 0.0
        %s6346 = sld [smem:[#allocation2 + $0x120]]
        %v6347 = vstv %s6346
        %v6348 = vmul.f32 %v6347, %v4078
        %v6349 = vmul.f32 %v6347, %v4079
        %v6350 = vadd.f32 %v6348, 0.0
        %v6351 = vadd.f32 %v6349, 0.0
        %s6352 = sld [smem:[#allocation2 + $0x130]]
        %v6353 = vstv %s6352
        %v6354 = vmul.f32 %v6353, %v4078
        %v6355 = vmul.f32 %v6353, %v4079
        %6358 = vrot.lane.b32.xlu0 %v6354, 127
        %v6359 = vpop.permute.xlu0 %6358
        %6360 = vrot.lane.b32.xlu0 %v6355, 127
        %v6361 = vpop.permute.xlu0 %6360
        %v6364 = vadd.f32 %v6350, %v6359
        %v6365 = vadd.f32 %v6351, %v6361
        %s6366 = sld [smem:[#allocation2 + $0x140]]
        %v6367 = vstv %s6366
        %v6368 = vmul.f32 %v6367, %v4078
        %v6369 = vmul.f32 %v6367, %v4079
        %6372 = vrot.lane.b32.xlu0 %v6368, 126
        %v6373 = vpop.permute.xlu0 %6372
        %6374 = vrot.lane.b32.xlu0 %v6369, 126
        %v6375 = vpop.permute.xlu0 %6374
        %v6378 = vadd.f32 %v6364, %v6373
        %v6379 = vadd.f32 %v6365, %v6375
        %s6380 = sld [smem:[#allocation2 + $0x150]]
        %v6381 = vstv %s6380
        %v6382 = vmul.f32 %v6381, %v4078
        %v6383 = vmul.f32 %v6381, %v4079
        %v6384 = vmul.f32 %v6381, %v4080
        %v6388 = vrot.slane %v6382, 1
        %v6389 = vrot.slane %v6383, 1
        %v6390 = vsel %vm343, %v6388, %v6389
        %v6391 = vrot.slane %v6384, 1
        %v6392 = vsel %vm343, %v6389, %v6391
        %v6395 = vadd.f32 %v6378, %v6390
        %v6396 = vadd.f32 %v6379, %v6392
        %s6397 = sld [smem:[#allocation2 + $0x160]]
        %v6398 = vstv %s6397
        %v6399 = vmul.f32 %v6398, %v4078
        %v6400 = vmul.f32 %v6398, %v4079
        %v6401 = vmul.f32 %v6398, %v4080
        %v6405 = vrot.slane %v6399, 1
        %v6406 = vrot.slane %v6400, 1
        %v6407 = vsel %vm343, %v6405, %v6406
        %v6408 = vrot.slane %v6401, 1
        %v6409 = vsel %vm343, %v6406, %v6408
        %6410 = vrot.lane.b32.xlu0 %v6407, 127
        %v6411 = vpop.permute.xlu0 %6410
        %6412 = vrot.lane.b32.xlu0 %v6409, 127
        %v6413 = vpop.permute.xlu0 %6412
        %v6416 = vadd.f32 %v6395, %v6411
        %v6417 = vadd.f32 %v6396, %v6413
        %s6418 = sld [smem:[#allocation2 + $0x170]]
        %v6419 = vstv %s6418
        %v6420 = vmul.f32 %v6419, %v4078
        %v6421 = vmul.f32 %v6419, %v4079
        %v6422 = vmul.f32 %v6419, %v4080
        %v6426 = vrot.slane %v6420, 1
        %v6427 = vrot.slane %v6421, 1
        %v6428 = vsel %vm343, %v6426, %v6427
        %v6429 = vrot.slane %v6422, 1
        %v6430 = vsel %vm343, %v6427, %v6429
        %6431 = vrot.lane.b32.xlu0 %v6428, 126
        %v6432 = vpop.permute.xlu0 %6431
        %6433 = vrot.lane.b32.xlu0 %v6430, 126
        %v6434 = vpop.permute.xlu0 %6433
        %v6437 = vadd.f32 %v6416, %v6432
        %v6438 = vadd.f32 %v6417, %v6434
        %s6439 = sld [smem:[#allocation2 + $0x180]]
        %v6440 = vstv %s6439
        %v6441 = vmul.f32 %v6440, %v4078
        %v6442 = vmul.f32 %v6440, %v4079
        %v6443 = vmul.f32 %v6440, %v4080
        %v6447 = vrot.slane %v6441, 2
        %v6448 = vrot.slane %v6442, 2
        %v6449 = vsel %vm413, %v6447, %v6448
        %v6450 = vrot.slane %v6443, 2
        %v6451 = vsel %vm413, %v6448, %v6450
        %v6454 = vadd.f32 %v6437, %v6449
        %v6455 = vadd.f32 %v6438, %v6451
        %s6456 = sld [smem:[#allocation2 + $0x190]]
        %v6457 = vstv %s6456
        %v6458 = vmul.f32 %v6457, %v4078
        %v6459 = vmul.f32 %v6457, %v4079
        %v6460 = vmul.f32 %v6457, %v4080
        %v6464 = vrot.slane %v6458, 2
        %v6465 = vrot.slane %v6459, 2
        %v6466 = vsel %vm413, %v6464, %v6465
        %v6467 = vrot.slane %v6460, 2
        %v6468 = vsel %vm413, %v6465, %v6467
        %6469 = vrot.lane.b32.xlu0 %v6466, 127
        %v6470 = vpop.permute.xlu0 %6469
        %6471 = vrot.lane.b32.xlu0 %v6468, 127
        %v6472 = vpop.permute.xlu0 %6471
        %v6475 = vadd.f32 %v6454, %v6470
        %v6476 = vadd.f32 %v6455, %v6472
        %s6477 = sld [smem:[#allocation2 + $0x1a0]]
        %v6478 = vstv %s6477
        %v6479 = vmul.f32 %v6478, %v4078
        %v6480 = vmul.f32 %v6478, %v4079
        %v6481 = vmul.f32 %v6478, %v4080
        %v6485 = vrot.slane %v6479, 2
        %v6486 = vrot.slane %v6480, 2
        %v6487 = vsel %vm413, %v6485, %v6486
        %v6488 = vrot.slane %v6481, 2
        %v6489 = vsel %vm413, %v6486, %v6488
        %6490 = vrot.lane.b32.xlu0 %v6487, 126
        %v6491 = vpop.permute.xlu0 %6490
        %6492 = vrot.lane.b32.xlu0 %v6489, 126
        %v6493 = vpop.permute.xlu0 %6492
        %v6496 = vadd.f32 %v6475, %v6491
        %v6497 = vadd.f32 %v6476, %v6493
        %s6498 = sld [smem:[#allocation2 + $0x124]]
        %v6499 = vstv %s6498
        %v6500 = vmul.f32 %v6499, %v4833
        %v6501 = vmul.f32 %v6499, %v4834
        %v6502 = vadd.f32 %v6496, %v6500
        %v6503 = vadd.f32 %v6497, %v6501
        %s6504 = sld [smem:[#allocation2 + $0x134]]
        %v6505 = vstv %s6504
        %v6506 = vmul.f32 %v6505, %v4833
        %v6507 = vmul.f32 %v6505, %v4834
        %6510 = vrot.lane.b32.xlu0 %v6506, 127
        %v6511 = vpop.permute.xlu0 %6510
        %6512 = vrot.lane.b32.xlu0 %v6507, 127
        %v6513 = vpop.permute.xlu0 %6512
        %v6516 = vadd.f32 %v6502, %v6511
        %v6517 = vadd.f32 %v6503, %v6513
        %s6518 = sld [smem:[#allocation2 + $0x144]]
        %v6519 = vstv %s6518
        %v6520 = vmul.f32 %v6519, %v4833
        %v6521 = vmul.f32 %v6519, %v4834
        %6524 = vrot.lane.b32.xlu0 %v6520, 126
        %v6525 = vpop.permute.xlu0 %6524
        %6526 = vrot.lane.b32.xlu0 %v6521, 126
        %v6527 = vpop.permute.xlu0 %6526
        %v6530 = vadd.f32 %v6516, %v6525
        %v6531 = vadd.f32 %v6517, %v6527
        %s6532 = sld [smem:[#allocation2 + $0x154]]
        %v6533 = vstv %s6532
        %v6534 = vmul.f32 %v6533, %v4833
        %v6535 = vmul.f32 %v6533, %v4834
        %v6536 = vmul.f32 %v6533, %v4835
        %v6540 = vrot.slane %v6534, 1
        %v6541 = vrot.slane %v6535, 1
        %v6542 = vsel %vm343, %v6540, %v6541
        %v6543 = vrot.slane %v6536, 1
        %v6544 = vsel %vm343, %v6541, %v6543
        %v6547 = vadd.f32 %v6530, %v6542
        %v6548 = vadd.f32 %v6531, %v6544
        %s6549 = sld [smem:[#allocation2 + $0x164]]
        %v6550 = vstv %s6549
        %v6551 = vmul.f32 %v6550, %v4833
        %v6552 = vmul.f32 %v6550, %v4834
        %v6553 = vmul.f32 %v6550, %v4835
        %v6557 = vrot.slane %v6551, 1
        %v6558 = vrot.slane %v6552, 1
        %v6559 = vsel %vm343, %v6557, %v6558
        %v6560 = vrot.slane %v6553, 1
        %v6561 = vsel %vm343, %v6558, %v6560
        %6562 = vrot.lane.b32.xlu0 %v6559, 127
        %v6563 = vpop.permute.xlu0 %6562
        %6564 = vrot.lane.b32.xlu0 %v6561, 127
        %v6565 = vpop.permute.xlu0 %6564
        %v6568 = vadd.f32 %v6547, %v6563
        %v6569 = vadd.f32 %v6548, %v6565
        %s6570 = sld [smem:[#allocation2 + $0x174]]
        %v6571 = vstv %s6570
        %v6572 = vmul.f32 %v6571, %v4833
        %v6573 = vmul.f32 %v6571, %v4834
        %v6574 = vmul.f32 %v6571, %v4835
        %v6578 = vrot.slane %v6572, 1
        %v6579 = vrot.slane %v6573, 1
        %v6580 = vsel %vm343, %v6578, %v6579
        %v6581 = vrot.slane %v6574, 1
        %v6582 = vsel %vm343, %v6579, %v6581
        %6583 = vrot.lane.b32.xlu0 %v6580, 126
        %v6584 = vpop.permute.xlu0 %6583
        %6585 = vrot.lane.b32.xlu0 %v6582, 126
        %v6586 = vpop.permute.xlu0 %6585
        %v6589 = vadd.f32 %v6568, %v6584
        %v6590 = vadd.f32 %v6569, %v6586
        %s6591 = sld [smem:[#allocation2 + $0x184]]
        %v6592 = vstv %s6591
        %v6593 = vmul.f32 %v6592, %v4833
        %v6594 = vmul.f32 %v6592, %v4834
        %v6595 = vmul.f32 %v6592, %v4835
        %v6599 = vrot.slane %v6593, 2
        %v6600 = vrot.slane %v6594, 2
        %v6601 = vsel %vm413, %v6599, %v6600
        %v6602 = vrot.slane %v6595, 2
        %v6603 = vsel %vm413, %v6600, %v6602
        %v6606 = vadd.f32 %v6589, %v6601
        %v6607 = vadd.f32 %v6590, %v6603
        %s6608 = sld [smem:[#allocation2 + $0x194]]
        %v6609 = vstv %s6608
        %v6610 = vmul.f32 %v6609, %v4833
        %v6611 = vmul.f32 %v6609, %v4834
        %v6612 = vmul.f32 %v6609, %v4835
        %v6616 = vrot.slane %v6610, 2
        %v6617 = vrot.slane %v6611, 2
        %v6618 = vsel %vm413, %v6616, %v6617
        %v6619 = vrot.slane %v6612, 2
        %v6620 = vsel %vm413, %v6617, %v6619
        %6621 = vrot.lane.b32.xlu0 %v6618, 127
        %v6622 = vpop.permute.xlu0 %6621
        %6623 = vrot.lane.b32.xlu0 %v6620, 127
        %v6624 = vpop.permute.xlu0 %6623
        %v6627 = vadd.f32 %v6606, %v6622
        %v6628 = vadd.f32 %v6607, %v6624
        %s6629 = sld [smem:[#allocation2 + $0x1a4]]
        %v6630 = vstv %s6629
        %v6631 = vmul.f32 %v6630, %v4833
        %v6632 = vmul.f32 %v6630, %v4834
        %v6633 = vmul.f32 %v6630, %v4835
        %v6637 = vrot.slane %v6631, 2
        %v6638 = vrot.slane %v6632, 2
        %v6639 = vsel %vm413, %v6637, %v6638
        %v6640 = vrot.slane %v6633, 2
        %v6641 = vsel %vm413, %v6638, %v6640
        %6642 = vrot.lane.b32.xlu0 %v6639, 126
        %v6643 = vpop.permute.xlu0 %6642
        %6644 = vrot.lane.b32.xlu0 %v6641, 126
        %v6645 = vpop.permute.xlu0 %6644
        %v6648 = vadd.f32 %v6627, %v6643
        %v6649 = vadd.f32 %v6628, %v6645
        %s6650 = sld [smem:[#allocation2 + $0x128]]
        %v6651 = vstv %s6650
        %v6652 = vmul.f32 %v6651, %v5588
        %v6653 = vmul.f32 %v6651, %v5589
        %v6654 = vadd.f32 %v6648, %v6652
        %v6655 = vadd.f32 %v6649, %v6653
        %s6656 = sld [smem:[#allocation2 + $0x138]]
        %v6657 = vstv %s6656
        %v6658 = vmul.f32 %v6657, %v5588
        %v6659 = vmul.f32 %v6657, %v5589
        %6662 = vrot.lane.b32.xlu0 %v6658, 127
        %v6663 = vpop.permute.xlu0 %6662
        %6664 = vrot.lane.b32.xlu0 %v6659, 127
        %v6665 = vpop.permute.xlu0 %6664
        %v6668 = vadd.f32 %v6654, %v6663
        %v6669 = vadd.f32 %v6655, %v6665
        %s6670 = sld [smem:[#allocation2 + $0x148]]
        %v6671 = vstv %s6670
        %v6672 = vmul.f32 %v6671, %v5588
        %v6673 = vmul.f32 %v6671, %v5589
        %6676 = vrot.lane.b32.xlu0 %v6672, 126
        %v6677 = vpop.permute.xlu0 %6676
        %6678 = vrot.lane.b32.xlu0 %v6673, 126
        %v6679 = vpop.permute.xlu0 %6678
        %v6682 = vadd.f32 %v6668, %v6677
        %v6683 = vadd.f32 %v6669, %v6679
        %s6684 = sld [smem:[#allocation2 + $0x158]]
        %v6685 = vstv %s6684
        %v6686 = vmul.f32 %v6685, %v5588
        %v6687 = vmul.f32 %v6685, %v5589
        %v6688 = vmul.f32 %v6685, %v5590
        %v6692 = vrot.slane %v6686, 1
        %v6693 = vrot.slane %v6687, 1
        %v6694 = vsel %vm343, %v6692, %v6693
        %v6695 = vrot.slane %v6688, 1
        %v6696 = vsel %vm343, %v6693, %v6695
        %v6699 = vadd.f32 %v6682, %v6694
        %v6700 = vadd.f32 %v6683, %v6696
        %s6701 = sld [smem:[#allocation2 + $0x168]]
        %v6702 = vstv %s6701
        %v6703 = vmul.f32 %v6702, %v5588
        %v6704 = vmul.f32 %v6702, %v5589
        %v6705 = vmul.f32 %v6702, %v5590
        %v6709 = vrot.slane %v6703, 1
        %v6710 = vrot.slane %v6704, 1
        %v6711 = vsel %vm343, %v6709, %v6710
        %v6712 = vrot.slane %v6705, 1
        %v6713 = vsel %vm343, %v6710, %v6712
        %6714 = vrot.lane.b32.xlu0 %v6711, 127
        %v6715 = vpop.permute.xlu0 %6714
        %6716 = vrot.lane.b32.xlu0 %v6713, 127
        %v6717 = vpop.permute.xlu0 %6716
        %v6720 = vadd.f32 %v6699, %v6715
        %v6721 = vadd.f32 %v6700, %v6717
        %s6722 = sld [smem:[#allocation2 + $0x178]]
        %v6723 = vstv %s6722
        %v6724 = vmul.f32 %v6723, %v5588
        %v6725 = vmul.f32 %v6723, %v5589
        %v6726 = vmul.f32 %v6723, %v5590
        %v6730 = vrot.slane %v6724, 1
        %v6731 = vrot.slane %v6725, 1
        %v6732 = vsel %vm343, %v6730, %v6731
        %v6733 = vrot.slane %v6726, 1
        %v6734 = vsel %vm343, %v6731, %v6733
        %6735 = vrot.lane.b32.xlu0 %v6732, 126
        %v6736 = vpop.permute.xlu0 %6735
        %6737 = vrot.lane.b32.xlu0 %v6734, 126
        %v6738 = vpop.permute.xlu0 %6737
        %v6741 = vadd.f32 %v6720, %v6736
        %v6742 = vadd.f32 %v6721, %v6738
        %s6743 = sld [smem:[#allocation2 + $0x188]]
        %v6744 = vstv %s6743
        %v6745 = vmul.f32 %v6744, %v5588
        %v6746 = vmul.f32 %v6744, %v5589
        %v6747 = vmul.f32 %v6744, %v5590
        %v6751 = vrot.slane %v6745, 2
        %v6752 = vrot.slane %v6746, 2
        %v6753 = vsel %vm413, %v6751, %v6752
        %v6754 = vrot.slane %v6747, 2
        %v6755 = vsel %vm413, %v6752, %v6754
        %v6758 = vadd.f32 %v6741, %v6753
        %v6759 = vadd.f32 %v6742, %v6755
        %s6760 = sld [smem:[#allocation2 + $0x198]]
        %v6761 = vstv %s6760
        %v6762 = vmul.f32 %v6761, %v5588
        %v6763 = vmul.f32 %v6761, %v5589
        %v6764 = vmul.f32 %v6761, %v5590
        %v6768 = vrot.slane %v6762, 2
        %v6769 = vrot.slane %v6763, 2
        %v6770 = vsel %vm413, %v6768, %v6769
        %v6771 = vrot.slane %v6764, 2
        %v6772 = vsel %vm413, %v6769, %v6771
        %6773 = vrot.lane.b32.xlu0 %v6770, 127
        %v6774 = vpop.permute.xlu0 %6773
        %6775 = vrot.lane.b32.xlu0 %v6772, 127
        %v6776 = vpop.permute.xlu0 %6775
        %v6779 = vadd.f32 %v6758, %v6774
        %v6780 = vadd.f32 %v6759, %v6776
        %s6781 = sld [smem:[#allocation2 + $0x1a8]]
        %v6782 = vstv %s6781
        %v6783 = vmul.f32 %v6782, %v5588
        %v6784 = vmul.f32 %v6782, %v5589
        %v6785 = vmul.f32 %v6782, %v5590
        %v6789 = vrot.slane %v6783, 2
        %v6790 = vrot.slane %v6784, 2
        %v6791 = vsel %vm413, %v6789, %v6790
        %v6792 = vrot.slane %v6785, 2
        %v6793 = vsel %vm413, %v6790, %v6792
        %6794 = vrot.lane.b32.xlu0 %v6791, 126
        %v6795 = vpop.permute.xlu0 %6794
        %6796 = vrot.lane.b32.xlu0 %v6793, 126
        %v6797 = vpop.permute.xlu0 %6796
        %v6800 = vadd.f32 %v6779, %v6795
        %v6801 = vadd.f32 %v6780, %v6797
        %s6802 = sld [smem:[#allocation2 + $0x12c]]
        %v6803 = vstv %s6802
        %v6804 = vmul.f32 %v6803, %v6343
        %v6805 = vmul.f32 %v6803, %v6344
        %v6806 = vadd.f32 %v6800, %v6804
        %v6807 = vadd.f32 %v6801, %v6805
        %s6808 = sld [smem:[#allocation2 + $0x13c]]
        %v6809 = vstv %s6808
        %v6810 = vmul.f32 %v6809, %v6343
        %v6811 = vmul.f32 %v6809, %v6344
        %6814 = vrot.lane.b32.xlu0 %v6810, 127
        %v6815 = vpop.permute.xlu0 %6814
        %6816 = vrot.lane.b32.xlu0 %v6811, 127
        %v6817 = vpop.permute.xlu0 %6816
        %v6820 = vadd.f32 %v6806, %v6815
        %v6821 = vadd.f32 %v6807, %v6817
        %s6822 = sld [smem:[#allocation2 + $0x14c]]
        %v6823 = vstv %s6822
        %v6824 = vmul.f32 %v6823, %v6343
        %v6825 = vmul.f32 %v6823, %v6344
        %6828 = vrot.lane.b32.xlu0 %v6824, 126
        %v6829 = vpop.permute.xlu0 %6828
        %6830 = vrot.lane.b32.xlu0 %v6825, 126
        %v6831 = vpop.permute.xlu0 %6830
        %v6834 = vadd.f32 %v6820, %v6829
        %v6835 = vadd.f32 %v6821, %v6831
        %s6836 = sld [smem:[#allocation2 + $0x15c]]
        %v6837 = vstv %s6836
        %v6838 = vmul.f32 %v6837, %v6343
        %v6839 = vmul.f32 %v6837, %v6344
        %v6840 = vmul.f32 %v6837, %v6345
        %v6844 = vrot.slane %v6838, 1
        %v6845 = vrot.slane %v6839, 1
        %v6846 = vsel %vm343, %v6844, %v6845
        %v6847 = vrot.slane %v6840, 1
        %v6848 = vsel %vm343, %v6845, %v6847
        %v6851 = vadd.f32 %v6834, %v6846
        %v6852 = vadd.f32 %v6835, %v6848
        %s6853 = sld [smem:[#allocation2 + $0x16c]]
        %v6854 = vstv %s6853
        %v6855 = vmul.f32 %v6854, %v6343
        %v6856 = vmul.f32 %v6854, %v6344
        %v6857 = vmul.f32 %v6854, %v6345
        %v6861 = vrot.slane %v6855, 1
        %v6862 = vrot.slane %v6856, 1
        %v6863 = vsel %vm343, %v6861, %v6862
        %v6864 = vrot.slane %v6857, 1
        %v6865 = vsel %vm343, %v6862, %v6864
        %6866 = vrot.lane.b32.xlu0 %v6863, 127
        %v6867 = vpop.permute.xlu0 %6866
        %6868 = vrot.lane.b32.xlu0 %v6865, 127
        %v6869 = vpop.permute.xlu0 %6868
        %v6872 = vadd.f32 %v6851, %v6867
        %v6873 = vadd.f32 %v6852, %v6869
        %s6874 = sld [smem:[#allocation2 + $0x17c]]
        %v6875 = vstv %s6874
        %v6876 = vmul.f32 %v6875, %v6343
        %v6877 = vmul.f32 %v6875, %v6344
        %v6878 = vmul.f32 %v6875, %v6345
        %v6882 = vrot.slane %v6876, 1
        %v6883 = vrot.slane %v6877, 1
        %v6884 = vsel %vm343, %v6882, %v6883
        %v6885 = vrot.slane %v6878, 1
        %v6886 = vsel %vm343, %v6883, %v6885
        %6887 = vrot.lane.b32.xlu0 %v6884, 126
        %v6888 = vpop.permute.xlu0 %6887
        %6889 = vrot.lane.b32.xlu0 %v6886, 126
        %v6890 = vpop.permute.xlu0 %6889
        %v6893 = vadd.f32 %v6872, %v6888
        %v6894 = vadd.f32 %v6873, %v6890
        %s6895 = sld [smem:[#allocation2 + $0x18c]]
        %v6896 = vstv %s6895
        %v6897 = vmul.f32 %v6896, %v6343
        %v6898 = vmul.f32 %v6896, %v6344
        %v6899 = vmul.f32 %v6896, %v6345
        %v6903 = vrot.slane %v6897, 2
        %v6904 = vrot.slane %v6898, 2
        %v6905 = vsel %vm413, %v6903, %v6904
        %v6906 = vrot.slane %v6899, 2
        %v6907 = vsel %vm413, %v6904, %v6906
        %v6910 = vadd.f32 %v6893, %v6905
        %v6911 = vadd.f32 %v6894, %v6907
        %s6912 = sld [smem:[#allocation2 + $0x19c]]
        %v6913 = vstv %s6912
        %v6914 = vmul.f32 %v6913, %v6343
        %v6915 = vmul.f32 %v6913, %v6344
        %v6916 = vmul.f32 %v6913, %v6345
        %v6920 = vrot.slane %v6914, 2
        %v6921 = vrot.slane %v6915, 2
        %v6922 = vsel %vm413, %v6920, %v6921
        %v6923 = vrot.slane %v6916, 2
        %v6924 = vsel %vm413, %v6921, %v6923
        %6925 = vrot.lane.b32.xlu0 %v6922, 127
        %v6926 = vpop.permute.xlu0 %6925
        %6927 = vrot.lane.b32.xlu0 %v6924, 127
        %v6928 = vpop.permute.xlu0 %6927
        %v6931 = vadd.f32 %v6910, %v6926
        %v6932 = vadd.f32 %v6911, %v6928
        %s6933 = sld [smem:[#allocation2 + $0x1ac]]
        %v6934 = vstv %s6933
        %v6935 = vmul.f32 %v6934, %v6343
        %v6936 = vmul.f32 %v6934, %v6344
        %v6937 = vmul.f32 %v6934, %v6345
        %v6941 = vrot.slane %v6935, 2
        %v6942 = vrot.slane %v6936, 2
        %v6943 = vsel %vm413, %v6941, %v6942
        %v6944 = vrot.slane %v6937, 2
        %v6945 = vsel %vm413, %v6942, %v6944
        %6946 = vrot.lane.b32.xlu0 %v6943, 126
        %v6947 = vpop.permute.xlu0 %6946
        %6948 = vrot.lane.b32.xlu0 %v6945, 126
        %v6949 = vpop.permute.xlu0 %6948
        %v6952 = vadd.f32 %v6931, %v6947
        %v6953 = vadd.f32 %v6932, %v6949
        %s6954 = sld [smem:[#allocation5 + $0x8]]
        %v6955 = vstv %s6954
        %v6956 = vadd.f32 %v6952, %v6955
        %v6957 = vadd.f32 %v6953, %v6955
        %v6958 = vmax.f32 %v6956, 0.0
        %v6959 = vmax.f32 %v6957, 0.0
        %s6960 = sld [smem:[#allocation2 + $0x121]]
        %v6961 = vstv %s6960
        %v6962 = vmul.f32 %v6961, %v4078
        %v6963 = vmul.f32 %v6961, %v4079
        %v6964 = vadd.f32 %v6962, 0.0
        %v6965 = vadd.f32 %v6963, 0.0
        %s6966 = sld [smem:[#allocation2 + $0x131]]
        %v6967 = vstv %s6966
        %v6968 = vmul.f32 %v6967, %v4078
        %v6969 = vmul.f32 %v6967, %v4079
        %6972 = vrot.lane.b32.xlu0 %v6968, 127
        %v6973 = vpop.permute.xlu0 %6972
        %6974 = vrot.lane.b32.xlu0 %v6969, 127
        %v6975 = vpop.permute.xlu0 %6974
        %v6978 = vadd.f32 %v6964, %v6973
        %v6979 = vadd.f32 %v6965, %v6975
        %s6980 = sld [smem:[#allocation2 + $0x141]]
        %v6981 = vstv %s6980
        %v6982 = vmul.f32 %v6981, %v4078
        %v6983 = vmul.f32 %v6981, %v4079
        %6986 = vrot.lane.b32.xlu0 %v6982, 126
        %v6987 = vpop.permute.xlu0 %6986
        %6988 = vrot.lane.b32.xlu0 %v6983, 126
        %v6989 = vpop.permute.xlu0 %6988
        %v6992 = vadd.f32 %v6978, %v6987
        %v6993 = vadd.f32 %v6979, %v6989
        %s6994 = sld [smem:[#allocation2 + $0x151]]
        %v6995 = vstv %s6994
        %v6996 = vmul.f32 %v6995, %v4078
        %v6997 = vmul.f32 %v6995, %v4079
        %v6998 = vmul.f32 %v6995, %v4080
        %v7002 = vrot.slane %v6996, 1
        %v7003 = vrot.slane %v6997, 1
        %v7004 = vsel %vm343, %v7002, %v7003
        %v7005 = vrot.slane %v6998, 1
        %v7006 = vsel %vm343, %v7003, %v7005
        %v7009 = vadd.f32 %v6992, %v7004
        %v7010 = vadd.f32 %v6993, %v7006
        %s7011 = sld [smem:[#allocation2 + $0x161]]
        %v7012 = vstv %s7011
        %v7013 = vmul.f32 %v7012, %v4078
        %v7014 = vmul.f32 %v7012, %v4079
        %v7015 = vmul.f32 %v7012, %v4080
        %v7019 = vrot.slane %v7013, 1
        %v7020 = vrot.slane %v7014, 1
        %v7021 = vsel %vm343, %v7019, %v7020
        %v7022 = vrot.slane %v7015, 1
        %v7023 = vsel %vm343, %v7020, %v7022
        %7024 = vrot.lane.b32.xlu0 %v7021, 127
        %v7025 = vpop.permute.xlu0 %7024
        %7026 = vrot.lane.b32.xlu0 %v7023, 127
        %v7027 = vpop.permute.xlu0 %7026
        %v7030 = vadd.f32 %v7009, %v7025
        %v7031 = vadd.f32 %v7010, %v7027
        %s7032 = sld [smem:[#allocation2 + $0x171]]
        %v7033 = vstv %s7032
        %v7034 = vmul.f32 %v7033, %v4078
        %v7035 = vmul.f32 %v7033, %v4079
        %v7036 = vmul.f32 %v7033, %v4080
        %v7040 = vrot.slane %v7034, 1
        %v7041 = vrot.slane %v7035, 1
        %v7042 = vsel %vm343, %v7040, %v7041
        %v7043 = vrot.slane %v7036, 1
        %v7044 = vsel %vm343, %v7041, %v7043
        %7045 = vrot.lane.b32.xlu0 %v7042, 126
        %v7046 = vpop.permute.xlu0 %7045
        %7047 = vrot.lane.b32.xlu0 %v7044, 126
        %v7048 = vpop.permute.xlu0 %7047
        %v7051 = vadd.f32 %v7030, %v7046
        %v7052 = vadd.f32 %v7031, %v7048
        %s7053 = sld [smem:[#allocation2 + $0x181]]
        %v7054 = vstv %s7053
        %v7055 = vmul.f32 %v7054, %v4078
        %v7056 = vmul.f32 %v7054, %v4079
        %v7057 = vmul.f32 %v7054, %v4080
        %v7061 = vrot.slane %v7055, 2
        %v7062 = vrot.slane %v7056, 2
        %v7063 = vsel %vm413, %v7061, %v7062
        %v7064 = vrot.slane %v7057, 2
        %v7065 = vsel %vm413, %v7062, %v7064
        %v7068 = vadd.f32 %v7051, %v7063
        %v7069 = vadd.f32 %v7052, %v7065
        %s7070 = sld [smem:[#allocation2 + $0x191]]
        %v7071 = vstv %s7070
        %v7072 = vmul.f32 %v7071, %v4078
        %v7073 = vmul.f32 %v7071, %v4079
        %v7074 = vmul.f32 %v7071, %v4080
        %v7078 = vrot.slane %v7072, 2
        %v7079 = vrot.slane %v7073, 2
        %v7080 = vsel %vm413, %v7078, %v7079
        %v7081 = vrot.slane %v7074, 2
        %v7082 = vsel %vm413, %v7079, %v7081
        %7083 = vrot.lane.b32.xlu0 %v7080, 127
        %v7084 = vpop.permute.xlu0 %7083
        %7085 = vrot.lane.b32.xlu0 %v7082, 127
        %v7086 = vpop.permute.xlu0 %7085
        %v7089 = vadd.f32 %v7068, %v7084
        %v7090 = vadd.f32 %v7069, %v7086
        %s7091 = sld [smem:[#allocation2 + $0x1a1]]
        %v7092 = vstv %s7091
        %v7093 = vmul.f32 %v7092, %v4078
        %v7094 = vmul.f32 %v7092, %v4079
        %v7095 = vmul.f32 %v7092, %v4080
        %v7099 = vrot.slane %v7093, 2
        %v7100 = vrot.slane %v7094, 2
        %v7101 = vsel %vm413, %v7099, %v7100
        %v7102 = vrot.slane %v7095, 2
        %v7103 = vsel %vm413, %v7100, %v7102
        %7104 = vrot.lane.b32.xlu0 %v7101, 126
        %v7105 = vpop.permute.xlu0 %7104
        %7106 = vrot.lane.b32.xlu0 %v7103, 126
        %v7107 = vpop.permute.xlu0 %7106
        %v7110 = vadd.f32 %v7089, %v7105
        %v7111 = vadd.f32 %v7090, %v7107
        %s7112 = sld [smem:[#allocation2 + $0x125]]
        %v7113 = vstv %s7112
        %v7114 = vmul.f32 %v7113, %v4833
        %v7115 = vmul.f32 %v7113, %v4834
        %v7116 = vadd.f32 %v7110, %v7114
        %v7117 = vadd.f32 %v7111, %v7115
        %s7118 = sld [smem:[#allocation2 + $0x135]]
        %v7119 = vstv %s7118
        %v7120 = vmul.f32 %v7119, %v4833
        %v7121 = vmul.f32 %v7119, %v4834
        %7124 = vrot.lane.b32.xlu0 %v7120, 127
        %v7125 = vpop.permute.xlu0 %7124
        %7126 = vrot.lane.b32.xlu0 %v7121, 127
        %v7127 = vpop.permute.xlu0 %7126
        %v7130 = vadd.f32 %v7116, %v7125
        %v7131 = vadd.f32 %v7117, %v7127
        %s7132 = sld [smem:[#allocation2 + $0x145]]
        %v7133 = vstv %s7132
        %v7134 = vmul.f32 %v7133, %v4833
        %v7135 = vmul.f32 %v7133, %v4834
        %7138 = vrot.lane.b32.xlu0 %v7134, 126
        %v7139 = vpop.permute.xlu0 %7138
        %7140 = vrot.lane.b32.xlu0 %v7135, 126
        %v7141 = vpop.permute.xlu0 %7140
        %v7144 = vadd.f32 %v7130, %v7139
        %v7145 = vadd.f32 %v7131, %v7141
        %s7146 = sld [smem:[#allocation2 + $0x155]]
        %v7147 = vstv %s7146
        %v7148 = vmul.f32 %v7147, %v4833
        %v7149 = vmul.f32 %v7147, %v4834
        %v7150 = vmul.f32 %v7147, %v4835
        %v7154 = vrot.slane %v7148, 1
        %v7155 = vrot.slane %v7149, 1
        %v7156 = vsel %vm343, %v7154, %v7155
        %v7157 = vrot.slane %v7150, 1
        %v7158 = vsel %vm343, %v7155, %v7157
        %v7161 = vadd.f32 %v7144, %v7156
        %v7162 = vadd.f32 %v7145, %v7158
        %s7163 = sld [smem:[#allocation2 + $0x165]]
        %v7164 = vstv %s7163
        %v7165 = vmul.f32 %v7164, %v4833
        %v7166 = vmul.f32 %v7164, %v4834
        %v7167 = vmul.f32 %v7164, %v4835
        %v7171 = vrot.slane %v7165, 1
        %v7172 = vrot.slane %v7166, 1
        %v7173 = vsel %vm343, %v7171, %v7172
        %v7174 = vrot.slane %v7167, 1
        %v7175 = vsel %vm343, %v7172, %v7174
        %7176 = vrot.lane.b32.xlu0 %v7173, 127
        %v7177 = vpop.permute.xlu0 %7176
        %7178 = vrot.lane.b32.xlu0 %v7175, 127
        %v7179 = vpop.permute.xlu0 %7178
        %v7182 = vadd.f32 %v7161, %v7177
        %v7183 = vadd.f32 %v7162, %v7179
        %s7184 = sld [smem:[#allocation2 + $0x175]]
        %v7185 = vstv %s7184
        %v7186 = vmul.f32 %v7185, %v4833
        %v7187 = vmul.f32 %v7185, %v4834
        %v7188 = vmul.f32 %v7185, %v4835
        %v7192 = vrot.slane %v7186, 1
        %v7193 = vrot.slane %v7187, 1
        %v7194 = vsel %vm343, %v7192, %v7193
        %v7195 = vrot.slane %v7188, 1
        %v7196 = vsel %vm343, %v7193, %v7195
        %7197 = vrot.lane.b32.xlu0 %v7194, 126
        %v7198 = vpop.permute.xlu0 %7197
        %7199 = vrot.lane.b32.xlu0 %v7196, 126
        %v7200 = vpop.permute.xlu0 %7199
        %v7203 = vadd.f32 %v7182, %v7198
        %v7204 = vadd.f32 %v7183, %v7200
        %s7205 = sld [smem:[#allocation2 + $0x185]]
        %v7206 = vstv %s7205
        %v7207 = vmul.f32 %v7206, %v4833
        %v7208 = vmul.f32 %v7206, %v4834
        %v7209 = vmul.f32 %v7206, %v4835
        %v7213 = vrot.slane %v7207, 2
        %v7214 = vrot.slane %v7208, 2
        %v7215 = vsel %vm413, %v7213, %v7214
        %v7216 = vrot.slane %v7209, 2
        %v7217 = vsel %vm413, %v7214, %v7216
        %v7220 = vadd.f32 %v7203, %v7215
        %v7221 = vadd.f32 %v7204, %v7217
        %s7222 = sld [smem:[#allocation2 + $0x195]]
        %v7223 = vstv %s7222
        %v7224 = vmul.f32 %v7223, %v4833
        %v7225 = vmul.f32 %v7223, %v4834
        %v7226 = vmul.f32 %v7223, %v4835
        %v7230 = vrot.slane %v7224, 2
        %v7231 = vrot.slane %v7225, 2
        %v7232 = vsel %vm413, %v7230, %v7231
        %v7233 = vrot.slane %v7226, 2
        %v7234 = vsel %vm413, %v7231, %v7233
        %7235 = vrot.lane.b32.xlu0 %v7232, 127
        %v7236 = vpop.permute.xlu0 %7235
        %7237 = vrot.lane.b32.xlu0 %v7234, 127
        %v7238 = vpop.permute.xlu0 %7237
        %v7241 = vadd.f32 %v7220, %v7236
        %v7242 = vadd.f32 %v7221, %v7238
        %s7243 = sld [smem:[#allocation2 + $0x1a5]]
        %v7244 = vstv %s7243
        %v7245 = vmul.f32 %v7244, %v4833
        %v7246 = vmul.f32 %v7244, %v4834
        %v7247 = vmul.f32 %v7244, %v4835
        %v7251 = vrot.slane %v7245, 2
        %v7252 = vrot.slane %v7246, 2
        %v7253 = vsel %vm413, %v7251, %v7252
        %v7254 = vrot.slane %v7247, 2
        %v7255 = vsel %vm413, %v7252, %v7254
        %7256 = vrot.lane.b32.xlu0 %v7253, 126
        %v7257 = vpop.permute.xlu0 %7256
        %7258 = vrot.lane.b32.xlu0 %v7255, 126
        %v7259 = vpop.permute.xlu0 %7258
        %v7262 = vadd.f32 %v7241, %v7257
        %v7263 = vadd.f32 %v7242, %v7259
        %s7264 = sld [smem:[#allocation2 + $0x129]]
        %v7265 = vstv %s7264
        %v7266 = vmul.f32 %v7265, %v5588
        %v7267 = vmul.f32 %v7265, %v5589
        %v7268 = vadd.f32 %v7262, %v7266
        %v7269 = vadd.f32 %v7263, %v7267
        %s7270 = sld [smem:[#allocation2 + $0x139]]
        %v7271 = vstv %s7270
        %v7272 = vmul.f32 %v7271, %v5588
        %v7273 = vmul.f32 %v7271, %v5589
        %7276 = vrot.lane.b32.xlu0 %v7272, 127
        %v7277 = vpop.permute.xlu0 %7276
        %7278 = vrot.lane.b32.xlu0 %v7273, 127
        %v7279 = vpop.permute.xlu0 %7278
        %v7282 = vadd.f32 %v7268, %v7277
        %v7283 = vadd.f32 %v7269, %v7279
        %s7284 = sld [smem:[#allocation2 + $0x149]]
        %v7285 = vstv %s7284
        %v7286 = vmul.f32 %v7285, %v5588
        %v7287 = vmul.f32 %v7285, %v5589
        %7290 = vrot.lane.b32.xlu0 %v7286, 126
        %v7291 = vpop.permute.xlu0 %7290
        %7292 = vrot.lane.b32.xlu0 %v7287, 126
        %v7293 = vpop.permute.xlu0 %7292
        %v7296 = vadd.f32 %v7282, %v7291
        %v7297 = vadd.f32 %v7283, %v7293
        %s7298 = sld [smem:[#allocation2 + $0x159]]
        %v7299 = vstv %s7298
        %v7300 = vmul.f32 %v7299, %v5588
        %v7301 = vmul.f32 %v7299, %v5589
        %v7302 = vmul.f32 %v7299, %v5590
        %v7306 = vrot.slane %v7300, 1
        %v7307 = vrot.slane %v7301, 1
        %v7308 = vsel %vm343, %v7306, %v7307
        %v7309 = vrot.slane %v7302, 1
        %v7310 = vsel %vm343, %v7307, %v7309
        %v7313 = vadd.f32 %v7296, %v7308
        %v7314 = vadd.f32 %v7297, %v7310
        %s7315 = sld [smem:[#allocation2 + $0x169]]
        %v7316 = vstv %s7315
        %v7317 = vmul.f32 %v7316, %v5588
        %v7318 = vmul.f32 %v7316, %v5589
        %v7319 = vmul.f32 %v7316, %v5590
        %v7323 = vrot.slane %v7317, 1
        %v7324 = vrot.slane %v7318, 1
        %v7325 = vsel %vm343, %v7323, %v7324
        %v7326 = vrot.slane %v7319, 1
        %v7327 = vsel %vm343, %v7324, %v7326
        %7328 = vrot.lane.b32.xlu0 %v7325, 127
        %v7329 = vpop.permute.xlu0 %7328
        %7330 = vrot.lane.b32.xlu0 %v7327, 127
        %v7331 = vpop.permute.xlu0 %7330
        %v7334 = vadd.f32 %v7313, %v7329
        %v7335 = vadd.f32 %v7314, %v7331
        %s7336 = sld [smem:[#allocation2 + $0x179]]
        %v7337 = vstv %s7336
        %v7338 = vmul.f32 %v7337, %v5588
        %v7339 = vmul.f32 %v7337, %v5589
        %v7340 = vmul.f32 %v7337, %v5590
        %v7344 = vrot.slane %v7338, 1
        %v7345 = vrot.slane %v7339, 1
        %v7346 = vsel %vm343, %v7344, %v7345
        %v7347 = vrot.slane %v7340, 1
        %v7348 = vsel %vm343, %v7345, %v7347
        %7349 = vrot.lane.b32.xlu0 %v7346, 126
        %v7350 = vpop.permute.xlu0 %7349
        %7351 = vrot.lane.b32.xlu0 %v7348, 126
        %v7352 = vpop.permute.xlu0 %7351
        %v7355 = vadd.f32 %v7334, %v7350
        %v7356 = vadd.f32 %v7335, %v7352
        %s7357 = sld [smem:[#allocation2 + $0x189]]
        %v7358 = vstv %s7357
        %v7359 = vmul.f32 %v7358, %v5588
        %v7360 = vmul.f32 %v7358, %v5589
        %v7361 = vmul.f32 %v7358, %v5590
        %v7365 = vrot.slane %v7359, 2
        %v7366 = vrot.slane %v7360, 2
        %v7367 = vsel %vm413, %v7365, %v7366
        %v7368 = vrot.slane %v7361, 2
        %v7369 = vsel %vm413, %v7366, %v7368
        %v7372 = vadd.f32 %v7355, %v7367
        %v7373 = vadd.f32 %v7356, %v7369
        %s7374 = sld [smem:[#allocation2 + $0x199]]
        %v7375 = vstv %s7374
        %v7376 = vmul.f32 %v7375, %v5588
        %v7377 = vmul.f32 %v7375, %v5589
        %v7378 = vmul.f32 %v7375, %v5590
        %v7382 = vrot.slane %v7376, 2
        %v7383 = vrot.slane %v7377, 2
        %v7384 = vsel %vm413, %v7382, %v7383
        %v7385 = vrot.slane %v7378, 2
        %v7386 = vsel %vm413, %v7383, %v7385
        %7387 = vrot.lane.b32.xlu0 %v7384, 127
        %v7388 = vpop.permute.xlu0 %7387
        %7389 = vrot.lane.b32.xlu0 %v7386, 127
        %v7390 = vpop.permute.xlu0 %7389
        %v7393 = vadd.f32 %v7372, %v7388
        %v7394 = vadd.f32 %v7373, %v7390
        %s7395 = sld [smem:[#allocation2 + $0x1a9]]
        %v7396 = vstv %s7395
        %v7397 = vmul.f32 %v7396, %v5588
        %v7398 = vmul.f32 %v7396, %v5589
        %v7399 = vmul.f32 %v7396, %v5590
        %v7403 = vrot.slane %v7397, 2
        %v7404 = vrot.slane %v7398, 2
        %v7405 = vsel %vm413, %v7403, %v7404
        %v7406 = vrot.slane %v7399, 2
        %v7407 = vsel %vm413, %v7404, %v7406
        %7408 = vrot.lane.b32.xlu0 %v7405, 126
        %v7409 = vpop.permute.xlu0 %7408
        %7410 = vrot.lane.b32.xlu0 %v7407, 126
        %v7411 = vpop.permute.xlu0 %7410
        %v7414 = vadd.f32 %v7393, %v7409
        %v7415 = vadd.f32 %v7394, %v7411
        %s7416 = sld [smem:[#allocation2 + $0x12d]]
        %v7417 = vstv %s7416
        %v7418 = vmul.f32 %v7417, %v6343
        %v7419 = vmul.f32 %v7417, %v6344
        %v7420 = vadd.f32 %v7414, %v7418
        %v7421 = vadd.f32 %v7415, %v7419
        %s7422 = sld [smem:[#allocation2 + $0x13d]]
        %v7423 = vstv %s7422
        %v7424 = vmul.f32 %v7423, %v6343
        %v7425 = vmul.f32 %v7423, %v6344
        %7428 = vrot.lane.b32.xlu0 %v7424, 127
        %v7429 = vpop.permute.xlu0 %7428
        %7430 = vrot.lane.b32.xlu0 %v7425, 127
        %v7431 = vpop.permute.xlu0 %7430
        %v7434 = vadd.f32 %v7420, %v7429
        %v7435 = vadd.f32 %v7421, %v7431
        %s7436 = sld [smem:[#allocation2 + $0x14d]]
        %v7437 = vstv %s7436
        %v7438 = vmul.f32 %v7437, %v6343
        %v7439 = vmul.f32 %v7437, %v6344
        %7442 = vrot.lane.b32.xlu0 %v7438, 126
        %v7443 = vpop.permute.xlu0 %7442
        %7444 = vrot.lane.b32.xlu0 %v7439, 126
        %v7445 = vpop.permute.xlu0 %7444
        %v7448 = vadd.f32 %v7434, %v7443
        %v7449 = vadd.f32 %v7435, %v7445
        %s7450 = sld [smem:[#allocation2 + $0x15d]]
        %v7451 = vstv %s7450
        %v7452 = vmul.f32 %v7451, %v6343
        %v7453 = vmul.f32 %v7451, %v6344
        %v7454 = vmul.f32 %v7451, %v6345
        %v7458 = vrot.slane %v7452, 1
        %v7459 = vrot.slane %v7453, 1
        %v7460 = vsel %vm343, %v7458, %v7459
        %v7461 = vrot.slane %v7454, 1
        %v7462 = vsel %vm343, %v7459, %v7461
        %v7465 = vadd.f32 %v7448, %v7460
        %v7466 = vadd.f32 %v7449, %v7462
        %s7467 = sld [smem:[#allocation2 + $0x16d]]
        %v7468 = vstv %s7467
        %v7469 = vmul.f32 %v7468, %v6343
        %v7470 = vmul.f32 %v7468, %v6344
        %v7471 = vmul.f32 %v7468, %v6345
        %v7475 = vrot.slane %v7469, 1
        %v7476 = vrot.slane %v7470, 1
        %v7477 = vsel %vm343, %v7475, %v7476
        %v7478 = vrot.slane %v7471, 1
        %v7479 = vsel %vm343, %v7476, %v7478
        %7480 = vrot.lane.b32.xlu0 %v7477, 127
        %v7481 = vpop.permute.xlu0 %7480
        %7482 = vrot.lane.b32.xlu0 %v7479, 127
        %v7483 = vpop.permute.xlu0 %7482
        %v7486 = vadd.f32 %v7465, %v7481
        %v7487 = vadd.f32 %v7466, %v7483
        %s7488 = sld [smem:[#allocation2 + $0x17d]]
        %v7489 = vstv %s7488
        %v7490 = vmul.f32 %v7489, %v6343
        %v7491 = vmul.f32 %v7489, %v6344
        %v7492 = vmul.f32 %v7489, %v6345
        %v7496 = vrot.slane %v7490, 1
        %v7497 = vrot.slane %v7491, 1
        %v7498 = vsel %vm343, %v7496, %v7497
        %v7499 = vrot.slane %v7492, 1
        %v7500 = vsel %vm343, %v7497, %v7499
        %7501 = vrot.lane.b32.xlu0 %v7498, 126
        %v7502 = vpop.permute.xlu0 %7501
        %7503 = vrot.lane.b32.xlu0 %v7500, 126
        %v7504 = vpop.permute.xlu0 %7503
        %v7507 = vadd.f32 %v7486, %v7502
        %v7508 = vadd.f32 %v7487, %v7504
        %s7509 = sld [smem:[#allocation2 + $0x18d]]
        %v7510 = vstv %s7509
        %v7511 = vmul.f32 %v7510, %v6343
        %v7512 = vmul.f32 %v7510, %v6344
        %v7513 = vmul.f32 %v7510, %v6345
        %v7517 = vrot.slane %v7511, 2
        %v7518 = vrot.slane %v7512, 2
        %v7519 = vsel %vm413, %v7517, %v7518
        %v7520 = vrot.slane %v7513, 2
        %v7521 = vsel %vm413, %v7518, %v7520
        %v7524 = vadd.f32 %v7507, %v7519
        %v7525 = vadd.f32 %v7508, %v7521
        %s7526 = sld [smem:[#allocation2 + $0x19d]]
        %v7527 = vstv %s7526
        %v7528 = vmul.f32 %v7527, %v6343
        %v7529 = vmul.f32 %v7527, %v6344
        %v7530 = vmul.f32 %v7527, %v6345
        %v7534 = vrot.slane %v7528, 2
        %v7535 = vrot.slane %v7529, 2
        %v7536 = vsel %vm413, %v7534, %v7535
        %v7537 = vrot.slane %v7530, 2
        %v7538 = vsel %vm413, %v7535, %v7537
        %7539 = vrot.lane.b32.xlu0 %v7536, 127
        %v7540 = vpop.permute.xlu0 %7539
        %7541 = vrot.lane.b32.xlu0 %v7538, 127
        %v7542 = vpop.permute.xlu0 %7541
        %v7545 = vadd.f32 %v7524, %v7540
        %v7546 = vadd.f32 %v7525, %v7542
        %s7547 = sld [smem:[#allocation2 + $0x1ad]]
        %v7548 = vstv %s7547
        %v7549 = vmul.f32 %v7548, %v6343
        %v7550 = vmul.f32 %v7548, %v6344
        %v7551 = vmul.f32 %v7548, %v6345
        %v7555 = vrot.slane %v7549, 2
        %v7556 = vrot.slane %v7550, 2
        %v7557 = vsel %vm413, %v7555, %v7556
        %v7558 = vrot.slane %v7551, 2
        %v7559 = vsel %vm413, %v7556, %v7558
        %7560 = vrot.lane.b32.xlu0 %v7557, 126
        %v7561 = vpop.permute.xlu0 %7560
        %7562 = vrot.lane.b32.xlu0 %v7559, 126
        %v7563 = vpop.permute.xlu0 %7562
        %v7566 = vadd.f32 %v7545, %v7561
        %v7567 = vadd.f32 %v7546, %v7563
        %s7568 = sld [smem:[#allocation5 + $0x9]]
        %v7569 = vstv %s7568
        %v7570 = vadd.f32 %v7566, %v7569
        %v7571 = vadd.f32 %v7567, %v7569
        %v7572 = vmax.f32 %v7570, 0.0
        %v7573 = vmax.f32 %v7571, 0.0
        %s7574 = sld [smem:[#allocation2 + $0x122]]
        %v7575 = vstv %s7574
        %v7576 = vmul.f32 %v7575, %v4078
        %v7577 = vmul.f32 %v7575, %v4079
        %v7578 = vadd.f32 %v7576, 0.0
        %v7579 = vadd.f32 %v7577, 0.0
        %s7580 = sld [smem:[#allocation2 + $0x132]]
        %v7581 = vstv %s7580
        %v7582 = vmul.f32 %v7581, %v4078
        %v7583 = vmul.f32 %v7581, %v4079
        %7586 = vrot.lane.b32.xlu0 %v7582, 127
        %v7587 = vpop.permute.xlu0 %7586
        %7588 = vrot.lane.b32.xlu0 %v7583, 127
        %v7589 = vpop.permute.xlu0 %7588
        %v7592 = vadd.f32 %v7578, %v7587
        %v7593 = vadd.f32 %v7579, %v7589
        %s7594 = sld [smem:[#allocation2 + $0x142]]
        %v7595 = vstv %s7594
        %v7596 = vmul.f32 %v7595, %v4078
        %v7597 = vmul.f32 %v7595, %v4079
        %7600 = vrot.lane.b32.xlu0 %v7596, 126
        %v7601 = vpop.permute.xlu0 %7600
        %7602 = vrot.lane.b32.xlu0 %v7597, 126
        %v7603 = vpop.permute.xlu0 %7602
        %v7606 = vadd.f32 %v7592, %v7601
        %v7607 = vadd.f32 %v7593, %v7603
        %s7608 = sld [smem:[#allocation2 + $0x152]]
        %v7609 = vstv %s7608
        %v7610 = vmul.f32 %v7609, %v4078
        %v7611 = vmul.f32 %v7609, %v4079
        %v7612 = vmul.f32 %v7609, %v4080
        %v7616 = vrot.slane %v7610, 1
        %v7617 = vrot.slane %v7611, 1
        %v7618 = vsel %vm343, %v7616, %v7617
        %v7619 = vrot.slane %v7612, 1
        %v7620 = vsel %vm343, %v7617, %v7619
        %v7623 = vadd.f32 %v7606, %v7618
        %v7624 = vadd.f32 %v7607, %v7620
        %s7625 = sld [smem:[#allocation2 + $0x162]]
        %v7626 = vstv %s7625
        %v7627 = vmul.f32 %v7626, %v4078
        %v7628 = vmul.f32 %v7626, %v4079
        %v7629 = vmul.f32 %v7626, %v4080
        %v7633 = vrot.slane %v7627, 1
        %v7634 = vrot.slane %v7628, 1
        %v7635 = vsel %vm343, %v7633, %v7634
        %v7636 = vrot.slane %v7629, 1
        %v7637 = vsel %vm343, %v7634, %v7636
        %7638 = vrot.lane.b32.xlu0 %v7635, 127
        %v7639 = vpop.permute.xlu0 %7638
        %7640 = vrot.lane.b32.xlu0 %v7637, 127
        %v7641 = vpop.permute.xlu0 %7640
        %v7644 = vadd.f32 %v7623, %v7639
        %v7645 = vadd.f32 %v7624, %v7641
        %s7646 = sld [smem:[#allocation2 + $0x172]]
        %v7647 = vstv %s7646
        %v7648 = vmul.f32 %v7647, %v4078
        %v7649 = vmul.f32 %v7647, %v4079
        %v7650 = vmul.f32 %v7647, %v4080
        %v7654 = vrot.slane %v7648, 1
        %v7655 = vrot.slane %v7649, 1
        %v7656 = vsel %vm343, %v7654, %v7655
        %v7657 = vrot.slane %v7650, 1
        %v7658 = vsel %vm343, %v7655, %v7657
        %7659 = vrot.lane.b32.xlu0 %v7656, 126
        %v7660 = vpop.permute.xlu0 %7659
        %7661 = vrot.lane.b32.xlu0 %v7658, 126
        %v7662 = vpop.permute.xlu0 %7661
        %v7665 = vadd.f32 %v7644, %v7660
        %v7666 = vadd.f32 %v7645, %v7662
        %s7667 = sld [smem:[#allocation2 + $0x182]]
        %v7668 = vstv %s7667
        %v7669 = vmul.f32 %v7668, %v4078
        %v7670 = vmul.f32 %v7668, %v4079
        %v7671 = vmul.f32 %v7668, %v4080
        %v7675 = vrot.slane %v7669, 2
        %v7676 = vrot.slane %v7670, 2
        %v7677 = vsel %vm413, %v7675, %v7676
        %v7678 = vrot.slane %v7671, 2
        %v7679 = vsel %vm413, %v7676, %v7678
        %v7682 = vadd.f32 %v7665, %v7677
        %v7683 = vadd.f32 %v7666, %v7679
        %s7684 = sld [smem:[#allocation2 + $0x192]]
        %v7685 = vstv %s7684
        %v7686 = vmul.f32 %v7685, %v4078
        %v7687 = vmul.f32 %v7685, %v4079
        %v7688 = vmul.f32 %v7685, %v4080
        %v7692 = vrot.slane %v7686, 2
        %v7693 = vrot.slane %v7687, 2
        %v7694 = vsel %vm413, %v7692, %v7693
        %v7695 = vrot.slane %v7688, 2
        %v7696 = vsel %vm413, %v7693, %v7695
        %7697 = vrot.lane.b32.xlu0 %v7694, 127
        %v7698 = vpop.permute.xlu0 %7697
        %7699 = vrot.lane.b32.xlu0 %v7696, 127
        %v7700 = vpop.permute.xlu0 %7699
        %v7703 = vadd.f32 %v7682, %v7698
        %v7704 = vadd.f32 %v7683, %v7700
        %s7705 = sld [smem:[#allocation2 + $0x1a2]]
        %v7706 = vstv %s7705
        %v7707 = vmul.f32 %v7706, %v4078
        %v7708 = vmul.f32 %v7706, %v4079
        %v7709 = vmul.f32 %v7706, %v4080
        %v7713 = vrot.slane %v7707, 2
        %v7714 = vrot.slane %v7708, 2
        %v7715 = vsel %vm413, %v7713, %v7714
        %v7716 = vrot.slane %v7709, 2
        %v7717 = vsel %vm413, %v7714, %v7716
        %7718 = vrot.lane.b32.xlu0 %v7715, 126
        %v7719 = vpop.permute.xlu0 %7718
        %7720 = vrot.lane.b32.xlu0 %v7717, 126
        %v7721 = vpop.permute.xlu0 %7720
        %v7724 = vadd.f32 %v7703, %v7719
        %v7725 = vadd.f32 %v7704, %v7721
        %s7726 = sld [smem:[#allocation2 + $0x126]]
        %v7727 = vstv %s7726
        %v7728 = vmul.f32 %v7727, %v4833
        %v7729 = vmul.f32 %v7727, %v4834
        %v7730 = vadd.f32 %v7724, %v7728
        %v7731 = vadd.f32 %v7725, %v7729
        %s7732 = sld [smem:[#allocation2 + $0x136]]
        %v7733 = vstv %s7732
        %v7734 = vmul.f32 %v7733, %v4833
        %v7735 = vmul.f32 %v7733, %v4834
        %7738 = vrot.lane.b32.xlu0 %v7734, 127
        %v7739 = vpop.permute.xlu0 %7738
        %7740 = vrot.lane.b32.xlu0 %v7735, 127
        %v7741 = vpop.permute.xlu0 %7740
        %v7744 = vadd.f32 %v7730, %v7739
        %v7745 = vadd.f32 %v7731, %v7741
        %s7746 = sld [smem:[#allocation2 + $0x146]]
        %v7747 = vstv %s7746
        %v7748 = vmul.f32 %v7747, %v4833
        %v7749 = vmul.f32 %v7747, %v4834
        %7752 = vrot.lane.b32.xlu0 %v7748, 126
        %v7753 = vpop.permute.xlu0 %7752
        %7754 = vrot.lane.b32.xlu0 %v7749, 126
        %v7755 = vpop.permute.xlu0 %7754
        %v7758 = vadd.f32 %v7744, %v7753
        %v7759 = vadd.f32 %v7745, %v7755
        %s7760 = sld [smem:[#allocation2 + $0x156]]
        %v7761 = vstv %s7760
        %v7762 = vmul.f32 %v7761, %v4833
        %v7763 = vmul.f32 %v7761, %v4834
        %v7764 = vmul.f32 %v7761, %v4835
        %v7768 = vrot.slane %v7762, 1
        %v7769 = vrot.slane %v7763, 1
        %v7770 = vsel %vm343, %v7768, %v7769
        %v7771 = vrot.slane %v7764, 1
        %v7772 = vsel %vm343, %v7769, %v7771
        %v7775 = vadd.f32 %v7758, %v7770
        %v7776 = vadd.f32 %v7759, %v7772
        %s7777 = sld [smem:[#allocation2 + $0x166]]
        %v7778 = vstv %s7777
        %v7779 = vmul.f32 %v7778, %v4833
        %v7780 = vmul.f32 %v7778, %v4834
        %v7781 = vmul.f32 %v7778, %v4835
        %v7785 = vrot.slane %v7779, 1
        %v7786 = vrot.slane %v7780, 1
        %v7787 = vsel %vm343, %v7785, %v7786
        %v7788 = vrot.slane %v7781, 1
        %v7789 = vsel %vm343, %v7786, %v7788
        %7790 = vrot.lane.b32.xlu0 %v7787, 127
        %v7791 = vpop.permute.xlu0 %7790
        %7792 = vrot.lane.b32.xlu0 %v7789, 127
        %v7793 = vpop.permute.xlu0 %7792
        %v7796 = vadd.f32 %v7775, %v7791
        %v7797 = vadd.f32 %v7776, %v7793
        %s7798 = sld [smem:[#allocation2 + $0x176]]
        %v7799 = vstv %s7798
        %v7800 = vmul.f32 %v7799, %v4833
        %v7801 = vmul.f32 %v7799, %v4834
        %v7802 = vmul.f32 %v7799, %v4835
        %v7806 = vrot.slane %v7800, 1
        %v7807 = vrot.slane %v7801, 1
        %v7808 = vsel %vm343, %v7806, %v7807
        %v7809 = vrot.slane %v7802, 1
        %v7810 = vsel %vm343, %v7807, %v7809
        %7811 = vrot.lane.b32.xlu0 %v7808, 126
        %v7812 = vpop.permute.xlu0 %7811
        %7813 = vrot.lane.b32.xlu0 %v7810, 126
        %v7814 = vpop.permute.xlu0 %7813
        %v7817 = vadd.f32 %v7796, %v7812
        %v7818 = vadd.f32 %v7797, %v7814
        %s7819 = sld [smem:[#allocation2 + $0x186]]
        %v7820 = vstv %s7819
        %v7821 = vmul.f32 %v7820, %v4833
        %v7822 = vmul.f32 %v7820, %v4834
        %v7823 = vmul.f32 %v7820, %v4835
        %v7827 = vrot.slane %v7821, 2
        %v7828 = vrot.slane %v7822, 2
        %v7829 = vsel %vm413, %v7827, %v7828
        %v7830 = vrot.slane %v7823, 2
        %v7831 = vsel %vm413, %v7828, %v7830
        %v7834 = vadd.f32 %v7817, %v7829
        %v7835 = vadd.f32 %v7818, %v7831
        %s7836 = sld [smem:[#allocation2 + $0x196]]
        %v7837 = vstv %s7836
        %v7838 = vmul.f32 %v7837, %v4833
        %v7839 = vmul.f32 %v7837, %v4834
        %v7840 = vmul.f32 %v7837, %v4835
        %v7844 = vrot.slane %v7838, 2
        %v7845 = vrot.slane %v7839, 2
        %v7846 = vsel %vm413, %v7844, %v7845
        %v7847 = vrot.slane %v7840, 2
        %v7848 = vsel %vm413, %v7845, %v7847
        %7849 = vrot.lane.b32.xlu0 %v7846, 127
        %v7850 = vpop.permute.xlu0 %7849
        %7851 = vrot.lane.b32.xlu0 %v7848, 127
        %v7852 = vpop.permute.xlu0 %7851
        %v7855 = vadd.f32 %v7834, %v7850
        %v7856 = vadd.f32 %v7835, %v7852
        %s7857 = sld [smem:[#allocation2 + $0x1a6]]
        %v7858 = vstv %s7857
        %v7859 = vmul.f32 %v7858, %v4833
        %v7860 = vmul.f32 %v7858, %v4834
        %v7861 = vmul.f32 %v7858, %v4835
        %v7865 = vrot.slane %v7859, 2
        %v7866 = vrot.slane %v7860, 2
        %v7867 = vsel %vm413, %v7865, %v7866
        %v7868 = vrot.slane %v7861, 2
        %v7869 = vsel %vm413, %v7866, %v7868
        %7870 = vrot.lane.b32.xlu0 %v7867, 126
        %v7871 = vpop.permute.xlu0 %7870
        %7872 = vrot.lane.b32.xlu0 %v7869, 126
        %v7873 = vpop.permute.xlu0 %7872
        %v7876 = vadd.f32 %v7855, %v7871
        %v7877 = vadd.f32 %v7856, %v7873
        %s7878 = sld [smem:[#allocation2 + $0x12a]]
        %v7879 = vstv %s7878
        %v7880 = vmul.f32 %v7879, %v5588
        %v7881 = vmul.f32 %v7879, %v5589
        %v7882 = vadd.f32 %v7876, %v7880
        %v7883 = vadd.f32 %v7877, %v7881
        %s7884 = sld [smem:[#allocation2 + $0x13a]]
        %v7885 = vstv %s7884
        %v7886 = vmul.f32 %v7885, %v5588
        %v7887 = vmul.f32 %v7885, %v5589
        %7890 = vrot.lane.b32.xlu0 %v7886, 127
        %v7891 = vpop.permute.xlu0 %7890
        %7892 = vrot.lane.b32.xlu0 %v7887, 127
        %v7893 = vpop.permute.xlu0 %7892
        %v7896 = vadd.f32 %v7882, %v7891
        %v7897 = vadd.f32 %v7883, %v7893
        %s7898 = sld [smem:[#allocation2 + $0x14a]]
        %v7899 = vstv %s7898
        %v7900 = vmul.f32 %v7899, %v5588
        %v7901 = vmul.f32 %v7899, %v5589
        %7904 = vrot.lane.b32.xlu0 %v7900, 126
        %v7905 = vpop.permute.xlu0 %7904
        %7906 = vrot.lane.b32.xlu0 %v7901, 126
        %v7907 = vpop.permute.xlu0 %7906
        %v7910 = vadd.f32 %v7896, %v7905
        %v7911 = vadd.f32 %v7897, %v7907
        %s7912 = sld [smem:[#allocation2 + $0x15a]]
        %v7913 = vstv %s7912
        %v7914 = vmul.f32 %v7913, %v5588
        %v7915 = vmul.f32 %v7913, %v5589
        %v7916 = vmul.f32 %v7913, %v5590
        %v7920 = vrot.slane %v7914, 1
        %v7921 = vrot.slane %v7915, 1
        %v7922 = vsel %vm343, %v7920, %v7921
        %v7923 = vrot.slane %v7916, 1
        %v7924 = vsel %vm343, %v7921, %v7923
        %v7927 = vadd.f32 %v7910, %v7922
        %v7928 = vadd.f32 %v7911, %v7924
        %s7929 = sld [smem:[#allocation2 + $0x16a]]
        %v7930 = vstv %s7929
        %v7931 = vmul.f32 %v7930, %v5588
        %v7932 = vmul.f32 %v7930, %v5589
        %v7933 = vmul.f32 %v7930, %v5590
        %v7937 = vrot.slane %v7931, 1
        %v7938 = vrot.slane %v7932, 1
        %v7939 = vsel %vm343, %v7937, %v7938
        %v7940 = vrot.slane %v7933, 1
        %v7941 = vsel %vm343, %v7938, %v7940
        %7942 = vrot.lane.b32.xlu0 %v7939, 127
        %v7943 = vpop.permute.xlu0 %7942
        %7944 = vrot.lane.b32.xlu0 %v7941, 127
        %v7945 = vpop.permute.xlu0 %7944
        %v7948 = vadd.f32 %v7927, %v7943
        %v7949 = vadd.f32 %v7928, %v7945
        %s7950 = sld [smem:[#allocation2 + $0x17a]]
        %v7951 = vstv %s7950
        %v7952 = vmul.f32 %v7951, %v5588
        %v7953 = vmul.f32 %v7951, %v5589
        %v7954 = vmul.f32 %v7951, %v5590
        %v7958 = vrot.slane %v7952, 1
        %v7959 = vrot.slane %v7953, 1
        %v7960 = vsel %vm343, %v7958, %v7959
        %v7961 = vrot.slane %v7954, 1
        %v7962 = vsel %vm343, %v7959, %v7961
        %7963 = vrot.lane.b32.xlu0 %v7960, 126
        %v7964 = vpop.permute.xlu0 %7963
        %7965 = vrot.lane.b32.xlu0 %v7962, 126
        %v7966 = vpop.permute.xlu0 %7965
        %v7969 = vadd.f32 %v7948, %v7964
        %v7970 = vadd.f32 %v7949, %v7966
        %s7971 = sld [smem:[#allocation2 + $0x18a]]
        %v7972 = vstv %s7971
        %v7973 = vmul.f32 %v7972, %v5588
        %v7974 = vmul.f32 %v7972, %v5589
        %v7975 = vmul.f32 %v7972, %v5590
        %v7979 = vrot.slane %v7973, 2
        %v7980 = vrot.slane %v7974, 2
        %v7981 = vsel %vm413, %v7979, %v7980
        %v7982 = vrot.slane %v7975, 2
        %v7983 = vsel %vm413, %v7980, %v7982
        %v7986 = vadd.f32 %v7969, %v7981
        %v7987 = vadd.f32 %v7970, %v7983
        %s7988 = sld [smem:[#allocation2 + $0x19a]]
        %v7989 = vstv %s7988
        %v7990 = vmul.f32 %v7989, %v5588
        %v7991 = vmul.f32 %v7989, %v5589
        %v7992 = vmul.f32 %v7989, %v5590
        %v7996 = vrot.slane %v7990, 2
        %v7997 = vrot.slane %v7991, 2
        %v7998 = vsel %vm413, %v7996, %v7997
        %v7999 = vrot.slane %v7992, 2
        %v8000 = vsel %vm413, %v7997, %v7999
        %8001 = vrot.lane.b32.xlu0 %v7998, 127
        %v8002 = vpop.permute.xlu0 %8001
        %8003 = vrot.lane.b32.xlu0 %v8000, 127
        %v8004 = vpop.permute.xlu0 %8003
        %v8007 = vadd.f32 %v7986, %v8002
        %v8008 = vadd.f32 %v7987, %v8004
        %s8009 = sld [smem:[#allocation2 + $0x1aa]]
        %v8010 = vstv %s8009
        %v8011 = vmul.f32 %v8010, %v5588
        %v8012 = vmul.f32 %v8010, %v5589
        %v8013 = vmul.f32 %v8010, %v5590
        %v8017 = vrot.slane %v8011, 2
        %v8018 = vrot.slane %v8012, 2
        %v8019 = vsel %vm413, %v8017, %v8018
        %v8020 = vrot.slane %v8013, 2
        %v8021 = vsel %vm413, %v8018, %v8020
        %8022 = vrot.lane.b32.xlu0 %v8019, 126
        %v8023 = vpop.permute.xlu0 %8022
        %8024 = vrot.lane.b32.xlu0 %v8021, 126
        %v8025 = vpop.permute.xlu0 %8024
        %v8028 = vadd.f32 %v8007, %v8023
        %v8029 = vadd.f32 %v8008, %v8025
        %s8030 = sld [smem:[#allocation2 + $0x12e]]
        %v8031 = vstv %s8030
        %v8032 = vmul.f32 %v8031, %v6343
        %v8033 = vmul.f32 %v8031, %v6344
        %v8034 = vadd.f32 %v8028, %v8032
        %v8035 = vadd.f32 %v8029, %v8033
        %s8036 = sld [smem:[#allocation2 + $0x13e]]
        %v8037 = vstv %s8036
        %v8038 = vmul.f32 %v8037, %v6343
        %v8039 = vmul.f32 %v8037, %v6344
        %8042 = vrot.lane.b32.xlu0 %v8038, 127
        %v8043 = vpop.permute.xlu0 %8042
        %8044 = vrot.lane.b32.xlu0 %v8039, 127
        %v8045 = vpop.permute.xlu0 %8044
        %v8048 = vadd.f32 %v8034, %v8043
        %v8049 = vadd.f32 %v8035, %v8045
        %s8050 = sld [smem:[#allocation2 + $0x14e]]
        %v8051 = vstv %s8050
        %v8052 = vmul.f32 %v8051, %v6343
        %v8053 = vmul.f32 %v8051, %v6344
        %8056 = vrot.lane.b32.xlu0 %v8052, 126
        %v8057 = vpop.permute.xlu0 %8056
        %8058 = vrot.lane.b32.xlu0 %v8053, 126
        %v8059 = vpop.permute.xlu0 %8058
        %v8062 = vadd.f32 %v8048, %v8057
        %v8063 = vadd.f32 %v8049, %v8059
        %s8064 = sld [smem:[#allocation2 + $0x15e]]
        %v8065 = vstv %s8064
        %v8066 = vmul.f32 %v8065, %v6343
        %v8067 = vmul.f32 %v8065, %v6344
        %v8068 = vmul.f32 %v8065, %v6345
        %v8072 = vrot.slane %v8066, 1
        %v8073 = vrot.slane %v8067, 1
        %v8074 = vsel %vm343, %v8072, %v8073
        %v8075 = vrot.slane %v8068, 1
        %v8076 = vsel %vm343, %v8073, %v8075
        %v8079 = vadd.f32 %v8062, %v8074
        %v8080 = vadd.f32 %v8063, %v8076
        %s8081 = sld [smem:[#allocation2 + $0x16e]]
        %v8082 = vstv %s8081
        %v8083 = vmul.f32 %v8082, %v6343
        %v8084 = vmul.f32 %v8082, %v6344
        %v8085 = vmul.f32 %v8082, %v6345
        %v8089 = vrot.slane %v8083, 1
        %v8090 = vrot.slane %v8084, 1
        %v8091 = vsel %vm343, %v8089, %v8090
        %v8092 = vrot.slane %v8085, 1
        %v8093 = vsel %vm343, %v8090, %v8092
        %8094 = vrot.lane.b32.xlu0 %v8091, 127
        %v8095 = vpop.permute.xlu0 %8094
        %8096 = vrot.lane.b32.xlu0 %v8093, 127
        %v8097 = vpop.permute.xlu0 %8096
        %v8100 = vadd.f32 %v8079, %v8095
        %v8101 = vadd.f32 %v8080, %v8097
        %s8102 = sld [smem:[#allocation2 + $0x17e]]
        %v8103 = vstv %s8102
        %v8104 = vmul.f32 %v8103, %v6343
        %v8105 = vmul.f32 %v8103, %v6344
        %v8106 = vmul.f32 %v8103, %v6345
        %v8110 = vrot.slane %v8104, 1
        %v8111 = vrot.slane %v8105, 1
        %v8112 = vsel %vm343, %v8110, %v8111
        %v8113 = vrot.slane %v8106, 1
        %v8114 = vsel %vm343, %v8111, %v8113
        %8115 = vrot.lane.b32.xlu0 %v8112, 126
        %v8116 = vpop.permute.xlu0 %8115
        %8117 = vrot.lane.b32.xlu0 %v8114, 126
        %v8118 = vpop.permute.xlu0 %8117
        %v8121 = vadd.f32 %v8100, %v8116
        %v8122 = vadd.f32 %v8101, %v8118
        %s8123 = sld [smem:[#allocation2 + $0x18e]]
        %v8124 = vstv %s8123
        %v8125 = vmul.f32 %v8124, %v6343
        %v8126 = vmul.f32 %v8124, %v6344
        %v8127 = vmul.f32 %v8124, %v6345
        %v8131 = vrot.slane %v8125, 2
        %v8132 = vrot.slane %v8126, 2
        %v8133 = vsel %vm413, %v8131, %v8132
        %v8134 = vrot.slane %v8127, 2
        %v8135 = vsel %vm413, %v8132, %v8134
        %v8138 = vadd.f32 %v8121, %v8133
        %v8139 = vadd.f32 %v8122, %v8135
        %s8140 = sld [smem:[#allocation2 + $0x19e]]
        %v8141 = vstv %s8140
        %v8142 = vmul.f32 %v8141, %v6343
        %v8143 = vmul.f32 %v8141, %v6344
        %v8144 = vmul.f32 %v8141, %v6345
        %v8148 = vrot.slane %v8142, 2
        %v8149 = vrot.slane %v8143, 2
        %v8150 = vsel %vm413, %v8148, %v8149
        %v8151 = vrot.slane %v8144, 2
        %v8152 = vsel %vm413, %v8149, %v8151
        %8153 = vrot.lane.b32.xlu0 %v8150, 127
        %v8154 = vpop.permute.xlu0 %8153
        %8155 = vrot.lane.b32.xlu0 %v8152, 127
        %v8156 = vpop.permute.xlu0 %8155
        %v8159 = vadd.f32 %v8138, %v8154
        %v8160 = vadd.f32 %v8139, %v8156
        %s8161 = sld [smem:[#allocation2 + $0x1ae]]
        %v8162 = vstv %s8161
        %v8163 = vmul.f32 %v8162, %v6343
        %v8164 = vmul.f32 %v8162, %v6344
        %v8165 = vmul.f32 %v8162, %v6345
        %v8169 = vrot.slane %v8163, 2
        %v8170 = vrot.slane %v8164, 2
        %v8171 = vsel %vm413, %v8169, %v8170
        %v8172 = vrot.slane %v8165, 2
        %v8173 = vsel %vm413, %v8170, %v8172
        %8174 = vrot.lane.b32.xlu0 %v8171, 126
        %v8175 = vpop.permute.xlu0 %8174
        %8176 = vrot.lane.b32.xlu0 %v8173, 126
        %v8177 = vpop.permute.xlu0 %8176
        %v8180 = vadd.f32 %v8159, %v8175
        %v8181 = vadd.f32 %v8160, %v8177
        %s8182 = sld [smem:[#allocation5 + $0xa]]
        %v8183 = vstv %s8182
        %v8184 = vadd.f32 %v8180, %v8183
        %v8185 = vadd.f32 %v8181, %v8183
        %v8186 = vmax.f32 %v8184, 0.0
        %v8187 = vmax.f32 %v8185, 0.0
        %s8188 = sld [smem:[#allocation2 + $0x123]]
        %v8189 = vstv %s8188
        %v8190 = vmul.f32 %v8189, %v4078
        %v8191 = vmul.f32 %v8189, %v4079
        %v8192 = vadd.f32 %v8190, 0.0
        %v8193 = vadd.f32 %v8191, 0.0
        %s8194 = sld [smem:[#allocation2 + $0x133]]
        %v8195 = vstv %s8194
        %v8196 = vmul.f32 %v8195, %v4078
        %v8197 = vmul.f32 %v8195, %v4079
        %8200 = vrot.lane.b32.xlu0 %v8196, 127
        %v8201 = vpop.permute.xlu0 %8200
        %8202 = vrot.lane.b32.xlu0 %v8197, 127
        %v8203 = vpop.permute.xlu0 %8202
        %v8206 = vadd.f32 %v8192, %v8201
        %v8207 = vadd.f32 %v8193, %v8203
        %s8208 = sld [smem:[#allocation2 + $0x143]]
        %v8209 = vstv %s8208
        %v8210 = vmul.f32 %v8209, %v4078
        %v8211 = vmul.f32 %v8209, %v4079
        %8214 = vrot.lane.b32.xlu0 %v8210, 126
        %v8215 = vpop.permute.xlu0 %8214
        %8216 = vrot.lane.b32.xlu0 %v8211, 126
        %v8217 = vpop.permute.xlu0 %8216
        %v8220 = vadd.f32 %v8206, %v8215
        %v8221 = vadd.f32 %v8207, %v8217
        %s8222 = sld [smem:[#allocation2 + $0x153]]
        %v8223 = vstv %s8222
        %v8224 = vmul.f32 %v8223, %v4078
        %v8225 = vmul.f32 %v8223, %v4079
        %v8226 = vmul.f32 %v8223, %v4080
        %v8230 = vrot.slane %v8224, 1
        %v8231 = vrot.slane %v8225, 1
        %v8232 = vsel %vm343, %v8230, %v8231
        %v8233 = vrot.slane %v8226, 1
        %v8234 = vsel %vm343, %v8231, %v8233
        %v8237 = vadd.f32 %v8220, %v8232
        %v8238 = vadd.f32 %v8221, %v8234
        %s8239 = sld [smem:[#allocation2 + $0x163]]
        %v8240 = vstv %s8239
        %v8241 = vmul.f32 %v8240, %v4078
        %v8242 = vmul.f32 %v8240, %v4079
        %v8243 = vmul.f32 %v8240, %v4080
        %v8247 = vrot.slane %v8241, 1
        %v8248 = vrot.slane %v8242, 1
        %v8249 = vsel %vm343, %v8247, %v8248
        %v8250 = vrot.slane %v8243, 1
        %v8251 = vsel %vm343, %v8248, %v8250
        %8252 = vrot.lane.b32.xlu0 %v8249, 127
        %v8253 = vpop.permute.xlu0 %8252
        %8254 = vrot.lane.b32.xlu0 %v8251, 127
        %v8255 = vpop.permute.xlu0 %8254
        %v8258 = vadd.f32 %v8237, %v8253
        %v8259 = vadd.f32 %v8238, %v8255
        %s8260 = sld [smem:[#allocation2 + $0x173]]
        %v8261 = vstv %s8260
        %v8262 = vmul.f32 %v8261, %v4078
        %v8263 = vmul.f32 %v8261, %v4079
        %v8264 = vmul.f32 %v8261, %v4080
        %v8268 = vrot.slane %v8262, 1
        %v8269 = vrot.slane %v8263, 1
        %v8270 = vsel %vm343, %v8268, %v8269
        %v8271 = vrot.slane %v8264, 1
        %v8272 = vsel %vm343, %v8269, %v8271
        %8273 = vrot.lane.b32.xlu0 %v8270, 126
        %v8274 = vpop.permute.xlu0 %8273
        %8275 = vrot.lane.b32.xlu0 %v8272, 126
        %v8276 = vpop.permute.xlu0 %8275
        %v8279 = vadd.f32 %v8258, %v8274
        %v8280 = vadd.f32 %v8259, %v8276
        %s8281 = sld [smem:[#allocation2 + $0x183]]
        %v8282 = vstv %s8281
        %v8283 = vmul.f32 %v8282, %v4078
        %v8284 = vmul.f32 %v8282, %v4079
        %v8285 = vmul.f32 %v8282, %v4080
        %v8289 = vrot.slane %v8283, 2
        %v8290 = vrot.slane %v8284, 2
        %v8291 = vsel %vm413, %v8289, %v8290
        %v8292 = vrot.slane %v8285, 2
        %v8293 = vsel %vm413, %v8290, %v8292
        %v8296 = vadd.f32 %v8279, %v8291
        %v8297 = vadd.f32 %v8280, %v8293
        %s8298 = sld [smem:[#allocation2 + $0x193]]
        %v8299 = vstv %s8298
        %v8300 = vmul.f32 %v8299, %v4078
        %v8301 = vmul.f32 %v8299, %v4079
        %v8302 = vmul.f32 %v8299, %v4080
        %v8306 = vrot.slane %v8300, 2
        %v8307 = vrot.slane %v8301, 2
        %v8308 = vsel %vm413, %v8306, %v8307
        %v8309 = vrot.slane %v8302, 2
        %v8310 = vsel %vm413, %v8307, %v8309
        %8311 = vrot.lane.b32.xlu0 %v8308, 127
        %v8312 = vpop.permute.xlu0 %8311
        %8313 = vrot.lane.b32.xlu0 %v8310, 127
        %v8314 = vpop.permute.xlu0 %8313
        %v8317 = vadd.f32 %v8296, %v8312
        %v8318 = vadd.f32 %v8297, %v8314
        %s8319 = sld [smem:[#allocation2 + $0x1a3]]
        %v8320 = vstv %s8319
        %v8321 = vmul.f32 %v8320, %v4078
        %v8322 = vmul.f32 %v8320, %v4079
        %v8323 = vmul.f32 %v8320, %v4080
        %v8327 = vrot.slane %v8321, 2
        %v8328 = vrot.slane %v8322, 2
        %v8329 = vsel %vm413, %v8327, %v8328
        %v8330 = vrot.slane %v8323, 2
        %v8331 = vsel %vm413, %v8328, %v8330
        %8332 = vrot.lane.b32.xlu0 %v8329, 126
        %v8333 = vpop.permute.xlu0 %8332
        %8334 = vrot.lane.b32.xlu0 %v8331, 126
        %v8335 = vpop.permute.xlu0 %8334
        %v8338 = vadd.f32 %v8317, %v8333
        %v8339 = vadd.f32 %v8318, %v8335
        %s8340 = sld [smem:[#allocation2 + $0x127]]
        %v8341 = vstv %s8340
        %v8342 = vmul.f32 %v8341, %v4833
        %v8343 = vmul.f32 %v8341, %v4834
        %v8344 = vadd.f32 %v8338, %v8342
        %v8345 = vadd.f32 %v8339, %v8343
        %s8346 = sld [smem:[#allocation2 + $0x137]]
        %v8347 = vstv %s8346
        %v8348 = vmul.f32 %v8347, %v4833
        %v8349 = vmul.f32 %v8347, %v4834
        %8352 = vrot.lane.b32.xlu0 %v8348, 127
        %v8353 = vpop.permute.xlu0 %8352
        %8354 = vrot.lane.b32.xlu0 %v8349, 127
        %v8355 = vpop.permute.xlu0 %8354
        %v8358 = vadd.f32 %v8344, %v8353
        %v8359 = vadd.f32 %v8345, %v8355
        %s8360 = sld [smem:[#allocation2 + $0x147]]
        %v8361 = vstv %s8360
        %v8362 = vmul.f32 %v8361, %v4833
        %v8363 = vmul.f32 %v8361, %v4834
        %8366 = vrot.lane.b32.xlu0 %v8362, 126
        %v8367 = vpop.permute.xlu0 %8366
        %8368 = vrot.lane.b32.xlu0 %v8363, 126
        %v8369 = vpop.permute.xlu0 %8368
        %v8372 = vadd.f32 %v8358, %v8367
        %v8373 = vadd.f32 %v8359, %v8369
        %s8374 = sld [smem:[#allocation2 + $0x157]]
        %v8375 = vstv %s8374
        %v8376 = vmul.f32 %v8375, %v4833
        %v8377 = vmul.f32 %v8375, %v4834
        %v8378 = vmul.f32 %v8375, %v4835
        %v8382 = vrot.slane %v8376, 1
        %v8383 = vrot.slane %v8377, 1
        %v8384 = vsel %vm343, %v8382, %v8383
        %v8385 = vrot.slane %v8378, 1
        %v8386 = vsel %vm343, %v8383, %v8385
        %v8389 = vadd.f32 %v8372, %v8384
        %v8390 = vadd.f32 %v8373, %v8386
        %s8391 = sld [smem:[#allocation2 + $0x167]]
        %v8392 = vstv %s8391
        %v8393 = vmul.f32 %v8392, %v4833
        %v8394 = vmul.f32 %v8392, %v4834
        %v8395 = vmul.f32 %v8392, %v4835
        %v8399 = vrot.slane %v8393, 1
        %v8400 = vrot.slane %v8394, 1
        %v8401 = vsel %vm343, %v8399, %v8400
        %v8402 = vrot.slane %v8395, 1
        %v8403 = vsel %vm343, %v8400, %v8402
        %8404 = vrot.lane.b32.xlu0 %v8401, 127
        %v8405 = vpop.permute.xlu0 %8404
        %8406 = vrot.lane.b32.xlu0 %v8403, 127
        %v8407 = vpop.permute.xlu0 %8406
        %v8410 = vadd.f32 %v8389, %v8405
        %v8411 = vadd.f32 %v8390, %v8407
        %s8412 = sld [smem:[#allocation2 + $0x177]]
        %v8413 = vstv %s8412
        %v8414 = vmul.f32 %v8413, %v4833
        %v8415 = vmul.f32 %v8413, %v4834
        %v8416 = vmul.f32 %v8413, %v4835
        %v8420 = vrot.slane %v8414, 1
        %v8421 = vrot.slane %v8415, 1
        %v8422 = vsel %vm343, %v8420, %v8421
        %v8423 = vrot.slane %v8416, 1
        %v8424 = vsel %vm343, %v8421, %v8423
        %8425 = vrot.lane.b32.xlu0 %v8422, 126
        %v8426 = vpop.permute.xlu0 %8425
        %8427 = vrot.lane.b32.xlu0 %v8424, 126
        %v8428 = vpop.permute.xlu0 %8427
        %v8431 = vadd.f32 %v8410, %v8426
        %v8432 = vadd.f32 %v8411, %v8428
        %s8433 = sld [smem:[#allocation2 + $0x187]]
        %v8434 = vstv %s8433
        %v8435 = vmul.f32 %v8434, %v4833
        %v8436 = vmul.f32 %v8434, %v4834
        %v8437 = vmul.f32 %v8434, %v4835
        %v8441 = vrot.slane %v8435, 2
        %v8442 = vrot.slane %v8436, 2
        %v8443 = vsel %vm413, %v8441, %v8442
        %v8444 = vrot.slane %v8437, 2
        %v8445 = vsel %vm413, %v8442, %v8444
        %v8448 = vadd.f32 %v8431, %v8443
        %v8449 = vadd.f32 %v8432, %v8445
        %s8450 = sld [smem:[#allocation2 + $0x197]]
        %v8451 = vstv %s8450
        %v8452 = vmul.f32 %v8451, %v4833
        %v8453 = vmul.f32 %v8451, %v4834
        %v8454 = vmul.f32 %v8451, %v4835
        %v8458 = vrot.slane %v8452, 2
        %v8459 = vrot.slane %v8453, 2
        %v8460 = vsel %vm413, %v8458, %v8459
        %v8461 = vrot.slane %v8454, 2
        %v8462 = vsel %vm413, %v8459, %v8461
        %8463 = vrot.lane.b32.xlu0 %v8460, 127
        %v8464 = vpop.permute.xlu0 %8463
        %8465 = vrot.lane.b32.xlu0 %v8462, 127
        %v8466 = vpop.permute.xlu0 %8465
        %v8469 = vadd.f32 %v8448, %v8464
        %v8470 = vadd.f32 %v8449, %v8466
        %s8471 = sld [smem:[#allocation2 + $0x1a7]]
        %v8472 = vstv %s8471
        %v8473 = vmul.f32 %v8472, %v4833
        %v8474 = vmul.f32 %v8472, %v4834
        %v8475 = vmul.f32 %v8472, %v4835
        %v8479 = vrot.slane %v8473, 2
        %v8480 = vrot.slane %v8474, 2
        %v8481 = vsel %vm413, %v8479, %v8480
        %v8482 = vrot.slane %v8475, 2
        %v8483 = vsel %vm413, %v8480, %v8482
        %8484 = vrot.lane.b32.xlu0 %v8481, 126
        %v8485 = vpop.permute.xlu0 %8484
        %8486 = vrot.lane.b32.xlu0 %v8483, 126
        %v8487 = vpop.permute.xlu0 %8486
        %v8490 = vadd.f32 %v8469, %v8485
        %v8491 = vadd.f32 %v8470, %v8487
        %s8492 = sld [smem:[#allocation2 + $0x12b]]
        %v8493 = vstv %s8492
        %v8494 = vmul.f32 %v8493, %v5588
        %v8495 = vmul.f32 %v8493, %v5589
        %v8496 = vadd.f32 %v8490, %v8494
        %v8497 = vadd.f32 %v8491, %v8495
        %s8498 = sld [smem:[#allocation2 + $0x13b]]
        %v8499 = vstv %s8498
        %v8500 = vmul.f32 %v8499, %v5588
        %v8501 = vmul.f32 %v8499, %v5589
        %8504 = vrot.lane.b32.xlu0 %v8500, 127
        %v8505 = vpop.permute.xlu0 %8504
        %8506 = vrot.lane.b32.xlu0 %v8501, 127
        %v8507 = vpop.permute.xlu0 %8506
        %v8510 = vadd.f32 %v8496, %v8505
        %v8511 = vadd.f32 %v8497, %v8507
        %s8512 = sld [smem:[#allocation2 + $0x14b]]
        %v8513 = vstv %s8512
        %v8514 = vmul.f32 %v8513, %v5588
        %v8515 = vmul.f32 %v8513, %v5589
        %8518 = vrot.lane.b32.xlu0 %v8514, 126
        %v8519 = vpop.permute.xlu0 %8518
        %8520 = vrot.lane.b32.xlu0 %v8515, 126
        %v8521 = vpop.permute.xlu0 %8520
        %v8524 = vadd.f32 %v8510, %v8519
        %v8525 = vadd.f32 %v8511, %v8521
        %s8526 = sld [smem:[#allocation2 + $0x15b]]
        %v8527 = vstv %s8526
        %v8528 = vmul.f32 %v8527, %v5588
        %v8529 = vmul.f32 %v8527, %v5589
        %v8530 = vmul.f32 %v8527, %v5590
        %v8534 = vrot.slane %v8528, 1
        %v8535 = vrot.slane %v8529, 1
        %v8536 = vsel %vm343, %v8534, %v8535
        %v8537 = vrot.slane %v8530, 1
        %v8538 = vsel %vm343, %v8535, %v8537
        %v8541 = vadd.f32 %v8524, %v8536
        %v8542 = vadd.f32 %v8525, %v8538
        %s8543 = sld [smem:[#allocation2 + $0x16b]]
        %v8544 = vstv %s8543
        %v8545 = vmul.f32 %v8544, %v5588
        %v8546 = vmul.f32 %v8544, %v5589
        %v8547 = vmul.f32 %v8544, %v5590
        %v8551 = vrot.slane %v8545, 1
        %v8552 = vrot.slane %v8546, 1
        %v8553 = vsel %vm343, %v8551, %v8552
        %v8554 = vrot.slane %v8547, 1
        %v8555 = vsel %vm343, %v8552, %v8554
        %8556 = vrot.lane.b32.xlu0 %v8553, 127
        %v8557 = vpop.permute.xlu0 %8556
        %8558 = vrot.lane.b32.xlu0 %v8555, 127
        %v8559 = vpop.permute.xlu0 %8558
        %v8562 = vadd.f32 %v8541, %v8557
        %v8563 = vadd.f32 %v8542, %v8559
        %s8564 = sld [smem:[#allocation2 + $0x17b]]
        %v8565 = vstv %s8564
        %v8566 = vmul.f32 %v8565, %v5588
        %v8567 = vmul.f32 %v8565, %v5589
        %v8568 = vmul.f32 %v8565, %v5590
        %v8572 = vrot.slane %v8566, 1
        %v8573 = vrot.slane %v8567, 1
        %v8574 = vsel %vm343, %v8572, %v8573
        %v8575 = vrot.slane %v8568, 1
        %v8576 = vsel %vm343, %v8573, %v8575
        %8577 = vrot.lane.b32.xlu0 %v8574, 126
        %v8578 = vpop.permute.xlu0 %8577
        %8579 = vrot.lane.b32.xlu0 %v8576, 126
        %v8580 = vpop.permute.xlu0 %8579
        %v8583 = vadd.f32 %v8562, %v8578
        %v8584 = vadd.f32 %v8563, %v8580
        %s8585 = sld [smem:[#allocation2 + $0x18b]]
        %v8586 = vstv %s8585
        %v8587 = vmul.f32 %v8586, %v5588
        %v8588 = vmul.f32 %v8586, %v5589
        %v8589 = vmul.f32 %v8586, %v5590
        %v8593 = vrot.slane %v8587, 2
        %v8594 = vrot.slane %v8588, 2
        %v8595 = vsel %vm413, %v8593, %v8594
        %v8596 = vrot.slane %v8589, 2
        %v8597 = vsel %vm413, %v8594, %v8596
        %v8600 = vadd.f32 %v8583, %v8595
        %v8601 = vadd.f32 %v8584, %v8597
        %s8602 = sld [smem:[#allocation2 + $0x19b]]
        %v8603 = vstv %s8602
        %v8604 = vmul.f32 %v8603, %v5588
        %v8605 = vmul.f32 %v8603, %v5589
        %v8606 = vmul.f32 %v8603, %v5590
        %v8610 = vrot.slane %v8604, 2
        %v8611 = vrot.slane %v8605, 2
        %v8612 = vsel %vm413, %v8610, %v8611
        %v8613 = vrot.slane %v8606, 2
        %v8614 = vsel %vm413, %v8611, %v8613
        %8615 = vrot.lane.b32.xlu0 %v8612, 127
        %v8616 = vpop.permute.xlu0 %8615
        %8617 = vrot.lane.b32.xlu0 %v8614, 127
        %v8618 = vpop.permute.xlu0 %8617
        %v8621 = vadd.f32 %v8600, %v8616
        %v8622 = vadd.f32 %v8601, %v8618
        %s8623 = sld [smem:[#allocation2 + $0x1ab]]
        %v8624 = vstv %s8623
        %v8625 = vmul.f32 %v8624, %v5588
        %v8626 = vmul.f32 %v8624, %v5589
        %v8627 = vmul.f32 %v8624, %v5590
        %v8631 = vrot.slane %v8625, 2
        %v8632 = vrot.slane %v8626, 2
        %v8633 = vsel %vm413, %v8631, %v8632
        %v8634 = vrot.slane %v8627, 2
        %v8635 = vsel %vm413, %v8632, %v8634
        %8636 = vrot.lane.b32.xlu0 %v8633, 126
        %v8637 = vpop.permute.xlu0 %8636
        %8638 = vrot.lane.b32.xlu0 %v8635, 126
        %v8639 = vpop.permute.xlu0 %8638
        %v8642 = vadd.f32 %v8621, %v8637
        %v8643 = vadd.f32 %v8622, %v8639
        %s8644 = sld [smem:[#allocation2 + $0x12f]]
        %v8645 = vstv %s8644
        %v8646 = vmul.f32 %v8645, %v6343
        %v8647 = vmul.f32 %v8645, %v6344
        %v8648 = vadd.f32 %v8642, %v8646
        %v8649 = vadd.f32 %v8643, %v8647
        %s8650 = sld [smem:[#allocation2 + $0x13f]]
        %v8651 = vstv %s8650
        %v8652 = vmul.f32 %v8651, %v6343
        %v8653 = vmul.f32 %v8651, %v6344
        %8656 = vrot.lane.b32.xlu0 %v8652, 127
        %v8657 = vpop.permute.xlu0 %8656
        %8658 = vrot.lane.b32.xlu0 %v8653, 127
        %v8659 = vpop.permute.xlu0 %8658
        %v8662 = vadd.f32 %v8648, %v8657
        %v8663 = vadd.f32 %v8649, %v8659
        %s8664 = sld [smem:[#allocation2 + $0x14f]]
        %v8665 = vstv %s8664
        %v8666 = vmul.f32 %v8665, %v6343
        %v8667 = vmul.f32 %v8665, %v6344
        %8670 = vrot.lane.b32.xlu0 %v8666, 126
        %v8671 = vpop.permute.xlu0 %8670
        %8672 = vrot.lane.b32.xlu0 %v8667, 126
        %v8673 = vpop.permute.xlu0 %8672
        %v8676 = vadd.f32 %v8662, %v8671
        %v8677 = vadd.f32 %v8663, %v8673
        %s8678 = sld [smem:[#allocation2 + $0x15f]]
        %v8679 = vstv %s8678
        %v8680 = vmul.f32 %v8679, %v6343
        %v8681 = vmul.f32 %v8679, %v6344
        %v8682 = vmul.f32 %v8679, %v6345
        %v8686 = vrot.slane %v8680, 1
        %v8687 = vrot.slane %v8681, 1
        %v8688 = vsel %vm343, %v8686, %v8687
        %v8689 = vrot.slane %v8682, 1
        %v8690 = vsel %vm343, %v8687, %v8689
        %v8693 = vadd.f32 %v8676, %v8688
        %v8694 = vadd.f32 %v8677, %v8690
        %s8695 = sld [smem:[#allocation2 + $0x16f]]
        %v8696 = vstv %s8695
        %v8697 = vmul.f32 %v8696, %v6343
        %v8698 = vmul.f32 %v8696, %v6344
        %v8699 = vmul.f32 %v8696, %v6345
        %v8703 = vrot.slane %v8697, 1
        %v8704 = vrot.slane %v8698, 1
        %v8705 = vsel %vm343, %v8703, %v8704
        %v8706 = vrot.slane %v8699, 1
        %v8707 = vsel %vm343, %v8704, %v8706
        %8708 = vrot.lane.b32.xlu0 %v8705, 127
        %v8709 = vpop.permute.xlu0 %8708
        %8710 = vrot.lane.b32.xlu0 %v8707, 127
        %v8711 = vpop.permute.xlu0 %8710
        %v8714 = vadd.f32 %v8693, %v8709
        %v8715 = vadd.f32 %v8694, %v8711
        %s8716 = sld [smem:[#allocation2 + $0x17f]]
        %v8717 = vstv %s8716
        %v8718 = vmul.f32 %v8717, %v6343
        %v8719 = vmul.f32 %v8717, %v6344
        %v8720 = vmul.f32 %v8717, %v6345
        %v8724 = vrot.slane %v8718, 1
        %v8725 = vrot.slane %v8719, 1
        %v8726 = vsel %vm343, %v8724, %v8725
        %v8727 = vrot.slane %v8720, 1
        %v8728 = vsel %vm343, %v8725, %v8727
        %8729 = vrot.lane.b32.xlu0 %v8726, 126
        %v8730 = vpop.permute.xlu0 %8729
        %8731 = vrot.lane.b32.xlu0 %v8728, 126
        %v8732 = vpop.permute.xlu0 %8731
        %v8735 = vadd.f32 %v8714, %v8730
        %v8736 = vadd.f32 %v8715, %v8732
        %s8737 = sld [smem:[#allocation2 + $0x18f]]
        %v8738 = vstv %s8737
        %v8739 = vmul.f32 %v8738, %v6343
        %v8740 = vmul.f32 %v8738, %v6344
        %v8741 = vmul.f32 %v8738, %v6345
        %v8745 = vrot.slane %v8739, 2
        %v8746 = vrot.slane %v8740, 2
        %v8747 = vsel %vm413, %v8745, %v8746
        %v8748 = vrot.slane %v8741, 2
        %v8749 = vsel %vm413, %v8746, %v8748
        %v8752 = vadd.f32 %v8735, %v8747
        %v8753 = vadd.f32 %v8736, %v8749
        %s8754 = sld [smem:[#allocation2 + $0x19f]]
        %v8755 = vstv %s8754
        %v8756 = vmul.f32 %v8755, %v6343
        %v8757 = vmul.f32 %v8755, %v6344
        %v8758 = vmul.f32 %v8755, %v6345
        %v8762 = vrot.slane %v8756, 2
        %v8763 = vrot.slane %v8757, 2
        %v8764 = vsel %vm413, %v8762, %v8763
        %v8765 = vrot.slane %v8758, 2
        %v8766 = vsel %vm413, %v8763, %v8765
        %8767 = vrot.lane.b32.xlu0 %v8764, 127
        %v8768 = vpop.permute.xlu0 %8767
        %8769 = vrot.lane.b32.xlu0 %v8766, 127
        %v8770 = vpop.permute.xlu0 %8769
        %v8773 = vadd.f32 %v8752, %v8768
        %v8774 = vadd.f32 %v8753, %v8770
        %s8775 = sld [smem:[#allocation2 + $0x1af]]
        %v8776 = vstv %s8775
        %v8777 = vmul.f32 %v8776, %v6343
        %v8778 = vmul.f32 %v8776, %v6344
        %v8779 = vmul.f32 %v8776, %v6345
        %v8783 = vrot.slane %v8777, 2
        %v8784 = vrot.slane %v8778, 2
        %v8785 = vsel %vm413, %v8783, %v8784
        %v8786 = vrot.slane %v8779, 2
        %v8787 = vsel %vm413, %v8784, %v8786
        %8788 = vrot.lane.b32.xlu0 %v8785, 126
        %v8789 = vpop.permute.xlu0 %8788
        %8790 = vrot.lane.b32.xlu0 %v8787, 126
        %v8791 = vpop.permute.xlu0 %8790
        %v8794 = vadd.f32 %v8773, %v8789
        %v8795 = vadd.f32 %v8774, %v8791
        %s8796 = sld [smem:[#allocation5 + $0xb]]
        %v8797 = vstv %s8796
        %v8798 = vadd.f32 %v8794, %v8797
        %v8799 = vadd.f32 %v8795, %v8797
        %v8800 = vmax.f32 %v8798, 0.0
        %v8801 = vmax.f32 %v8799, 0.0
        %v8802 = vld [vmem:[%s3] sm:$0xf]
        %v8803 = vld [vmem:[%s4] sm:$0x1]
        %vm8804 = vcmask 130048
        %v8805 = vsel %vm8804, %v6958, 0.0
        %8806 = vadd.xlane.f32.xlu0 %v8805
        %v8807 = vpop.xlane.xlu0 %8806
        %v8808 = vsel %vm8804, %v6959, 0.0
        %8809 = vadd.xlane.f32.xlu0 %v8808
        %v8810 = vpop.xlane.xlu0 %8809
        %v8811 = vadd.f32 %v8807, %v8810
        %v8812 = vrot.slane %v8811, 4
        %v8813 = vadd.f32 %v8811, %v8812
        %v8814 = vrot.slane %v8813, 2
        %v8815 = vadd.f32 %v8813, %v8814
        %v8816 = vrot.slane %v8815, 1
        %v8817 = vadd.f32 %v8815, %v8816
        %v8818 = vmul.f32 %v8817, 0.00390625
        %v8819 = vmul.f32 %v8818, %v8802
        %v8820 = vadd.f32 %v8803, %v8819
        %v8821 = vsel %vm8804, %v7572, 0.0
        %8822 = vadd.xlane.f32.xlu0 %v8821
        %v8823 = vpop.xlane.xlu0 %8822
        %v8824 = vsel %vm8804, %v7573, 0.0
        %8825 = vadd.xlane.f32.xlu0 %v8824
        %v8826 = vpop.xlane.xlu0 %8825
        %v8827 = vadd.f32 %v8823, %v8826
        %v8828 = vrot.slane %v8827, 4
        %v8829 = vadd.f32 %v8827, %v8828
        %v8830 = vrot.slane %v8829, 2
        %v8831 = vadd.f32 %v8829, %v8830
        %v8832 = vrot.slane %v8831, 1
        %v8833 = vadd.f32 %v8831, %v8832
        %v8834 = vmul.f32 %v8833, 0.00390625
        %v8835 = vmul.f32 %v8834, %v8802
        %8837 = vst [vmem:[#allocation1] sm:$0xff] %v8835
        %s8838 = scalar_lea.vmem [#allocation1], 1
        %v8839 = vld [vmem:[%s8838] ss:$9 sm:$0xff]
        %v8841 = vadd.f32 %v8820, %v8839
        %v8842 = vsel %vm8804, %v8186, 0.0
        %8843 = vadd.xlane.f32.xlu0 %v8842
        %v8844 = vpop.xlane.xlu0 %8843
        %v8845 = vsel %vm8804, %v8187, 0.0
        %8846 = vadd.xlane.f32.xlu0 %v8845
        %v8847 = vpop.xlane.xlu0 %8846
        %v8848 = vadd.f32 %v8844, %v8847
        %v8849 = vrot.slane %v8848, 4
        %v8850 = vadd.f32 %v8848, %v8849
        %v8851 = vrot.slane %v8850, 2
        %v8852 = vadd.f32 %v8850, %v8851
        %v8853 = vrot.slane %v8852, 1
        %v8854 = vadd.f32 %v8852, %v8853
        %v8855 = vmul.f32 %v8854, 0.00390625
        %v8856 = vmul.f32 %v8855, %v8802
        %8858 = vst [vmem:[#allocation1] sm:$0xff] %v8856
        %s8859 = scalar_lea.vmem [#allocation1], 2
        %v8860 = vld [vmem:[%s8859] ss:$9 sm:$0xff]
        %v8862 = vadd.f32 %v8841, %v8860
        %v8863 = vsel %vm8804, %v8800, 0.0
        %8864 = vadd.xlane.f32.xlu0 %v8863
        %v8865 = vpop.xlane.xlu0 %8864
        %v8866 = vsel %vm8804, %v8801, 0.0
        %8867 = vadd.xlane.f32.xlu0 %v8866
        %v8868 = vpop.xlane.xlu0 %8867
        %v8869 = vadd.f32 %v8865, %v8868
        %v8870 = vrot.slane %v8869, 4
        %v8871 = vadd.f32 %v8869, %v8870
        %v8872 = vrot.slane %v8871, 2
        %v8873 = vadd.f32 %v8871, %v8872
        %v8874 = vrot.slane %v8873, 1
        %v8875 = vadd.f32 %v8873, %v8874
        %v8876 = vmul.f32 %v8875, 0.00390625
        %v8877 = vmul.f32 %v8876, %v8802
        %8879 = vst [vmem:[#allocation1] sm:$0xff] %v8877
        %s8880 = scalar_lea.vmem [#allocation1], 3
        %v8881 = vld [vmem:[%s8880] ss:$9 sm:$0xff]
        %v8883 = vadd.f32 %v8862, %v8881
        %8884 = vst [vmem:[%s243] sm:$0x1] %v8883
        %s8885 = sand.u32 %s139, 1
        %s8886 = scalar_lea.sflag [#allocation3], %s8885
        %s8887 = sand.u32 %s139, 1
        %s8888 = scalar_lea.vmem [#allocation7], %s8887
        // Predicated region
        $region49: #{tpu_custom_call.1} parent=39 // pred_check
          %p8889 = pneg %p149
        $region50: #{tpu_custom_call.1} parent=39 // pred_check_branch
          %8891 = sbr.rel (%p8889) target = $region52
        $region51: #{tpu_custom_call.1} parent=39 // pred_region
          %8893 = vsyncadd %s8886, 0
          %s8894 = scalar_lea.hbm %s5, %s21
          %s8896 = sshll.u32 %s8888, 4
          %s8897 = int_to_ptr.vmem [resolvable:$true] %s8896
          %s8898 = sshll.u32 %s8894, 4
          %s8899 = int_to_ptr.hbm [resolvable:$true] %s8898
          %8901 = dma.vmem_to_hbm [thread:$0]  %s8897, 16, %s8899, %s8886
        $region52: #{tpu_custom_call.1} parent=39 // pred_fallthru
          _
      $region40: #{tpu_custom_call.1} parent=5 // pred_fallthru
        _
      %p8902 = scmp.le.s32.totalorder 2, %s16
      // Predicated region
      $region53: #{tpu_custom_call.1} parent=5 // pred_check
        %p8903 = pneg %p8902
      $region54: #{tpu_custom_call.1} parent=5 // pred_check_branch
        %8905 = sbr.rel (%p8903) target = $region56
      $region55: #{tpu_custom_call.1} parent=5 // pred_region
        %s8906 = ssub.s32 %s16, 2
        // Predicated region
        $region57: #{tpu_custom_call.1} parent=55 // pred_check
          %p8907 = pneg %p155
        $region58: #{tpu_custom_call.1} parent=55 // pred_check_branch
          %8909 = sbr.rel (%p8907) target = $region60
        $region59: #{tpu_custom_call.1} parent=55 // pred_region
          %s8910 = sand.u32 %s140, 1
          %s8911 = scalar_lea.sflag [#allocation3], %s8910
          %s8912 = sand.u32 %s140, 1
          %s8913 = scalar_lea.vmem [#allocation7], %s8912
          %8915 = dma.done %s8911, 16
        $region60: #{tpu_custom_call.1} parent=55 // pred_fallthru
          _
      $region56: #{tpu_custom_call.1} parent=5 // pred_fallthru
        _
    $region6: #{tpu_custom_call.1} parent=1 // loop_footer
      %s20 = sadd.s32 1, %s16
    $region7: #{tpu_custom_call.1} parent=1 // loop_footer_branch
      %15 = sbr.rel target = $region3
    $region8: #{tpu_custom_call.1} parent=1 // loop_exit
      _
    %8916 = vsyncpa [#allocation3], 1
    %s8917 = scalar_lea.sflag [#allocation3], 1
    %8918 = vsyncpa %s8917, 1
    %8919 = vsyncpa [#allocation4], 1
    %s8920 = scalar_lea.sflag [#allocation4], 1
    %8921 = vsyncpa %s8920, 1
    %8922 = vsyncpa [#allocation6], 1

</llo_original>
